<compile_context>
chip_gen: v5e
topology: v5e:2x2
jax: 0.10.0
libtpu: 0.0.40
codegen_flags: <defaults>
</compile_context>

<pallas_src>
import functools

import jax
import jax.numpy as jnp
from jax import lax
from jax.experimental import pallas as pl
from jax.experimental.pallas import tpu as pltpu

LANE = 128


def _round_up_lane(c):
    return ((c + LANE - 1) // LANE) * LANE


def _batch_block(n, h, w):
    """Smallest divisor bb of n with bb*h*w >= 128 (feeds the MXU M dim),
    capped at n//2 so there are always >= 2 grid steps (v7x 2 TCs + DMA/compute
    pipelining)."""
    if n <= 1:
        return 1
    cap = max(1, n // 2)
    best = 1
    for bb in range(1, cap + 1):
        if n % bb == 0:
            best = bb
            if bb * h * w >= 128:
                break
    return best


def _im2col3x3(xp, h, w):
    """xp: (bb, h+2, w+2, Cpad) zero-bordered image (f32 value) ->
    (bb*h*w, 9*Cpad) patch matrix.  Tap order (dh, dw) row-major matches
    hwio.reshape(9*Cpad, O); Cpad is a multiple of 128 so the minor-dim
    concatenate stays lane-tile aligned."""
    bb, c = xp.shape[0], xp.shape[-1]
    taps = [xp[:, dh:dh + h, dw:dw + w, :].reshape(bb * h * w, c)
            for dh in range(3) for dw in range(3)]
    return jnp.concatenate(taps, axis=-1)


# ----------------------------------------------------------------------------
# Kernel 1: fused stem = conv_1 (3x3, pad 1, bias) + residual stack + ReLU.
# ----------------------------------------------------------------------------
def _stem_kernel(x_ref, cw_ref, cb_ref, rw3_ref, rw1_ref, o_ref,
                 xp_ref, hp_ref, *, H, W, L):
    """x_ref : (bb, H, W, Cin)        bf16
       cw_ref: (9*CinP, C)            bf16 im2col conv_1 weight (lane-padded K)
       cb_ref: (1, C)                 f32 bias
       rw3_ref: (L, 9*CP, Crh)        bf16   3x3 residual weights
       rw1_ref: (L, Crh, C)           bf16   1x1 residual weights
       o_ref : (bb, H, W, C)          bf16
       xp_ref: (bb, H+2, W+2, CinP)   f32 scratch (in-kernel zero border)
       hp_ref: (bb, H+2, W+2, CP)     f32 scratch (in-kernel zero border)
    """
    bb = x_ref.shape[0]
    cin = x_ref.shape[-1]
    C = o_ref.shape[-1]

    # ---- conv_1: border handled in VMEM, one im2col matmul ----
    xp_ref[...] = jnp.zeros(xp_ref.shape, xp_ref.dtype)
    xp_ref[:, 1:H + 1, 1:W + 1, :cin] = x_ref[...].astype(jnp.float32)
    p0 = _im2col3x3(xp_ref[...], H, W).astype(jnp.bfloat16)
    h = jnp.dot(p0, cw_ref[...], preferred_element_type=jnp.float32)
    h = h + cb_ref[...]                                   # (bb*H*W, C) f32

    # ---- residual stack: h never leaves VMEM ----
    hp_ref[...] = jnp.zeros(hp_ref.shape, hp_ref.dtype)   # border stays zero
    for l in range(L):
        t = jnp.maximum(h, 0.0)                           # ReLU
        hp_ref[:, 1:H + 1, 1:W + 1, :C] = t.reshape(bb, H, W, C)
        p = _im2col3x3(hp_ref[...], H, W).astype(jnp.bfloat16)
        r = jnp.dot(p, rw3_ref[l], preferred_element_type=jnp.float32)
        r = jnp.maximum(r, 0.0).astype(jnp.bfloat16)      # ReLU
        h = h + jnp.dot(r, rw1_ref[l], preferred_element_type=jnp.float32)

    h = jnp.maximum(h, 0.0)                               # ResidualStack ReLU
    o_ref[...] = h.reshape(bb, H, W, C).astype(o_ref.dtype)


def stem_pallas(x, cw, cb, rw3, rw1):
    N, H, W, Cin = x.shape
    C = cw.shape[-1]
    CinP = cw.shape[0] // 9
    CP = rw3.shape[1] // 9
    L = rw3.shape[0]
    assert Cin <= CinP and C <= CP
    bb = _batch_block(N, H, W)
    assert N % bb == 0
    kernel = functools.partial(_stem_kernel, H=H, W=W, L=L)
    return pl.pallas_call(
        kernel,
        out_shape=jax.ShapeDtypeStruct((N, H, W, C), jnp.bfloat16),
        grid=(N // bb,),
        in_specs=[
            pl.BlockSpec((bb, H, W, Cin), lambda n: (n, 0, 0, 0)),
            pl.BlockSpec(cw.shape, lambda n: (0, 0)),
            pl.BlockSpec(cb.shape, lambda n: (0, 0)),
            pl.BlockSpec(rw3.shape, lambda n: (0, 0, 0)),
            pl.BlockSpec(rw1.shape, lambda n: (0, 0, 0)),
        ],
        out_specs=pl.BlockSpec((bb, H, W, C), lambda n: (n, 0, 0, 0)),
        scratch_shapes=[
            pltpu.VMEM((bb, H + 2, W + 2, CinP), jnp.float32),
            pltpu.VMEM((bb, H + 2, W + 2, CP), jnp.float32),
        ],
        compiler_params=pltpu.CompilerParams(
            dimension_semantics=("parallel",)),
    )(x, cw, cb, rw3, rw1)


# ----------------------------------------------------------------------------
# Kernel 2: ConvTranspose2d(k=4, s=2, p=1) -- 4 phases in ONE union-of-taps
# matmul, phase-interleaved store so depth-to-space is a free reshape.
# ----------------------------------------------------------------------------
def _convT_kernel(x_ref, w_ref, b_ref, o_ref, xp_ref, *, H, W, relu_out):
    """x_ref : (bb, H, W, Cin)         bf16
       w_ref : (9*CinP, 4*Cout)        bf16 (zero rows for unused taps / pad)
       b_ref : (1, 4*Cout)             f32 (bias tiled per phase)
       o_ref : (bb, H, 2, W, 2*Cout)   out[n,i,r,j,s*Cout+c] = pixel (2i+r,2j+s)
       xp_ref: (bb, H+2, W+2, CinP)    f32 scratch (in-kernel zero border)
    """
    bb = x_ref.shape[0]
    cin = x_ref.shape[-1]
    c2 = o_ref.shape[-1]                                  # 2 * Cout
    xp_ref[...] = jnp.zeros(xp_ref.shape, xp_ref.dtype)
    xp_ref[:, 1:H + 1, 1:W + 1, :cin] = x_ref[...].astype(jnp.float32)
    p = _im2col3x3(xp_ref[...], H, W).astype(jnp.bfloat16)
    acc = jnp.dot(p, w_ref[...], preferred_element_type=jnp.float32)
    acc = acc + b_ref[...]
    if relu_out:
        acc = jnp.maximum(acc, 0.0)
    # acc columns = [phase(0,0) | (0,1) | (1,0) | (1,1)], each Cout wide.
    for r in range(2):
        o_ref[:, :, r:r + 1, :, :] = (
            acc[:, r * c2:(r + 1) * c2]
            .reshape(bb, H, 1, W, c2).astype(o_ref.dtype))


def conv_transpose_2x_pallas(x, w_union, b4, *, relu_out=False, out_dtype=None):
    N, H, W, Cin = x.shape
    CinP = w_union.shape[0] // 9
    Cout = w_union.shape[-1] // 4
    assert Cin <= CinP
    out_dtype = x.dtype if out_dtype is None else out_dtype
    bb = _batch_block(N, H, W)
    assert N % bb == 0
    kernel = functools.partial(_convT_kernel, H=H, W=W, relu_out=relu_out)
    y = pl.pallas_call(
        kernel,
        out_shape=jax.ShapeDtypeStruct((N, H, 2, W, 2 * Cout), out_dtype),
        grid=(N // bb,),
        in_specs=[
            pl.BlockSpec((bb, H, W, Cin), lambda n: (n, 0, 0, 0)),
            pl.BlockSpec(w_union.shape, lambda n: (0, 0)),
            pl.BlockSpec(b4.shape, lambda n: (0, 0)),
        ],
        out_specs=pl.BlockSpec((bb, H, 2, W, 2 * Cout),
                               lambda n: (n, 0, 0, 0, 0)),
        scratch_shapes=[pltpu.VMEM((bb, H + 2, W + 2, CinP), jnp.float32)],
        compiler_params=pltpu.CompilerParams(
            dimension_semantics=("parallel",)),
    )(x, w_union, b4)
    # depth-to-space: out[n, 2i+r, 2j+s, c] = y[n, i, r, j, s*Cout+c]
    # -> pure contiguous reshape, no HBM transpose.
    return y.reshape(N, 2 * H, 2 * W, Cout)


# ----------------------------------------------------------------------------
# Weight layout preparation (plain JAX, done once at init).
# ----------------------------------------------------------------------------
def _conv3x3_w_im2col(w_oikk):
    """torch Conv2d (O,I,3,3) -> (HWIO for the XLA reference,
    lane-padded im2col weight (9*Ipad, O) bf16)."""
    hwio = jnp.transpose(w_oikk, (2, 3, 1, 0))            # (3,3,I,O)
    _, _, I, O = hwio.shape
    Ip = _round_up_lane(I)
    w = jnp.zeros((3, 3, Ip, O), jnp.float32)
    w = w.at[:, :, :I, :].set(hwio)
    return hwio, w.reshape(9 * Ip, O).astype(jnp.bfloat16)


def _convT_w_union(w_iokk, cout_pad=None):
    """torch ConvTranspose2d (I,O,4,4) -> (direct-conv HWIO for the reference,
    union-of-taps weight (9*Ipad, 4*Opad) bf16 for the 4-phase single matmul).
    Phase (r,s) = output pixel (2i+r, 2j+s); tap (dh,dw) of the 1-padded
    compact input contributes iff (dh-r, dw-s) in {0,1}^2."""
    hwio = jnp.transpose(jnp.flip(w_iokk, axis=(2, 3)), (2, 3, 0, 1))  # (4,4,I,O)
    I, O = hwio.shape[2], hwio.shape[3]
    Ip = _round_up_lane(I)
    Op = O if cout_pad is None else cout_pad
    w = jnp.zeros((3, 3, Ip, 4 * Op), jnp.float32)
    for r in range(2):
        for s in range(2):
            ps = 2 * r + s
            for a in range(2):
                for b in range(2):
                    w = w.at[r + a, s + b, :I, ps * Op:ps * Op + O].set(
                        hwio[2 * a + r, 2 * b + s])
    return hwio, w.reshape(9 * Ip, 4 * Op).astype(jnp.bfloat16)


def init_params(key, in_channels, num_hiddens, num_residual_layers,
                num_residual_hiddens):
    ks = iter(jax.random.split(key, 2 + 2 * num_residual_layers + 4))
    nrm = lambda k, s: 0.1 * jax.random.normal(k, s, jnp.float32)

    flat, hwio = {}, {}

    w = nrm(next(ks), (num_hiddens, in_channels, 3, 3))        # Conv2d (O,I,K,K)
    hwio["conv1_w"], flat["conv1_w"] = _conv3x3_w_im2col(w)
    b1 = nrm(next(ks), (num_hiddens,))
    hwio["conv1_b"] = b1
    flat["conv1_b"] = b1.reshape(1, num_hiddens)

    w3s, w1s = [], []
    for i in range(num_residual_layers):
        w3 = nrm(next(ks), (num_residual_hiddens, num_hiddens, 3, 3))
        w1 = nrm(next(ks), (num_hiddens, num_residual_hiddens, 1, 1))
        h3, f3 = _conv3x3_w_im2col(w3)
        hwio[f"res{i}_w3"] = h3
        w1_hwio = jnp.transpose(w1, (2, 3, 1, 0))              # (1,1,I,O)
        hwio[f"res{i}_w1"] = w1_hwio
        w3s.append(f3)
        w1s.append(w1_hwio[0, 0].astype(jnp.bfloat16))
    flat["res_w3"] = jnp.stack(w3s)                            # (L, 9*CP, Crh)
    flat["res_w1"] = jnp.stack(w1s)                            # (L, Crh, C)

    wt1 = nrm(next(ks), (num_hiddens, num_hiddens // 2, 4, 4))  # ConvT (I,O,K,K)
    hwio["ct1_w"], flat["ct1_w"] = _convT_w_union(wt1)
    bt1 = nrm(next(ks), (num_hiddens // 2,))
    hwio["ct1_b"] = bt1
    flat["ct1_b"] = jnp.tile(bt1, 4).reshape(1, -1)

    wt2 = nrm(next(ks), (num_hiddens // 2, 3, 4, 4))
    ct2_pad = 8                 # lane-friendlier stores; sliced back to 3 outside
    hwio["ct2_w"], flat["ct2_w"] = _convT_w_union(wt2, cout_pad=ct2_pad)
    bt2 = nrm(next(ks), (3,))
    hwio["ct2_b"] = bt2
    flat["ct2_b"] = jnp.tile(jnp.pad(bt2, (0, ct2_pad - 3)), 4).reshape(1, -1)
    return flat, hwio


# ----------------------------------------------------------------------------
# Decoder forward (Pallas) and pure-JAX reference.
# ----------------------------------------------------------------------------
def decoder_forward_pallas(x_nchw, p, num_residual_layers):
    assert p["res_w3"].shape[0] == num_residual_layers
    x = jnp.transpose(x_nchw, (0, 2, 3, 1)).astype(jnp.bfloat16)  # NCHW -> NHWC
    # conv_1 + residual stack + final ReLU, fused.
    h = stem_pallas(x, p["conv1_w"], p["conv1_b"], p["res_w3"], p["res_w1"])
    # conv_trans_1 + F.relu
    h = conv_transpose_2x_pallas(h, p["ct1_w"], p["ct1_b"], relu_out=True)
    # conv_trans_2 (fp32 output)
    y = conv_transpose_2x_pallas(h, p["ct2_w"], p["ct2_b"],
                                 out_dtype=jnp.float32)
    # TODO(synk): fold the channel slice + NHWC->NCHW into the last kernel's
    # store (or keep the consumer NHWC) to drop this final full-res XLA pass.
    return jnp.transpose(y[..., :3], (0, 3, 1, 2))


def decoder_forward_reference(x_nchw, hw, num_residual_layers):
    """Pure-JAX fp32 reference (XLA convs) for correctness checking."""
    dn = ("NHWC", "HWIO", "NHWC")

    def conv(x, w, b, pad):
        y = lax.conv_general_dilated(x, w, (1, 1), ((pad, pad), (pad, pad)),
                                     dimension_numbers=dn)
        return y if b is None else y + b

    def convT(x, w, b):
        y = lax.conv_general_dilated(x, w, (1, 1), ((2, 2), (2, 2)),
                                     lhs_dilation=(2, 2), dimension_numbers=dn)
        return y + b

    x = jnp.transpose(x_nchw, (0, 2, 3, 1))
    h = conv(x, hw["conv1_w"], hw["conv1_b"], 1)
    for i in range(num_residual_layers):
        r = conv(jax.nn.relu(h), hw[f"res{i}_w3"], None, 1)
        h = h + conv(jax.nn.relu(r), hw[f"res{i}_w1"], None, 0)
    h = jax.nn.relu(h)
    h = jax.nn.relu(convT(h, hw["ct1_w"], hw["ct1_b"]))
    y = convT(h, hw["ct2_w"], hw["ct2_b"])
    return jnp.transpose(y, (0, 3, 1, 2))


if __name__ == "__main__":
    # Small deterministic config consistent with the module's structure.
    N, in_channels, H, W = 2, 4, 8, 8
    num_hiddens, num_residual_hiddens, num_residual_layers = 32, 16, 2

    key = jax.random.PRNGKey(0)
    kx, kp = jax.random.split(key)
    x = jax.random.normal(kx, (N, in_channels, H, W), jnp.float32)   # NCHW

    flat_params, hwio_params = init_params(kp, in_channels, num_hiddens,
                                           num_residual_layers,
                                           num_residual_hiddens)

    fwd = jax.jit(lambda xx, pp: decoder_forward_pallas(xx, pp,
                                                        num_residual_layers))
    out = jax.block_until_ready(fwd(x, flat_params))
    assert out.shape == (N, 3, 4 * H, 4 * W), out.shape

    ref = jax.block_until_ready(
        decoder_forward_reference(x, hwio_params, num_residual_layers))

    # bf16 matmul inputs / bf16 inter-layer activations, fp32 accumulation.
    max_diff = float(jnp.max(jnp.abs(out - ref)))
    if not bool(jnp.allclose(out, ref, rtol=5e-2, atol=5e-2)):
        raise AssertionError(
            f"mismatch vs fp32 reference, max abs diff = {max_diff}")

    print("KERNEL_OK")
</pallas_src>

<mosaic_0001>
module attributes {stable_mosaic.version = 11 : i64} {
  func.func @_stem_kernel(%arg0: i32, %arg1: memref<1x8x8x4xbf16, #tpu.memory_space<vmem>>, %arg2: memref<1152x32xbf16, #tpu.memory_space<vmem>>, %arg3: memref<1x32xf32, #tpu.memory_space<vmem>>, %arg4: memref<2x1152x16xbf16, #tpu.memory_space<vmem>>, %arg5: memref<2x16x32xbf16, #tpu.memory_space<vmem>>, %arg6: memref<1x8x8x32xbf16, #tpu.memory_space<vmem>>, %arg7: memref<1x10x10x128xf32, #tpu.memory_space<vmem>>, %arg8: memref<1x10x10x128xf32, #tpu.memory_space<vmem>>) attributes {dimension_semantics = [#tpu.dimension_semantics<parallel>], iteration_bounds = array<i64: 2>, scalar_prefetch = 0 : i64, scratch_operands = 2 : i64, tpu.core_type = #tpu.core_type<tc>, window_params = [{transform_indices = @transform_0, window_bounds = array<i64: 1, 8, 8, 4>}, {pipeline_mode = #tpu.pipeline_mode<synchronous>, transform_indices = @transform_1, window_bounds = array<i64: 1152, 32>}, {pipeline_mode = #tpu.pipeline_mode<synchronous>, transform_indices = @transform_2, window_bounds = array<i64: 1, 32>}, {pipeline_mode = #tpu.pipeline_mode<synchronous>, transform_indices = @transform_3, window_bounds = array<i64: 2, 1152, 16>}, {pipeline_mode = #tpu.pipeline_mode<synchronous>, transform_indices = @transform_4, window_bounds = array<i64: 2, 16, 32>}, {transform_indices = @transform_5, window_bounds = array<i64: 1, 8, 8, 32>}]} {
    %cst = arith.constant 0.000000e+00 : f32
    %0 = vector.broadcast %cst : f32 to vector<1x10x10x128xf32>
    %c0 = arith.constant 0 : index
    %c0_0 = arith.constant 0 : index
    %c0_1 = arith.constant 0 : index
    %c0_2 = arith.constant 0 : index
    %1 = vector.load %arg7[%c0, %c0_0, %c0_1, %c0_2] : memref<1x10x10x128xf32, #tpu.memory_space<vmem>>, vector<1x10x10x128xf32>
    tpu.vector_store %arg7[%c0, %c0_0, %c0_1, %c0_2], %0 {strides = array<i32>} : memref<1x10x10x128xf32, #tpu.memory_space<vmem>>, vector<1x10x10x128xf32>,
    %c0_3 = arith.constant 0 : index
    %c0_4 = arith.constant 0 : index
    %c0_5 = arith.constant 0 : index
    %c0_6 = arith.constant 0 : index
    %2 = vector.load %arg1[%c0_3, %c0_4, %c0_5, %c0_6] : memref<1x8x8x4xbf16, #tpu.memory_space<vmem>>, vector<1x8x8x4xbf16>
    %3 = arith.extf %2 : vector<1x8x8x4xbf16> to vector<1x8x8x4xf32>
    %c0_7 = arith.constant 0 : index
    %c1 = arith.constant 1 : index
    %c1_8 = arith.constant 1 : index
    %c0_9 = arith.constant 0 : index
    %4 = vector.load %arg7[%c0_7, %c1, %c1_8, %c0_9] : memref<1x10x10x128xf32, #tpu.memory_space<vmem>>, vector<1x8x8x4xf32>
    tpu.vector_store %arg7[%c0_7, %c1, %c1_8, %c0_9], %3 {strides = array<i32>} : memref<1x10x10x128xf32, #tpu.memory_space<vmem>>, vector<1x8x8x4xf32>,
    %c0_10 = arith.constant 0 : index
    %c0_11 = arith.constant 0 : index
    %c0_12 = arith.constant 0 : index
    %c0_13 = arith.constant 0 : index
    %5 = vector.load %arg7[%c0_10, %c0_11, %c0_12, %c0_13] : memref<1x10x10x128xf32, #tpu.memory_space<vmem>>, vector<1x10x10x128xf32>
    %6 = vector.extract_strided_slice %5 {offsets = [0, 0, 0, 0], sizes = [1, 8, 8, 128], strides = [1, 1, 1, 1]} : vector<1x10x10x128xf32> to vector<1x8x8x128xf32>
    %7 = vector.shape_cast %6 : vector<1x8x8x128xf32> to vector<64x128xf32>
    %8 = vector.extract_strided_slice %5 {offsets = [0, 0, 1, 0], sizes = [1, 8, 8, 128], strides = [1, 1, 1, 1]} : vector<1x10x10x128xf32> to vector<1x8x8x128xf32>
    %9 = vector.shape_cast %8 : vector<1x8x8x128xf32> to vector<64x128xf32>
    %10 = vector.extract_strided_slice %5 {offsets = [0, 0, 2, 0], sizes = [1, 8, 8, 128], strides = [1, 1, 1, 1]} : vector<1x10x10x128xf32> to vector<1x8x8x128xf32>
    %11 = vector.shape_cast %10 : vector<1x8x8x128xf32> to vector<64x128xf32>
    %12 = vector.extract_strided_slice %5 {offsets = [0, 1, 0, 0], sizes = [1, 8, 8, 128], strides = [1, 1, 1, 1]} : vector<1x10x10x128xf32> to vector<1x8x8x128xf32>
    %13 = vector.shape_cast %12 : vector<1x8x8x128xf32> to vector<64x128xf32>
    %14 = vector.extract_strided_slice %5 {offsets = [0, 1, 1, 0], sizes = [1, 8, 8, 128], strides = [1, 1, 1, 1]} : vector<1x10x10x128xf32> to vector<1x8x8x128xf32>
    %15 = vector.shape_cast %14 : vector<1x8x8x128xf32> to vector<64x128xf32>
    %16 = vector.extract_strided_slice %5 {offsets = [0, 1, 2, 0], sizes = [1, 8, 8, 128], strides = [1, 1, 1, 1]} : vector<1x10x10x128xf32> to vector<1x8x8x128xf32>
    %17 = vector.shape_cast %16 : vector<1x8x8x128xf32> to vector<64x128xf32>
    %18 = vector.extract_strided_slice %5 {offsets = [0, 2, 0, 0], sizes = [1, 8, 8, 128], strides = [1, 1, 1, 1]} : vector<1x10x10x128xf32> to vector<1x8x8x128xf32>
    %19 = vector.shape_cast %18 : vector<1x8x8x128xf32> to vector<64x128xf32>
    %20 = vector.extract_strided_slice %5 {offsets = [0, 2, 1, 0], sizes = [1, 8, 8, 128], strides = [1, 1, 1, 1]} : vector<1x10x10x128xf32> to vector<1x8x8x128xf32>
    %21 = vector.shape_cast %20 : vector<1x8x8x128xf32> to vector<64x128xf32>
    %22 = vector.extract_strided_slice %5 {offsets = [0, 2, 2, 0], sizes = [1, 8, 8, 128], strides = [1, 1, 1, 1]} : vector<1x10x10x128xf32> to vector<1x8x8x128xf32>
    %23 = vector.shape_cast %22 : vector<1x8x8x128xf32> to vector<64x128xf32>
    %24 = tpu.concatenate %7, %9, %11, %13, %15, %17, %19, %21, %23 in 1 : vector<64x128xf32>, vector<64x128xf32>, vector<64x128xf32>, vector<64x128xf32>, vector<64x128xf32>, vector<64x128xf32>, vector<64x128xf32>, vector<64x128xf32>, vector<64x128xf32> -> vector<64x1152xf32>
    %25 = arith.truncf %24 : vector<64x1152xf32> to vector<64x1152xbf16>
    %c0_14 = arith.constant 0 : index
    %c0_15 = arith.constant 0 : index
    %26 = vector.load %arg2[%c0_14, %c0_15] : memref<1152x32xbf16, #tpu.memory_space<vmem>>, vector<1152x32xbf16>
    %cst_16 = arith.constant dense<0.000000e+00> : vector<64x32xf32>
    %27 = tpu.matmul %25, %26, %cst_16 {dimension_numbers = #tpu.dot_dimension_numbers<[1], [0], [0], [1], [0, 0, 1, 1], [], []>} : vector<64x1152xbf16>, vector<1152x32xbf16>, vector<64x32xf32> -> vector<64x32xf32>
    %c0_17 = arith.constant 0 : index
    %c0_18 = arith.constant 0 : index
    %28 = vector.load %arg3[%c0_17, %c0_18] : memref<1x32xf32, #tpu.memory_space<vmem>>, vector<1x32xf32>
    %29 = vector.broadcast %28 : vector<1x32xf32> to vector<64x32xf32>
    %30 = arith.addf %27, %29 : vector<64x32xf32>
    %cst_19 = arith.constant 0.000000e+00 : f32
    %31 = vector.broadcast %cst_19 : f32 to vector<1x10x10x128xf32>
    %c0_20 = arith.constant 0 : index
    %c0_21 = arith.constant 0 : index
    %c0_22 = arith.constant 0 : index
    %c0_23 = arith.constant 0 : index
    %32 = vector.load %arg8[%c0_20, %c0_21, %c0_22, %c0_23] : memref<1x10x10x128xf32, #tpu.memory_space<vmem>>, vector<1x10x10x128xf32>
    tpu.vector_store %arg8[%c0_20, %c0_21, %c0_22, %c0_23], %31 {strides = array<i32>} : memref<1x10x10x128xf32, #tpu.memory_space<vmem>>, vector<1x10x10x128xf32>,
    %cst_24 = arith.constant 0.000000e+00 : f32
    %33 = vector.broadcast %cst_24 : f32 to vector<64x32xf32>
    %34 = arith.maximumf %30, %33 : vector<64x32xf32>
    %35 = vector.shape_cast %34 : vector<64x32xf32> to vector<1x8x8x32xf32>
    %c0_25 = arith.constant 0 : index
    %c1_26 = arith.constant 1 : index
    %c1_27 = arith.constant 1 : index
    %c0_28 = arith.constant 0 : index
    %36 = vector.load %arg8[%c0_25, %c1_26, %c1_27, %c0_28] : memref<1x10x10x128xf32, #tpu.memory_space<vmem>>, vector<1x8x8x32xf32>
    tpu.vector_store %arg8[%c0_25, %c1_26, %c1_27, %c0_28], %35 {strides = array<i32>} : memref<1x10x10x128xf32, #tpu.memory_space<vmem>>, vector<1x8x8x32xf32>,
    %c0_29 = arith.constant 0 : index
    %c0_30 = arith.constant 0 : index
    %c0_31 = arith.constant 0 : index
    %c0_32 = arith.constant 0 : index
    %37 = vector.load %arg8[%c0_29, %c0_30, %c0_31, %c0_32] : memref<1x10x10x128xf32, #tpu.memory_space<vmem>>, vector<1x10x10x128xf32>
    %38 = vector.extract_strided_slice %37 {offsets = [0, 0, 0, 0], sizes = [1, 8, 8, 128], strides = [1, 1, 1, 1]} : vector<1x10x10x128xf32> to vector<1x8x8x128xf32>
    %39 = vector.shape_cast %38 : vector<1x8x8x128xf32> to vector<64x128xf32>
    %40 = vector.extract_strided_slice %37 {offsets = [0, 0, 1, 0], sizes = [1, 8, 8, 128], strides = [1, 1, 1, 1]} : vector<1x10x10x128xf32> to vector<1x8x8x128xf32>
    %41 = vector.shape_cast %40 : vector<1x8x8x128xf32> to vector<64x128xf32>
    %42 = vector.extract_strided_slice %37 {offsets = [0, 0, 2, 0], sizes = [1, 8, 8, 128], strides = [1, 1, 1, 1]} : vector<1x10x10x128xf32> to vector<1x8x8x128xf32>
    %43 = vector.shape_cast %42 : vector<1x8x8x128xf32> to vector<64x128xf32>
    %44 = vector.extract_strided_slice %37 {offsets = [0, 1, 0, 0], sizes = [1, 8, 8, 128], strides = [1, 1, 1, 1]} : vector<1x10x10x128xf32> to vector<1x8x8x128xf32>
    %45 = vector.shape_cast %44 : vector<1x8x8x128xf32> to vector<64x128xf32>
    %46 = vector.extract_strided_slice %37 {offsets = [0, 1, 1, 0], sizes = [1, 8, 8, 128], strides = [1, 1, 1, 1]} : vector<1x10x10x128xf32> to vector<1x8x8x128xf32>
    %47 = vector.shape_cast %46 : vector<1x8x8x128xf32> to vector<64x128xf32>
    %48 = vector.extract_strided_slice %37 {offsets = [0, 1, 2, 0], sizes = [1, 8, 8, 128], strides = [1, 1, 1, 1]} : vector<1x10x10x128xf32> to vector<1x8x8x128xf32>
    %49 = vector.shape_cast %48 : vector<1x8x8x128xf32> to vector<64x128xf32>
    %50 = vector.extract_strided_slice %37 {offsets = [0, 2, 0, 0], sizes = [1, 8, 8, 128], strides = [1, 1, 1, 1]} : vector<1x10x10x128xf32> to vector<1x8x8x128xf32>
    %51 = vector.shape_cast %50 : vector<1x8x8x128xf32> to vector<64x128xf32>
    %52 = vector.extract_strided_slice %37 {offsets = [0, 2, 1, 0], sizes = [1, 8, 8, 128], strides = [1, 1, 1, 1]} : vector<1x10x10x128xf32> to vector<1x8x8x128xf32>
    %53 = vector.shape_cast %52 : vector<1x8x8x128xf32> to vector<64x128xf32>
    %54 = vector.extract_strided_slice %37 {offsets = [0, 2, 2, 0], sizes = [1, 8, 8, 128], strides = [1, 1, 1, 1]} : vector<1x10x10x128xf32> to vector<1x8x8x128xf32>
    %55 = vector.shape_cast %54 : vector<1x8x8x128xf32> to vector<64x128xf32>
    %56 = tpu.concatenate %39, %41, %43, %45, %47, %49, %51, %53, %55 in 1 : vector<64x128xf32>, vector<64x128xf32>, vector<64x128xf32>, vector<64x128xf32>, vector<64x128xf32>, vector<64x128xf32>, vector<64x128xf32>, vector<64x128xf32>, vector<64x128xf32> -> vector<64x1152xf32>
    %57 = arith.truncf %56 : vector<64x1152xf32> to vector<64x1152xbf16>
    %c0_33 = arith.constant 0 : index
    %c0_34 = arith.constant 0 : index
    %c0_35 = arith.constant 0 : index
    %58 = vector.load %arg4[%c0_33, %c0_34, %c0_35] : memref<2x1152x16xbf16, #tpu.memory_space<vmem>>, vector<1x1152x16xbf16>
    %59 = vector.shape_cast %58 : vector<1x1152x16xbf16> to vector<1152x16xbf16>
    %cst_36 = arith.constant dense<0.000000e+00> : vector<64x16xf32>
    %60 = tpu.matmul %57, %59, %cst_36 {dimension_numbers = #tpu.dot_dimension_numbers<[1], [0], [0], [1], [0, 0, 1, 1], [], []>} : vector<64x1152xbf16>, vector<1152x16xbf16>, vector<64x16xf32> -> vector<64x16xf32>
    %cst_37 = arith.constant 0.000000e+00 : f32
    %61 = vector.broadcast %cst_37 : f32 to vector<64x16xf32>
    %62 = arith.maximumf %60, %61 : vector<64x16xf32>
    %63 = arith.truncf %62 : vector<64x16xf32> to vector<64x16xbf16>
    %c0_38 = arith.constant 0 : index
    %c0_39 = arith.constant 0 : index
    %c0_40 = arith.constant 0 : index
    %64 = vector.load %arg5[%c0_38, %c0_39, %c0_40] : memref<2x16x32xbf16, #tpu.memory_space<vmem>>, vector<1x16x32xbf16>
    %65 = vector.shape_cast %64 : vector<1x16x32xbf16> to vector<16x32xbf16>
    %cst_41 = arith.constant dense<0.000000e+00> : vector<64x32xf32>
    %66 = tpu.matmul %63, %65, %cst_41 {dimension_numbers = #tpu.dot_dimension_numbers<[1], [0], [0], [1], [0, 0, 1, 1], [], []>} : vector<64x16xbf16>, vector<16x32xbf16>, vector<64x32xf32> -> vector<64x32xf32>
    %67 = arith.addf %30, %66 : vector<64x32xf32>
    %cst_42 = arith.constant 0.000000e+00 : f32
    %68 = vector.broadcast %cst_42 : f32 to vector<64x32xf32>
    %69 = arith.maximumf %67, %68 : vector<64x32xf32>
    %70 = vector.shape_cast %69 : vector<64x32xf32> to vector<1x8x8x32xf32>
    %c0_43 = arith.constant 0 : index
    %c1_44 = arith.constant 1 : index
    %c1_45 = arith.constant 1 : index
    %c0_46 = arith.constant 0 : index
    %71 = vector.load %arg8[%c0_43, %c1_44, %c1_45, %c0_46] : memref<1x10x10x128xf32, #tpu.memory_space<vmem>>, vector<1x8x8x32xf32>
    tpu.vector_store %arg8[%c0_43, %c1_44, %c1_45, %c0_46], %70 {strides = array<i32>} : memref<1x10x10x128xf32, #tpu.memory_space<vmem>>, vector<1x8x8x32xf32>,
    %c0_47 = arith.constant 0 : index
    %c0_48 = arith.constant 0 : index
    %c0_49 = arith.constant 0 : index
    %c0_50 = arith.constant 0 : index
    %72 = vector.load %arg8[%c0_47, %c0_48, %c0_49, %c0_50] : memref<1x10x10x128xf32, #tpu.memory_space<vmem>>, vector<1x10x10x128xf32>
    %73 = vector.extract_strided_slice %72 {offsets = [0, 0, 0, 0], sizes = [1, 8, 8, 128], strides = [1, 1, 1, 1]} : vector<1x10x10x128xf32> to vector<1x8x8x128xf32>
    %74 = vector.shape_cast %73 : vector<1x8x8x128xf32> to vector<64x128xf32>
    %75 = vector.extract_strided_slice %72 {offsets = [0, 0, 1, 0], sizes = [1, 8, 8, 128], strides = [1, 1, 1, 1]} : vector<1x10x10x128xf32> to vector<1x8x8x128xf32>
    %76 = vector.shape_cast %75 : vector<1x8x8x128xf32> to vector<64x128xf32>
    %77 = vector.extract_strided_slice %72 {offsets = [0, 0, 2, 0], sizes = [1, 8, 8, 128], strides = [1, 1, 1, 1]} : vector<1x10x10x128xf32> to vector<1x8x8x128xf32>
    %78 = vector.shape_cast %77 : vector<1x8x8x128xf32> to vector<64x128xf32>
    %79 = vector.extract_strided_slice %72 {offsets = [0, 1, 0, 0], sizes = [1, 8, 8, 128], strides = [1, 1, 1, 1]} : vector<1x10x10x128xf32> to vector<1x8x8x128xf32>
    %80 = vector.shape_cast %79 : vector<1x8x8x128xf32> to vector<64x128xf32>
    %81 = vector.extract_strided_slice %72 {offsets = [0, 1, 1, 0], sizes = [1, 8, 8, 128], strides = [1, 1, 1, 1]} : vector<1x10x10x128xf32> to vector<1x8x8x128xf32>
    %82 = vector.shape_cast %81 : vector<1x8x8x128xf32> to vector<64x128xf32>
    %83 = vector.extract_strided_slice %72 {offsets = [0, 1, 2, 0], sizes = [1, 8, 8, 128], strides = [1, 1, 1, 1]} : vector<1x10x10x128xf32> to vector<1x8x8x128xf32>
    %84 = vector.shape_cast %83 : vector<1x8x8x128xf32> to vector<64x128xf32>
    %85 = vector.extract_strided_slice %72 {offsets = [0, 2, 0, 0], sizes = [1, 8, 8, 128], strides = [1, 1, 1, 1]} : vector<1x10x10x128xf32> to vector<1x8x8x128xf32>
    %86 = vector.shape_cast %85 : vector<1x8x8x128xf32> to vector<64x128xf32>
    %87 = vector.extract_strided_slice %72 {offsets = [0, 2, 1, 0], sizes = [1, 8, 8, 128], strides = [1, 1, 1, 1]} : vector<1x10x10x128xf32> to vector<1x8x8x128xf32>
    %88 = vector.shape_cast %87 : vector<1x8x8x128xf32> to vector<64x128xf32>
    %89 = vector.extract_strided_slice %72 {offsets = [0, 2, 2, 0], sizes = [1, 8, 8, 128], strides = [1, 1, 1, 1]} : vector<1x10x10x128xf32> to vector<1x8x8x128xf32>
    %90 = vector.shape_cast %89 : vector<1x8x8x128xf32> to vector<64x128xf32>
    %91 = tpu.concatenate %74, %76, %78, %80, %82, %84, %86, %88, %90 in 1 : vector<64x128xf32>, vector<64x128xf32>, vector<64x128xf32>, vector<64x128xf32>, vector<64x128xf32>, vector<64x128xf32>, vector<64x128xf32>, vector<64x128xf32>, vector<64x128xf32> -> vector<64x1152xf32>
    %92 = arith.truncf %91 : vector<64x1152xf32> to vector<64x1152xbf16>
    %c1_51 = arith.constant 1 : index
    %c0_52 = arith.constant 0 : index
    %c0_53 = arith.constant 0 : index
    %93 = vector.load %arg4[%c1_51, %c0_52, %c0_53] : memref<2x1152x16xbf16, #tpu.memory_space<vmem>>, vector<1x1152x16xbf16>
    %94 = vector.shape_cast %93 : vector<1x1152x16xbf16> to vector<1152x16xbf16>
    %cst_54 = arith.constant dense<0.000000e+00> : vector<64x16xf32>
    %95 = tpu.matmul %92, %94, %cst_54 {dimension_numbers = #tpu.dot_dimension_numbers<[1], [0], [0], [1], [0, 0, 1, 1], [], []>} : vector<64x1152xbf16>, vector<1152x16xbf16>, vector<64x16xf32> -> vector<64x16xf32>
    %cst_55 = arith.constant 0.000000e+00 : f32
    %96 = vector.broadcast %cst_55 : f32 to vector<64x16xf32>
    %97 = arith.maximumf %95, %96 : vector<64x16xf32>
    %98 = arith.truncf %97 : vector<64x16xf32> to vector<64x16xbf16>
    %c1_56 = arith.constant 1 : index
    %c0_57 = arith.constant 0 : index
    %c0_58 = arith.constant 0 : index
    %99 = vector.load %arg5[%c1_56, %c0_57, %c0_58] : memref<2x16x32xbf16, #tpu.memory_space<vmem>>, vector<1x16x32xbf16>
    %100 = vector.shape_cast %99 : vector<1x16x32xbf16> to vector<16x32xbf16>
    %cst_59 = arith.constant dense<0.000000e+00> : vector<64x32xf32>
    %101 = tpu.matmul %98, %100, %cst_59 {dimension_numbers = #tpu.dot_dimension_numbers<[1], [0], [0], [1], [0, 0, 1, 1], [], []>} : vector<64x16xbf16>, vector<16x32xbf16>, vector<64x32xf32> -> vector<64x32xf32>
    %102 = arith.addf %67, %101 : vector<64x32xf32>
    %cst_60 = arith.constant 0.000000e+00 : f32
    %103 = vector.broadcast %cst_60 : f32 to vector<64x32xf32>
    %104 = arith.maximumf %102, %103 : vector<64x32xf32>
    %105 = vector.shape_cast %104 : vector<64x32xf32> to vector<1x8x8x32xf32>
    %106 = arith.truncf %105 : vector<1x8x8x32xf32> to vector<1x8x8x32xbf16>
    %c0_61 = arith.constant 0 : index
    %c0_62 = arith.constant 0 : index
    %c0_63 = arith.constant 0 : index
    %c0_64 = arith.constant 0 : index
    %107 = vector.load %arg6[%c0_61, %c0_62, %c0_63, %c0_64] : memref<1x8x8x32xbf16, #tpu.memory_space<vmem>>, vector<1x8x8x32xbf16>
    tpu.vector_store %arg6[%c0_61, %c0_62, %c0_63, %c0_64], %106 {strides = array<i32>} : memref<1x8x8x32xbf16, #tpu.memory_space<vmem>>, vector<1x8x8x32xbf16>,
    return
  }
  func.func @transform_0(%arg0: i32) -> (i32, i32, i32, i32) {
    %c0_i32 = arith.constant 0 : i32
    %c0_i32_0 = arith.constant 0 : i32
    %c0_i32_1 = arith.constant 0 : i32
    %c0_i32_2 = arith.constant 0 : i32
    return %arg0, %c0_i32, %c0_i32_0, %c0_i32_1 : i32, i32, i32, i32
  }
  func.func @transform_1(%arg0: i32) -> (i32, i32) {
    %c0_i32 = arith.constant 0 : i32
    %c0_i32_0 = arith.constant 0 : i32
    %c0_i32_1 = arith.constant 0 : i32
    return %c0_i32, %c0_i32_0 : i32, i32
  }
  func.func @transform_2(%arg0: i32) -> (i32, i32) {
    %c0_i32 = arith.constant 0 : i32
    %c0_i32_0 = arith.constant 0 : i32
    %c0_i32_1 = arith.constant 0 : i32
    return %c0_i32, %c0_i32_0 : i32, i32
  }
  func.func @transform_3(%arg0: i32) -> (i32, i32, i32) {
    %c0_i32 = arith.constant 0 : i32
    %c0_i32_0 = arith.constant 0 : i32
    %c0_i32_1 = arith.constant 0 : i32
    %c0_i32_2 = arith.constant 0 : i32
    return %c0_i32, %c0_i32_0, %c0_i32_1 : i32, i32, i32
  }
  func.func @transform_4(%arg0: i32) -> (i32, i32, i32) {
    %c0_i32 = arith.constant 0 : i32
    %c0_i32_0 = arith.constant 0 : i32
    %c0_i32_1 = arith.constant 0 : i32
    %c0_i32_2 = arith.constant 0 : i32
    return %c0_i32, %c0_i32_0, %c0_i32_1 : i32, i32, i32
  }
  func.func @transform_5(%arg0: i32) -> (i32, i32, i32, i32) {
    %c0_i32 = arith.constant 0 : i32
    %c0_i32_0 = arith.constant 0 : i32
    %c0_i32_1 = arith.constant 0 : i32
    %c0_i32_2 = arith.constant 0 : i32
    return %arg0, %c0_i32, %c0_i32_0, %c0_i32_1 : i32, i32, i32, i32
  }
}

module attributes {stable_mosaic.version = 11 : i64} {
  func.func @_convT_kernel(%arg0: i32, %arg1: memref<1x8x8x32xbf16, #tpu.memory_space<vmem>>, %arg2: memref<1152x64xbf16, #tpu.memory_space<vmem>>, %arg3: memref<1x64xf32, #tpu.memory_space<vmem>>, %arg4: memref<1x8x2x8x32xbf16, #tpu.memory_space<vmem>>, %arg5: memref<1x10x10x128xf32, #tpu.memory_space<vmem>>) attributes {dimension_semantics = [#tpu.dimension_semantics<parallel>], iteration_bounds = array<i64: 2>, scalar_prefetch = 0 : i64, scratch_operands = 1 : i64, tpu.core_type = #tpu.core_type<tc>, window_params = [{transform_indices = @transform_0, window_bounds = array<i64: 1, 8, 8, 32>}, {pipeline_mode = #tpu.pipeline_mode<synchronous>, transform_indices = @transform_1, window_bounds = array<i64: 1152, 64>}, {pipeline_mode = #tpu.pipeline_mode<synchronous>, transform_indices = @transform_2, window_bounds = array<i64: 1, 64>}, {transform_indices = @transform_3, window_bounds = array<i64: 1, 8, 2, 8, 32>}]} {
    %cst = arith.constant 0.000000e+00 : f32
    %0 = vector.broadcast %cst : f32 to vector<1x10x10x128xf32>
    %c0 = arith.constant 0 : index
    %c0_0 = arith.constant 0 : index
    %c0_1 = arith.constant 0 : index
    %c0_2 = arith.constant 0 : index
    %1 = vector.load %arg5[%c0, %c0_0, %c0_1, %c0_2] : memref<1x10x10x128xf32, #tpu.memory_space<vmem>>, vector<1x10x10x128xf32>
    tpu.vector_store %arg5[%c0, %c0_0, %c0_1, %c0_2], %0 {strides = array<i32>} : memref<1x10x10x128xf32, #tpu.memory_space<vmem>>, vector<1x10x10x128xf32>,
    %c0_3 = arith.constant 0 : index
    %c0_4 = arith.constant 0 : index
    %c0_5 = arith.constant 0 : index
    %c0_6 = arith.constant 0 : index
    %2 = vector.load %arg1[%c0_3, %c0_4, %c0_5, %c0_6] : memref<1x8x8x32xbf16, #tpu.memory_space<vmem>>, vector<1x8x8x32xbf16>
    %3 = arith.extf %2 : vector<1x8x8x32xbf16> to vector<1x8x8x32xf32>
    %c0_7 = arith.constant 0 : index
    %c1 = arith.constant 1 : index
    %c1_8 = arith.constant 1 : index
    %c0_9 = arith.constant 0 : index
    %4 = vector.load %arg5[%c0_7, %c1, %c1_8, %c0_9] : memref<1x10x10x128xf32, #tpu.memory_space<vmem>>, vector<1x8x8x32xf32>
    tpu.vector_store %arg5[%c0_7, %c1, %c1_8, %c0_9], %3 {strides = array<i32>} : memref<1x10x10x128xf32, #tpu.memory_space<vmem>>, vector<1x8x8x32xf32>,
    %c0_10 = arith.constant 0 : index
    %c0_11 = arith.constant 0 : index
    %c0_12 = arith.constant 0 : index
    %c0_13 = arith.constant 0 : index
    %5 = vector.load %arg5[%c0_10, %c0_11, %c0_12, %c0_13] : memref<1x10x10x128xf32, #tpu.memory_space<vmem>>, vector<1x10x10x128xf32>
    %6 = vector.extract_strided_slice %5 {offsets = [0, 0, 0, 0], sizes = [1, 8, 8, 128], strides = [1, 1, 1, 1]} : vector<1x10x10x128xf32> to vector<1x8x8x128xf32>
    %7 = vector.shape_cast %6 : vector<1x8x8x128xf32> to vector<64x128xf32>
    %8 = vector.extract_strided_slice %5 {offsets = [0, 0, 1, 0], sizes = [1, 8, 8, 128], strides = [1, 1, 1, 1]} : vector<1x10x10x128xf32> to vector<1x8x8x128xf32>
    %9 = vector.shape_cast %8 : vector<1x8x8x128xf32> to vector<64x128xf32>
    %10 = vector.extract_strided_slice %5 {offsets = [0, 0, 2, 0], sizes = [1, 8, 8, 128], strides = [1, 1, 1, 1]} : vector<1x10x10x128xf32> to vector<1x8x8x128xf32>
    %11 = vector.shape_cast %10 : vector<1x8x8x128xf32> to vector<64x128xf32>
    %12 = vector.extract_strided_slice %5 {offsets = [0, 1, 0, 0], sizes = [1, 8, 8, 128], strides = [1, 1, 1, 1]} : vector<1x10x10x128xf32> to vector<1x8x8x128xf32>
    %13 = vector.shape_cast %12 : vector<1x8x8x128xf32> to vector<64x128xf32>
    %14 = vector.extract_strided_slice %5 {offsets = [0, 1, 1, 0], sizes = [1, 8, 8, 128], strides = [1, 1, 1, 1]} : vector<1x10x10x128xf32> to vector<1x8x8x128xf32>
    %15 = vector.shape_cast %14 : vector<1x8x8x128xf32> to vector<64x128xf32>
    %16 = vector.extract_strided_slice %5 {offsets = [0, 1, 2, 0], sizes = [1, 8, 8, 128], strides = [1, 1, 1, 1]} : vector<1x10x10x128xf32> to vector<1x8x8x128xf32>
    %17 = vector.shape_cast %16 : vector<1x8x8x128xf32> to vector<64x128xf32>
    %18 = vector.extract_strided_slice %5 {offsets = [0, 2, 0, 0], sizes = [1, 8, 8, 128], strides = [1, 1, 1, 1]} : vector<1x10x10x128xf32> to vector<1x8x8x128xf32>
    %19 = vector.shape_cast %18 : vector<1x8x8x128xf32> to vector<64x128xf32>
    %20 = vector.extract_strided_slice %5 {offsets = [0, 2, 1, 0], sizes = [1, 8, 8, 128], strides = [1, 1, 1, 1]} : vector<1x10x10x128xf32> to vector<1x8x8x128xf32>
    %21 = vector.shape_cast %20 : vector<1x8x8x128xf32> to vector<64x128xf32>
    %22 = vector.extract_strided_slice %5 {offsets = [0, 2, 2, 0], sizes = [1, 8, 8, 128], strides = [1, 1, 1, 1]} : vector<1x10x10x128xf32> to vector<1x8x8x128xf32>
    %23 = vector.shape_cast %22 : vector<1x8x8x128xf32> to vector<64x128xf32>
    %24 = tpu.concatenate %7, %9, %11, %13, %15, %17, %19, %21, %23 in 1 : vector<64x128xf32>, vector<64x128xf32>, vector<64x128xf32>, vector<64x128xf32>, vector<64x128xf32>, vector<64x128xf32>, vector<64x128xf32>, vector<64x128xf32>, vector<64x128xf32> -> vector<64x1152xf32>
    %25 = arith.truncf %24 : vector<64x1152xf32> to vector<64x1152xbf16>
    %c0_14 = arith.constant 0 : index
    %c0_15 = arith.constant 0 : index
    %26 = vector.load %arg2[%c0_14, %c0_15] : memref<1152x64xbf16, #tpu.memory_space<vmem>>, vector<1152x64xbf16>
    %cst_16 = arith.constant dense<0.000000e+00> : vector<64x64xf32>
    %27 = tpu.matmul %25, %26, %cst_16 {dimension_numbers = #tpu.dot_dimension_numbers<[1], [0], [0], [1], [0, 0, 1, 1], [], []>} : vector<64x1152xbf16>, vector<1152x64xbf16>, vector<64x64xf32> -> vector<64x64xf32>
    %c0_17 = arith.constant 0 : index
    %c0_18 = arith.constant 0 : index
    %28 = vector.load %arg3[%c0_17, %c0_18] : memref<1x64xf32, #tpu.memory_space<vmem>>, vector<1x64xf32>
    %29 = vector.broadcast %28 : vector<1x64xf32> to vector<64x64xf32>
    %30 = arith.addf %27, %29 : vector<64x64xf32>
    %cst_19 = arith.constant 0.000000e+00 : f32
    %31 = vector.broadcast %cst_19 : f32 to vector<64x64xf32>
    %32 = arith.maximumf %30, %31 : vector<64x64xf32>
    %33 = vector.extract_strided_slice %32 {offsets = [0, 0], sizes = [64, 32], strides = [1, 1]} : vector<64x64xf32> to vector<64x32xf32>
    %34 = vector.shape_cast %33 : vector<64x32xf32> to vector<1x8x1x8x32xf32>
    %35 = arith.truncf %34 : vector<1x8x1x8x32xf32> to vector<1x8x1x8x32xbf16>
    %c0_20 = arith.constant 0 : index
    %c0_21 = arith.constant 0 : index
    %c0_22 = arith.constant 0 : index
    %c0_23 = arith.constant 0 : index
    %c0_24 = arith.constant 0 : index
    %36 = vector.load %arg4[%c0_20, %c0_21, %c0_22, %c0_23, %c0_24] : memref<1x8x2x8x32xbf16, #tpu.memory_space<vmem>>, vector<1x8x1x8x32xbf16>
    tpu.vector_store %arg4[%c0_20, %c0_21, %c0_22, %c0_23, %c0_24], %35 {strides = array<i32>} : memref<1x8x2x8x32xbf16, #tpu.memory_space<vmem>>, vector<1x8x1x8x32xbf16>,
    %37 = vector.extract_strided_slice %32 {offsets = [0, 32], sizes = [64, 32], strides = [1, 1]} : vector<64x64xf32> to vector<64x32xf32>
    %38 = vector.shape_cast %37 : vector<64x32xf32> to vector<1x8x1x8x32xf32>
    %39 = arith.truncf %38 : vector<1x8x1x8x32xf32> to vector<1x8x1x8x32xbf16>
    %c0_25 = arith.constant 0 : index
    %c0_26 = arith.constant 0 : index
    %c1_27 = arith.constant 1 : index
    %c0_28 = arith.constant 0 : index
    %c0_29 = arith.constant 0 : index
    %40 = vector.load %arg4[%c0_25, %c0_26, %c1_27, %c0_28, %c0_29] : memref<1x8x2x8x32xbf16, #tpu.memory_space<vmem>>, vector<1x8x1x8x32xbf16>
    tpu.vector_store %arg4[%c0_25, %c0_26, %c1_27, %c0_28, %c0_29], %39 {strides = array<i32>} : memref<1x8x2x8x32xbf16, #tpu.memory_space<vmem>>, vector<1x8x1x8x32xbf16>,
    return
  }
  func.func @transform_0(%arg0: i32) -> (i32, i32, i32, i32) {
    %c0_i32 = arith.constant 0 : i32
    %c0_i32_0 = arith.constant 0 : i32
    %c0_i32_1 = arith.constant 0 : i32
    %c0_i32_2 = arith.constant 0 : i32
    return %arg0, %c0_i32, %c0_i32_0, %c0_i32_1 : i32, i32, i32, i32
  }
  func.func @transform_1(%arg0: i32) -> (i32, i32) {
    %c0_i32 = arith.constant 0 : i32
    %c0_i32_0 = arith.constant 0 : i32
    %c0_i32_1 = arith.constant 0 : i32
    return %c0_i32, %c0_i32_0 : i32, i32
  }
  func.func @transform_2(%arg0: i32) -> (i32, i32) {
    %c0_i32 = arith.constant 0 : i32
    %c0_i32_0 = arith.constant 0 : i32
    %c0_i32_1 = arith.constant 0 : i32
    return %c0_i32, %c0_i32_0 : i32, i32
  }
  func.func @transform_3(%arg0: i32) -> (i32, i32, i32, i32, i32) {
    %c0_i32 = arith.constant 0 : i32
    %c0_i32_0 = arith.constant 0 : i32
    %c0_i32_1 = arith.constant 0 : i32
    %c0_i32_2 = arith.constant 0 : i32
    %c0_i32_3 = arith.constant 0 : i32
    return %arg0, %c0_i32, %c0_i32_0, %c0_i32_1, %c0_i32_2 : i32, i32, i32, i32, i32
  }
}

module attributes {stable_mosaic.version = 11 : i64} {
  func.func @_convT_kernel(%arg0: i32, %arg1: memref<1x16x16x16xbf16, #tpu.memory_space<vmem>>, %arg2: memref<1152x32xbf16, #tpu.memory_space<vmem>>, %arg3: memref<1x32xf32, #tpu.memory_space<vmem>>, %arg4: memref<1x16x2x16x16xf32, #tpu.memory_space<vmem>>, %arg5: memref<1x18x18x128xf32, #tpu.memory_space<vmem>>) attributes {dimension_semantics = [#tpu.dimension_semantics<parallel>], iteration_bounds = array<i64: 2>, scalar_prefetch = 0 : i64, scratch_operands = 1 : i64, tpu.core_type = #tpu.core_type<tc>, window_params = [{transform_indices = @transform_0, window_bounds = array<i64: 1, 16, 16, 16>}, {pipeline_mode = #tpu.pipeline_mode<synchronous>, transform_indices = @transform_1, window_bounds = array<i64: 1152, 32>}, {pipeline_mode = #tpu.pipeline_mode<synchronous>, transform_indices = @transform_2, window_bounds = array<i64: 1, 32>}, {transform_indices = @transform_3, window_bounds = array<i64: 1, 16, 2, 16, 16>}]} {
    %cst = arith.constant 0.000000e+00 : f32
    %0 = vector.broadcast %cst : f32 to vector<1x18x18x128xf32>
    %c0 = arith.constant 0 : index
    %c0_0 = arith.constant 0 : index
    %c0_1 = arith.constant 0 : index
    %c0_2 = arith.constant 0 : index
    %1 = vector.load %arg5[%c0, %c0_0, %c0_1, %c0_2] : memref<1x18x18x128xf32, #tpu.memory_space<vmem>>, vector<1x18x18x128xf32>
    tpu.vector_store %arg5[%c0, %c0_0, %c0_1, %c0_2], %0 {strides = array<i32>} : memref<1x18x18x128xf32, #tpu.memory_space<vmem>>, vector<1x18x18x128xf32>,
    %c0_3 = arith.constant 0 : index
    %c0_4 = arith.constant 0 : index
    %c0_5 = arith.constant 0 : index
    %c0_6 = arith.constant 0 : index
    %2 = vector.load %arg1[%c0_3, %c0_4, %c0_5, %c0_6] : memref<1x16x16x16xbf16, #tpu.memory_space<vmem>>, vector<1x16x16x16xbf16>
    %3 = arith.extf %2 : vector<1x16x16x16xbf16> to vector<1x16x16x16xf32>
    %c0_7 = arith.constant 0 : index
    %c1 = arith.constant 1 : index
    %c1_8 = arith.constant 1 : index
    %c0_9 = arith.constant 0 : index
    %4 = vector.load %arg5[%c0_7, %c1, %c1_8, %c0_9] : memref<1x18x18x128xf32, #tpu.memory_space<vmem>>, vector<1x16x16x16xf32>
    tpu.vector_store %arg5[%c0_7, %c1, %c1_8, %c0_9], %3 {strides = array<i32>} : memref<1x18x18x128xf32, #tpu.memory_space<vmem>>, vector<1x16x16x16xf32>,
    %c0_10 = arith.constant 0 : index
    %c0_11 = arith.constant 0 : index
    %c0_12 = arith.constant 0 : index
    %c0_13 = arith.constant 0 : index
    %5 = vector.load %arg5[%c0_10, %c0_11, %c0_12, %c0_13] : memref<1x18x18x128xf32, #tpu.memory_space<vmem>>, vector<1x18x18x128xf32>
    %6 = vector.extract_strided_slice %5 {offsets = [0, 0, 0, 0], sizes = [1, 16, 16, 128], strides = [1, 1, 1, 1]} : vector<1x18x18x128xf32> to vector<1x16x16x128xf32>
    %7 = vector.shape_cast %6 : vector<1x16x16x128xf32> to vector<256x128xf32>
    %8 = vector.extract_strided_slice %5 {offsets = [0, 0, 1, 0], sizes = [1, 16, 16, 128], strides = [1, 1, 1, 1]} : vector<1x18x18x128xf32> to vector<1x16x16x128xf32>
    %9 = vector.shape_cast %8 : vector<1x16x16x128xf32> to vector<256x128xf32>
    %10 = vector.extract_strided_slice %5 {offsets = [0, 0, 2, 0], sizes = [1, 16, 16, 128], strides = [1, 1, 1, 1]} : vector<1x18x18x128xf32> to vector<1x16x16x128xf32>
    %11 = vector.shape_cast %10 : vector<1x16x16x128xf32> to vector<256x128xf32>
    %12 = vector.extract_strided_slice %5 {offsets = [0, 1, 0, 0], sizes = [1, 16, 16, 128], strides = [1, 1, 1, 1]} : vector<1x18x18x128xf32> to vector<1x16x16x128xf32>
    %13 = vector.shape_cast %12 : vector<1x16x16x128xf32> to vector<256x128xf32>
    %14 = vector.extract_strided_slice %5 {offsets = [0, 1, 1, 0], sizes = [1, 16, 16, 128], strides = [1, 1, 1, 1]} : vector<1x18x18x128xf32> to vector<1x16x16x128xf32>
    %15 = vector.shape_cast %14 : vector<1x16x16x128xf32> to vector<256x128xf32>
    %16 = vector.extract_strided_slice %5 {offsets = [0, 1, 2, 0], sizes = [1, 16, 16, 128], strides = [1, 1, 1, 1]} : vector<1x18x18x128xf32> to vector<1x16x16x128xf32>
    %17 = vector.shape_cast %16 : vector<1x16x16x128xf32> to vector<256x128xf32>
    %18 = vector.extract_strided_slice %5 {offsets = [0, 2, 0, 0], sizes = [1, 16, 16, 128], strides = [1, 1, 1, 1]} : vector<1x18x18x128xf32> to vector<1x16x16x128xf32>
    %19 = vector.shape_cast %18 : vector<1x16x16x128xf32> to vector<256x128xf32>
    %20 = vector.extract_strided_slice %5 {offsets = [0, 2, 1, 0], sizes = [1, 16, 16, 128], strides = [1, 1, 1, 1]} : vector<1x18x18x128xf32> to vector<1x16x16x128xf32>
    %21 = vector.shape_cast %20 : vector<1x16x16x128xf32> to vector<256x128xf32>
    %22 = vector.extract_strided_slice %5 {offsets = [0, 2, 2, 0], sizes = [1, 16, 16, 128], strides = [1, 1, 1, 1]} : vector<1x18x18x128xf32> to vector<1x16x16x128xf32>
    %23 = vector.shape_cast %22 : vector<1x16x16x128xf32> to vector<256x128xf32>
    %24 = tpu.concatenate %7, %9, %11, %13, %15, %17, %19, %21, %23 in 1 : vector<256x128xf32>, vector<256x128xf32>, vector<256x128xf32>, vector<256x128xf32>, vector<256x128xf32>, vector<256x128xf32>, vector<256x128xf32>, vector<256x128xf32>, vector<256x128xf32> -> vector<256x1152xf32>
    %25 = arith.truncf %24 : vector<256x1152xf32> to vector<256x1152xbf16>
    %c0_14 = arith.constant 0 : index
    %c0_15 = arith.constant 0 : index
    %26 = vector.load %arg2[%c0_14, %c0_15] : memref<1152x32xbf16, #tpu.memory_space<vmem>>, vector<1152x32xbf16>
    %cst_16 = arith.constant dense<0.000000e+00> : vector<256x32xf32>
    %27 = tpu.matmul %25, %26, %cst_16 {dimension_numbers = #tpu.dot_dimension_numbers<[1], [0], [0], [1], [0, 0, 1, 1], [], []>} : vector<256x1152xbf16>, vector<1152x32xbf16>, vector<256x32xf32> -> vector<256x32xf32>
    %c0_17 = arith.constant 0 : index
    %c0_18 = arith.constant 0 : index
    %28 = vector.load %arg3[%c0_17, %c0_18] : memref<1x32xf32, #tpu.memory_space<vmem>>, vector<1x32xf32>
    %29 = vector.broadcast %28 : vector<1x32xf32> to vector<256x32xf32>
    %30 = arith.addf %27, %29 : vector<256x32xf32>
    %31 = vector.extract_strided_slice %30 {offsets = [0, 0], sizes = [256, 16], strides = [1, 1]} : vector<256x32xf32> to vector<256x16xf32>
    %32 = vector.shape_cast %31 : vector<256x16xf32> to vector<1x16x1x16x16xf32>
    %c0_19 = arith.constant 0 : index
    %c0_20 = arith.constant 0 : index
    %c0_21 = arith.constant 0 : index
    %c0_22 = arith.constant 0 : index
    %c0_23 = arith.constant 0 : index
    %33 = vector.load %arg4[%c0_19, %c0_20, %c0_21, %c0_22, %c0_23] : memref<1x16x2x16x16xf32, #tpu.memory_space<vmem>>, vector<1x16x1x16x16xf32>
    tpu.vector_store %arg4[%c0_19, %c0_20, %c0_21, %c0_22, %c0_23], %32 {strides = array<i32>} : memref<1x16x2x16x16xf32, #tpu.memory_space<vmem>>, vector<1x16x1x16x16xf32>,
    %34 = vector.extract_strided_slice %30 {offsets = [0, 16], sizes = [256, 16], strides = [1, 1]} : vector<256x32xf32> to vector<256x16xf32>
    %35 = vector.shape_cast %34 : vector<256x16xf32> to vector<1x16x1x16x16xf32>
    %c0_24 = arith.constant 0 : index
    %c0_25 = arith.constant 0 : index
    %c1_26 = arith.constant 1 : index
    %c0_27 = arith.constant 0 : index
    %c0_28 = arith.constant 0 : index
    %36 = vector.load %arg4[%c0_24, %c0_25, %c1_26, %c0_27, %c0_28] : memref<1x16x2x16x16xf32, #tpu.memory_space<vmem>>, vector<1x16x1x16x16xf32>
    tpu.vector_store %arg4[%c0_24, %c0_25, %c1_26, %c0_27, %c0_28], %35 {strides = array<i32>} : memref<1x16x2x16x16xf32, #tpu.memory_space<vmem>>, vector<1x16x1x16x16xf32>,
    return
  }
  func.func @transform_0(%arg0: i32) -> (i32, i32, i32, i32) {
    %c0_i32 = arith.constant 0 : i32
    %c0_i32_0 = arith.constant 0 : i32
    %c0_i32_1 = arith.constant 0 : i32
    %c0_i32_2 = arith.constant 0 : i32
    return %arg0, %c0_i32, %c0_i32_0, %c0_i32_1 : i32, i32, i32, i32
  }
  func.func @transform_1(%arg0: i32) -> (i32, i32) {
    %c0_i32 = arith.constant 0 : i32
    %c0_i32_0 = arith.constant 0 : i32
    %c0_i32_1 = arith.constant 0 : i32
    return %c0_i32, %c0_i32_0 : i32, i32
  }
  func.func @transform_2(%arg0: i32) -> (i32, i32) {
    %c0_i32 = arith.constant 0 : i32
    %c0_i32_0 = arith.constant 0 : i32
    %c0_i32_1 = arith.constant 0 : i32
    return %c0_i32, %c0_i32_0 : i32, i32
  }
  func.func @transform_3(%arg0: i32) -> (i32, i32, i32, i32, i32) {
    %c0_i32 = arith.constant 0 : i32
    %c0_i32_0 = arith.constant 0 : i32
    %c0_i32_1 = arith.constant 0 : i32
    %c0_i32_2 = arith.constant 0 : i32
    %c0_i32_3 = arith.constant 0 : i32
    return %arg0, %c0_i32, %c0_i32_0, %c0_i32_1, %c0_i32_2 : i32, i32, i32, i32, i32
  }
}

</mosaic_0001>

<llo_original>
// kernel: _lambda_.4
$region0: #{_lambda_.4}
  #allocation0 [shape = 'u32[]', space=smem, size = 0x4, offset = 0x4, fixed_abs, tag = 'smem constant byte address 0x4 - core index']
  #allocation1 [shape = 'u32[72,128]{1,0:T(1,128)}', space=vmem, size = 0x9000, scoped, tag = 'internal scratch']
  #allocation2 [shape = 'f32[1,10,10,128]{3,2,1,0:T(8,128)}', space=vmem, size = 0x14000, scoped, tag = 'scratch operand']
  %s0 = inlined_call_operand.vmem [shape: bf16[2,8,8,32], index: 0, kind: input, shape index: {}]
  %s1 = inlined_call_operand.vmem [shape: bf16[1152,64], index: 1, kind: input, shape index: {}]
  %s2 = inlined_call_operand.vmem [shape: f32[1,64], index: 2, kind: input, shape index: {}]
  %s3 = inlined_call_operand.vmem [shape: bf16[2,8,2,8,32], index: 3, kind: output, shape index: {}]
  %s4 = sld [smem:[#allocation0]]
  $region45: #{_lambda_.4} parent=0
    _
  %s6 = ssub.s32 1, %s4
  %s7 = scalar_select 0, %s6, %s4
  loop: start=0, step=1, limit=4
  $region2: #{_lambda_.4} parent=0 // loop_pre_header
    _
  $region3: #{_lambda_.4} parent=0 // loop_header
    %s9 = sphi 0, %s13
    %p10 = scmp.ge.s32.totalorder %s9, 4
    %s19 = sphi 0, %s21
    %s22 = sphi 0, %s19
    %s23 = sphi 0, %s22
    %s39 = sphi 0, %s23
    %s43 = sphi 0, %s43
    %s45 = sphi 0, %s43
    %s46 = sphi 0, %s45
    %s60 = sphi 0, %s46
    %s64 = sphi 0, %s64
    %s66 = sphi 0, %s64
    %s67 = sphi 0, %s66
    %s81 = sphi 0, %s67
    %s87 = sphi 0, %s89
    %s90 = sphi 0, %s87
    %s91 = sphi 0, %s90
    %s107 = sphi 0, %s91
  $region4: #{_lambda_.4} parent=0 // loop_header_branch
    %12 = sbr.rel (%p10) target = $region8
  $region5: #{_lambda_.4} parent=0 // loop_body
    %s14 = ssub.s32 %s9, 1
    %s15 = ssub.s32 %s9, 2
    %s16 = sadd.s32 %s9, 1
    %s17 = ssub.s32 %s9, %s16
    %p18 = scmp.eq.s32.totalorder %s17, 0
    %s20 = sadd.s32 %s19, 1
    %s21 = scalar_select %p18, %s19, %s20
    %p24 = pneg %p18
    %p25 = scmp.eq.s32.totalorder %s9, 1
    %p26 = por %p24, %p25
    %p27 = scmp.ne.s32.totalorder %s19, %s22
    %p28 = scmp.eq.s32.totalorder %s9, 0
    %p29 = por %p27, %p28
    %p30 = scmp.ne.s32.totalorder %s19, %s22
    %p31 = scmp.eq.s32.totalorder %s14, 1
    %p32 = por %p30, %p31
    %p33 = scmp.ne.s32.totalorder %s22, %s23
    %p34 = scmp.eq.s32.totalorder %s14, 0
    %p35 = por %p33, %p34
    %p36 = scmp.ne.s32.totalorder %s22, %s23
    %p37 = scmp.eq.s32.totalorder %s15, 1
    %p38 = por %p36, %p37
    %p40 = scmp.ne.s32.totalorder %s23, %s39
    %p41 = scmp.eq.s32.totalorder %s15, 0
    %p42 = por %p40, %p41
    %s44 = sadd.s32 %s43, 1
    %p47 = scmp.eq.s32.totalorder %s9, 1
    %p48 = scmp.ne.s32.totalorder %s43, %s45
    %p49 = scmp.eq.s32.totalorder %s9, 0
    %p50 = por %p48, %p49
    %p51 = scmp.ne.s32.totalorder %s43, %s45
    %p52 = scmp.eq.s32.totalorder %s14, 1
    %p53 = por %p51, %p52
    %p54 = scmp.ne.s32.totalorder %s45, %s46
    %p55 = scmp.eq.s32.totalorder %s14, 0
    %p56 = por %p54, %p55
    %p57 = scmp.ne.s32.totalorder %s45, %s46
    %p58 = scmp.eq.s32.totalorder %s15, 1
    %p59 = por %p57, %p58
    %p61 = scmp.ne.s32.totalorder %s46, %s60
    %p62 = scmp.eq.s32.totalorder %s15, 0
    %p63 = por %p61, %p62
    %s65 = sadd.s32 %s64, 1
    %p68 = scmp.eq.s32.totalorder %s9, 1
    %p69 = scmp.ne.s32.totalorder %s64, %s66
    %p70 = scmp.eq.s32.totalorder %s9, 0
    %p71 = por %p69, %p70
    %p72 = scmp.ne.s32.totalorder %s64, %s66
    %p73 = scmp.eq.s32.totalorder %s14, 1
    %p74 = por %p72, %p73
    %p75 = scmp.ne.s32.totalorder %s66, %s67
    %p76 = scmp.eq.s32.totalorder %s14, 0
    %p77 = por %p75, %p76
    %p78 = scmp.ne.s32.totalorder %s66, %s67
    %p79 = scmp.eq.s32.totalorder %s15, 1
    %p80 = por %p78, %p79
    %p82 = scmp.ne.s32.totalorder %s67, %s81
    %p83 = scmp.eq.s32.totalorder %s15, 0
    %p84 = por %p82, %p83
    %s85 = ssub.s32 %s9, %s16
    %p86 = scmp.eq.s32.totalorder %s85, 0
    %s88 = sadd.s32 %s87, 1
    %s89 = scalar_select %p86, %s87, %s88
    %p92 = pneg %p86
    %p93 = scmp.eq.s32.totalorder %s9, 1
    %p94 = por %p92, %p93
    %p95 = scmp.ne.s32.totalorder %s87, %s90
    %p96 = scmp.eq.s32.totalorder %s9, 0
    %p97 = por %p95, %p96
    %p98 = scmp.ne.s32.totalorder %s87, %s90
    %p99 = scmp.eq.s32.totalorder %s14, 1
    %p100 = por %p98, %p99
    %p101 = scmp.ne.s32.totalorder %s90, %s91
    %p102 = scmp.eq.s32.totalorder %s14, 0
    %p103 = por %p101, %p102
    %p104 = scmp.ne.s32.totalorder %s90, %s91
    %p105 = scmp.eq.s32.totalorder %s15, 1
    %p106 = por %p104, %p105
    %p108 = scmp.ne.s32.totalorder %s91, %s107
    %p109 = scmp.eq.s32.totalorder %s15, 0
    %p110 = por %p108, %p109
    %p111 = scmp.le.s32.totalorder 1, %s9
    %p112 = scmp.lt.s32.totalorder %s9, 3
    %p113 = pnand %p111, %p112
    %p114 = pneg %p113
    // Predicated region
    $region9: #{_lambda_.4} parent=5 // pred_check
      _
    $region10: #{_lambda_.4} parent=5 // pred_check_branch
      %116 = sbr.rel (%p113) target = $region12
    $region11: #{_lambda_.4} parent=5 // pred_region
      %s117 = ssub.s32 %s9, 1
      // Predicated region
      $region13: #{_lambda_.4} parent=11 // pred_check
        %p118 = pneg %p56
      $region14: #{_lambda_.4} parent=11 // pred_check_branch
        %120 = sbr.rel (%p118) target = $region16
      $region15: #{_lambda_.4} parent=11 // pred_region
        _
      $region16: #{_lambda_.4} parent=11 // pred_fallthru
        _
      // Predicated region
      $region17: #{_lambda_.4} parent=11 // pred_check
        %p121 = pneg %p77
      $region18: #{_lambda_.4} parent=11 // pred_check_branch
        %123 = sbr.rel (%p121) target = $region20
      $region19: #{_lambda_.4} parent=11 // pred_region
        _
      $region20: #{_lambda_.4} parent=11 // pred_fallthru
        _
    $region12: #{_lambda_.4} parent=5 // pred_fallthru
      _
    %p124 = scmp.lt.s32.totalorder %s9, 2
    // Predicated region
    $region21: #{_lambda_.4} parent=5 // pred_check
      %p125 = pneg %p124
    $region22: #{_lambda_.4} parent=5 // pred_check_branch
      %127 = sbr.rel (%p125) target = $region24
    $region23: #{_lambda_.4} parent=5 // pred_region
      // Predicated region
      $region25: #{_lambda_.4} parent=23 // pred_check
        %p128 = pneg %p29
      $region26: #{_lambda_.4} parent=23 // pred_check_branch
        %130 = sbr.rel (%p128) target = $region28
      $region27: #{_lambda_.4} parent=23 // pred_region
        %p131 = scmp.lt.s32.totalorder %s9, 1
        %s132 = scalar_select %p131, %s9, 1
        %s133 = smul.addr %s132, 8
        %s134 = smul.addr %s133, 4
        %s135 = scalar_lea.vmem %s0, %s134
      $region28: #{_lambda_.4} parent=23 // pred_fallthru
        _
    $region24: #{_lambda_.4} parent=5 // pred_fallthru
      _
    %p136 = scmp.le.s32.totalorder 1, %s9
    %p137 = scmp.lt.s32.totalorder %s9, 3
    %p138 = pnand %p136, %p137
    %p139 = pneg %p138
    // Predicated region
    $region29: #{_lambda_.4} parent=5 // pred_check
      _
    $region30: #{_lambda_.4} parent=5 // pred_check_branch
      %141 = sbr.rel (%p138) target = $region32
    $region31: #{_lambda_.4} parent=5 // pred_region
      %s142 = ssub.s32 %s9, 1
      %p143 = scmp.lt.s32.totalorder %s14, 1
      %s144 = scalar_select %p143, %s14, 1
      %s145 = smul.addr %s144, 8
      %s146 = smul.addr %s145, 4
      %s147 = scalar_lea.vmem %s0, %s146
      %p148 = pneg %p35
      %p149 = pneg %p32
      %p150 = pneg %p56
      %p151 = pneg %p53
      %p152 = pneg %p77
      %p153 = pneg %p74
      %p154 = pneg %p103
      %p155 = pneg %p100
      %p156 = scmp.lt.s32.totalorder %s14, 1
      %s157 = scalar_select %p156, %s14, 1
      %s158 = smul.addr %s157, 16
      %s159 = smul.addr %s158, 4
      %s160 = scalar_lea.vmem %s3, %s159
      %p161 = scmp.lt.s32.totalorder %s14, 1
      %s162 = scalar_select %p161, %s14, 1
      %s163 = smul.addr %s162, 8
      %s164 = smul.addr %s163, 4
      %s165 = scalar_lea.vmem %s0, %s164
      %p166 = scmp.lt.s32.totalorder %s14, 1
      %s167 = scalar_select %p166, %s14, 1
      %s168 = smul.addr %s167, 16
      %s169 = smul.addr %s168, 4
      %s170 = scalar_lea.vmem %s3, %s169
      %171 = vst [vmem:[#allocation2] sm:$0xff] 0.0
      %172 = vst [vmem:[#allocation2 + $0x8] sm:$0x3] 0.0
      %173 = vst [vmem:[#allocation2 + $0x10] sm:$0xff] 0.0
      %174 = vst [vmem:[#allocation2 + $0x18] sm:$0x3] 0.0
      %175 = vst [vmem:[#allocation2 + $0x20] sm:$0xff] 0.0
      %176 = vst [vmem:[#allocation2 + $0x28] sm:$0x3] 0.0
      %177 = vst [vmem:[#allocation2 + $0x30] sm:$0xff] 0.0
      %178 = vst [vmem:[#allocation2 + $0x38] sm:$0x3] 0.0
      %179 = vst [vmem:[#allocation2 + $0x40] sm:$0xff] 0.0
      %180 = vst [vmem:[#allocation2 + $0x48] sm:$0x3] 0.0
      %181 = vst [vmem:[#allocation2 + $0x50] sm:$0xff] 0.0
      %182 = vst [vmem:[#allocation2 + $0x58] sm:$0x3] 0.0
      %183 = vst [vmem:[#allocation2 + $0x60] sm:$0xff] 0.0
      %184 = vst [vmem:[#allocation2 + $0x68] sm:$0x3] 0.0
      %185 = vst [vmem:[#allocation2 + $0x70] sm:$0xff] 0.0
      %186 = vst [vmem:[#allocation2 + $0x78] sm:$0x3] 0.0
      %187 = vst [vmem:[#allocation2 + $0x80] sm:$0xff] 0.0
      %188 = vst [vmem:[#allocation2 + $0x88] sm:$0x3] 0.0
      %189 = vst [vmem:[#allocation2 + $0x90] sm:$0xff] 0.0
      %190 = vst [vmem:[#allocation2 + $0x98] sm:$0x3] 0.0
      %v191 = vld [vmem:[%s165] sm:$0xf]
      %v192 = vld [vmem:[%s165 + $0x4] sm:$0xf]
      %v193 = vld [vmem:[%s165 + $0x8] sm:$0xf]
      %v194 = vld [vmem:[%s165 + $0xc] sm:$0xf]
      %v195 = vld [vmem:[%s165 + $0x10] sm:$0xf]
      %v196 = vld [vmem:[%s165 + $0x14] sm:$0xf]
      %v197 = vld [vmem:[%s165 + $0x18] sm:$0xf]
      %v198 = vld [vmem:[%s165 + $0x1c] sm:$0xf]
      %v199 = vunpack.c.l.bf16 %v191
      %v200 = vunpack.c.l.bf16 %v192
      %v201 = vunpack.c.l.bf16 %v193
      %v202 = vunpack.c.l.bf16 %v194
      %v203 = vunpack.c.l.bf16 %v195
      %v204 = vunpack.c.l.bf16 %v196
      %v205 = vunpack.c.l.bf16 %v197
      %v206 = vunpack.c.l.bf16 %v198
      %s207 = scalar_lea.vmem [#allocation2], 16
      %vm208 = vcmask 261120
      %209 = vst.msk [vmem:[%s207 + $0x1] sm:$0xff] %vm208, %v199
      %210 = vst.msk [vmem:[%s207 + $0x11] sm:$0xff] %vm208, %v200
      %211 = vst.msk [vmem:[%s207 + $0x21] sm:$0xff] %vm208, %v201
      %212 = vst.msk [vmem:[%s207 + $0x31] sm:$0xff] %vm208, %v202
      %213 = vst.msk [vmem:[%s207 + $0x41] sm:$0xff] %vm208, %v203
      %214 = vst.msk [vmem:[%s207 + $0x51] sm:$0xff] %vm208, %v204
      %215 = vst.msk [vmem:[%s207 + $0x61] sm:$0xff] %vm208, %v205
      %216 = vst.msk [vmem:[%s207 + $0x71] sm:$0xff] %vm208, %v206
      %v217 = vld [vmem:[#allocation2] sm:$0xff]
      %v218 = vld [vmem:[#allocation2 + $0x8] sm:$0x3]
      %v219 = vld [vmem:[#allocation2 + $0x10] sm:$0xff]
      %v220 = vld [vmem:[#allocation2 + $0x18] sm:$0x3]
      %v221 = vld [vmem:[#allocation2 + $0x20] sm:$0xff]
      %v222 = vld [vmem:[#allocation2 + $0x28] sm:$0x3]
      %v223 = vld [vmem:[#allocation2 + $0x30] sm:$0xff]
      %v224 = vld [vmem:[#allocation2 + $0x38] sm:$0x3]
      %v225 = vld [vmem:[#allocation2 + $0x40] sm:$0xff]
      %v226 = vld [vmem:[#allocation2 + $0x48] sm:$0x3]
      %v227 = vld [vmem:[#allocation2 + $0x50] sm:$0xff]
      %v228 = vld [vmem:[#allocation2 + $0x58] sm:$0x3]
      %v229 = vld [vmem:[#allocation2 + $0x60] sm:$0xff]
      %v230 = vld [vmem:[#allocation2 + $0x68] sm:$0x3]
      %v231 = vld [vmem:[#allocation2 + $0x70] sm:$0xff]
      %v232 = vld [vmem:[#allocation2 + $0x78] sm:$0x3]
      %v233 = vld [vmem:[#allocation2 + $0x80] sm:$0xff]
      %v234 = vld [vmem:[#allocation2 + $0x88] sm:$0x3]
      %v235 = vld [vmem:[#allocation2 + $0x90] sm:$0xff]
      %v236 = vld [vmem:[#allocation2 + $0x98] sm:$0x3]
      %vm253 = vcmask 1046528
      %v254 = vrot.slane %v217, 1
      %v255 = vrot.slane %v218, 1
      %v256 = vsel %vm253, %v254, %v255
      %v257 = vrot.slane %v219, 1
      %v258 = vrot.slane %v220, 1
      %v259 = vsel %vm253, %v257, %v258
      %v260 = vrot.slane %v221, 1
      %v261 = vrot.slane %v222, 1
      %v262 = vsel %vm253, %v260, %v261
      %v263 = vrot.slane %v223, 1
      %v264 = vrot.slane %v224, 1
      %v265 = vsel %vm253, %v263, %v264
      %v266 = vrot.slane %v225, 1
      %v267 = vrot.slane %v226, 1
      %v268 = vsel %vm253, %v266, %v267
      %v269 = vrot.slane %v227, 1
      %v270 = vrot.slane %v228, 1
      %v271 = vsel %vm253, %v269, %v270
      %v272 = vrot.slane %v229, 1
      %v273 = vrot.slane %v230, 1
      %v274 = vsel %vm253, %v272, %v273
      %v275 = vrot.slane %v231, 1
      %v276 = vrot.slane %v232, 1
      %v277 = vsel %vm253, %v275, %v276
      %vm286 = vcmask 1045504
      %v287 = vrot.slane %v217, 2
      %v288 = vrot.slane %v218, 2
      %v289 = vsel %vm286, %v287, %v288
      %v290 = vrot.slane %v219, 2
      %v291 = vrot.slane %v220, 2
      %v292 = vsel %vm286, %v290, %v291
      %v293 = vrot.slane %v221, 2
      %v294 = vrot.slane %v222, 2
      %v295 = vsel %vm286, %v293, %v294
      %v296 = vrot.slane %v223, 2
      %v297 = vrot.slane %v224, 2
      %v298 = vsel %vm286, %v296, %v297
      %v299 = vrot.slane %v225, 2
      %v300 = vrot.slane %v226, 2
      %v301 = vsel %vm286, %v299, %v300
      %v302 = vrot.slane %v227, 2
      %v303 = vrot.slane %v228, 2
      %v304 = vsel %vm286, %v302, %v303
      %v305 = vrot.slane %v229, 2
      %v306 = vrot.slane %v230, 2
      %v307 = vsel %vm286, %v305, %v306
      %v308 = vrot.slane %v231, 2
      %v309 = vrot.slane %v232, 2
      %v310 = vsel %vm286, %v308, %v309
      %v321 = vrot.slane %v233, 1
      %v322 = vrot.slane %v234, 1
      %v323 = vsel %vm253, %v321, %v322
      %v325 = vrot.slane %v233, 2
      %v326 = vrot.slane %v234, 2
      %v327 = vsel %vm286, %v325, %v326
      %v331 = vrot.slane %v235, 1
      %v332 = vrot.slane %v236, 1
      %v333 = vsel %vm253, %v331, %v332
      %v335 = vrot.slane %v235, 2
      %v336 = vrot.slane %v236, 2
      %v337 = vsel %vm286, %v335, %v336
      %v339 = vpack.c.bf16 %v219, %v217
      %v340 = vpack.c.bf16 %v259, %v256
      %v341 = vpack.c.bf16 %v292, %v289
      %v342 = vpack.c.bf16 %v221, %v219
      %v343 = vpack.c.bf16 %v262, %v259
      %v344 = vpack.c.bf16 %v295, %v292
      %v345 = vpack.c.bf16 %v223, %v221
      %v346 = vpack.c.bf16 %v265, %v262
      %v347 = vpack.c.bf16 %v298, %v295
      %v348 = vpack.c.bf16 %v225, %v223
      %v349 = vpack.c.bf16 %v268, %v265
      %v350 = vpack.c.bf16 %v301, %v298
      %v351 = vpack.c.bf16 %v227, %v225
      %v352 = vpack.c.bf16 %v271, %v268
      %v353 = vpack.c.bf16 %v304, %v301
      %v354 = vpack.c.bf16 %v229, %v227
      %v355 = vpack.c.bf16 %v274, %v271
      %v356 = vpack.c.bf16 %v307, %v304
      %v357 = vpack.c.bf16 %v231, %v229
      %v358 = vpack.c.bf16 %v277, %v274
      %v359 = vpack.c.bf16 %v310, %v307
      %v360 = vpack.c.bf16 %v233, %v231
      %v361 = vpack.c.bf16 %v323, %v277
      %v362 = vpack.c.bf16 %v327, %v310
      %v363 = vpack.c.bf16 %v235, %v233
      %v364 = vpack.c.bf16 %v333, %v323
      %v365 = vpack.c.bf16 %v337, %v327
      %v366 = vld [vmem:[%s1] sm:$0xf]
      %v367 = vld [vmem:[%s1 + $0x4] sm:$0xf]
      %v368 = vld [vmem:[%s1 + $0x8] sm:$0xf]
      %v369 = vld [vmem:[%s1 + $0xc] sm:$0xf]
      %v370 = vld [vmem:[%s1 + $0x10] sm:$0xf]
      %v371 = vld [vmem:[%s1 + $0x14] sm:$0xf]
      %v372 = vld [vmem:[%s1 + $0x18] sm:$0xf]
      %v373 = vld [vmem:[%s1 + $0x1c] sm:$0xf]
      %v374 = vld [vmem:[%s1 + $0x20] sm:$0xf]
      %v375 = vld [vmem:[%s1 + $0x24] sm:$0xf]
      %v376 = vld [vmem:[%s1 + $0x28] sm:$0xf]
      %v377 = vld [vmem:[%s1 + $0x2c] sm:$0xf]
      %v378 = vld [vmem:[%s1 + $0x30] sm:$0xf]
      %v379 = vld [vmem:[%s1 + $0x34] sm:$0xf]
      %v380 = vld [vmem:[%s1 + $0x38] sm:$0xf]
      %v381 = vld [vmem:[%s1 + $0x3c] sm:$0xf]
      %v382 = vld [vmem:[%s1 + $0x40] sm:$0xf]
      %v383 = vld [vmem:[%s1 + $0x44] sm:$0xf]
      %v384 = vld [vmem:[%s1 + $0x48] sm:$0xf]
      %v385 = vld [vmem:[%s1 + $0x4c] sm:$0xf]
      %v386 = vld [vmem:[%s1 + $0x50] sm:$0xf]
      %v387 = vld [vmem:[%s1 + $0x54] sm:$0xf]
      %v388 = vld [vmem:[%s1 + $0x58] sm:$0xf]
      %v389 = vld [vmem:[%s1 + $0x5c] sm:$0xf]
      %v390 = vld [vmem:[%s1 + $0x60] sm:$0xf]
      %v391 = vld [vmem:[%s1 + $0x64] sm:$0xf]
      %v392 = vld [vmem:[%s1 + $0x68] sm:$0xf]
      %v393 = vld [vmem:[%s1 + $0x6c] sm:$0xf]
      %v394 = vld [vmem:[%s1 + $0x70] sm:$0xf]
      %v395 = vld [vmem:[%s1 + $0x74] sm:$0xf]
      %v396 = vld [vmem:[%s1 + $0x78] sm:$0xf]
      %v397 = vld [vmem:[%s1 + $0x7c] sm:$0xf]
      %v398 = vld [vmem:[%s1 + $0x80] sm:$0xf]
      %v399 = vld [vmem:[%s1 + $0x84] sm:$0xf]
      %v400 = vld [vmem:[%s1 + $0x88] sm:$0xf]
      %v401 = vld [vmem:[%s1 + $0x8c] sm:$0xf]
      %v402 = vld [vmem:[%s1 + $0x90] sm:$0xf]
      %v403 = vld [vmem:[%s1 + $0x94] sm:$0xf]
      %v404 = vld [vmem:[%s1 + $0x98] sm:$0xf]
      %v405 = vld [vmem:[%s1 + $0x9c] sm:$0xf]
      %v406 = vld [vmem:[%s1 + $0xa0] sm:$0xf]
      %v407 = vld [vmem:[%s1 + $0xa4] sm:$0xf]
      %v408 = vld [vmem:[%s1 + $0xa8] sm:$0xf]
      %v409 = vld [vmem:[%s1 + $0xac] sm:$0xf]
      %v410 = vld [vmem:[%s1 + $0xb0] sm:$0xf]
      %v411 = vld [vmem:[%s1 + $0xb4] sm:$0xf]
      %v412 = vld [vmem:[%s1 + $0xb8] sm:$0xf]
      %v413 = vld [vmem:[%s1 + $0xbc] sm:$0xf]
      %v414 = vld [vmem:[%s1 + $0xc0] sm:$0xf]
      %v415 = vld [vmem:[%s1 + $0xc4] sm:$0xf]
      %v416 = vld [vmem:[%s1 + $0xc8] sm:$0xf]
      %v417 = vld [vmem:[%s1 + $0xcc] sm:$0xf]
      %v418 = vld [vmem:[%s1 + $0xd0] sm:$0xf]
      %v419 = vld [vmem:[%s1 + $0xd4] sm:$0xf]
      %v420 = vld [vmem:[%s1 + $0xd8] sm:$0xf]
      %v421 = vld [vmem:[%s1 + $0xdc] sm:$0xf]
      %v422 = vld [vmem:[%s1 + $0xe0] sm:$0xf]
      %v423 = vld [vmem:[%s1 + $0xe4] sm:$0xf]
      %v424 = vld [vmem:[%s1 + $0xe8] sm:$0xf]
      %v425 = vld [vmem:[%s1 + $0xec] sm:$0xf]
      %v426 = vld [vmem:[%s1 + $0xf0] sm:$0xf]
      %v427 = vld [vmem:[%s1 + $0xf4] sm:$0xf]
      %v428 = vld [vmem:[%s1 + $0xf8] sm:$0xf]
      %v429 = vld [vmem:[%s1 + $0xfc] sm:$0xf]
      %v430 = vld [vmem:[%s1 + $0x100] sm:$0xf]
      %v431 = vld [vmem:[%s1 + $0x104] sm:$0xf]
      %v432 = vld [vmem:[%s1 + $0x108] sm:$0xf]
      %v433 = vld [vmem:[%s1 + $0x10c] sm:$0xf]
      %v434 = vld [vmem:[%s1 + $0x110] sm:$0xf]
      %v435 = vld [vmem:[%s1 + $0x114] sm:$0xf]
      %v436 = vld [vmem:[%s1 + $0x118] sm:$0xf]
      %v437 = vld [vmem:[%s1 + $0x11c] sm:$0xf]
      %v438 = vld [vmem:[%s1 + $0x120] sm:$0xf]
      %v439 = vld [vmem:[%s1 + $0x124] sm:$0xf]
      %v440 = vld [vmem:[%s1 + $0x128] sm:$0xf]
      %v441 = vld [vmem:[%s1 + $0x12c] sm:$0xf]
      %v442 = vld [vmem:[%s1 + $0x130] sm:$0xf]
      %v443 = vld [vmem:[%s1 + $0x134] sm:$0xf]
      %v444 = vld [vmem:[%s1 + $0x138] sm:$0xf]
      %v445 = vld [vmem:[%s1 + $0x13c] sm:$0xf]
      %v446 = vld [vmem:[%s1 + $0x140] sm:$0xf]
      %v447 = vld [vmem:[%s1 + $0x144] sm:$0xf]
      %v448 = vld [vmem:[%s1 + $0x148] sm:$0xf]
      %v449 = vld [vmem:[%s1 + $0x14c] sm:$0xf]
      %v450 = vld [vmem:[%s1 + $0x150] sm:$0xf]
      %v451 = vld [vmem:[%s1 + $0x154] sm:$0xf]
      %v452 = vld [vmem:[%s1 + $0x158] sm:$0xf]
      %v453 = vld [vmem:[%s1 + $0x15c] sm:$0xf]
      %v454 = vld [vmem:[%s1 + $0x160] sm:$0xf]
      %v455 = vld [vmem:[%s1 + $0x164] sm:$0xf]
      %v456 = vld [vmem:[%s1 + $0x168] sm:$0xf]
      %v457 = vld [vmem:[%s1 + $0x16c] sm:$0xf]
      %v458 = vld [vmem:[%s1 + $0x170] sm:$0xf]
      %v459 = vld [vmem:[%s1 + $0x174] sm:$0xf]
      %v460 = vld [vmem:[%s1 + $0x178] sm:$0xf]
      %v461 = vld [vmem:[%s1 + $0x17c] sm:$0xf]
      %v462 = vld [vmem:[%s1 + $0x180] sm:$0xf]
      %v463 = vld [vmem:[%s1 + $0x184] sm:$0xf]
      %v464 = vld [vmem:[%s1 + $0x188] sm:$0xf]
      %v465 = vld [vmem:[%s1 + $0x18c] sm:$0xf]
      %v466 = vld [vmem:[%s1 + $0x190] sm:$0xf]
      %v467 = vld [vmem:[%s1 + $0x194] sm:$0xf]
      %v468 = vld [vmem:[%s1 + $0x198] sm:$0xf]
      %v469 = vld [vmem:[%s1 + $0x19c] sm:$0xf]
      %v470 = vld [vmem:[%s1 + $0x1a0] sm:$0xf]
      %v471 = vld [vmem:[%s1 + $0x1a4] sm:$0xf]
      %v472 = vld [vmem:[%s1 + $0x1a8] sm:$0xf]
      %v473 = vld [vmem:[%s1 + $0x1ac] sm:$0xf]
      %v474 = vld [vmem:[%s1 + $0x1b0] sm:$0xf]
      %v475 = vld [vmem:[%s1 + $0x1b4] sm:$0xf]
      %v476 = vld [vmem:[%s1 + $0x1b8] sm:$0xf]
      %v477 = vld [vmem:[%s1 + $0x1bc] sm:$0xf]
      %v478 = vld [vmem:[%s1 + $0x1c0] sm:$0xf]
      %v479 = vld [vmem:[%s1 + $0x1c4] sm:$0xf]
      %v480 = vld [vmem:[%s1 + $0x1c8] sm:$0xf]
      %v481 = vld [vmem:[%s1 + $0x1cc] sm:$0xf]
      %v482 = vld [vmem:[%s1 + $0x1d0] sm:$0xf]
      %v483 = vld [vmem:[%s1 + $0x1d4] sm:$0xf]
      %v484 = vld [vmem:[%s1 + $0x1d8] sm:$0xf]
      %v485 = vld [vmem:[%s1 + $0x1dc] sm:$0xf]
      %v486 = vld [vmem:[%s1 + $0x1e0] sm:$0xf]
      %v487 = vld [vmem:[%s1 + $0x1e4] sm:$0xf]
      %v488 = vld [vmem:[%s1 + $0x1e8] sm:$0xf]
      %v489 = vld [vmem:[%s1 + $0x1ec] sm:$0xf]
      %v490 = vld [vmem:[%s1 + $0x1f0] sm:$0xf]
      %v491 = vld [vmem:[%s1 + $0x1f4] sm:$0xf]
      %v492 = vld [vmem:[%s1 + $0x1f8] sm:$0xf]
      %v493 = vld [vmem:[%s1 + $0x1fc] sm:$0xf]
      %v494 = vld [vmem:[%s1 + $0x200] sm:$0xf]
      %v495 = vld [vmem:[%s1 + $0x204] sm:$0xf]
      %v496 = vld [vmem:[%s1 + $0x208] sm:$0xf]
      %v497 = vld [vmem:[%s1 + $0x20c] sm:$0xf]
      %v498 = vld [vmem:[%s1 + $0x210] sm:$0xf]
      %v499 = vld [vmem:[%s1 + $0x214] sm:$0xf]
      %v500 = vld [vmem:[%s1 + $0x218] sm:$0xf]
      %v501 = vld [vmem:[%s1 + $0x21c] sm:$0xf]
      %v502 = vld [vmem:[%s1 + $0x220] sm:$0xf]
      %v503 = vld [vmem:[%s1 + $0x224] sm:$0xf]
      %v504 = vld [vmem:[%s1 + $0x228] sm:$0xf]
      %v505 = vld [vmem:[%s1 + $0x22c] sm:$0xf]
      %v506 = vld [vmem:[%s1 + $0x230] sm:$0xf]
      %v507 = vld [vmem:[%s1 + $0x234] sm:$0xf]
      %v508 = vld [vmem:[%s1 + $0x238] sm:$0xf]
      %v509 = vld [vmem:[%s1 + $0x23c] sm:$0xf]
      %v510 = vld [vmem:[%s2] sm:$0x1]
      %v512 = vperm.slane %v510, 0
      %v658 = vunpack.c.l.b16 %v366
      %v659 = vunpack.c.l.b16 %v367
      %v660 = vunpack.c.l.b16 %v368
      %v661 = vunpack.c.l.b16 %v369
      %v662 = vunpack.c.l.b16 %v370
      %v663 = vunpack.c.l.b16 %v371
      %v664 = vunpack.c.l.b16 %v372
      %v665 = vunpack.c.l.b16 %v373
      %v666 = vunpack.c.l.b16 %v374
      %v667 = vunpack.c.l.b16 %v375
      %v668 = vunpack.c.l.b16 %v376
      %v669 = vunpack.c.l.b16 %v377
      %v670 = vunpack.c.l.b16 %v378
      %v671 = vunpack.c.l.b16 %v379
      %v672 = vunpack.c.l.b16 %v380
      %v673 = vunpack.c.l.b16 %v381
      %v674 = vunpack.c.l.b16 %v382
      %v675 = vunpack.c.l.b16 %v383
      %v676 = vunpack.c.l.b16 %v384
      %v677 = vunpack.c.l.b16 %v385
      %v678 = vunpack.c.l.b16 %v386
      %v679 = vunpack.c.l.b16 %v387
      %v680 = vunpack.c.l.b16 %v388
      %v681 = vunpack.c.l.b16 %v389
      %v682 = vunpack.c.l.b16 %v390
      %v683 = vunpack.c.l.b16 %v391
      %v684 = vunpack.c.l.b16 %v392
      %v685 = vunpack.c.l.b16 %v393
      %v686 = vunpack.c.l.b16 %v394
      %v687 = vunpack.c.l.b16 %v395
      %v688 = vunpack.c.l.b16 %v396
      %v689 = vunpack.c.l.b16 %v397
      %v690 = vunpack.c.l.b16 %v398
      %v691 = vunpack.c.l.b16 %v399
      %v692 = vunpack.c.l.b16 %v400
      %v693 = vunpack.c.l.b16 %v401
      %v694 = vunpack.c.l.b16 %v402
      %v695 = vunpack.c.l.b16 %v403
      %v696 = vunpack.c.l.b16 %v404
      %v697 = vunpack.c.l.b16 %v405
      %v698 = vunpack.c.l.b16 %v406
      %v699 = vunpack.c.l.b16 %v407
      %v700 = vunpack.c.l.b16 %v408
      %v701 = vunpack.c.l.b16 %v409
      %v702 = vunpack.c.l.b16 %v410
      %v703 = vunpack.c.l.b16 %v411
      %v704 = vunpack.c.l.b16 %v412
      %v705 = vunpack.c.l.b16 %v413
      %v706 = vunpack.c.l.b16 %v414
      %v707 = vunpack.c.l.b16 %v415
      %v708 = vunpack.c.l.b16 %v416
      %v709 = vunpack.c.l.b16 %v417
      %v710 = vunpack.c.l.b16 %v418
      %v711 = vunpack.c.l.b16 %v419
      %v712 = vunpack.c.l.b16 %v420
      %v713 = vunpack.c.l.b16 %v421
      %v714 = vunpack.c.l.b16 %v422
      %v715 = vunpack.c.l.b16 %v423
      %v716 = vunpack.c.l.b16 %v424
      %v717 = vunpack.c.l.b16 %v425
      %v718 = vunpack.c.l.b16 %v426
      %v719 = vunpack.c.l.b16 %v427
      %v720 = vunpack.c.l.b16 %v428
      %v721 = vunpack.c.l.b16 %v429
      %v722 = vunpack.c.l.b16 %v430
      %v723 = vunpack.c.l.b16 %v431
      %v724 = vunpack.c.l.b16 %v432
      %v725 = vunpack.c.l.b16 %v433
      %v726 = vunpack.c.l.b16 %v434
      %v727 = vunpack.c.l.b16 %v435
      %v728 = vunpack.c.l.b16 %v436
      %v729 = vunpack.c.l.b16 %v437
      %v730 = vunpack.c.l.b16 %v438
      %v731 = vunpack.c.l.b16 %v439
      %v732 = vunpack.c.l.b16 %v440
      %v733 = vunpack.c.l.b16 %v441
      %v734 = vunpack.c.l.b16 %v442
      %v735 = vunpack.c.l.b16 %v443
      %v736 = vunpack.c.l.b16 %v444
      %v737 = vunpack.c.l.b16 %v445
      %v738 = vunpack.c.l.b16 %v446
      %v739 = vunpack.c.l.b16 %v447
      %v740 = vunpack.c.l.b16 %v448
      %v741 = vunpack.c.l.b16 %v449
      %v742 = vunpack.c.l.b16 %v450
      %v743 = vunpack.c.l.b16 %v451
      %v744 = vunpack.c.l.b16 %v452
      %v745 = vunpack.c.l.b16 %v453
      %v746 = vunpack.c.l.b16 %v454
      %v747 = vunpack.c.l.b16 %v455
      %v748 = vunpack.c.l.b16 %v456
      %v749 = vunpack.c.l.b16 %v457
      %v750 = vunpack.c.l.b16 %v458
      %v751 = vunpack.c.l.b16 %v459
      %v752 = vunpack.c.l.b16 %v460
      %v753 = vunpack.c.l.b16 %v461
      %v754 = vunpack.c.l.b16 %v462
      %v755 = vunpack.c.l.b16 %v463
      %v756 = vunpack.c.l.b16 %v464
      %v757 = vunpack.c.l.b16 %v465
      %v758 = vunpack.c.l.b16 %v466
      %v759 = vunpack.c.l.b16 %v467
      %v760 = vunpack.c.l.b16 %v468
      %v761 = vunpack.c.l.b16 %v469
      %v762 = vunpack.c.l.b16 %v470
      %v763 = vunpack.c.l.b16 %v471
      %v764 = vunpack.c.l.b16 %v472
      %v765 = vunpack.c.l.b16 %v473
      %v766 = vunpack.c.l.b16 %v474
      %v767 = vunpack.c.l.b16 %v475
      %v768 = vunpack.c.l.b16 %v476
      %v769 = vunpack.c.l.b16 %v477
      %v770 = vunpack.c.l.b16 %v478
      %v771 = vunpack.c.l.b16 %v479
      %v772 = vunpack.c.l.b16 %v480
      %v773 = vunpack.c.l.b16 %v481
      %v774 = vunpack.c.l.b16 %v482
      %v775 = vunpack.c.l.b16 %v483
      %v776 = vunpack.c.l.b16 %v484
      %v777 = vunpack.c.l.b16 %v485
      %v778 = vunpack.c.l.b16 %v486
      %v779 = vunpack.c.l.b16 %v487
      %v780 = vunpack.c.l.b16 %v488
      %v781 = vunpack.c.l.b16 %v489
      %v782 = vunpack.c.l.b16 %v490
      %v783 = vunpack.c.l.b16 %v491
      %v784 = vunpack.c.l.b16 %v492
      %v785 = vunpack.c.l.b16 %v493
      %v786 = vunpack.c.l.b16 %v494
      %v787 = vunpack.c.l.b16 %v495
      %v788 = vunpack.c.l.b16 %v496
      %v789 = vunpack.c.l.b16 %v497
      %v790 = vunpack.c.l.b16 %v498
      %v791 = vunpack.c.l.b16 %v499
      %v792 = vunpack.c.l.b16 %v500
      %v793 = vunpack.c.l.b16 %v501
      %v794 = vunpack.c.l.b16 %v502
      %v795 = vunpack.c.l.b16 %v503
      %v796 = vunpack.c.l.b16 %v504
      %v797 = vunpack.c.l.b16 %v505
      %v798 = vunpack.c.l.b16 %v506
      %v799 = vunpack.c.l.b16 %v507
      %v800 = vunpack.c.l.b16 %v508
      %v801 = vunpack.c.l.b16 %v509
      %v802 = vpack.c.b16 %v659, %v658
      %v803 = vpack.c.b16 %v661, %v660
      %v804 = vpack.c.b16 %v663, %v662
      %v805 = vpack.c.b16 %v665, %v664
      %v806 = vpack.c.b16 %v667, %v666
      %v807 = vpack.c.b16 %v669, %v668
      %v808 = vpack.c.b16 %v671, %v670
      %v809 = vpack.c.b16 %v673, %v672
      %v810 = vpack.c.b16 %v675, %v674
      %v811 = vpack.c.b16 %v677, %v676
      %v812 = vpack.c.b16 %v679, %v678
      %v813 = vpack.c.b16 %v681, %v680
      %v814 = vpack.c.b16 %v683, %v682
      %v815 = vpack.c.b16 %v685, %v684
      %v816 = vpack.c.b16 %v687, %v686
      %v817 = vpack.c.b16 %v689, %v688
      %v818 = vpack.c.b16 %v691, %v690
      %v819 = vpack.c.b16 %v693, %v692
      %v820 = vpack.c.b16 %v695, %v694
      %v821 = vpack.c.b16 %v697, %v696
      %v822 = vpack.c.b16 %v699, %v698
      %v823 = vpack.c.b16 %v701, %v700
      %v824 = vpack.c.b16 %v703, %v702
      %v825 = vpack.c.b16 %v705, %v704
      %v826 = vpack.c.b16 %v707, %v706
      %v827 = vpack.c.b16 %v709, %v708
      %v828 = vpack.c.b16 %v711, %v710
      %v829 = vpack.c.b16 %v713, %v712
      %v830 = vpack.c.b16 %v715, %v714
      %v831 = vpack.c.b16 %v717, %v716
      %v832 = vpack.c.b16 %v719, %v718
      %v833 = vpack.c.b16 %v721, %v720
      %v834 = vpack.c.b16 %v723, %v722
      %v835 = vpack.c.b16 %v725, %v724
      %v836 = vpack.c.b16 %v727, %v726
      %v837 = vpack.c.b16 %v729, %v728
      %v838 = vpack.c.b16 %v731, %v730
      %v839 = vpack.c.b16 %v733, %v732
      %v840 = vpack.c.b16 %v735, %v734
      %v841 = vpack.c.b16 %v737, %v736
      %v842 = vpack.c.b16 %v739, %v738
      %v843 = vpack.c.b16 %v741, %v740
      %v844 = vpack.c.b16 %v743, %v742
      %v845 = vpack.c.b16 %v745, %v744
      %v846 = vpack.c.b16 %v747, %v746
      %v847 = vpack.c.b16 %v749, %v748
      %v848 = vpack.c.b16 %v751, %v750
      %v849 = vpack.c.b16 %v753, %v752
      %v850 = vpack.c.b16 %v755, %v754
      %v851 = vpack.c.b16 %v757, %v756
      %v852 = vpack.c.b16 %v759, %v758
      %v853 = vpack.c.b16 %v761, %v760
      %v854 = vpack.c.b16 %v763, %v762
      %v855 = vpack.c.b16 %v765, %v764
      %v856 = vpack.c.b16 %v767, %v766
      %v857 = vpack.c.b16 %v769, %v768
      %v858 = vpack.c.b16 %v771, %v770
      %v859 = vpack.c.b16 %v773, %v772
      %v860 = vpack.c.b16 %v775, %v774
      %v861 = vpack.c.b16 %v777, %v776
      %v862 = vpack.c.b16 %v779, %v778
      %v863 = vpack.c.b16 %v781, %v780
      %v864 = vpack.c.b16 %v783, %v782
      %v865 = vpack.c.b16 %v785, %v784
      %v866 = vpack.c.b16 %v787, %v786
      %v867 = vpack.c.b16 %v789, %v788
      %v868 = vpack.c.b16 %v791, %v790
      %v869 = vpack.c.b16 %v793, %v792
      %v870 = vpack.c.b16 %v795, %v794
      %v871 = vpack.c.b16 %v797, %v796
      %v872 = vpack.c.b16 %v799, %v798
      %v873 = vpack.c.b16 %v801, %v800
      %946 = vmatpush.bf16.msra.mxu0 %v809
      %947 = vmatpush.bf16.msra.mxu0 %v808
      %948 = vmatpush.bf16.msra.mxu0 %v807
      %949 = vmatpush.bf16.msra.mxu0 %v806
      %950 = vmatpush.bf16.msra.mxu0 %v805
      %951 = vmatpush.bf16.msra.mxu0 %v804
      %952 = vmatpush.bf16.msra.mxu0 %v803
      %953 = vmatpush.bf16.msra.mxu0 %v802
      %954 = vmatmul.bf16.gmra.mxu0 %v339
      %v955 = vpop.f32.mrf.mxu0
      %v956 = vadd.f32 %v512, %v955
      %v957 = vpop.f32.mrf.mxu0
      %v958 = vadd.f32 %v512, %v957
      %959 = vmatmul.bf16.gmra.mxu0 %v345
      %v960 = vpop.f32.mrf.mxu0
      %v961 = vadd.f32 %v512, %v960
      %v962 = vpop.f32.mrf.mxu0
      %v963 = vadd.f32 %v512, %v962
      %964 = vmatmul.bf16.gmra.mxu0 %v351
      %v965 = vpop.f32.mrf.mxu0
      %v966 = vadd.f32 %v512, %v965
      %v967 = vpop.f32.mrf.mxu0
      %v968 = vadd.f32 %v512, %v967
      %969 = vmatmul.bf16.gmra.mxu0 %v357
      %v970 = vpop.f32.mrf.mxu0
      %v971 = vadd.f32 %v512, %v970
      %v972 = vpop.f32.mrf.mxu0
      %v973 = vadd.f32 %v512, %v972
      %974 = vdwg.mxu0
      %975 = vmatpush.bf16.msra.mxu0 %v817
      %976 = vmatpush.bf16.msra.mxu0 %v816
      %977 = vmatpush.bf16.msra.mxu0 %v815
      %978 = vmatpush.bf16.msra.mxu0 %v814
      %979 = vmatpush.bf16.msra.mxu0 %v813
      %980 = vmatpush.bf16.msra.mxu0 %v812
      %981 = vmatpush.bf16.msra.mxu0 %v811
      %982 = vmatpush.bf16.msra.mxu0 %v810
      %983 = vmatmul.bf16.gmra.mxu0 %v340
      %v984 = vpop.f32.mrf.mxu0
      %v985 = vadd.f32 %v956, %v984
      %v986 = vpop.f32.mrf.mxu0
      %v987 = vadd.f32 %v958, %v986
      %988 = vmatmul.bf16.gmra.mxu0 %v346
      %v989 = vpop.f32.mrf.mxu0
      %v990 = vadd.f32 %v961, %v989
      %v991 = vpop.f32.mrf.mxu0
      %v992 = vadd.f32 %v963, %v991
      %993 = vmatmul.bf16.gmra.mxu0 %v352
      %v994 = vpop.f32.mrf.mxu0
      %v995 = vadd.f32 %v966, %v994
      %v996 = vpop.f32.mrf.mxu0
      %v997 = vadd.f32 %v968, %v996
      %998 = vmatmul.bf16.gmra.mxu0 %v358
      %v999 = vpop.f32.mrf.mxu0
      %v1000 = vadd.f32 %v971, %v999
      %v1001 = vpop.f32.mrf.mxu0
      %v1002 = vadd.f32 %v973, %v1001
      %1003 = vdwg.mxu0
      %1004 = vmatpush.bf16.msra.mxu0 %v825
      %1005 = vmatpush.bf16.msra.mxu0 %v824
      %1006 = vmatpush.bf16.msra.mxu0 %v823
      %1007 = vmatpush.bf16.msra.mxu0 %v822
      %1008 = vmatpush.bf16.msra.mxu0 %v821
      %1009 = vmatpush.bf16.msra.mxu0 %v820
      %1010 = vmatpush.bf16.msra.mxu0 %v819
      %1011 = vmatpush.bf16.msra.mxu0 %v818
      %1012 = vmatmul.bf16.gmra.mxu0 %v341
      %v1013 = vpop.f32.mrf.mxu0
      %v1014 = vadd.f32 %v985, %v1013
      %v1015 = vpop.f32.mrf.mxu0
      %v1016 = vadd.f32 %v987, %v1015
      %1017 = vmatmul.bf16.gmra.mxu0 %v347
      %v1018 = vpop.f32.mrf.mxu0
      %v1019 = vadd.f32 %v990, %v1018
      %v1020 = vpop.f32.mrf.mxu0
      %v1021 = vadd.f32 %v992, %v1020
      %1022 = vmatmul.bf16.gmra.mxu0 %v353
      %v1023 = vpop.f32.mrf.mxu0
      %v1024 = vadd.f32 %v995, %v1023
      %v1025 = vpop.f32.mrf.mxu0
      %v1026 = vadd.f32 %v997, %v1025
      %1027 = vmatmul.bf16.gmra.mxu0 %v359
      %v1028 = vpop.f32.mrf.mxu0
      %v1029 = vadd.f32 %v1000, %v1028
      %v1030 = vpop.f32.mrf.mxu0
      %v1031 = vadd.f32 %v1002, %v1030
      %1032 = vdwg.mxu0
      %1033 = vmatpush.bf16.msra.mxu0 %v833
      %1034 = vmatpush.bf16.msra.mxu0 %v832
      %1035 = vmatpush.bf16.msra.mxu0 %v831
      %1036 = vmatpush.bf16.msra.mxu0 %v830
      %1037 = vmatpush.bf16.msra.mxu0 %v829
      %1038 = vmatpush.bf16.msra.mxu0 %v828
      %1039 = vmatpush.bf16.msra.mxu0 %v827
      %1040 = vmatpush.bf16.msra.mxu0 %v826
      %1041 = vmatmul.bf16.gmra.mxu0 %v342
      %v1042 = vpop.f32.mrf.mxu0
      %v1043 = vadd.f32 %v1014, %v1042
      %v1044 = vpop.f32.mrf.mxu0
      %v1045 = vadd.f32 %v1016, %v1044
      %1046 = vmatmul.bf16.gmra.mxu0 %v348
      %v1047 = vpop.f32.mrf.mxu0
      %v1048 = vadd.f32 %v1019, %v1047
      %v1049 = vpop.f32.mrf.mxu0
      %v1050 = vadd.f32 %v1021, %v1049
      %1051 = vmatmul.bf16.gmra.mxu0 %v354
      %v1052 = vpop.f32.mrf.mxu0
      %v1053 = vadd.f32 %v1024, %v1052
      %v1054 = vpop.f32.mrf.mxu0
      %v1055 = vadd.f32 %v1026, %v1054
      %1056 = vmatmul.bf16.gmra.mxu0 %v360
      %v1057 = vpop.f32.mrf.mxu0
      %v1058 = vadd.f32 %v1029, %v1057
      %v1059 = vpop.f32.mrf.mxu0
      %v1060 = vadd.f32 %v1031, %v1059
      %1061 = vdwg.mxu0
      %1062 = vmatpush.bf16.msra.mxu0 %v841
      %1063 = vmatpush.bf16.msra.mxu0 %v840
      %1064 = vmatpush.bf16.msra.mxu0 %v839
      %1065 = vmatpush.bf16.msra.mxu0 %v838
      %1066 = vmatpush.bf16.msra.mxu0 %v837
      %1067 = vmatpush.bf16.msra.mxu0 %v836
      %1068 = vmatpush.bf16.msra.mxu0 %v835
      %1069 = vmatpush.bf16.msra.mxu0 %v834
      %1070 = vmatmul.bf16.gmra.mxu0 %v343
      %v1071 = vpop.f32.mrf.mxu0
      %v1072 = vadd.f32 %v1043, %v1071
      %v1073 = vpop.f32.mrf.mxu0
      %v1074 = vadd.f32 %v1045, %v1073
      %1075 = vmatmul.bf16.gmra.mxu0 %v349
      %v1076 = vpop.f32.mrf.mxu0
      %v1077 = vadd.f32 %v1048, %v1076
      %v1078 = vpop.f32.mrf.mxu0
      %v1079 = vadd.f32 %v1050, %v1078
      %1080 = vmatmul.bf16.gmra.mxu0 %v355
      %v1081 = vpop.f32.mrf.mxu0
      %v1082 = vadd.f32 %v1053, %v1081
      %v1083 = vpop.f32.mrf.mxu0
      %v1084 = vadd.f32 %v1055, %v1083
      %1085 = vmatmul.bf16.gmra.mxu0 %v361
      %v1086 = vpop.f32.mrf.mxu0
      %v1087 = vadd.f32 %v1058, %v1086
      %v1088 = vpop.f32.mrf.mxu0
      %v1089 = vadd.f32 %v1060, %v1088
      %1090 = vdwg.mxu0
      %1091 = vmatpush.bf16.msra.mxu0 %v849
      %1092 = vmatpush.bf16.msra.mxu0 %v848
      %1093 = vmatpush.bf16.msra.mxu0 %v847
      %1094 = vmatpush.bf16.msra.mxu0 %v846
      %1095 = vmatpush.bf16.msra.mxu0 %v845
      %1096 = vmatpush.bf16.msra.mxu0 %v844
      %1097 = vmatpush.bf16.msra.mxu0 %v843
      %1098 = vmatpush.bf16.msra.mxu0 %v842
      %1099 = vmatmul.bf16.gmra.mxu0 %v344
      %v1100 = vpop.f32.mrf.mxu0
      %v1101 = vadd.f32 %v1072, %v1100
      %v1102 = vpop.f32.mrf.mxu0
      %v1103 = vadd.f32 %v1074, %v1102
      %1104 = vmatmul.bf16.gmra.mxu0 %v350
      %v1105 = vpop.f32.mrf.mxu0
      %v1106 = vadd.f32 %v1077, %v1105
      %v1107 = vpop.f32.mrf.mxu0
      %v1108 = vadd.f32 %v1079, %v1107
      %1109 = vmatmul.bf16.gmra.mxu0 %v356
      %v1110 = vpop.f32.mrf.mxu0
      %v1111 = vadd.f32 %v1082, %v1110
      %v1112 = vpop.f32.mrf.mxu0
      %v1113 = vadd.f32 %v1084, %v1112
      %1114 = vmatmul.bf16.gmra.mxu0 %v362
      %v1115 = vpop.f32.mrf.mxu0
      %v1116 = vadd.f32 %v1087, %v1115
      %v1117 = vpop.f32.mrf.mxu0
      %v1118 = vadd.f32 %v1089, %v1117
      %1119 = vdwg.mxu0
      %1120 = vmatpush.bf16.msra.mxu0 %v857
      %1121 = vmatpush.bf16.msra.mxu0 %v856
      %1122 = vmatpush.bf16.msra.mxu0 %v855
      %1123 = vmatpush.bf16.msra.mxu0 %v854
      %1124 = vmatpush.bf16.msra.mxu0 %v853
      %1125 = vmatpush.bf16.msra.mxu0 %v852
      %1126 = vmatpush.bf16.msra.mxu0 %v851
      %1127 = vmatpush.bf16.msra.mxu0 %v850
      %1128 = vmatmul.bf16.gmra.mxu0 %v345
      %v1129 = vpop.f32.mrf.mxu0
      %v1130 = vadd.f32 %v1101, %v1129
      %v1131 = vpop.f32.mrf.mxu0
      %v1132 = vadd.f32 %v1103, %v1131
      %1133 = vmatmul.bf16.gmra.mxu0 %v351
      %v1134 = vpop.f32.mrf.mxu0
      %v1135 = vadd.f32 %v1106, %v1134
      %v1136 = vpop.f32.mrf.mxu0
      %v1137 = vadd.f32 %v1108, %v1136
      %1138 = vmatmul.bf16.gmra.mxu0 %v357
      %v1139 = vpop.f32.mrf.mxu0
      %v1140 = vadd.f32 %v1111, %v1139
      %v1141 = vpop.f32.mrf.mxu0
      %v1142 = vadd.f32 %v1113, %v1141
      %1143 = vmatmul.bf16.gmra.mxu0 %v363
      %v1144 = vpop.f32.mrf.mxu0
      %v1145 = vadd.f32 %v1116, %v1144
      %v1146 = vpop.f32.mrf.mxu0
      %v1147 = vadd.f32 %v1118, %v1146
      %1148 = vdwg.mxu0
      %1149 = vmatpush.bf16.msra.mxu0 %v865
      %1150 = vmatpush.bf16.msra.mxu0 %v864
      %1151 = vmatpush.bf16.msra.mxu0 %v863
      %1152 = vmatpush.bf16.msra.mxu0 %v862
      %1153 = vmatpush.bf16.msra.mxu0 %v861
      %1154 = vmatpush.bf16.msra.mxu0 %v860
      %1155 = vmatpush.bf16.msra.mxu0 %v859
      %1156 = vmatpush.bf16.msra.mxu0 %v858
      %1157 = vmatmul.bf16.gmra.mxu0 %v346
      %v1158 = vpop.f32.mrf.mxu0
      %v1159 = vadd.f32 %v1130, %v1158
      %v1160 = vpop.f32.mrf.mxu0
      %v1161 = vadd.f32 %v1132, %v1160
      %1162 = vmatmul.bf16.gmra.mxu0 %v352
      %v1163 = vpop.f32.mrf.mxu0
      %v1164 = vadd.f32 %v1135, %v1163
      %v1165 = vpop.f32.mrf.mxu0
      %v1166 = vadd.f32 %v1137, %v1165
      %1167 = vmatmul.bf16.gmra.mxu0 %v358
      %v1168 = vpop.f32.mrf.mxu0
      %v1169 = vadd.f32 %v1140, %v1168
      %v1170 = vpop.f32.mrf.mxu0
      %v1171 = vadd.f32 %v1142, %v1170
      %1172 = vmatmul.bf16.gmra.mxu0 %v364
      %v1173 = vpop.f32.mrf.mxu0
      %v1174 = vadd.f32 %v1145, %v1173
      %v1175 = vpop.f32.mrf.mxu0
      %v1176 = vadd.f32 %v1147, %v1175
      %1177 = vdwg.mxu0
      %1178 = vmatpush.bf16.msra.mxu0 %v873
      %1179 = vmatpush.bf16.msra.mxu0 %v872
      %1180 = vmatpush.bf16.msra.mxu0 %v871
      %1181 = vmatpush.bf16.msra.mxu0 %v870
      %1182 = vmatpush.bf16.msra.mxu0 %v869
      %1183 = vmatpush.bf16.msra.mxu0 %v868
      %1184 = vmatpush.bf16.msra.mxu0 %v867
      %1185 = vmatpush.bf16.msra.mxu0 %v866
      %1186 = vmatmul.bf16.gmra.mxu0 %v347
      %v1187 = vpop.f32.mrf.mxu0
      %v1188 = vadd.f32 %v1159, %v1187
      %v1189 = vpop.f32.mrf.mxu0
      %v1190 = vadd.f32 %v1161, %v1189
      %1191 = vmatmul.bf16.gmra.mxu0 %v353
      %v1192 = vpop.f32.mrf.mxu0
      %v1193 = vadd.f32 %v1164, %v1192
      %v1194 = vpop.f32.mrf.mxu0
      %v1195 = vadd.f32 %v1166, %v1194
      %1196 = vmatmul.bf16.gmra.mxu0 %v359
      %v1197 = vpop.f32.mrf.mxu0
      %v1198 = vadd.f32 %v1169, %v1197
      %v1199 = vpop.f32.mrf.mxu0
      %v1200 = vadd.f32 %v1171, %v1199
      %1201 = vmatmul.bf16.gmra.mxu0 %v365
      %v1202 = vpop.f32.mrf.mxu0
      %v1203 = vadd.f32 %v1174, %v1202
      %v1204 = vpop.f32.mrf.mxu0
      %v1205 = vadd.f32 %v1176, %v1204
      %1206 = vdwg.mxu0
      %v1207 = vmax.f32 %v1188, 0.0
      %v1208 = vmax.f32 %v1190, 0.0
      %v1209 = vmax.f32 %v1193, 0.0
      %v1210 = vmax.f32 %v1195, 0.0
      %v1211 = vmax.f32 %v1198, 0.0
      %v1212 = vmax.f32 %v1200, 0.0
      %v1213 = vmax.f32 %v1203, 0.0
      %v1214 = vmax.f32 %v1205, 0.0
      %v1215 = vpack.c.bf16 %v1207, %v1207
      %v1216 = vpack.c.bf16 %v1208, %v1208
      %v1217 = vpack.c.bf16 %v1209, %v1209
      %v1218 = vpack.c.bf16 %v1210, %v1210
      %v1219 = vpack.c.bf16 %v1211, %v1211
      %v1220 = vpack.c.bf16 %v1212, %v1212
      %v1221 = vpack.c.bf16 %v1213, %v1213
      %v1222 = vpack.c.bf16 %v1214, %v1214
      %vm1223 = vcmask 257024
      %1224 = vst.msk [vmem:[%s170] sm:$0xf] %vm1223, %v1215
      %1225 = vst.msk [vmem:[%s170 + $0x8] sm:$0xf] %vm1223, %v1216
      %1226 = vst.msk [vmem:[%s170 + $0x10] sm:$0xf] %vm1223, %v1217
      %1227 = vst.msk [vmem:[%s170 + $0x18] sm:$0xf] %vm1223, %v1218
      %1228 = vst.msk [vmem:[%s170 + $0x20] sm:$0xf] %vm1223, %v1219
      %1229 = vst.msk [vmem:[%s170 + $0x28] sm:$0xf] %vm1223, %v1220
      %1230 = vst.msk [vmem:[%s170 + $0x30] sm:$0xf] %vm1223, %v1221
      %1231 = vst.msk [vmem:[%s170 + $0x38] sm:$0xf] %vm1223, %v1222
      %1240 = vrot.lane.b32.xlu0 %v1215, 96
      %v1241 = vpop.permute.xlu0 %1240
      %1242 = vrot.lane.b32.xlu0 %v1216, 96
      %v1243 = vpop.permute.xlu0 %1242
      %1244 = vrot.lane.b32.xlu0 %v1217, 96
      %v1245 = vpop.permute.xlu0 %1244
      %1246 = vrot.lane.b32.xlu0 %v1218, 96
      %v1247 = vpop.permute.xlu0 %1246
      %1248 = vrot.lane.b32.xlu0 %v1219, 96
      %v1249 = vpop.permute.xlu0 %1248
      %1250 = vrot.lane.b32.xlu0 %v1220, 96
      %v1251 = vpop.permute.xlu0 %1250
      %1252 = vrot.lane.b32.xlu0 %v1221, 96
      %v1253 = vpop.permute.xlu0 %1252
      %1254 = vrot.lane.b32.xlu0 %v1222, 96
      %v1255 = vpop.permute.xlu0 %1254
      %s1264 = scalar_lea.vmem %s170, 4
      %1265 = vst.msk [vmem:[%s1264] sm:$0xf] %vm1223, %v1241
      %1266 = vst.msk [vmem:[%s1264 + $0x8] sm:$0xf] %vm1223, %v1243
      %1267 = vst.msk [vmem:[%s1264 + $0x10] sm:$0xf] %vm1223, %v1245
      %1268 = vst.msk [vmem:[%s1264 + $0x18] sm:$0xf] %vm1223, %v1247
      %1269 = vst.msk [vmem:[%s1264 + $0x20] sm:$0xf] %vm1223, %v1249
      %1270 = vst.msk [vmem:[%s1264 + $0x28] sm:$0xf] %vm1223, %v1251
      %1271 = vst.msk [vmem:[%s1264 + $0x30] sm:$0xf] %vm1223, %v1253
      %1272 = vst.msk [vmem:[%s1264 + $0x38] sm:$0xf] %vm1223, %v1255
      %p1273 = scmp.lt.s32.totalorder %s14, 1
      %s1274 = scalar_select %p1273, %s14, 1
      %s1275 = smul.addr %s1274, 16
      %s1276 = smul.addr %s1275, 4
      %s1277 = scalar_lea.vmem %s3, %s1276
      // Predicated region
      $region33: #{_lambda_.4} parent=31 // pred_check
        %p1278 = pneg %p100
      $region34: #{_lambda_.4} parent=31 // pred_check_branch
        %1280 = sbr.rel (%p1278) target = $region36
      $region35: #{_lambda_.4} parent=31 // pred_region
        _
      $region36: #{_lambda_.4} parent=31 // pred_fallthru
        _
    $region32: #{_lambda_.4} parent=5 // pred_fallthru
      _
    %p1281 = scmp.le.s32.totalorder 2, %s9
    // Predicated region
    $region37: #{_lambda_.4} parent=5 // pred_check
      %p1282 = pneg %p1281
    $region38: #{_lambda_.4} parent=5 // pred_check_branch
      %1284 = sbr.rel (%p1282) target = $region40
    $region39: #{_lambda_.4} parent=5 // pred_region
      %s1285 = ssub.s32 %s9, 2
      // Predicated region
      $region41: #{_lambda_.4} parent=39 // pred_check
        %p1286 = pneg %p106
      $region42: #{_lambda_.4} parent=39 // pred_check_branch
        %1288 = sbr.rel (%p1286) target = $region44
      $region43: #{_lambda_.4} parent=39 // pred_region
        %p1289 = scmp.lt.s32.totalorder %s15, 1
        %s1290 = scalar_select %p1289, %s15, 1
        %s1291 = smul.addr %s1290, 16
        %s1292 = smul.addr %s1291, 4
        %s1293 = scalar_lea.vmem %s3, %s1292
      $region44: #{_lambda_.4} parent=39 // pred_fallthru
        _
    $region40: #{_lambda_.4} parent=5 // pred_fallthru
      _
  $region6: #{_lambda_.4} parent=0 // loop_footer
    %s13 = sadd.s32 1, %s9
  $region7: #{_lambda_.4} parent=0 // loop_footer_branch
    %8 = sbr.rel target = $region3
  $region8: #{_lambda_.4} parent=0 // loop_exit
    _

// kernel: _lambda_.3
$region0: #{_lambda_.3}
  #allocation0 [shape = 'u32[]', space=smem, size = 0x4, offset = 0x4, fixed_abs, tag = 'smem constant byte address 0x4 - core index']
  #allocation1 [shape = 'u32[72,128]{1,0:T(1,128)}', space=vmem, size = 0x9000, scoped, tag = 'internal scratch']
  #allocation2 [shape = 'f32[1,10,10,128]{3,2,1,0:T(8,128)}', space=vmem, size = 0x14000, scoped, tag = 'scratch operand']
  #allocation3 [shape = 'f32[1,10,10,128]{3,2,1,0:T(8,128)}', space=vmem, size = 0x14000, scoped, tag = 'scratch operand']
  %s0 = inlined_call_operand.vmem [shape: bf16[2,8,8,4], index: 0, kind: input, shape index: {}]
  %s1 = inlined_call_operand.vmem [shape: bf16[1152,32], index: 1, kind: input, shape index: {}]
  %s2 = inlined_call_operand.vmem [shape: f32[1,32], index: 2, kind: input, shape index: {}]
  %s3 = inlined_call_operand.vmem [shape: bf16[2,1152,16], index: 3, kind: input, shape index: {}]
  %s4 = inlined_call_operand.vmem [shape: bf16[2,16,32], index: 4, kind: input, shape index: {}]
  %s5 = inlined_call_operand.vmem [shape: bf16[2,8,8,32], index: 5, kind: output, shape index: {}]
  %s6 = sld [smem:[#allocation0]]
  $region53: #{_lambda_.3} parent=0
    _
  %s8 = ssub.s32 1, %s6
  %s9 = scalar_select 0, %s8, %s6
  loop: start=0, step=1, limit=4
  $region2: #{_lambda_.3} parent=0 // loop_pre_header
    _
  $region3: #{_lambda_.3} parent=0 // loop_header
    %s11 = sphi 0, %s15
    %p12 = scmp.ge.s32.totalorder %s11, 4
    %s21 = sphi 0, %s23
    %s24 = sphi 0, %s21
    %s25 = sphi 0, %s24
    %s41 = sphi 0, %s25
    %s45 = sphi 0, %s45
    %s47 = sphi 0, %s45
    %s48 = sphi 0, %s47
    %s62 = sphi 0, %s48
    %s66 = sphi 0, %s66
    %s68 = sphi 0, %s66
    %s69 = sphi 0, %s68
    %s83 = sphi 0, %s69
    %s87 = sphi 0, %s87
    %s89 = sphi 0, %s87
    %s90 = sphi 0, %s89
    %s104 = sphi 0, %s90
    %s108 = sphi 0, %s108
    %s110 = sphi 0, %s108
    %s111 = sphi 0, %s110
    %s125 = sphi 0, %s111
    %s131 = sphi 0, %s133
    %s134 = sphi 0, %s131
    %s135 = sphi 0, %s134
    %s151 = sphi 0, %s135
  $region4: #{_lambda_.3} parent=0 // loop_header_branch
    %14 = sbr.rel (%p12) target = $region8
  $region5: #{_lambda_.3} parent=0 // loop_body
    %s16 = ssub.s32 %s11, 1
    %s17 = ssub.s32 %s11, 2
    %s18 = sadd.s32 %s11, 1
    %s19 = ssub.s32 %s11, %s18
    %p20 = scmp.eq.s32.totalorder %s19, 0
    %s22 = sadd.s32 %s21, 1
    %s23 = scalar_select %p20, %s21, %s22
    %p26 = pneg %p20
    %p27 = scmp.eq.s32.totalorder %s11, 1
    %p28 = por %p26, %p27
    %p29 = scmp.ne.s32.totalorder %s21, %s24
    %p30 = scmp.eq.s32.totalorder %s11, 0
    %p31 = por %p29, %p30
    %p32 = scmp.ne.s32.totalorder %s21, %s24
    %p33 = scmp.eq.s32.totalorder %s16, 1
    %p34 = por %p32, %p33
    %p35 = scmp.ne.s32.totalorder %s24, %s25
    %p36 = scmp.eq.s32.totalorder %s16, 0
    %p37 = por %p35, %p36
    %p38 = scmp.ne.s32.totalorder %s24, %s25
    %p39 = scmp.eq.s32.totalorder %s17, 1
    %p40 = por %p38, %p39
    %p42 = scmp.ne.s32.totalorder %s25, %s41
    %p43 = scmp.eq.s32.totalorder %s17, 0
    %p44 = por %p42, %p43
    %s46 = sadd.s32 %s45, 1
    %p49 = scmp.eq.s32.totalorder %s11, 1
    %p50 = scmp.ne.s32.totalorder %s45, %s47
    %p51 = scmp.eq.s32.totalorder %s11, 0
    %p52 = por %p50, %p51
    %p53 = scmp.ne.s32.totalorder %s45, %s47
    %p54 = scmp.eq.s32.totalorder %s16, 1
    %p55 = por %p53, %p54
    %p56 = scmp.ne.s32.totalorder %s47, %s48
    %p57 = scmp.eq.s32.totalorder %s16, 0
    %p58 = por %p56, %p57
    %p59 = scmp.ne.s32.totalorder %s47, %s48
    %p60 = scmp.eq.s32.totalorder %s17, 1
    %p61 = por %p59, %p60
    %p63 = scmp.ne.s32.totalorder %s48, %s62
    %p64 = scmp.eq.s32.totalorder %s17, 0
    %p65 = por %p63, %p64
    %s67 = sadd.s32 %s66, 1
    %p70 = scmp.eq.s32.totalorder %s11, 1
    %p71 = scmp.ne.s32.totalorder %s66, %s68
    %p72 = scmp.eq.s32.totalorder %s11, 0
    %p73 = por %p71, %p72
    %p74 = scmp.ne.s32.totalorder %s66, %s68
    %p75 = scmp.eq.s32.totalorder %s16, 1
    %p76 = por %p74, %p75
    %p77 = scmp.ne.s32.totalorder %s68, %s69
    %p78 = scmp.eq.s32.totalorder %s16, 0
    %p79 = por %p77, %p78
    %p80 = scmp.ne.s32.totalorder %s68, %s69
    %p81 = scmp.eq.s32.totalorder %s17, 1
    %p82 = por %p80, %p81
    %p84 = scmp.ne.s32.totalorder %s69, %s83
    %p85 = scmp.eq.s32.totalorder %s17, 0
    %p86 = por %p84, %p85
    %s88 = sadd.s32 %s87, 1
    %p91 = scmp.eq.s32.totalorder %s11, 1
    %p92 = scmp.ne.s32.totalorder %s87, %s89
    %p93 = scmp.eq.s32.totalorder %s11, 0
    %p94 = por %p92, %p93
    %p95 = scmp.ne.s32.totalorder %s87, %s89
    %p96 = scmp.eq.s32.totalorder %s16, 1
    %p97 = por %p95, %p96
    %p98 = scmp.ne.s32.totalorder %s89, %s90
    %p99 = scmp.eq.s32.totalorder %s16, 0
    %p100 = por %p98, %p99
    %p101 = scmp.ne.s32.totalorder %s89, %s90
    %p102 = scmp.eq.s32.totalorder %s17, 1
    %p103 = por %p101, %p102
    %p105 = scmp.ne.s32.totalorder %s90, %s104
    %p106 = scmp.eq.s32.totalorder %s17, 0
    %p107 = por %p105, %p106
    %s109 = sadd.s32 %s108, 1
    %p112 = scmp.eq.s32.totalorder %s11, 1
    %p113 = scmp.ne.s32.totalorder %s108, %s110
    %p114 = scmp.eq.s32.totalorder %s11, 0
    %p115 = por %p113, %p114
    %p116 = scmp.ne.s32.totalorder %s108, %s110
    %p117 = scmp.eq.s32.totalorder %s16, 1
    %p118 = por %p116, %p117
    %p119 = scmp.ne.s32.totalorder %s110, %s111
    %p120 = scmp.eq.s32.totalorder %s16, 0
    %p121 = por %p119, %p120
    %p122 = scmp.ne.s32.totalorder %s110, %s111
    %p123 = scmp.eq.s32.totalorder %s17, 1
    %p124 = por %p122, %p123
    %p126 = scmp.ne.s32.totalorder %s111, %s125
    %p127 = scmp.eq.s32.totalorder %s17, 0
    %p128 = por %p126, %p127
    %s129 = ssub.s32 %s11, %s18
    %p130 = scmp.eq.s32.totalorder %s129, 0
    %s132 = sadd.s32 %s131, 1
    %s133 = scalar_select %p130, %s131, %s132
    %p136 = pneg %p130
    %p137 = scmp.eq.s32.totalorder %s11, 1
    %p138 = por %p136, %p137
    %p139 = scmp.ne.s32.totalorder %s131, %s134
    %p140 = scmp.eq.s32.totalorder %s11, 0
    %p141 = por %p139, %p140
    %p142 = scmp.ne.s32.totalorder %s131, %s134
    %p143 = scmp.eq.s32.totalorder %s16, 1
    %p144 = por %p142, %p143
    %p145 = scmp.ne.s32.totalorder %s134, %s135
    %p146 = scmp.eq.s32.totalorder %s16, 0
    %p147 = por %p145, %p146
    %p148 = scmp.ne.s32.totalorder %s134, %s135
    %p149 = scmp.eq.s32.totalorder %s17, 1
    %p150 = por %p148, %p149
    %p152 = scmp.ne.s32.totalorder %s135, %s151
    %p153 = scmp.eq.s32.totalorder %s17, 0
    %p154 = por %p152, %p153
    %p155 = scmp.le.s32.totalorder 1, %s11
    %p156 = scmp.lt.s32.totalorder %s11, 3
    %p157 = pnand %p155, %p156
    %p158 = pneg %p157
    // Predicated region
    $region9: #{_lambda_.3} parent=5 // pred_check
      _
    $region10: #{_lambda_.3} parent=5 // pred_check_branch
      %160 = sbr.rel (%p157) target = $region12
    $region11: #{_lambda_.3} parent=5 // pred_region
      %s161 = ssub.s32 %s11, 1
      // Predicated region
      $region13: #{_lambda_.3} parent=11 // pred_check
        %p162 = pneg %p58
      $region14: #{_lambda_.3} parent=11 // pred_check_branch
        %164 = sbr.rel (%p162) target = $region16
      $region15: #{_lambda_.3} parent=11 // pred_region
        _
      $region16: #{_lambda_.3} parent=11 // pred_fallthru
        _
      // Predicated region
      $region17: #{_lambda_.3} parent=11 // pred_check
        %p165 = pneg %p79
      $region18: #{_lambda_.3} parent=11 // pred_check_branch
        %167 = sbr.rel (%p165) target = $region20
      $region19: #{_lambda_.3} parent=11 // pred_region
        _
      $region20: #{_lambda_.3} parent=11 // pred_fallthru
        _
      // Predicated region
      $region21: #{_lambda_.3} parent=11 // pred_check
        %p168 = pneg %p100
      $region22: #{_lambda_.3} parent=11 // pred_check_branch
        %170 = sbr.rel (%p168) target = $region24
      $region23: #{_lambda_.3} parent=11 // pred_region
        _
      $region24: #{_lambda_.3} parent=11 // pred_fallthru
        _
      // Predicated region
      $region25: #{_lambda_.3} parent=11 // pred_check
        %p171 = pneg %p121
      $region26: #{_lambda_.3} parent=11 // pred_check_branch
        %173 = sbr.rel (%p171) target = $region28
      $region27: #{_lambda_.3} parent=11 // pred_region
        _
      $region28: #{_lambda_.3} parent=11 // pred_fallthru
        _
    $region12: #{_lambda_.3} parent=5 // pred_fallthru
      _
    %p174 = scmp.lt.s32.totalorder %s11, 2
    // Predicated region
    $region29: #{_lambda_.3} parent=5 // pred_check
      %p175 = pneg %p174
    $region30: #{_lambda_.3} parent=5 // pred_check_branch
      %177 = sbr.rel (%p175) target = $region32
    $region31: #{_lambda_.3} parent=5 // pred_region
      // Predicated region
      $region33: #{_lambda_.3} parent=31 // pred_check
        %p178 = pneg %p31
      $region34: #{_lambda_.3} parent=31 // pred_check_branch
        %180 = sbr.rel (%p178) target = $region36
      $region35: #{_lambda_.3} parent=31 // pred_region
        %p181 = scmp.lt.s32.totalorder %s11, 1
        %s182 = scalar_select %p181, %s11, 1
        %s183 = smul.addr %s182, 8
        %s184 = smul.addr %s183, 4
        %s185 = scalar_lea.vmem %s0, %s184
      $region36: #{_lambda_.3} parent=31 // pred_fallthru
        _
    $region32: #{_lambda_.3} parent=5 // pred_fallthru
      _
    %p186 = scmp.le.s32.totalorder 1, %s11
    %p187 = scmp.lt.s32.totalorder %s11, 3
    %p188 = pnand %p186, %p187
    %p189 = pneg %p188
    // Predicated region
    $region37: #{_lambda_.3} parent=5 // pred_check
      _
    $region38: #{_lambda_.3} parent=5 // pred_check_branch
      %191 = sbr.rel (%p188) target = $region40
    $region39: #{_lambda_.3} parent=5 // pred_region
      %s192 = ssub.s32 %s11, 1
      %p193 = scmp.lt.s32.totalorder %s16, 1
      %s194 = scalar_select %p193, %s16, 1
      %s195 = smul.addr %s194, 8
      %s196 = smul.addr %s195, 4
      %s197 = scalar_lea.vmem %s0, %s196
      %p198 = pneg %p37
      %p199 = pneg %p34
      %p200 = pneg %p58
      %p201 = pneg %p55
      %p202 = pneg %p79
      %p203 = pneg %p76
      %p204 = pneg %p100
      %p205 = pneg %p97
      %p206 = pneg %p121
      %p207 = pneg %p118
      %p208 = pneg %p147
      %p209 = pneg %p144
      %p210 = scmp.lt.s32.totalorder %s16, 1
      %s211 = scalar_select %p210, %s16, 1
      %s212 = smul.addr %s211, 8
      %s213 = smul.addr %s212, 4
      %s214 = scalar_lea.vmem %s5, %s213
      %p215 = scmp.lt.s32.totalorder %s16, 1
      %s216 = scalar_select %p215, %s16, 1
      %s217 = smul.addr %s216, 8
      %s218 = smul.addr %s217, 4
      %s219 = scalar_lea.vmem %s0, %s218
      %p220 = scmp.lt.s32.totalorder %s16, 1
      %s221 = scalar_select %p220, %s16, 1
      %s222 = smul.addr %s221, 8
      %s223 = smul.addr %s222, 4
      %s224 = scalar_lea.vmem %s5, %s223
      %226 = vst [vmem:[#allocation2] sm:$0xff] 0.0
      %227 = vst [vmem:[#allocation2 + $0x8] sm:$0x3] 0.0
      %228 = vst [vmem:[#allocation2 + $0x10] sm:$0xff] 0.0
      %229 = vst [vmem:[#allocation2 + $0x18] sm:$0x3] 0.0
      %230 = vst [vmem:[#allocation2 + $0x20] sm:$0xff] 0.0
      %231 = vst [vmem:[#allocation2 + $0x28] sm:$0x3] 0.0
      %232 = vst [vmem:[#allocation2 + $0x30] sm:$0xff] 0.0
      %233 = vst [vmem:[#allocation2 + $0x38] sm:$0x3] 0.0
      %234 = vst [vmem:[#allocation2 + $0x40] sm:$0xff] 0.0
      %235 = vst [vmem:[#allocation2 + $0x48] sm:$0x3] 0.0
      %236 = vst [vmem:[#allocation2 + $0x50] sm:$0xff] 0.0
      %237 = vst [vmem:[#allocation2 + $0x58] sm:$0x3] 0.0
      %238 = vst [vmem:[#allocation2 + $0x60] sm:$0xff] 0.0
      %239 = vst [vmem:[#allocation2 + $0x68] sm:$0x3] 0.0
      %240 = vst [vmem:[#allocation2 + $0x70] sm:$0xff] 0.0
      %241 = vst [vmem:[#allocation2 + $0x78] sm:$0x3] 0.0
      %242 = vst [vmem:[#allocation2 + $0x80] sm:$0xff] 0.0
      %243 = vst [vmem:[#allocation2 + $0x88] sm:$0x3] 0.0
      %244 = vst [vmem:[#allocation2 + $0x90] sm:$0xff] 0.0
      %245 = vst [vmem:[#allocation2 + $0x98] sm:$0x3] 0.0
      %v246 = vld [vmem:[%s219] sm:$0xf]
      %v247 = vld [vmem:[%s219 + $0x4] sm:$0xf]
      %v248 = vld [vmem:[%s219 + $0x8] sm:$0xf]
      %v249 = vld [vmem:[%s219 + $0xc] sm:$0xf]
      %v250 = vld [vmem:[%s219 + $0x10] sm:$0xf]
      %v251 = vld [vmem:[%s219 + $0x14] sm:$0xf]
      %v252 = vld [vmem:[%s219 + $0x18] sm:$0xf]
      %v253 = vld [vmem:[%s219 + $0x1c] sm:$0xf]
      %v254 = vunpack.c.l.bf16 %v246
      %v255 = vunpack.c.l.bf16 %v247
      %v256 = vunpack.c.l.bf16 %v248
      %v257 = vunpack.c.l.bf16 %v249
      %v258 = vunpack.c.l.bf16 %v250
      %v259 = vunpack.c.l.bf16 %v251
      %v260 = vunpack.c.l.bf16 %v252
      %v261 = vunpack.c.l.bf16 %v253
      %s262 = scalar_lea.vmem [#allocation2], 16
      %vm263 = vcmask 31744
      %264 = vst.msk [vmem:[%s262 + $0x1] sm:$0xff] %vm263, %v254
      %265 = vst.msk [vmem:[%s262 + $0x11] sm:$0xff] %vm263, %v255
      %266 = vst.msk [vmem:[%s262 + $0x21] sm:$0xff] %vm263, %v256
      %267 = vst.msk [vmem:[%s262 + $0x31] sm:$0xff] %vm263, %v257
      %268 = vst.msk [vmem:[%s262 + $0x41] sm:$0xff] %vm263, %v258
      %269 = vst.msk [vmem:[%s262 + $0x51] sm:$0xff] %vm263, %v259
      %270 = vst.msk [vmem:[%s262 + $0x61] sm:$0xff] %vm263, %v260
      %271 = vst.msk [vmem:[%s262 + $0x71] sm:$0xff] %vm263, %v261
      %v272 = vld [vmem:[#allocation2] sm:$0xff]
      %v273 = vld [vmem:[#allocation2 + $0x8] sm:$0x3]
      %v274 = vld [vmem:[#allocation2 + $0x10] sm:$0xff]
      %v275 = vld [vmem:[#allocation2 + $0x18] sm:$0x3]
      %v276 = vld [vmem:[#allocation2 + $0x20] sm:$0xff]
      %v277 = vld [vmem:[#allocation2 + $0x28] sm:$0x3]
      %v278 = vld [vmem:[#allocation2 + $0x30] sm:$0xff]
      %v279 = vld [vmem:[#allocation2 + $0x38] sm:$0x3]
      %v280 = vld [vmem:[#allocation2 + $0x40] sm:$0xff]
      %v281 = vld [vmem:[#allocation2 + $0x48] sm:$0x3]
      %v282 = vld [vmem:[#allocation2 + $0x50] sm:$0xff]
      %v283 = vld [vmem:[#allocation2 + $0x58] sm:$0x3]
      %v284 = vld [vmem:[#allocation2 + $0x60] sm:$0xff]
      %v285 = vld [vmem:[#allocation2 + $0x68] sm:$0x3]
      %v286 = vld [vmem:[#allocation2 + $0x70] sm:$0xff]
      %v287 = vld [vmem:[#allocation2 + $0x78] sm:$0x3]
      %v288 = vld [vmem:[#allocation2 + $0x80] sm:$0xff]
      %v289 = vld [vmem:[#allocation2 + $0x88] sm:$0x3]
      %v290 = vld [vmem:[#allocation2 + $0x90] sm:$0xff]
      %v291 = vld [vmem:[#allocation2 + $0x98] sm:$0x3]
      %vm308 = vcmask 1046528
      %v309 = vrot.slane %v272, 1
      %v310 = vrot.slane %v273, 1
      %v311 = vsel %vm308, %v309, %v310
      %v312 = vrot.slane %v274, 1
      %v313 = vrot.slane %v275, 1
      %v314 = vsel %vm308, %v312, %v313
      %v315 = vrot.slane %v276, 1
      %v316 = vrot.slane %v277, 1
      %v317 = vsel %vm308, %v315, %v316
      %v318 = vrot.slane %v278, 1
      %v319 = vrot.slane %v279, 1
      %v320 = vsel %vm308, %v318, %v319
      %v321 = vrot.slane %v280, 1
      %v322 = vrot.slane %v281, 1
      %v323 = vsel %vm308, %v321, %v322
      %v324 = vrot.slane %v282, 1
      %v325 = vrot.slane %v283, 1
      %v326 = vsel %vm308, %v324, %v325
      %v327 = vrot.slane %v284, 1
      %v328 = vrot.slane %v285, 1
      %v329 = vsel %vm308, %v327, %v328
      %v330 = vrot.slane %v286, 1
      %v331 = vrot.slane %v287, 1
      %v332 = vsel %vm308, %v330, %v331
      %vm341 = vcmask 1045504
      %v342 = vrot.slane %v272, 2
      %v343 = vrot.slane %v273, 2
      %v344 = vsel %vm341, %v342, %v343
      %v345 = vrot.slane %v274, 2
      %v346 = vrot.slane %v275, 2
      %v347 = vsel %vm341, %v345, %v346
      %v348 = vrot.slane %v276, 2
      %v349 = vrot.slane %v277, 2
      %v350 = vsel %vm341, %v348, %v349
      %v351 = vrot.slane %v278, 2
      %v352 = vrot.slane %v279, 2
      %v353 = vsel %vm341, %v351, %v352
      %v354 = vrot.slane %v280, 2
      %v355 = vrot.slane %v281, 2
      %v356 = vsel %vm341, %v354, %v355
      %v357 = vrot.slane %v282, 2
      %v358 = vrot.slane %v283, 2
      %v359 = vsel %vm341, %v357, %v358
      %v360 = vrot.slane %v284, 2
      %v361 = vrot.slane %v285, 2
      %v362 = vsel %vm341, %v360, %v361
      %v363 = vrot.slane %v286, 2
      %v364 = vrot.slane %v287, 2
      %v365 = vsel %vm341, %v363, %v364
      %v376 = vrot.slane %v288, 1
      %v377 = vrot.slane %v289, 1
      %v378 = vsel %vm308, %v376, %v377
      %v380 = vrot.slane %v288, 2
      %v381 = vrot.slane %v289, 2
      %v382 = vsel %vm341, %v380, %v381
      %v386 = vrot.slane %v290, 1
      %v387 = vrot.slane %v291, 1
      %v388 = vsel %vm308, %v386, %v387
      %v390 = vrot.slane %v290, 2
      %v391 = vrot.slane %v291, 2
      %v392 = vsel %vm341, %v390, %v391
      %v394 = vpack.c.bf16 %v274, %v272
      %v395 = vpack.c.bf16 %v314, %v311
      %v396 = vpack.c.bf16 %v347, %v344
      %v397 = vpack.c.bf16 %v276, %v274
      %v398 = vpack.c.bf16 %v317, %v314
      %v399 = vpack.c.bf16 %v350, %v347
      %v400 = vpack.c.bf16 %v278, %v276
      %v401 = vpack.c.bf16 %v320, %v317
      %v402 = vpack.c.bf16 %v353, %v350
      %v403 = vpack.c.bf16 %v280, %v278
      %v404 = vpack.c.bf16 %v323, %v320
      %v405 = vpack.c.bf16 %v356, %v353
      %v406 = vpack.c.bf16 %v282, %v280
      %v407 = vpack.c.bf16 %v326, %v323
      %v408 = vpack.c.bf16 %v359, %v356
      %v409 = vpack.c.bf16 %v284, %v282
      %v410 = vpack.c.bf16 %v329, %v326
      %v411 = vpack.c.bf16 %v362, %v359
      %v412 = vpack.c.bf16 %v286, %v284
      %v413 = vpack.c.bf16 %v332, %v329
      %v414 = vpack.c.bf16 %v365, %v362
      %v415 = vpack.c.bf16 %v288, %v286
      %v416 = vpack.c.bf16 %v378, %v332
      %v417 = vpack.c.bf16 %v382, %v365
      %v418 = vpack.c.bf16 %v290, %v288
      %v419 = vpack.c.bf16 %v388, %v378
      %v420 = vpack.c.bf16 %v392, %v382
      %v421 = vld [vmem:[%s1] sm:$0xf]
      %v422 = vld [vmem:[%s1 + $0x4] sm:$0xf]
      %v423 = vld [vmem:[%s1 + $0x8] sm:$0xf]
      %v424 = vld [vmem:[%s1 + $0xc] sm:$0xf]
      %v425 = vld [vmem:[%s1 + $0x10] sm:$0xf]
      %v426 = vld [vmem:[%s1 + $0x14] sm:$0xf]
      %v427 = vld [vmem:[%s1 + $0x18] sm:$0xf]
      %v428 = vld [vmem:[%s1 + $0x1c] sm:$0xf]
      %v429 = vld [vmem:[%s1 + $0x20] sm:$0xf]
      %v430 = vld [vmem:[%s1 + $0x24] sm:$0xf]
      %v431 = vld [vmem:[%s1 + $0x28] sm:$0xf]
      %v432 = vld [vmem:[%s1 + $0x2c] sm:$0xf]
      %v433 = vld [vmem:[%s1 + $0x30] sm:$0xf]
      %v434 = vld [vmem:[%s1 + $0x34] sm:$0xf]
      %v435 = vld [vmem:[%s1 + $0x38] sm:$0xf]
      %v436 = vld [vmem:[%s1 + $0x3c] sm:$0xf]
      %v437 = vld [vmem:[%s1 + $0x40] sm:$0xf]
      %v438 = vld [vmem:[%s1 + $0x44] sm:$0xf]
      %v439 = vld [vmem:[%s1 + $0x48] sm:$0xf]
      %v440 = vld [vmem:[%s1 + $0x4c] sm:$0xf]
      %v441 = vld [vmem:[%s1 + $0x50] sm:$0xf]
      %v442 = vld [vmem:[%s1 + $0x54] sm:$0xf]
      %v443 = vld [vmem:[%s1 + $0x58] sm:$0xf]
      %v444 = vld [vmem:[%s1 + $0x5c] sm:$0xf]
      %v445 = vld [vmem:[%s1 + $0x60] sm:$0xf]
      %v446 = vld [vmem:[%s1 + $0x64] sm:$0xf]
      %v447 = vld [vmem:[%s1 + $0x68] sm:$0xf]
      %v448 = vld [vmem:[%s1 + $0x6c] sm:$0xf]
      %v449 = vld [vmem:[%s1 + $0x70] sm:$0xf]
      %v450 = vld [vmem:[%s1 + $0x74] sm:$0xf]
      %v451 = vld [vmem:[%s1 + $0x78] sm:$0xf]
      %v452 = vld [vmem:[%s1 + $0x7c] sm:$0xf]
      %v453 = vld [vmem:[%s1 + $0x80] sm:$0xf]
      %v454 = vld [vmem:[%s1 + $0x84] sm:$0xf]
      %v455 = vld [vmem:[%s1 + $0x88] sm:$0xf]
      %v456 = vld [vmem:[%s1 + $0x8c] sm:$0xf]
      %v457 = vld [vmem:[%s1 + $0x90] sm:$0xf]
      %v458 = vld [vmem:[%s1 + $0x94] sm:$0xf]
      %v459 = vld [vmem:[%s1 + $0x98] sm:$0xf]
      %v460 = vld [vmem:[%s1 + $0x9c] sm:$0xf]
      %v461 = vld [vmem:[%s1 + $0xa0] sm:$0xf]
      %v462 = vld [vmem:[%s1 + $0xa4] sm:$0xf]
      %v463 = vld [vmem:[%s1 + $0xa8] sm:$0xf]
      %v464 = vld [vmem:[%s1 + $0xac] sm:$0xf]
      %v465 = vld [vmem:[%s1 + $0xb0] sm:$0xf]
      %v466 = vld [vmem:[%s1 + $0xb4] sm:$0xf]
      %v467 = vld [vmem:[%s1 + $0xb8] sm:$0xf]
      %v468 = vld [vmem:[%s1 + $0xbc] sm:$0xf]
      %v469 = vld [vmem:[%s1 + $0xc0] sm:$0xf]
      %v470 = vld [vmem:[%s1 + $0xc4] sm:$0xf]
      %v471 = vld [vmem:[%s1 + $0xc8] sm:$0xf]
      %v472 = vld [vmem:[%s1 + $0xcc] sm:$0xf]
      %v473 = vld [vmem:[%s1 + $0xd0] sm:$0xf]
      %v474 = vld [vmem:[%s1 + $0xd4] sm:$0xf]
      %v475 = vld [vmem:[%s1 + $0xd8] sm:$0xf]
      %v476 = vld [vmem:[%s1 + $0xdc] sm:$0xf]
      %v477 = vld [vmem:[%s1 + $0xe0] sm:$0xf]
      %v478 = vld [vmem:[%s1 + $0xe4] sm:$0xf]
      %v479 = vld [vmem:[%s1 + $0xe8] sm:$0xf]
      %v480 = vld [vmem:[%s1 + $0xec] sm:$0xf]
      %v481 = vld [vmem:[%s1 + $0xf0] sm:$0xf]
      %v482 = vld [vmem:[%s1 + $0xf4] sm:$0xf]
      %v483 = vld [vmem:[%s1 + $0xf8] sm:$0xf]
      %v484 = vld [vmem:[%s1 + $0xfc] sm:$0xf]
      %v485 = vld [vmem:[%s1 + $0x100] sm:$0xf]
      %v486 = vld [vmem:[%s1 + $0x104] sm:$0xf]
      %v487 = vld [vmem:[%s1 + $0x108] sm:$0xf]
      %v488 = vld [vmem:[%s1 + $0x10c] sm:$0xf]
      %v489 = vld [vmem:[%s1 + $0x110] sm:$0xf]
      %v490 = vld [vmem:[%s1 + $0x114] sm:$0xf]
      %v491 = vld [vmem:[%s1 + $0x118] sm:$0xf]
      %v492 = vld [vmem:[%s1 + $0x11c] sm:$0xf]
      %v493 = vld [vmem:[%s1 + $0x120] sm:$0xf]
      %v494 = vld [vmem:[%s1 + $0x124] sm:$0xf]
      %v495 = vld [vmem:[%s1 + $0x128] sm:$0xf]
      %v496 = vld [vmem:[%s1 + $0x12c] sm:$0xf]
      %v497 = vld [vmem:[%s1 + $0x130] sm:$0xf]
      %v498 = vld [vmem:[%s1 + $0x134] sm:$0xf]
      %v499 = vld [vmem:[%s1 + $0x138] sm:$0xf]
      %v500 = vld [vmem:[%s1 + $0x13c] sm:$0xf]
      %v501 = vld [vmem:[%s1 + $0x140] sm:$0xf]
      %v502 = vld [vmem:[%s1 + $0x144] sm:$0xf]
      %v503 = vld [vmem:[%s1 + $0x148] sm:$0xf]
      %v504 = vld [vmem:[%s1 + $0x14c] sm:$0xf]
      %v505 = vld [vmem:[%s1 + $0x150] sm:$0xf]
      %v506 = vld [vmem:[%s1 + $0x154] sm:$0xf]
      %v507 = vld [vmem:[%s1 + $0x158] sm:$0xf]
      %v508 = vld [vmem:[%s1 + $0x15c] sm:$0xf]
      %v509 = vld [vmem:[%s1 + $0x160] sm:$0xf]
      %v510 = vld [vmem:[%s1 + $0x164] sm:$0xf]
      %v511 = vld [vmem:[%s1 + $0x168] sm:$0xf]
      %v512 = vld [vmem:[%s1 + $0x16c] sm:$0xf]
      %v513 = vld [vmem:[%s1 + $0x170] sm:$0xf]
      %v514 = vld [vmem:[%s1 + $0x174] sm:$0xf]
      %v515 = vld [vmem:[%s1 + $0x178] sm:$0xf]
      %v516 = vld [vmem:[%s1 + $0x17c] sm:$0xf]
      %v517 = vld [vmem:[%s1 + $0x180] sm:$0xf]
      %v518 = vld [vmem:[%s1 + $0x184] sm:$0xf]
      %v519 = vld [vmem:[%s1 + $0x188] sm:$0xf]
      %v520 = vld [vmem:[%s1 + $0x18c] sm:$0xf]
      %v521 = vld [vmem:[%s1 + $0x190] sm:$0xf]
      %v522 = vld [vmem:[%s1 + $0x194] sm:$0xf]
      %v523 = vld [vmem:[%s1 + $0x198] sm:$0xf]
      %v524 = vld [vmem:[%s1 + $0x19c] sm:$0xf]
      %v525 = vld [vmem:[%s1 + $0x1a0] sm:$0xf]
      %v526 = vld [vmem:[%s1 + $0x1a4] sm:$0xf]
      %v527 = vld [vmem:[%s1 + $0x1a8] sm:$0xf]
      %v528 = vld [vmem:[%s1 + $0x1ac] sm:$0xf]
      %v529 = vld [vmem:[%s1 + $0x1b0] sm:$0xf]
      %v530 = vld [vmem:[%s1 + $0x1b4] sm:$0xf]
      %v531 = vld [vmem:[%s1 + $0x1b8] sm:$0xf]
      %v532 = vld [vmem:[%s1 + $0x1bc] sm:$0xf]
      %v533 = vld [vmem:[%s1 + $0x1c0] sm:$0xf]
      %v534 = vld [vmem:[%s1 + $0x1c4] sm:$0xf]
      %v535 = vld [vmem:[%s1 + $0x1c8] sm:$0xf]
      %v536 = vld [vmem:[%s1 + $0x1cc] sm:$0xf]
      %v537 = vld [vmem:[%s1 + $0x1d0] sm:$0xf]
      %v538 = vld [vmem:[%s1 + $0x1d4] sm:$0xf]
      %v539 = vld [vmem:[%s1 + $0x1d8] sm:$0xf]
      %v540 = vld [vmem:[%s1 + $0x1dc] sm:$0xf]
      %v541 = vld [vmem:[%s1 + $0x1e0] sm:$0xf]
      %v542 = vld [vmem:[%s1 + $0x1e4] sm:$0xf]
      %v543 = vld [vmem:[%s1 + $0x1e8] sm:$0xf]
      %v544 = vld [vmem:[%s1 + $0x1ec] sm:$0xf]
      %v545 = vld [vmem:[%s1 + $0x1f0] sm:$0xf]
      %v546 = vld [vmem:[%s1 + $0x1f4] sm:$0xf]
      %v547 = vld [vmem:[%s1 + $0x1f8] sm:$0xf]
      %v548 = vld [vmem:[%s1 + $0x1fc] sm:$0xf]
      %v549 = vld [vmem:[%s1 + $0x200] sm:$0xf]
      %v550 = vld [vmem:[%s1 + $0x204] sm:$0xf]
      %v551 = vld [vmem:[%s1 + $0x208] sm:$0xf]
      %v552 = vld [vmem:[%s1 + $0x20c] sm:$0xf]
      %v553 = vld [vmem:[%s1 + $0x210] sm:$0xf]
      %v554 = vld [vmem:[%s1 + $0x214] sm:$0xf]
      %v555 = vld [vmem:[%s1 + $0x218] sm:$0xf]
      %v556 = vld [vmem:[%s1 + $0x21c] sm:$0xf]
      %v557 = vld [vmem:[%s1 + $0x220] sm:$0xf]
      %v558 = vld [vmem:[%s1 + $0x224] sm:$0xf]
      %v559 = vld [vmem:[%s1 + $0x228] sm:$0xf]
      %v560 = vld [vmem:[%s1 + $0x22c] sm:$0xf]
      %v561 = vld [vmem:[%s1 + $0x230] sm:$0xf]
      %v562 = vld [vmem:[%s1 + $0x234] sm:$0xf]
      %v563 = vld [vmem:[%s1 + $0x238] sm:$0xf]
      %v564 = vld [vmem:[%s1 + $0x23c] sm:$0xf]
      %v565 = vld [vmem:[%s2] sm:$0x1]
      %v567 = vperm.slane %v565, 0
      %v713 = vunpack.c.l.b16 %v421
      %v714 = vunpack.c.l.b16 %v422
      %v715 = vunpack.c.l.b16 %v423
      %v716 = vunpack.c.l.b16 %v424
      %v717 = vunpack.c.l.b16 %v425
      %v718 = vunpack.c.l.b16 %v426
      %v719 = vunpack.c.l.b16 %v427
      %v720 = vunpack.c.l.b16 %v428
      %v721 = vunpack.c.l.b16 %v429
      %v722 = vunpack.c.l.b16 %v430
      %v723 = vunpack.c.l.b16 %v431
      %v724 = vunpack.c.l.b16 %v432
      %v725 = vunpack.c.l.b16 %v433
      %v726 = vunpack.c.l.b16 %v434
      %v727 = vunpack.c.l.b16 %v435
      %v728 = vunpack.c.l.b16 %v436
      %v729 = vunpack.c.l.b16 %v437
      %v730 = vunpack.c.l.b16 %v438
      %v731 = vunpack.c.l.b16 %v439
      %v732 = vunpack.c.l.b16 %v440
      %v733 = vunpack.c.l.b16 %v441
      %v734 = vunpack.c.l.b16 %v442
      %v735 = vunpack.c.l.b16 %v443
      %v736 = vunpack.c.l.b16 %v444
      %v737 = vunpack.c.l.b16 %v445
      %v738 = vunpack.c.l.b16 %v446
      %v739 = vunpack.c.l.b16 %v447
      %v740 = vunpack.c.l.b16 %v448
      %v741 = vunpack.c.l.b16 %v449
      %v742 = vunpack.c.l.b16 %v450
      %v743 = vunpack.c.l.b16 %v451
      %v744 = vunpack.c.l.b16 %v452
      %v745 = vunpack.c.l.b16 %v453
      %v746 = vunpack.c.l.b16 %v454
      %v747 = vunpack.c.l.b16 %v455
      %v748 = vunpack.c.l.b16 %v456
      %v749 = vunpack.c.l.b16 %v457
      %v750 = vunpack.c.l.b16 %v458
      %v751 = vunpack.c.l.b16 %v459
      %v752 = vunpack.c.l.b16 %v460
      %v753 = vunpack.c.l.b16 %v461
      %v754 = vunpack.c.l.b16 %v462
      %v755 = vunpack.c.l.b16 %v463
      %v756 = vunpack.c.l.b16 %v464
      %v757 = vunpack.c.l.b16 %v465
      %v758 = vunpack.c.l.b16 %v466
      %v759 = vunpack.c.l.b16 %v467
      %v760 = vunpack.c.l.b16 %v468
      %v761 = vunpack.c.l.b16 %v469
      %v762 = vunpack.c.l.b16 %v470
      %v763 = vunpack.c.l.b16 %v471
      %v764 = vunpack.c.l.b16 %v472
      %v765 = vunpack.c.l.b16 %v473
      %v766 = vunpack.c.l.b16 %v474
      %v767 = vunpack.c.l.b16 %v475
      %v768 = vunpack.c.l.b16 %v476
      %v769 = vunpack.c.l.b16 %v477
      %v770 = vunpack.c.l.b16 %v478
      %v771 = vunpack.c.l.b16 %v479
      %v772 = vunpack.c.l.b16 %v480
      %v773 = vunpack.c.l.b16 %v481
      %v774 = vunpack.c.l.b16 %v482
      %v775 = vunpack.c.l.b16 %v483
      %v776 = vunpack.c.l.b16 %v484
      %v777 = vunpack.c.l.b16 %v485
      %v778 = vunpack.c.l.b16 %v486
      %v779 = vunpack.c.l.b16 %v487
      %v780 = vunpack.c.l.b16 %v488
      %v781 = vunpack.c.l.b16 %v489
      %v782 = vunpack.c.l.b16 %v490
      %v783 = vunpack.c.l.b16 %v491
      %v784 = vunpack.c.l.b16 %v492
      %v785 = vunpack.c.l.b16 %v493
      %v786 = vunpack.c.l.b16 %v494
      %v787 = vunpack.c.l.b16 %v495
      %v788 = vunpack.c.l.b16 %v496
      %v789 = vunpack.c.l.b16 %v497
      %v790 = vunpack.c.l.b16 %v498
      %v791 = vunpack.c.l.b16 %v499
      %v792 = vunpack.c.l.b16 %v500
      %v793 = vunpack.c.l.b16 %v501
      %v794 = vunpack.c.l.b16 %v502
      %v795 = vunpack.c.l.b16 %v503
      %v796 = vunpack.c.l.b16 %v504
      %v797 = vunpack.c.l.b16 %v505
      %v798 = vunpack.c.l.b16 %v506
      %v799 = vunpack.c.l.b16 %v507
      %v800 = vunpack.c.l.b16 %v508
      %v801 = vunpack.c.l.b16 %v509
      %v802 = vunpack.c.l.b16 %v510
      %v803 = vunpack.c.l.b16 %v511
      %v804 = vunpack.c.l.b16 %v512
      %v805 = vunpack.c.l.b16 %v513
      %v806 = vunpack.c.l.b16 %v514
      %v807 = vunpack.c.l.b16 %v515
      %v808 = vunpack.c.l.b16 %v516
      %v809 = vunpack.c.l.b16 %v517
      %v810 = vunpack.c.l.b16 %v518
      %v811 = vunpack.c.l.b16 %v519
      %v812 = vunpack.c.l.b16 %v520
      %v813 = vunpack.c.l.b16 %v521
      %v814 = vunpack.c.l.b16 %v522
      %v815 = vunpack.c.l.b16 %v523
      %v816 = vunpack.c.l.b16 %v524
      %v817 = vunpack.c.l.b16 %v525
      %v818 = vunpack.c.l.b16 %v526
      %v819 = vunpack.c.l.b16 %v527
      %v820 = vunpack.c.l.b16 %v528
      %v821 = vunpack.c.l.b16 %v529
      %v822 = vunpack.c.l.b16 %v530
      %v823 = vunpack.c.l.b16 %v531
      %v824 = vunpack.c.l.b16 %v532
      %v825 = vunpack.c.l.b16 %v533
      %v826 = vunpack.c.l.b16 %v534
      %v827 = vunpack.c.l.b16 %v535
      %v828 = vunpack.c.l.b16 %v536
      %v829 = vunpack.c.l.b16 %v537
      %v830 = vunpack.c.l.b16 %v538
      %v831 = vunpack.c.l.b16 %v539
      %v832 = vunpack.c.l.b16 %v540
      %v833 = vunpack.c.l.b16 %v541
      %v834 = vunpack.c.l.b16 %v542
      %v835 = vunpack.c.l.b16 %v543
      %v836 = vunpack.c.l.b16 %v544
      %v837 = vunpack.c.l.b16 %v545
      %v838 = vunpack.c.l.b16 %v546
      %v839 = vunpack.c.l.b16 %v547
      %v840 = vunpack.c.l.b16 %v548
      %v841 = vunpack.c.l.b16 %v549
      %v842 = vunpack.c.l.b16 %v550
      %v843 = vunpack.c.l.b16 %v551
      %v844 = vunpack.c.l.b16 %v552
      %v845 = vunpack.c.l.b16 %v553
      %v846 = vunpack.c.l.b16 %v554
      %v847 = vunpack.c.l.b16 %v555
      %v848 = vunpack.c.l.b16 %v556
      %v849 = vunpack.c.l.b16 %v557
      %v850 = vunpack.c.l.b16 %v558
      %v851 = vunpack.c.l.b16 %v559
      %v852 = vunpack.c.l.b16 %v560
      %v853 = vunpack.c.l.b16 %v561
      %v854 = vunpack.c.l.b16 %v562
      %v855 = vunpack.c.l.b16 %v563
      %v856 = vunpack.c.l.b16 %v564
      %v857 = vpack.c.b16 %v714, %v713
      %v858 = vpack.c.b16 %v716, %v715
      %v859 = vpack.c.b16 %v718, %v717
      %v860 = vpack.c.b16 %v720, %v719
      %v861 = vpack.c.b16 %v722, %v721
      %v862 = vpack.c.b16 %v724, %v723
      %v863 = vpack.c.b16 %v726, %v725
      %v864 = vpack.c.b16 %v728, %v727
      %v865 = vpack.c.b16 %v730, %v729
      %v866 = vpack.c.b16 %v732, %v731
      %v867 = vpack.c.b16 %v734, %v733
      %v868 = vpack.c.b16 %v736, %v735
      %v869 = vpack.c.b16 %v738, %v737
      %v870 = vpack.c.b16 %v740, %v739
      %v871 = vpack.c.b16 %v742, %v741
      %v872 = vpack.c.b16 %v744, %v743
      %v873 = vpack.c.b16 %v746, %v745
      %v874 = vpack.c.b16 %v748, %v747
      %v875 = vpack.c.b16 %v750, %v749
      %v876 = vpack.c.b16 %v752, %v751
      %v877 = vpack.c.b16 %v754, %v753
      %v878 = vpack.c.b16 %v756, %v755
      %v879 = vpack.c.b16 %v758, %v757
      %v880 = vpack.c.b16 %v760, %v759
      %v881 = vpack.c.b16 %v762, %v761
      %v882 = vpack.c.b16 %v764, %v763
      %v883 = vpack.c.b16 %v766, %v765
      %v884 = vpack.c.b16 %v768, %v767
      %v885 = vpack.c.b16 %v770, %v769
      %v886 = vpack.c.b16 %v772, %v771
      %v887 = vpack.c.b16 %v774, %v773
      %v888 = vpack.c.b16 %v776, %v775
      %v889 = vpack.c.b16 %v778, %v777
      %v890 = vpack.c.b16 %v780, %v779
      %v891 = vpack.c.b16 %v782, %v781
      %v892 = vpack.c.b16 %v784, %v783
      %v893 = vpack.c.b16 %v786, %v785
      %v894 = vpack.c.b16 %v788, %v787
      %v895 = vpack.c.b16 %v790, %v789
      %v896 = vpack.c.b16 %v792, %v791
      %v897 = vpack.c.b16 %v794, %v793
      %v898 = vpack.c.b16 %v796, %v795
      %v899 = vpack.c.b16 %v798, %v797
      %v900 = vpack.c.b16 %v800, %v799
      %v901 = vpack.c.b16 %v802, %v801
      %v902 = vpack.c.b16 %v804, %v803
      %v903 = vpack.c.b16 %v806, %v805
      %v904 = vpack.c.b16 %v808, %v807
      %v905 = vpack.c.b16 %v810, %v809
      %v906 = vpack.c.b16 %v812, %v811
      %v907 = vpack.c.b16 %v814, %v813
      %v908 = vpack.c.b16 %v816, %v815
      %v909 = vpack.c.b16 %v818, %v817
      %v910 = vpack.c.b16 %v820, %v819
      %v911 = vpack.c.b16 %v822, %v821
      %v912 = vpack.c.b16 %v824, %v823
      %v913 = vpack.c.b16 %v826, %v825
      %v914 = vpack.c.b16 %v828, %v827
      %v915 = vpack.c.b16 %v830, %v829
      %v916 = vpack.c.b16 %v832, %v831
      %v917 = vpack.c.b16 %v834, %v833
      %v918 = vpack.c.b16 %v836, %v835
      %v919 = vpack.c.b16 %v838, %v837
      %v920 = vpack.c.b16 %v840, %v839
      %v921 = vpack.c.b16 %v842, %v841
      %v922 = vpack.c.b16 %v844, %v843
      %v923 = vpack.c.b16 %v846, %v845
      %v924 = vpack.c.b16 %v848, %v847
      %v925 = vpack.c.b16 %v850, %v849
      %v926 = vpack.c.b16 %v852, %v851
      %v927 = vpack.c.b16 %v854, %v853
      %v928 = vpack.c.b16 %v856, %v855
      %1001 = vmatpush.bf16.msra.mxu0 %v864
      %1002 = vmatpush.bf16.msra.mxu0 %v863
      %1003 = vmatpush.bf16.msra.mxu0 %v862
      %1004 = vmatpush.bf16.msra.mxu0 %v861
      %1005 = vmatpush.bf16.msra.mxu0 %v860
      %1006 = vmatpush.bf16.msra.mxu0 %v859
      %1007 = vmatpush.bf16.msra.mxu0 %v858
      %1008 = vmatpush.bf16.msra.mxu0 %v857
      %1009 = vmatmul.bf16.gmra.mxu0 %v394
      %v1010 = vpop.f32.mrf.mxu0
      %v1011 = vadd.f32 %v567, %v1010
      %v1012 = vpop.f32.mrf.mxu0
      %v1013 = vadd.f32 %v567, %v1012
      %1014 = vmatmul.bf16.gmra.mxu0 %v400
      %v1015 = vpop.f32.mrf.mxu0
      %v1016 = vadd.f32 %v567, %v1015
      %v1017 = vpop.f32.mrf.mxu0
      %v1018 = vadd.f32 %v567, %v1017
      %1019 = vmatmul.bf16.gmra.mxu0 %v406
      %v1020 = vpop.f32.mrf.mxu0
      %v1021 = vadd.f32 %v567, %v1020
      %v1022 = vpop.f32.mrf.mxu0
      %v1023 = vadd.f32 %v567, %v1022
      %1024 = vmatmul.bf16.gmra.mxu0 %v412
      %v1025 = vpop.f32.mrf.mxu0
      %v1026 = vadd.f32 %v567, %v1025
      %v1027 = vpop.f32.mrf.mxu0
      %v1028 = vadd.f32 %v567, %v1027
      %1029 = vdwg.mxu0
      %1030 = vmatpush.bf16.msra.mxu0 %v872
      %1031 = vmatpush.bf16.msra.mxu0 %v871
      %1032 = vmatpush.bf16.msra.mxu0 %v870
      %1033 = vmatpush.bf16.msra.mxu0 %v869
      %1034 = vmatpush.bf16.msra.mxu0 %v868
      %1035 = vmatpush.bf16.msra.mxu0 %v867
      %1036 = vmatpush.bf16.msra.mxu0 %v866
      %1037 = vmatpush.bf16.msra.mxu0 %v865
      %1038 = vmatmul.bf16.gmra.mxu0 %v395
      %v1039 = vpop.f32.mrf.mxu0
      %v1040 = vadd.f32 %v1011, %v1039
      %v1041 = vpop.f32.mrf.mxu0
      %v1042 = vadd.f32 %v1013, %v1041
      %1043 = vmatmul.bf16.gmra.mxu0 %v401
      %v1044 = vpop.f32.mrf.mxu0
      %v1045 = vadd.f32 %v1016, %v1044
      %v1046 = vpop.f32.mrf.mxu0
      %v1047 = vadd.f32 %v1018, %v1046
      %1048 = vmatmul.bf16.gmra.mxu0 %v407
      %v1049 = vpop.f32.mrf.mxu0
      %v1050 = vadd.f32 %v1021, %v1049
      %v1051 = vpop.f32.mrf.mxu0
      %v1052 = vadd.f32 %v1023, %v1051
      %1053 = vmatmul.bf16.gmra.mxu0 %v413
      %v1054 = vpop.f32.mrf.mxu0
      %v1055 = vadd.f32 %v1026, %v1054
      %v1056 = vpop.f32.mrf.mxu0
      %v1057 = vadd.f32 %v1028, %v1056
      %1058 = vdwg.mxu0
      %1059 = vmatpush.bf16.msra.mxu0 %v880
      %1060 = vmatpush.bf16.msra.mxu0 %v879
      %1061 = vmatpush.bf16.msra.mxu0 %v878
      %1062 = vmatpush.bf16.msra.mxu0 %v877
      %1063 = vmatpush.bf16.msra.mxu0 %v876
      %1064 = vmatpush.bf16.msra.mxu0 %v875
      %1065 = vmatpush.bf16.msra.mxu0 %v874
      %1066 = vmatpush.bf16.msra.mxu0 %v873
      %1067 = vmatmul.bf16.gmra.mxu0 %v396
      %v1068 = vpop.f32.mrf.mxu0
      %v1069 = vadd.f32 %v1040, %v1068
      %v1070 = vpop.f32.mrf.mxu0
      %v1071 = vadd.f32 %v1042, %v1070
      %1072 = vmatmul.bf16.gmra.mxu0 %v402
      %v1073 = vpop.f32.mrf.mxu0
      %v1074 = vadd.f32 %v1045, %v1073
      %v1075 = vpop.f32.mrf.mxu0
      %v1076 = vadd.f32 %v1047, %v1075
      %1077 = vmatmul.bf16.gmra.mxu0 %v408
      %v1078 = vpop.f32.mrf.mxu0
      %v1079 = vadd.f32 %v1050, %v1078
      %v1080 = vpop.f32.mrf.mxu0
      %v1081 = vadd.f32 %v1052, %v1080
      %1082 = vmatmul.bf16.gmra.mxu0 %v414
      %v1083 = vpop.f32.mrf.mxu0
      %v1084 = vadd.f32 %v1055, %v1083
      %v1085 = vpop.f32.mrf.mxu0
      %v1086 = vadd.f32 %v1057, %v1085
      %1087 = vdwg.mxu0
      %1088 = vmatpush.bf16.msra.mxu0 %v888
      %1089 = vmatpush.bf16.msra.mxu0 %v887
      %1090 = vmatpush.bf16.msra.mxu0 %v886
      %1091 = vmatpush.bf16.msra.mxu0 %v885
      %1092 = vmatpush.bf16.msra.mxu0 %v884
      %1093 = vmatpush.bf16.msra.mxu0 %v883
      %1094 = vmatpush.bf16.msra.mxu0 %v882
      %1095 = vmatpush.bf16.msra.mxu0 %v881
      %1096 = vmatmul.bf16.gmra.mxu0 %v397
      %v1097 = vpop.f32.mrf.mxu0
      %v1098 = vadd.f32 %v1069, %v1097
      %v1099 = vpop.f32.mrf.mxu0
      %v1100 = vadd.f32 %v1071, %v1099
      %1101 = vmatmul.bf16.gmra.mxu0 %v403
      %v1102 = vpop.f32.mrf.mxu0
      %v1103 = vadd.f32 %v1074, %v1102
      %v1104 = vpop.f32.mrf.mxu0
      %v1105 = vadd.f32 %v1076, %v1104
      %1106 = vmatmul.bf16.gmra.mxu0 %v409
      %v1107 = vpop.f32.mrf.mxu0
      %v1108 = vadd.f32 %v1079, %v1107
      %v1109 = vpop.f32.mrf.mxu0
      %v1110 = vadd.f32 %v1081, %v1109
      %1111 = vmatmul.bf16.gmra.mxu0 %v415
      %v1112 = vpop.f32.mrf.mxu0
      %v1113 = vadd.f32 %v1084, %v1112
      %v1114 = vpop.f32.mrf.mxu0
      %v1115 = vadd.f32 %v1086, %v1114
      %1116 = vdwg.mxu0
      %1117 = vmatpush.bf16.msra.mxu0 %v896
      %1118 = vmatpush.bf16.msra.mxu0 %v895
      %1119 = vmatpush.bf16.msra.mxu0 %v894
      %1120 = vmatpush.bf16.msra.mxu0 %v893
      %1121 = vmatpush.bf16.msra.mxu0 %v892
      %1122 = vmatpush.bf16.msra.mxu0 %v891
      %1123 = vmatpush.bf16.msra.mxu0 %v890
      %1124 = vmatpush.bf16.msra.mxu0 %v889
      %1125 = vmatmul.bf16.gmra.mxu0 %v398
      %v1126 = vpop.f32.mrf.mxu0
      %v1127 = vadd.f32 %v1098, %v1126
      %v1128 = vpop.f32.mrf.mxu0
      %v1129 = vadd.f32 %v1100, %v1128
      %1130 = vmatmul.bf16.gmra.mxu0 %v404
      %v1131 = vpop.f32.mrf.mxu0
      %v1132 = vadd.f32 %v1103, %v1131
      %v1133 = vpop.f32.mrf.mxu0
      %v1134 = vadd.f32 %v1105, %v1133
      %1135 = vmatmul.bf16.gmra.mxu0 %v410
      %v1136 = vpop.f32.mrf.mxu0
      %v1137 = vadd.f32 %v1108, %v1136
      %v1138 = vpop.f32.mrf.mxu0
      %v1139 = vadd.f32 %v1110, %v1138
      %1140 = vmatmul.bf16.gmra.mxu0 %v416
      %v1141 = vpop.f32.mrf.mxu0
      %v1142 = vadd.f32 %v1113, %v1141
      %v1143 = vpop.f32.mrf.mxu0
      %v1144 = vadd.f32 %v1115, %v1143
      %1145 = vdwg.mxu0
      %1146 = vmatpush.bf16.msra.mxu0 %v904
      %1147 = vmatpush.bf16.msra.mxu0 %v903
      %1148 = vmatpush.bf16.msra.mxu0 %v902
      %1149 = vmatpush.bf16.msra.mxu0 %v901
      %1150 = vmatpush.bf16.msra.mxu0 %v900
      %1151 = vmatpush.bf16.msra.mxu0 %v899
      %1152 = vmatpush.bf16.msra.mxu0 %v898
      %1153 = vmatpush.bf16.msra.mxu0 %v897
      %1154 = vmatmul.bf16.gmra.mxu0 %v399
      %v1155 = vpop.f32.mrf.mxu0
      %v1156 = vadd.f32 %v1127, %v1155
      %v1157 = vpop.f32.mrf.mxu0
      %v1158 = vadd.f32 %v1129, %v1157
      %1159 = vmatmul.bf16.gmra.mxu0 %v405
      %v1160 = vpop.f32.mrf.mxu0
      %v1161 = vadd.f32 %v1132, %v1160
      %v1162 = vpop.f32.mrf.mxu0
      %v1163 = vadd.f32 %v1134, %v1162
      %1164 = vmatmul.bf16.gmra.mxu0 %v411
      %v1165 = vpop.f32.mrf.mxu0
      %v1166 = vadd.f32 %v1137, %v1165
      %v1167 = vpop.f32.mrf.mxu0
      %v1168 = vadd.f32 %v1139, %v1167
      %1169 = vmatmul.bf16.gmra.mxu0 %v417
      %v1170 = vpop.f32.mrf.mxu0
      %v1171 = vadd.f32 %v1142, %v1170
      %v1172 = vpop.f32.mrf.mxu0
      %v1173 = vadd.f32 %v1144, %v1172
      %1174 = vdwg.mxu0
      %1175 = vmatpush.bf16.msra.mxu0 %v912
      %1176 = vmatpush.bf16.msra.mxu0 %v911
      %1177 = vmatpush.bf16.msra.mxu0 %v910
      %1178 = vmatpush.bf16.msra.mxu0 %v909
      %1179 = vmatpush.bf16.msra.mxu0 %v908
      %1180 = vmatpush.bf16.msra.mxu0 %v907
      %1181 = vmatpush.bf16.msra.mxu0 %v906
      %1182 = vmatpush.bf16.msra.mxu0 %v905
      %1183 = vmatmul.bf16.gmra.mxu0 %v400
      %v1184 = vpop.f32.mrf.mxu0
      %v1185 = vadd.f32 %v1156, %v1184
      %v1186 = vpop.f32.mrf.mxu0
      %v1187 = vadd.f32 %v1158, %v1186
      %1188 = vmatmul.bf16.gmra.mxu0 %v406
      %v1189 = vpop.f32.mrf.mxu0
      %v1190 = vadd.f32 %v1161, %v1189
      %v1191 = vpop.f32.mrf.mxu0
      %v1192 = vadd.f32 %v1163, %v1191
      %1193 = vmatmul.bf16.gmra.mxu0 %v412
      %v1194 = vpop.f32.mrf.mxu0
      %v1195 = vadd.f32 %v1166, %v1194
      %v1196 = vpop.f32.mrf.mxu0
      %v1197 = vadd.f32 %v1168, %v1196
      %1198 = vmatmul.bf16.gmra.mxu0 %v418
      %v1199 = vpop.f32.mrf.mxu0
      %v1200 = vadd.f32 %v1171, %v1199
      %v1201 = vpop.f32.mrf.mxu0
      %v1202 = vadd.f32 %v1173, %v1201
      %1203 = vdwg.mxu0
      %1204 = vmatpush.bf16.msra.mxu0 %v920
      %1205 = vmatpush.bf16.msra.mxu0 %v919
      %1206 = vmatpush.bf16.msra.mxu0 %v918
      %1207 = vmatpush.bf16.msra.mxu0 %v917
      %1208 = vmatpush.bf16.msra.mxu0 %v916
      %1209 = vmatpush.bf16.msra.mxu0 %v915
      %1210 = vmatpush.bf16.msra.mxu0 %v914
      %1211 = vmatpush.bf16.msra.mxu0 %v913
      %1212 = vmatmul.bf16.gmra.mxu0 %v401
      %v1213 = vpop.f32.mrf.mxu0
      %v1214 = vadd.f32 %v1185, %v1213
      %v1215 = vpop.f32.mrf.mxu0
      %v1216 = vadd.f32 %v1187, %v1215
      %1217 = vmatmul.bf16.gmra.mxu0 %v407
      %v1218 = vpop.f32.mrf.mxu0
      %v1219 = vadd.f32 %v1190, %v1218
      %v1220 = vpop.f32.mrf.mxu0
      %v1221 = vadd.f32 %v1192, %v1220
      %1222 = vmatmul.bf16.gmra.mxu0 %v413
      %v1223 = vpop.f32.mrf.mxu0
      %v1224 = vadd.f32 %v1195, %v1223
      %v1225 = vpop.f32.mrf.mxu0
      %v1226 = vadd.f32 %v1197, %v1225
      %1227 = vmatmul.bf16.gmra.mxu0 %v419
      %v1228 = vpop.f32.mrf.mxu0
      %v1229 = vadd.f32 %v1200, %v1228
      %v1230 = vpop.f32.mrf.mxu0
      %v1231 = vadd.f32 %v1202, %v1230
      %1232 = vdwg.mxu0
      %1233 = vmatpush.bf16.msra.mxu0 %v928
      %1234 = vmatpush.bf16.msra.mxu0 %v927
      %1235 = vmatpush.bf16.msra.mxu0 %v926
      %1236 = vmatpush.bf16.msra.mxu0 %v925
      %1237 = vmatpush.bf16.msra.mxu0 %v924
      %1238 = vmatpush.bf16.msra.mxu0 %v923
      %1239 = vmatpush.bf16.msra.mxu0 %v922
      %1240 = vmatpush.bf16.msra.mxu0 %v921
      %1241 = vmatmul.bf16.gmra.mxu0 %v402
      %v1242 = vpop.f32.mrf.mxu0
      %v1243 = vadd.f32 %v1214, %v1242
      %v1244 = vpop.f32.mrf.mxu0
      %v1245 = vadd.f32 %v1216, %v1244
      %1246 = vmatmul.bf16.gmra.mxu0 %v408
      %v1247 = vpop.f32.mrf.mxu0
      %v1248 = vadd.f32 %v1219, %v1247
      %v1249 = vpop.f32.mrf.mxu0
      %v1250 = vadd.f32 %v1221, %v1249
      %1251 = vmatmul.bf16.gmra.mxu0 %v414
      %v1252 = vpop.f32.mrf.mxu0
      %v1253 = vadd.f32 %v1224, %v1252
      %v1254 = vpop.f32.mrf.mxu0
      %v1255 = vadd.f32 %v1226, %v1254
      %1256 = vmatmul.bf16.gmra.mxu0 %v420
      %v1257 = vpop.f32.mrf.mxu0
      %v1258 = vadd.f32 %v1229, %v1257
      %v1259 = vpop.f32.mrf.mxu0
      %v1260 = vadd.f32 %v1231, %v1259
      %1261 = vdwg.mxu0
      %1262 = vst [vmem:[#allocation3] sm:$0xff] 0.0
      %1263 = vst [vmem:[#allocation3 + $0x8] sm:$0x3] 0.0
      %1264 = vst [vmem:[#allocation3 + $0x10] sm:$0xff] 0.0
      %1265 = vst [vmem:[#allocation3 + $0x18] sm:$0x3] 0.0
      %1266 = vst [vmem:[#allocation3 + $0x20] sm:$0xff] 0.0
      %1267 = vst [vmem:[#allocation3 + $0x28] sm:$0x3] 0.0
      %1268 = vst [vmem:[#allocation3 + $0x30] sm:$0xff] 0.0
      %1269 = vst [vmem:[#allocation3 + $0x38] sm:$0x3] 0.0
      %1270 = vst [vmem:[#allocation3 + $0x40] sm:$0xff] 0.0
      %1271 = vst [vmem:[#allocation3 + $0x48] sm:$0x3] 0.0
      %1272 = vst [vmem:[#allocation3 + $0x50] sm:$0xff] 0.0
      %1273 = vst [vmem:[#allocation3 + $0x58] sm:$0x3] 0.0
      %1274 = vst [vmem:[#allocation3 + $0x60] sm:$0xff] 0.0
      %1275 = vst [vmem:[#allocation3 + $0x68] sm:$0x3] 0.0
      %1276 = vst [vmem:[#allocation3 + $0x70] sm:$0xff] 0.0
      %1277 = vst [vmem:[#allocation3 + $0x78] sm:$0x3] 0.0
      %1278 = vst [vmem:[#allocation3 + $0x80] sm:$0xff] 0.0
      %1279 = vst [vmem:[#allocation3 + $0x88] sm:$0x3] 0.0
      %1280 = vst [vmem:[#allocation3 + $0x90] sm:$0xff] 0.0
      %1281 = vst [vmem:[#allocation3 + $0x98] sm:$0x3] 0.0
      %v1282 = vmax.f32 %v1243, 0.0
      %v1283 = vmax.f32 %v1245, 0.0
      %v1284 = vmax.f32 %v1248, 0.0
      %v1285 = vmax.f32 %v1250, 0.0
      %v1286 = vmax.f32 %v1253, 0.0
      %v1287 = vmax.f32 %v1255, 0.0
      %v1288 = vmax.f32 %v1258, 0.0
      %v1289 = vmax.f32 %v1260, 0.0
      %s1290 = scalar_lea.vmem [#allocation3], 16
      %vm1291 = vcmask 261120
      %1292 = vst.msk [vmem:[%s1290 + $0x1] sm:$0xff] %vm1291, %v1282
      %1293 = vst.msk [vmem:[%s1290 + $0x11] sm:$0xff] %vm1291, %v1283
      %1294 = vst.msk [vmem:[%s1290 + $0x21] sm:$0xff] %vm1291, %v1284
      %1295 = vst.msk [vmem:[%s1290 + $0x31] sm:$0xff] %vm1291, %v1285
      %1296 = vst.msk [vmem:[%s1290 + $0x41] sm:$0xff] %vm1291, %v1286
      %1297 = vst.msk [vmem:[%s1290 + $0x51] sm:$0xff] %vm1291, %v1287
      %1298 = vst.msk [vmem:[%s1290 + $0x61] sm:$0xff] %vm1291, %v1288
      %1299 = vst.msk [vmem:[%s1290 + $0x71] sm:$0xff] %vm1291, %v1289
      %v1300 = vld [vmem:[#allocation3] sm:$0xff]
      %v1301 = vld [vmem:[#allocation3 + $0x8] sm:$0x3]
      %v1302 = vld [vmem:[#allocation3 + $0x10] sm:$0xff]
      %v1303 = vld [vmem:[#allocation3 + $0x18] sm:$0x3]
      %v1304 = vld [vmem:[#allocation3 + $0x20] sm:$0xff]
      %v1305 = vld [vmem:[#allocation3 + $0x28] sm:$0x3]
      %v1306 = vld [vmem:[#allocation3 + $0x30] sm:$0xff]
      %v1307 = vld [vmem:[#allocation3 + $0x38] sm:$0x3]
      %v1308 = vld [vmem:[#allocation3 + $0x40] sm:$0xff]
      %v1309 = vld [vmem:[#allocation3 + $0x48] sm:$0x3]
      %v1310 = vld [vmem:[#allocation3 + $0x50] sm:$0xff]
      %v1311 = vld [vmem:[#allocation3 + $0x58] sm:$0x3]
      %v1312 = vld [vmem:[#allocation3 + $0x60] sm:$0xff]
      %v1313 = vld [vmem:[#allocation3 + $0x68] sm:$0x3]
      %v1314 = vld [vmem:[#allocation3 + $0x70] sm:$0xff]
      %v1315 = vld [vmem:[#allocation3 + $0x78] sm:$0x3]
      %v1316 = vld [vmem:[#allocation3 + $0x80] sm:$0xff]
      %v1317 = vld [vmem:[#allocation3 + $0x88] sm:$0x3]
      %v1318 = vld [vmem:[#allocation3 + $0x90] sm:$0xff]
      %v1319 = vld [vmem:[#allocation3 + $0x98] sm:$0x3]
      %v1336 = vrot.slane %v1300, 1
      %v1337 = vrot.slane %v1301, 1
      %v1338 = vsel %vm308, %v1336, %v1337
      %v1339 = vrot.slane %v1302, 1
      %v1340 = vrot.slane %v1303, 1
      %v1341 = vsel %vm308, %v1339, %v1340
      %v1342 = vrot.slane %v1304, 1
      %v1343 = vrot.slane %v1305, 1
      %v1344 = vsel %vm308, %v1342, %v1343
      %v1345 = vrot.slane %v1306, 1
      %v1346 = vrot.slane %v1307, 1
      %v1347 = vsel %vm308, %v1345, %v1346
      %v1348 = vrot.slane %v1308, 1
      %v1349 = vrot.slane %v1309, 1
      %v1350 = vsel %vm308, %v1348, %v1349
      %v1351 = vrot.slane %v1310, 1
      %v1352 = vrot.slane %v1311, 1
      %v1353 = vsel %vm308, %v1351, %v1352
      %v1354 = vrot.slane %v1312, 1
      %v1355 = vrot.slane %v1313, 1
      %v1356 = vsel %vm308, %v1354, %v1355
      %v1357 = vrot.slane %v1314, 1
      %v1358 = vrot.slane %v1315, 1
      %v1359 = vsel %vm308, %v1357, %v1358
      %v1368 = vrot.slane %v1300, 2
      %v1369 = vrot.slane %v1301, 2
      %v1370 = vsel %vm341, %v1368, %v1369
      %v1371 = vrot.slane %v1302, 2
      %v1372 = vrot.slane %v1303, 2
      %v1373 = vsel %vm341, %v1371, %v1372
      %v1374 = vrot.slane %v1304, 2
      %v1375 = vrot.slane %v1305, 2
      %v1376 = vsel %vm341, %v1374, %v1375
      %v1377 = vrot.slane %v1306, 2
      %v1378 = vrot.slane %v1307, 2
      %v1379 = vsel %vm341, %v1377, %v1378
      %v1380 = vrot.slane %v1308, 2
      %v1381 = vrot.slane %v1309, 2
      %v1382 = vsel %vm341, %v1380, %v1381
      %v1383 = vrot.slane %v1310, 2
      %v1384 = vrot.slane %v1311, 2
      %v1385 = vsel %vm341, %v1383, %v1384
      %v1386 = vrot.slane %v1312, 2
      %v1387 = vrot.slane %v1313, 2
      %v1388 = vsel %vm341, %v1386, %v1387
      %v1389 = vrot.slane %v1314, 2
      %v1390 = vrot.slane %v1315, 2
      %v1391 = vsel %vm341, %v1389, %v1390
      %v1402 = vrot.slane %v1316, 1
      %v1403 = vrot.slane %v1317, 1
      %v1404 = vsel %vm308, %v1402, %v1403
      %v1406 = vrot.slane %v1316, 2
      %v1407 = vrot.slane %v1317, 2
      %v1408 = vsel %vm341, %v1406, %v1407
      %v1412 = vrot.slane %v1318, 1
      %v1413 = vrot.slane %v1319, 1
      %v1414 = vsel %vm308, %v1412, %v1413
      %v1416 = vrot.slane %v1318, 2
      %v1417 = vrot.slane %v1319, 2
      %v1418 = vsel %vm341, %v1416, %v1417
      %v1420 = vpack.c.bf16 %v1302, %v1300
      %v1421 = vpack.c.bf16 %v1341, %v1338
      %v1422 = vpack.c.bf16 %v1373, %v1370
      %v1423 = vpack.c.bf16 %v1304, %v1302
      %v1424 = vpack.c.bf16 %v1344, %v1341
      %v1425 = vpack.c.bf16 %v1376, %v1373
      %v1426 = vpack.c.bf16 %v1306, %v1304
      %v1427 = vpack.c.bf16 %v1347, %v1344
      %v1428 = vpack.c.bf16 %v1379, %v1376
      %v1429 = vpack.c.bf16 %v1308, %v1306
      %v1430 = vpack.c.bf16 %v1350, %v1347
      %v1431 = vpack.c.bf16 %v1382, %v1379
      %v1432 = vpack.c.bf16 %v1310, %v1308
      %v1433 = vpack.c.bf16 %v1353, %v1350
      %v1434 = vpack.c.bf16 %v1385, %v1382
      %v1435 = vpack.c.bf16 %v1312, %v1310
      %v1436 = vpack.c.bf16 %v1356, %v1353
      %v1437 = vpack.c.bf16 %v1388, %v1385
      %v1438 = vpack.c.bf16 %v1314, %v1312
      %v1439 = vpack.c.bf16 %v1359, %v1356
      %v1440 = vpack.c.bf16 %v1391, %v1388
      %v1441 = vpack.c.bf16 %v1316, %v1314
      %v1442 = vpack.c.bf16 %v1404, %v1359
      %v1443 = vpack.c.bf16 %v1408, %v1391
      %v1444 = vpack.c.bf16 %v1318, %v1316
      %v1445 = vpack.c.bf16 %v1414, %v1404
      %v1446 = vpack.c.bf16 %v1418, %v1408
      %v1447 = vld [vmem:[%s3] sm:$0xf]
      %v1448 = vld [vmem:[%s3 + $0x4] sm:$0xf]
      %v1449 = vld [vmem:[%s3 + $0x8] sm:$0xf]
      %v1450 = vld [vmem:[%s3 + $0xc] sm:$0xf]
      %v1451 = vld [vmem:[%s3 + $0x10] sm:$0xf]
      %v1452 = vld [vmem:[%s3 + $0x14] sm:$0xf]
      %v1453 = vld [vmem:[%s3 + $0x18] sm:$0xf]
      %v1454 = vld [vmem:[%s3 + $0x1c] sm:$0xf]
      %v1455 = vld [vmem:[%s3 + $0x20] sm:$0xf]
      %v1456 = vld [vmem:[%s3 + $0x24] sm:$0xf]
      %v1457 = vld [vmem:[%s3 + $0x28] sm:$0xf]
      %v1458 = vld [vmem:[%s3 + $0x2c] sm:$0xf]
      %v1459 = vld [vmem:[%s3 + $0x30] sm:$0xf]
      %v1460 = vld [vmem:[%s3 + $0x34] sm:$0xf]
      %v1461 = vld [vmem:[%s3 + $0x38] sm:$0xf]
      %v1462 = vld [vmem:[%s3 + $0x3c] sm:$0xf]
      %v1463 = vld [vmem:[%s3 + $0x40] sm:$0xf]
      %v1464 = vld [vmem:[%s3 + $0x44] sm:$0xf]
      %v1465 = vld [vmem:[%s3 + $0x48] sm:$0xf]
      %v1466 = vld [vmem:[%s3 + $0x4c] sm:$0xf]
      %v1467 = vld [vmem:[%s3 + $0x50] sm:$0xf]
      %v1468 = vld [vmem:[%s3 + $0x54] sm:$0xf]
      %v1469 = vld [vmem:[%s3 + $0x58] sm:$0xf]
      %v1470 = vld [vmem:[%s3 + $0x5c] sm:$0xf]
      %v1471 = vld [vmem:[%s3 + $0x60] sm:$0xf]
      %v1472 = vld [vmem:[%s3 + $0x64] sm:$0xf]
      %v1473 = vld [vmem:[%s3 + $0x68] sm:$0xf]
      %v1474 = vld [vmem:[%s3 + $0x6c] sm:$0xf]
      %v1475 = vld [vmem:[%s3 + $0x70] sm:$0xf]
      %v1476 = vld [vmem:[%s3 + $0x74] sm:$0xf]
      %v1477 = vld [vmem:[%s3 + $0x78] sm:$0xf]
      %v1478 = vld [vmem:[%s3 + $0x7c] sm:$0xf]
      %v1479 = vld [vmem:[%s3 + $0x80] sm:$0xf]
      %v1480 = vld [vmem:[%s3 + $0x84] sm:$0xf]
      %v1481 = vld [vmem:[%s3 + $0x88] sm:$0xf]
      %v1482 = vld [vmem:[%s3 + $0x8c] sm:$0xf]
      %v1483 = vld [vmem:[%s3 + $0x90] sm:$0xf]
      %v1484 = vld [vmem:[%s3 + $0x94] sm:$0xf]
      %v1485 = vld [vmem:[%s3 + $0x98] sm:$0xf]
      %v1486 = vld [vmem:[%s3 + $0x9c] sm:$0xf]
      %v1487 = vld [vmem:[%s3 + $0xa0] sm:$0xf]
      %v1488 = vld [vmem:[%s3 + $0xa4] sm:$0xf]
      %v1489 = vld [vmem:[%s3 + $0xa8] sm:$0xf]
      %v1490 = vld [vmem:[%s3 + $0xac] sm:$0xf]
      %v1491 = vld [vmem:[%s3 + $0xb0] sm:$0xf]
      %v1492 = vld [vmem:[%s3 + $0xb4] sm:$0xf]
      %v1493 = vld [vmem:[%s3 + $0xb8] sm:$0xf]
      %v1494 = vld [vmem:[%s3 + $0xbc] sm:$0xf]
      %v1495 = vld [vmem:[%s3 + $0xc0] sm:$0xf]
      %v1496 = vld [vmem:[%s3 + $0xc4] sm:$0xf]
      %v1497 = vld [vmem:[%s3 + $0xc8] sm:$0xf]
      %v1498 = vld [vmem:[%s3 + $0xcc] sm:$0xf]
      %v1499 = vld [vmem:[%s3 + $0xd0] sm:$0xf]
      %v1500 = vld [vmem:[%s3 + $0xd4] sm:$0xf]
      %v1501 = vld [vmem:[%s3 + $0xd8] sm:$0xf]
      %v1502 = vld [vmem:[%s3 + $0xdc] sm:$0xf]
      %v1503 = vld [vmem:[%s3 + $0xe0] sm:$0xf]
      %v1504 = vld [vmem:[%s3 + $0xe4] sm:$0xf]
      %v1505 = vld [vmem:[%s3 + $0xe8] sm:$0xf]
      %v1506 = vld [vmem:[%s3 + $0xec] sm:$0xf]
      %v1507 = vld [vmem:[%s3 + $0xf0] sm:$0xf]
      %v1508 = vld [vmem:[%s3 + $0xf4] sm:$0xf]
      %v1509 = vld [vmem:[%s3 + $0xf8] sm:$0xf]
      %v1510 = vld [vmem:[%s3 + $0xfc] sm:$0xf]
      %v1511 = vld [vmem:[%s3 + $0x100] sm:$0xf]
      %v1512 = vld [vmem:[%s3 + $0x104] sm:$0xf]
      %v1513 = vld [vmem:[%s3 + $0x108] sm:$0xf]
      %v1514 = vld [vmem:[%s3 + $0x10c] sm:$0xf]
      %v1515 = vld [vmem:[%s3 + $0x110] sm:$0xf]
      %v1516 = vld [vmem:[%s3 + $0x114] sm:$0xf]
      %v1517 = vld [vmem:[%s3 + $0x118] sm:$0xf]
      %v1518 = vld [vmem:[%s3 + $0x11c] sm:$0xf]
      %v1519 = vld [vmem:[%s3 + $0x120] sm:$0xf]
      %v1520 = vld [vmem:[%s3 + $0x124] sm:$0xf]
      %v1521 = vld [vmem:[%s3 + $0x128] sm:$0xf]
      %v1522 = vld [vmem:[%s3 + $0x12c] sm:$0xf]
      %v1523 = vld [vmem:[%s3 + $0x130] sm:$0xf]
      %v1524 = vld [vmem:[%s3 + $0x134] sm:$0xf]
      %v1525 = vld [vmem:[%s3 + $0x138] sm:$0xf]
      %v1526 = vld [vmem:[%s3 + $0x13c] sm:$0xf]
      %v1527 = vld [vmem:[%s3 + $0x140] sm:$0xf]
      %v1528 = vld [vmem:[%s3 + $0x144] sm:$0xf]
      %v1529 = vld [vmem:[%s3 + $0x148] sm:$0xf]
      %v1530 = vld [vmem:[%s3 + $0x14c] sm:$0xf]
      %v1531 = vld [vmem:[%s3 + $0x150] sm:$0xf]
      %v1532 = vld [vmem:[%s3 + $0x154] sm:$0xf]
      %v1533 = vld [vmem:[%s3 + $0x158] sm:$0xf]
      %v1534 = vld [vmem:[%s3 + $0x15c] sm:$0xf]
      %v1535 = vld [vmem:[%s3 + $0x160] sm:$0xf]
      %v1536 = vld [vmem:[%s3 + $0x164] sm:$0xf]
      %v1537 = vld [vmem:[%s3 + $0x168] sm:$0xf]
      %v1538 = vld [vmem:[%s3 + $0x16c] sm:$0xf]
      %v1539 = vld [vmem:[%s3 + $0x170] sm:$0xf]
      %v1540 = vld [vmem:[%s3 + $0x174] sm:$0xf]
      %v1541 = vld [vmem:[%s3 + $0x178] sm:$0xf]
      %v1542 = vld [vmem:[%s3 + $0x17c] sm:$0xf]
      %v1543 = vld [vmem:[%s3 + $0x180] sm:$0xf]
      %v1544 = vld [vmem:[%s3 + $0x184] sm:$0xf]
      %v1545 = vld [vmem:[%s3 + $0x188] sm:$0xf]
      %v1546 = vld [vmem:[%s3 + $0x18c] sm:$0xf]
      %v1547 = vld [vmem:[%s3 + $0x190] sm:$0xf]
      %v1548 = vld [vmem:[%s3 + $0x194] sm:$0xf]
      %v1549 = vld [vmem:[%s3 + $0x198] sm:$0xf]
      %v1550 = vld [vmem:[%s3 + $0x19c] sm:$0xf]
      %v1551 = vld [vmem:[%s3 + $0x1a0] sm:$0xf]
      %v1552 = vld [vmem:[%s3 + $0x1a4] sm:$0xf]
      %v1553 = vld [vmem:[%s3 + $0x1a8] sm:$0xf]
      %v1554 = vld [vmem:[%s3 + $0x1ac] sm:$0xf]
      %v1555 = vld [vmem:[%s3 + $0x1b0] sm:$0xf]
      %v1556 = vld [vmem:[%s3 + $0x1b4] sm:$0xf]
      %v1557 = vld [vmem:[%s3 + $0x1b8] sm:$0xf]
      %v1558 = vld [vmem:[%s3 + $0x1bc] sm:$0xf]
      %v1559 = vld [vmem:[%s3 + $0x1c0] sm:$0xf]
      %v1560 = vld [vmem:[%s3 + $0x1c4] sm:$0xf]
      %v1561 = vld [vmem:[%s3 + $0x1c8] sm:$0xf]
      %v1562 = vld [vmem:[%s3 + $0x1cc] sm:$0xf]
      %v1563 = vld [vmem:[%s3 + $0x1d0] sm:$0xf]
      %v1564 = vld [vmem:[%s3 + $0x1d4] sm:$0xf]
      %v1565 = vld [vmem:[%s3 + $0x1d8] sm:$0xf]
      %v1566 = vld [vmem:[%s3 + $0x1dc] sm:$0xf]
      %v1567 = vld [vmem:[%s3 + $0x1e0] sm:$0xf]
      %v1568 = vld [vmem:[%s3 + $0x1e4] sm:$0xf]
      %v1569 = vld [vmem:[%s3 + $0x1e8] sm:$0xf]
      %v1570 = vld [vmem:[%s3 + $0x1ec] sm:$0xf]
      %v1571 = vld [vmem:[%s3 + $0x1f0] sm:$0xf]
      %v1572 = vld [vmem:[%s3 + $0x1f4] sm:$0xf]
      %v1573 = vld [vmem:[%s3 + $0x1f8] sm:$0xf]
      %v1574 = vld [vmem:[%s3 + $0x1fc] sm:$0xf]
      %v1575 = vld [vmem:[%s3 + $0x200] sm:$0xf]
      %v1576 = vld [vmem:[%s3 + $0x204] sm:$0xf]
      %v1577 = vld [vmem:[%s3 + $0x208] sm:$0xf]
      %v1578 = vld [vmem:[%s3 + $0x20c] sm:$0xf]
      %v1579 = vld [vmem:[%s3 + $0x210] sm:$0xf]
      %v1580 = vld [vmem:[%s3 + $0x214] sm:$0xf]
      %v1581 = vld [vmem:[%s3 + $0x218] sm:$0xf]
      %v1582 = vld [vmem:[%s3 + $0x21c] sm:$0xf]
      %v1583 = vld [vmem:[%s3 + $0x220] sm:$0xf]
      %v1584 = vld [vmem:[%s3 + $0x224] sm:$0xf]
      %v1585 = vld [vmem:[%s3 + $0x228] sm:$0xf]
      %v1586 = vld [vmem:[%s3 + $0x22c] sm:$0xf]
      %v1587 = vld [vmem:[%s3 + $0x230] sm:$0xf]
      %v1588 = vld [vmem:[%s3 + $0x234] sm:$0xf]
      %v1589 = vld [vmem:[%s3 + $0x238] sm:$0xf]
      %v1590 = vld [vmem:[%s3 + $0x23c] sm:$0xf]
      %v1735 = vunpack.c.l.b16 %v1447
      %v1736 = vunpack.c.l.b16 %v1448
      %v1737 = vunpack.c.l.b16 %v1449
      %v1738 = vunpack.c.l.b16 %v1450
      %v1739 = vunpack.c.l.b16 %v1451
      %v1740 = vunpack.c.l.b16 %v1452
      %v1741 = vunpack.c.l.b16 %v1453
      %v1742 = vunpack.c.l.b16 %v1454
      %v1743 = vunpack.c.l.b16 %v1455
      %v1744 = vunpack.c.l.b16 %v1456
      %v1745 = vunpack.c.l.b16 %v1457
      %v1746 = vunpack.c.l.b16 %v1458
      %v1747 = vunpack.c.l.b16 %v1459
      %v1748 = vunpack.c.l.b16 %v1460
      %v1749 = vunpack.c.l.b16 %v1461
      %v1750 = vunpack.c.l.b16 %v1462
      %v1751 = vunpack.c.l.b16 %v1463
      %v1752 = vunpack.c.l.b16 %v1464
      %v1753 = vunpack.c.l.b16 %v1465
      %v1754 = vunpack.c.l.b16 %v1466
      %v1755 = vunpack.c.l.b16 %v1467
      %v1756 = vunpack.c.l.b16 %v1468
      %v1757 = vunpack.c.l.b16 %v1469
      %v1758 = vunpack.c.l.b16 %v1470
      %v1759 = vunpack.c.l.b16 %v1471
      %v1760 = vunpack.c.l.b16 %v1472
      %v1761 = vunpack.c.l.b16 %v1473
      %v1762 = vunpack.c.l.b16 %v1474
      %v1763 = vunpack.c.l.b16 %v1475
      %v1764 = vunpack.c.l.b16 %v1476
      %v1765 = vunpack.c.l.b16 %v1477
      %v1766 = vunpack.c.l.b16 %v1478
      %v1767 = vunpack.c.l.b16 %v1479
      %v1768 = vunpack.c.l.b16 %v1480
      %v1769 = vunpack.c.l.b16 %v1481
      %v1770 = vunpack.c.l.b16 %v1482
      %v1771 = vunpack.c.l.b16 %v1483
      %v1772 = vunpack.c.l.b16 %v1484
      %v1773 = vunpack.c.l.b16 %v1485
      %v1774 = vunpack.c.l.b16 %v1486
      %v1775 = vunpack.c.l.b16 %v1487
      %v1776 = vunpack.c.l.b16 %v1488
      %v1777 = vunpack.c.l.b16 %v1489
      %v1778 = vunpack.c.l.b16 %v1490
      %v1779 = vunpack.c.l.b16 %v1491
      %v1780 = vunpack.c.l.b16 %v1492
      %v1781 = vunpack.c.l.b16 %v1493
      %v1782 = vunpack.c.l.b16 %v1494
      %v1783 = vunpack.c.l.b16 %v1495
      %v1784 = vunpack.c.l.b16 %v1496
      %v1785 = vunpack.c.l.b16 %v1497
      %v1786 = vunpack.c.l.b16 %v1498
      %v1787 = vunpack.c.l.b16 %v1499
      %v1788 = vunpack.c.l.b16 %v1500
      %v1789 = vunpack.c.l.b16 %v1501
      %v1790 = vunpack.c.l.b16 %v1502
      %v1791 = vunpack.c.l.b16 %v1503
      %v1792 = vunpack.c.l.b16 %v1504
      %v1793 = vunpack.c.l.b16 %v1505
      %v1794 = vunpack.c.l.b16 %v1506
      %v1795 = vunpack.c.l.b16 %v1507
      %v1796 = vunpack.c.l.b16 %v1508
      %v1797 = vunpack.c.l.b16 %v1509
      %v1798 = vunpack.c.l.b16 %v1510
      %v1799 = vunpack.c.l.b16 %v1511
      %v1800 = vunpack.c.l.b16 %v1512
      %v1801 = vunpack.c.l.b16 %v1513
      %v1802 = vunpack.c.l.b16 %v1514
      %v1803 = vunpack.c.l.b16 %v1515
      %v1804 = vunpack.c.l.b16 %v1516
      %v1805 = vunpack.c.l.b16 %v1517
      %v1806 = vunpack.c.l.b16 %v1518
      %v1807 = vunpack.c.l.b16 %v1519
      %v1808 = vunpack.c.l.b16 %v1520
      %v1809 = vunpack.c.l.b16 %v1521
      %v1810 = vunpack.c.l.b16 %v1522
      %v1811 = vunpack.c.l.b16 %v1523
      %v1812 = vunpack.c.l.b16 %v1524
      %v1813 = vunpack.c.l.b16 %v1525
      %v1814 = vunpack.c.l.b16 %v1526
      %v1815 = vunpack.c.l.b16 %v1527
      %v1816 = vunpack.c.l.b16 %v1528
      %v1817 = vunpack.c.l.b16 %v1529
      %v1818 = vunpack.c.l.b16 %v1530
      %v1819 = vunpack.c.l.b16 %v1531
      %v1820 = vunpack.c.l.b16 %v1532
      %v1821 = vunpack.c.l.b16 %v1533
      %v1822 = vunpack.c.l.b16 %v1534
      %v1823 = vunpack.c.l.b16 %v1535
      %v1824 = vunpack.c.l.b16 %v1536
      %v1825 = vunpack.c.l.b16 %v1537
      %v1826 = vunpack.c.l.b16 %v1538
      %v1827 = vunpack.c.l.b16 %v1539
      %v1828 = vunpack.c.l.b16 %v1540
      %v1829 = vunpack.c.l.b16 %v1541
      %v1830 = vunpack.c.l.b16 %v1542
      %v1831 = vunpack.c.l.b16 %v1543
      %v1832 = vunpack.c.l.b16 %v1544
      %v1833 = vunpack.c.l.b16 %v1545
      %v1834 = vunpack.c.l.b16 %v1546
      %v1835 = vunpack.c.l.b16 %v1547
      %v1836 = vunpack.c.l.b16 %v1548
      %v1837 = vunpack.c.l.b16 %v1549
      %v1838 = vunpack.c.l.b16 %v1550
      %v1839 = vunpack.c.l.b16 %v1551
      %v1840 = vunpack.c.l.b16 %v1552
      %v1841 = vunpack.c.l.b16 %v1553
      %v1842 = vunpack.c.l.b16 %v1554
      %v1843 = vunpack.c.l.b16 %v1555
      %v1844 = vunpack.c.l.b16 %v1556
      %v1845 = vunpack.c.l.b16 %v1557
      %v1846 = vunpack.c.l.b16 %v1558
      %v1847 = vunpack.c.l.b16 %v1559
      %v1848 = vunpack.c.l.b16 %v1560
      %v1849 = vunpack.c.l.b16 %v1561
      %v1850 = vunpack.c.l.b16 %v1562
      %v1851 = vunpack.c.l.b16 %v1563
      %v1852 = vunpack.c.l.b16 %v1564
      %v1853 = vunpack.c.l.b16 %v1565
      %v1854 = vunpack.c.l.b16 %v1566
      %v1855 = vunpack.c.l.b16 %v1567
      %v1856 = vunpack.c.l.b16 %v1568
      %v1857 = vunpack.c.l.b16 %v1569
      %v1858 = vunpack.c.l.b16 %v1570
      %v1859 = vunpack.c.l.b16 %v1571
      %v1860 = vunpack.c.l.b16 %v1572
      %v1861 = vunpack.c.l.b16 %v1573
      %v1862 = vunpack.c.l.b16 %v1574
      %v1863 = vunpack.c.l.b16 %v1575
      %v1864 = vunpack.c.l.b16 %v1576
      %v1865 = vunpack.c.l.b16 %v1577
      %v1866 = vunpack.c.l.b16 %v1578
      %v1867 = vunpack.c.l.b16 %v1579
      %v1868 = vunpack.c.l.b16 %v1580
      %v1869 = vunpack.c.l.b16 %v1581
      %v1870 = vunpack.c.l.b16 %v1582
      %v1871 = vunpack.c.l.b16 %v1583
      %v1872 = vunpack.c.l.b16 %v1584
      %v1873 = vunpack.c.l.b16 %v1585
      %v1874 = vunpack.c.l.b16 %v1586
      %v1875 = vunpack.c.l.b16 %v1587
      %v1876 = vunpack.c.l.b16 %v1588
      %v1877 = vunpack.c.l.b16 %v1589
      %v1878 = vunpack.c.l.b16 %v1590
      %v1879 = vpack.c.b16 %v1736, %v1735
      %v1880 = vpack.c.b16 %v1738, %v1737
      %v1881 = vpack.c.b16 %v1740, %v1739
      %v1882 = vpack.c.b16 %v1742, %v1741
      %v1883 = vpack.c.b16 %v1744, %v1743
      %v1884 = vpack.c.b16 %v1746, %v1745
      %v1885 = vpack.c.b16 %v1748, %v1747
      %v1886 = vpack.c.b16 %v1750, %v1749
      %v1887 = vpack.c.b16 %v1752, %v1751
      %v1888 = vpack.c.b16 %v1754, %v1753
      %v1889 = vpack.c.b16 %v1756, %v1755
      %v1890 = vpack.c.b16 %v1758, %v1757
      %v1891 = vpack.c.b16 %v1760, %v1759
      %v1892 = vpack.c.b16 %v1762, %v1761
      %v1893 = vpack.c.b16 %v1764, %v1763
      %v1894 = vpack.c.b16 %v1766, %v1765
      %v1895 = vpack.c.b16 %v1768, %v1767
      %v1896 = vpack.c.b16 %v1770, %v1769
      %v1897 = vpack.c.b16 %v1772, %v1771
      %v1898 = vpack.c.b16 %v1774, %v1773
      %v1899 = vpack.c.b16 %v1776, %v1775
      %v1900 = vpack.c.b16 %v1778, %v1777
      %v1901 = vpack.c.b16 %v1780, %v1779
      %v1902 = vpack.c.b16 %v1782, %v1781
      %v1903 = vpack.c.b16 %v1784, %v1783
      %v1904 = vpack.c.b16 %v1786, %v1785
      %v1905 = vpack.c.b16 %v1788, %v1787
      %v1906 = vpack.c.b16 %v1790, %v1789
      %v1907 = vpack.c.b16 %v1792, %v1791
      %v1908 = vpack.c.b16 %v1794, %v1793
      %v1909 = vpack.c.b16 %v1796, %v1795
      %v1910 = vpack.c.b16 %v1798, %v1797
      %v1911 = vpack.c.b16 %v1800, %v1799
      %v1912 = vpack.c.b16 %v1802, %v1801
      %v1913 = vpack.c.b16 %v1804, %v1803
      %v1914 = vpack.c.b16 %v1806, %v1805
      %v1915 = vpack.c.b16 %v1808, %v1807
      %v1916 = vpack.c.b16 %v1810, %v1809
      %v1917 = vpack.c.b16 %v1812, %v1811
      %v1918 = vpack.c.b16 %v1814, %v1813
      %v1919 = vpack.c.b16 %v1816, %v1815
      %v1920 = vpack.c.b16 %v1818, %v1817
      %v1921 = vpack.c.b16 %v1820, %v1819
      %v1922 = vpack.c.b16 %v1822, %v1821
      %v1923 = vpack.c.b16 %v1824, %v1823
      %v1924 = vpack.c.b16 %v1826, %v1825
      %v1925 = vpack.c.b16 %v1828, %v1827
      %v1926 = vpack.c.b16 %v1830, %v1829
      %v1927 = vpack.c.b16 %v1832, %v1831
      %v1928 = vpack.c.b16 %v1834, %v1833
      %v1929 = vpack.c.b16 %v1836, %v1835
      %v1930 = vpack.c.b16 %v1838, %v1837
      %v1931 = vpack.c.b16 %v1840, %v1839
      %v1932 = vpack.c.b16 %v1842, %v1841
      %v1933 = vpack.c.b16 %v1844, %v1843
      %v1934 = vpack.c.b16 %v1846, %v1845
      %v1935 = vpack.c.b16 %v1848, %v1847
      %v1936 = vpack.c.b16 %v1850, %v1849
      %v1937 = vpack.c.b16 %v1852, %v1851
      %v1938 = vpack.c.b16 %v1854, %v1853
      %v1939 = vpack.c.b16 %v1856, %v1855
      %v1940 = vpack.c.b16 %v1858, %v1857
      %v1941 = vpack.c.b16 %v1860, %v1859
      %v1942 = vpack.c.b16 %v1862, %v1861
      %v1943 = vpack.c.b16 %v1864, %v1863
      %v1944 = vpack.c.b16 %v1866, %v1865
      %v1945 = vpack.c.b16 %v1868, %v1867
      %v1946 = vpack.c.b16 %v1870, %v1869
      %v1947 = vpack.c.b16 %v1872, %v1871
      %v1948 = vpack.c.b16 %v1874, %v1873
      %v1949 = vpack.c.b16 %v1876, %v1875
      %v1950 = vpack.c.b16 %v1878, %v1877
      %2023 = vmatpush.bf16.msra.mxu0 %v1886
      %2024 = vmatpush.bf16.msra.mxu0 %v1885
      %2025 = vmatpush.bf16.msra.mxu0 %v1884
      %2026 = vmatpush.bf16.msra.mxu0 %v1883
      %2027 = vmatpush.bf16.msra.mxu0 %v1882
      %2028 = vmatpush.bf16.msra.mxu0 %v1881
      %2029 = vmatpush.bf16.msra.mxu0 %v1880
      %2030 = vmatpush.bf16.msra.mxu0 %v1879
      %2031 = vmatmul.bf16.gmra.mxu0 %v1420
      %v2032 = vpop.f32.mrf.mxu0
      %v2033 = vadd.f32 0.0, %v2032
      %v2034 = vpop.f32.mrf.mxu0
      %v2035 = vadd.f32 0.0, %v2034
      %2036 = vmatmul.bf16.gmra.mxu0 %v1426
      %v2037 = vpop.f32.mrf.mxu0
      %v2038 = vadd.f32 0.0, %v2037
      %v2039 = vpop.f32.mrf.mxu0
      %v2040 = vadd.f32 0.0, %v2039
      %2041 = vmatmul.bf16.gmra.mxu0 %v1432
      %v2042 = vpop.f32.mrf.mxu0
      %v2043 = vadd.f32 0.0, %v2042
      %v2044 = vpop.f32.mrf.mxu0
      %v2045 = vadd.f32 0.0, %v2044
      %2046 = vmatmul.bf16.gmra.mxu0 %v1438
      %v2047 = vpop.f32.mrf.mxu0
      %v2048 = vadd.f32 0.0, %v2047
      %v2049 = vpop.f32.mrf.mxu0
      %v2050 = vadd.f32 0.0, %v2049
      %2051 = vdwg.mxu0
      %2052 = vmatpush.bf16.msra.mxu0 %v1894
      %2053 = vmatpush.bf16.msra.mxu0 %v1893
      %2054 = vmatpush.bf16.msra.mxu0 %v1892
      %2055 = vmatpush.bf16.msra.mxu0 %v1891
      %2056 = vmatpush.bf16.msra.mxu0 %v1890
      %2057 = vmatpush.bf16.msra.mxu0 %v1889
      %2058 = vmatpush.bf16.msra.mxu0 %v1888
      %2059 = vmatpush.bf16.msra.mxu0 %v1887
      %2060 = vmatmul.bf16.gmra.mxu0 %v1421
      %v2061 = vpop.f32.mrf.mxu0
      %v2062 = vadd.f32 %v2033, %v2061
      %v2063 = vpop.f32.mrf.mxu0
      %v2064 = vadd.f32 %v2035, %v2063
      %2065 = vmatmul.bf16.gmra.mxu0 %v1427
      %v2066 = vpop.f32.mrf.mxu0
      %v2067 = vadd.f32 %v2038, %v2066
      %v2068 = vpop.f32.mrf.mxu0
      %v2069 = vadd.f32 %v2040, %v2068
      %2070 = vmatmul.bf16.gmra.mxu0 %v1433
      %v2071 = vpop.f32.mrf.mxu0
      %v2072 = vadd.f32 %v2043, %v2071
      %v2073 = vpop.f32.mrf.mxu0
      %v2074 = vadd.f32 %v2045, %v2073
      %2075 = vmatmul.bf16.gmra.mxu0 %v1439
      %v2076 = vpop.f32.mrf.mxu0
      %v2077 = vadd.f32 %v2048, %v2076
      %v2078 = vpop.f32.mrf.mxu0
      %v2079 = vadd.f32 %v2050, %v2078
      %2080 = vdwg.mxu0
      %2081 = vmatpush.bf16.msra.mxu0 %v1902
      %2082 = vmatpush.bf16.msra.mxu0 %v1901
      %2083 = vmatpush.bf16.msra.mxu0 %v1900
      %2084 = vmatpush.bf16.msra.mxu0 %v1899
      %2085 = vmatpush.bf16.msra.mxu0 %v1898
      %2086 = vmatpush.bf16.msra.mxu0 %v1897
      %2087 = vmatpush.bf16.msra.mxu0 %v1896
      %2088 = vmatpush.bf16.msra.mxu0 %v1895
      %2089 = vmatmul.bf16.gmra.mxu0 %v1422
      %v2090 = vpop.f32.mrf.mxu0
      %v2091 = vadd.f32 %v2062, %v2090
      %v2092 = vpop.f32.mrf.mxu0
      %v2093 = vadd.f32 %v2064, %v2092
      %2094 = vmatmul.bf16.gmra.mxu0 %v1428
      %v2095 = vpop.f32.mrf.mxu0
      %v2096 = vadd.f32 %v2067, %v2095
      %v2097 = vpop.f32.mrf.mxu0
      %v2098 = vadd.f32 %v2069, %v2097
      %2099 = vmatmul.bf16.gmra.mxu0 %v1434
      %v2100 = vpop.f32.mrf.mxu0
      %v2101 = vadd.f32 %v2072, %v2100
      %v2102 = vpop.f32.mrf.mxu0
      %v2103 = vadd.f32 %v2074, %v2102
      %2104 = vmatmul.bf16.gmra.mxu0 %v1440
      %v2105 = vpop.f32.mrf.mxu0
      %v2106 = vadd.f32 %v2077, %v2105
      %v2107 = vpop.f32.mrf.mxu0
      %v2108 = vadd.f32 %v2079, %v2107
      %2109 = vdwg.mxu0
      %2110 = vmatpush.bf16.msra.mxu0 %v1910
      %2111 = vmatpush.bf16.msra.mxu0 %v1909
      %2112 = vmatpush.bf16.msra.mxu0 %v1908
      %2113 = vmatpush.bf16.msra.mxu0 %v1907
      %2114 = vmatpush.bf16.msra.mxu0 %v1906
      %2115 = vmatpush.bf16.msra.mxu0 %v1905
      %2116 = vmatpush.bf16.msra.mxu0 %v1904
      %2117 = vmatpush.bf16.msra.mxu0 %v1903
      %2118 = vmatmul.bf16.gmra.mxu0 %v1423
      %v2119 = vpop.f32.mrf.mxu0
      %v2120 = vadd.f32 %v2091, %v2119
      %v2121 = vpop.f32.mrf.mxu0
      %v2122 = vadd.f32 %v2093, %v2121
      %2123 = vmatmul.bf16.gmra.mxu0 %v1429
      %v2124 = vpop.f32.mrf.mxu0
      %v2125 = vadd.f32 %v2096, %v2124
      %v2126 = vpop.f32.mrf.mxu0
      %v2127 = vadd.f32 %v2098, %v2126
      %2128 = vmatmul.bf16.gmra.mxu0 %v1435
      %v2129 = vpop.f32.mrf.mxu0
      %v2130 = vadd.f32 %v2101, %v2129
      %v2131 = vpop.f32.mrf.mxu0
      %v2132 = vadd.f32 %v2103, %v2131
      %2133 = vmatmul.bf16.gmra.mxu0 %v1441
      %v2134 = vpop.f32.mrf.mxu0
      %v2135 = vadd.f32 %v2106, %v2134
      %v2136 = vpop.f32.mrf.mxu0
      %v2137 = vadd.f32 %v2108, %v2136
      %2138 = vdwg.mxu0
      %2139 = vmatpush.bf16.msra.mxu0 %v1918
      %2140 = vmatpush.bf16.msra.mxu0 %v1917
      %2141 = vmatpush.bf16.msra.mxu0 %v1916
      %2142 = vmatpush.bf16.msra.mxu0 %v1915
      %2143 = vmatpush.bf16.msra.mxu0 %v1914
      %2144 = vmatpush.bf16.msra.mxu0 %v1913
      %2145 = vmatpush.bf16.msra.mxu0 %v1912
      %2146 = vmatpush.bf16.msra.mxu0 %v1911
      %2147 = vmatmul.bf16.gmra.mxu0 %v1424
      %v2148 = vpop.f32.mrf.mxu0
      %v2149 = vadd.f32 %v2120, %v2148
      %v2150 = vpop.f32.mrf.mxu0
      %v2151 = vadd.f32 %v2122, %v2150
      %2152 = vmatmul.bf16.gmra.mxu0 %v1430
      %v2153 = vpop.f32.mrf.mxu0
      %v2154 = vadd.f32 %v2125, %v2153
      %v2155 = vpop.f32.mrf.mxu0
      %v2156 = vadd.f32 %v2127, %v2155
      %2157 = vmatmul.bf16.gmra.mxu0 %v1436
      %v2158 = vpop.f32.mrf.mxu0
      %v2159 = vadd.f32 %v2130, %v2158
      %v2160 = vpop.f32.mrf.mxu0
      %v2161 = vadd.f32 %v2132, %v2160
      %2162 = vmatmul.bf16.gmra.mxu0 %v1442
      %v2163 = vpop.f32.mrf.mxu0
      %v2164 = vadd.f32 %v2135, %v2163
      %v2165 = vpop.f32.mrf.mxu0
      %v2166 = vadd.f32 %v2137, %v2165
      %2167 = vdwg.mxu0
      %2168 = vmatpush.bf16.msra.mxu0 %v1926
      %2169 = vmatpush.bf16.msra.mxu0 %v1925
      %2170 = vmatpush.bf16.msra.mxu0 %v1924
      %2171 = vmatpush.bf16.msra.mxu0 %v1923
      %2172 = vmatpush.bf16.msra.mxu0 %v1922
      %2173 = vmatpush.bf16.msra.mxu0 %v1921
      %2174 = vmatpush.bf16.msra.mxu0 %v1920
      %2175 = vmatpush.bf16.msra.mxu0 %v1919
      %2176 = vmatmul.bf16.gmra.mxu0 %v1425
      %v2177 = vpop.f32.mrf.mxu0
      %v2178 = vadd.f32 %v2149, %v2177
      %v2179 = vpop.f32.mrf.mxu0
      %v2180 = vadd.f32 %v2151, %v2179
      %2181 = vmatmul.bf16.gmra.mxu0 %v1431
      %v2182 = vpop.f32.mrf.mxu0
      %v2183 = vadd.f32 %v2154, %v2182
      %v2184 = vpop.f32.mrf.mxu0
      %v2185 = vadd.f32 %v2156, %v2184
      %2186 = vmatmul.bf16.gmra.mxu0 %v1437
      %v2187 = vpop.f32.mrf.mxu0
      %v2188 = vadd.f32 %v2159, %v2187
      %v2189 = vpop.f32.mrf.mxu0
      %v2190 = vadd.f32 %v2161, %v2189
      %2191 = vmatmul.bf16.gmra.mxu0 %v1443
      %v2192 = vpop.f32.mrf.mxu0
      %v2193 = vadd.f32 %v2164, %v2192
      %v2194 = vpop.f32.mrf.mxu0
      %v2195 = vadd.f32 %v2166, %v2194
      %2196 = vdwg.mxu0
      %2197 = vmatpush.bf16.msra.mxu0 %v1934
      %2198 = vmatpush.bf16.msra.mxu0 %v1933
      %2199 = vmatpush.bf16.msra.mxu0 %v1932
      %2200 = vmatpush.bf16.msra.mxu0 %v1931
      %2201 = vmatpush.bf16.msra.mxu0 %v1930
      %2202 = vmatpush.bf16.msra.mxu0 %v1929
      %2203 = vmatpush.bf16.msra.mxu0 %v1928
      %2204 = vmatpush.bf16.msra.mxu0 %v1927
      %2205 = vmatmul.bf16.gmra.mxu0 %v1426
      %v2206 = vpop.f32.mrf.mxu0
      %v2207 = vadd.f32 %v2178, %v2206
      %v2208 = vpop.f32.mrf.mxu0
      %v2209 = vadd.f32 %v2180, %v2208
      %2210 = vmatmul.bf16.gmra.mxu0 %v1432
      %v2211 = vpop.f32.mrf.mxu0
      %v2212 = vadd.f32 %v2183, %v2211
      %v2213 = vpop.f32.mrf.mxu0
      %v2214 = vadd.f32 %v2185, %v2213
      %2215 = vmatmul.bf16.gmra.mxu0 %v1438
      %v2216 = vpop.f32.mrf.mxu0
      %v2217 = vadd.f32 %v2188, %v2216
      %v2218 = vpop.f32.mrf.mxu0
      %v2219 = vadd.f32 %v2190, %v2218
      %2220 = vmatmul.bf16.gmra.mxu0 %v1444
      %v2221 = vpop.f32.mrf.mxu0
      %v2222 = vadd.f32 %v2193, %v2221
      %v2223 = vpop.f32.mrf.mxu0
      %v2224 = vadd.f32 %v2195, %v2223
      %2225 = vdwg.mxu0
      %2226 = vmatpush.bf16.msra.mxu0 %v1942
      %2227 = vmatpush.bf16.msra.mxu0 %v1941
      %2228 = vmatpush.bf16.msra.mxu0 %v1940
      %2229 = vmatpush.bf16.msra.mxu0 %v1939
      %2230 = vmatpush.bf16.msra.mxu0 %v1938
      %2231 = vmatpush.bf16.msra.mxu0 %v1937
      %2232 = vmatpush.bf16.msra.mxu0 %v1936
      %2233 = vmatpush.bf16.msra.mxu0 %v1935
      %2234 = vmatmul.bf16.gmra.mxu0 %v1427
      %v2235 = vpop.f32.mrf.mxu0
      %v2236 = vadd.f32 %v2207, %v2235
      %v2237 = vpop.f32.mrf.mxu0
      %v2238 = vadd.f32 %v2209, %v2237
      %2239 = vmatmul.bf16.gmra.mxu0 %v1433
      %v2240 = vpop.f32.mrf.mxu0
      %v2241 = vadd.f32 %v2212, %v2240
      %v2242 = vpop.f32.mrf.mxu0
      %v2243 = vadd.f32 %v2214, %v2242
      %2244 = vmatmul.bf16.gmra.mxu0 %v1439
      %v2245 = vpop.f32.mrf.mxu0
      %v2246 = vadd.f32 %v2217, %v2245
      %v2247 = vpop.f32.mrf.mxu0
      %v2248 = vadd.f32 %v2219, %v2247
      %2249 = vmatmul.bf16.gmra.mxu0 %v1445
      %v2250 = vpop.f32.mrf.mxu0
      %v2251 = vadd.f32 %v2222, %v2250
      %v2252 = vpop.f32.mrf.mxu0
      %v2253 = vadd.f32 %v2224, %v2252
      %2254 = vdwg.mxu0
      %2255 = vmatpush.bf16.msra.mxu0 %v1950
      %2256 = vmatpush.bf16.msra.mxu0 %v1949
      %2257 = vmatpush.bf16.msra.mxu0 %v1948
      %2258 = vmatpush.bf16.msra.mxu0 %v1947
      %2259 = vmatpush.bf16.msra.mxu0 %v1946
      %2260 = vmatpush.bf16.msra.mxu0 %v1945
      %2261 = vmatpush.bf16.msra.mxu0 %v1944
      %2262 = vmatpush.bf16.msra.mxu0 %v1943
      %2263 = vmatmul.bf16.gmra.mxu0 %v1428
      %v2264 = vpop.f32.mrf.mxu0
      %v2265 = vadd.f32 %v2236, %v2264
      %v2266 = vpop.f32.mrf.mxu0
      %v2267 = vadd.f32 %v2238, %v2266
      %2268 = vmatmul.bf16.gmra.mxu0 %v1434
      %v2269 = vpop.f32.mrf.mxu0
      %v2270 = vadd.f32 %v2241, %v2269
      %v2271 = vpop.f32.mrf.mxu0
      %v2272 = vadd.f32 %v2243, %v2271
      %2273 = vmatmul.bf16.gmra.mxu0 %v1440
      %v2274 = vpop.f32.mrf.mxu0
      %v2275 = vadd.f32 %v2246, %v2274
      %v2276 = vpop.f32.mrf.mxu0
      %v2277 = vadd.f32 %v2248, %v2276
      %2278 = vmatmul.bf16.gmra.mxu0 %v1446
      %v2279 = vpop.f32.mrf.mxu0
      %v2280 = vadd.f32 %v2251, %v2279
      %v2281 = vpop.f32.mrf.mxu0
      %v2282 = vadd.f32 %v2253, %v2281
      %2283 = vdwg.mxu0
      %v2284 = vmax.f32 %v2265, 0.0
      %v2285 = vmax.f32 %v2267, 0.0
      %v2286 = vmax.f32 %v2270, 0.0
      %v2287 = vmax.f32 %v2272, 0.0
      %v2288 = vmax.f32 %v2275, 0.0
      %v2289 = vmax.f32 %v2277, 0.0
      %v2290 = vmax.f32 %v2280, 0.0
      %v2291 = vmax.f32 %v2282, 0.0
      %v2292 = vpack.c.bf16 %v2285, %v2284
      %v2293 = vpack.c.bf16 %v2287, %v2286
      %v2294 = vpack.c.bf16 %v2289, %v2288
      %v2295 = vpack.c.bf16 %v2291, %v2290
      %v2296 = vld [vmem:[%s4] sm:$0xf]
      %v2297 = vld [vmem:[%s4 + $0x4] sm:$0xf]
      %v2300 = vunpack.c.l.b16 %v2296
      %v2301 = vunpack.c.l.b16 %v2297
      %v2302 = vpack.c.b16 %v2301, %v2300
      %vm2304 = vcmask 130048
      %v2306 = vsel %vm2304, %v2292, 0
      %v2309 = vsel %vm2304, %v2293, 0
      %v2312 = vsel %vm2304, %v2294, 0
      %v2315 = vsel %vm2304, %v2295, 0
      %2317 = vmatpush.bf16.msra.mxu0 0
      %2318 = vmatpush.bf16.msra.mxu0 0
      %2319 = vmatpush.bf16.msra.mxu0 0
      %2320 = vmatpush.bf16.msra.mxu0 0
      %2321 = vmatpush.bf16.msra.mxu0 0
      %2322 = vmatpush.bf16.msra.mxu0 0
      %2323 = vmatpush.bf16.msra.mxu0 0
      %2324 = vmatpush.bf16.msra.mxu0 %v2302
      %2325 = vmatmul.bf16.gmra.mxu0 %v2306
      %v2326 = vpop.f32.mrf.mxu0
      %v2327 = vadd.f32 0.0, %v2326
      %v2328 = vpop.f32.mrf.mxu0
      %v2329 = vadd.f32 0.0, %v2328
      %2330 = vmatmul.bf16.gmra.mxu0 %v2309
      %v2331 = vpop.f32.mrf.mxu0
      %v2332 = vadd.f32 0.0, %v2331
      %v2333 = vpop.f32.mrf.mxu0
      %v2334 = vadd.f32 0.0, %v2333
      %2335 = vmatmul.bf16.gmra.mxu0 %v2312
      %v2336 = vpop.f32.mrf.mxu0
      %v2337 = vadd.f32 0.0, %v2336
      %v2338 = vpop.f32.mrf.mxu0
      %v2339 = vadd.f32 0.0, %v2338
      %2340 = vmatmul.bf16.gmra.mxu0 %v2315
      %v2341 = vpop.f32.mrf.mxu0
      %v2342 = vadd.f32 0.0, %v2341
      %v2343 = vpop.f32.mrf.mxu0
      %v2344 = vadd.f32 0.0, %v2343
      %2345 = vdwg.mxu0
      %v2346 = vadd.f32 %v1243, %v2327
      %v2347 = vadd.f32 %v1245, %v2329
      %v2348 = vadd.f32 %v1248, %v2332
      %v2349 = vadd.f32 %v1250, %v2334
      %v2350 = vadd.f32 %v1253, %v2337
      %v2351 = vadd.f32 %v1255, %v2339
      %v2352 = vadd.f32 %v1258, %v2342
      %v2353 = vadd.f32 %v1260, %v2344
      %v2354 = vmax.f32 %v2346, 0.0
      %v2355 = vmax.f32 %v2347, 0.0
      %v2356 = vmax.f32 %v2348, 0.0
      %v2357 = vmax.f32 %v2349, 0.0
      %v2358 = vmax.f32 %v2350, 0.0
      %v2359 = vmax.f32 %v2351, 0.0
      %v2360 = vmax.f32 %v2352, 0.0
      %v2361 = vmax.f32 %v2353, 0.0
      %2362 = vst.msk [vmem:[%s1290 + $0x1] sm:$0xff] %vm1291, %v2354
      %2363 = vst.msk [vmem:[%s1290 + $0x11] sm:$0xff] %vm1291, %v2355
      %2364 = vst.msk [vmem:[%s1290 + $0x21] sm:$0xff] %vm1291, %v2356
      %2365 = vst.msk [vmem:[%s1290 + $0x31] sm:$0xff] %vm1291, %v2357
      %2366 = vst.msk [vmem:[%s1290 + $0x41] sm:$0xff] %vm1291, %v2358
      %2367 = vst.msk [vmem:[%s1290 + $0x51] sm:$0xff] %vm1291, %v2359
      %2368 = vst.msk [vmem:[%s1290 + $0x61] sm:$0xff] %vm1291, %v2360
      %2369 = vst.msk [vmem:[%s1290 + $0x71] sm:$0xff] %vm1291, %v2361
      %v2370 = vld [vmem:[#allocation3] sm:$0xff]
      %v2371 = vld [vmem:[#allocation3 + $0x8] sm:$0x3]
      %v2372 = vld [vmem:[#allocation3 + $0x10] sm:$0xff]
      %v2373 = vld [vmem:[#allocation3 + $0x18] sm:$0x3]
      %v2374 = vld [vmem:[#allocation3 + $0x20] sm:$0xff]
      %v2375 = vld [vmem:[#allocation3 + $0x28] sm:$0x3]
      %v2376 = vld [vmem:[#allocation3 + $0x30] sm:$0xff]
      %v2377 = vld [vmem:[#allocation3 + $0x38] sm:$0x3]
      %v2378 = vld [vmem:[#allocation3 + $0x40] sm:$0xff]
      %v2379 = vld [vmem:[#allocation3 + $0x48] sm:$0x3]
      %v2380 = vld [vmem:[#allocation3 + $0x50] sm:$0xff]
      %v2381 = vld [vmem:[#allocation3 + $0x58] sm:$0x3]
      %v2382 = vld [vmem:[#allocation3 + $0x60] sm:$0xff]
      %v2383 = vld [vmem:[#allocation3 + $0x68] sm:$0x3]
      %v2384 = vld [vmem:[#allocation3 + $0x70] sm:$0xff]
      %v2385 = vld [vmem:[#allocation3 + $0x78] sm:$0x3]
      %v2386 = vld [vmem:[#allocation3 + $0x80] sm:$0xff]
      %v2387 = vld [vmem:[#allocation3 + $0x88] sm:$0x3]
      %v2388 = vld [vmem:[#allocation3 + $0x90] sm:$0xff]
      %v2389 = vld [vmem:[#allocation3 + $0x98] sm:$0x3]
      %v2406 = vrot.slane %v2370, 1
      %v2407 = vrot.slane %v2371, 1
      %v2408 = vsel %vm308, %v2406, %v2407
      %v2409 = vrot.slane %v2372, 1
      %v2410 = vrot.slane %v2373, 1
      %v2411 = vsel %vm308, %v2409, %v2410
      %v2412 = vrot.slane %v2374, 1
      %v2413 = vrot.slane %v2375, 1
      %v2414 = vsel %vm308, %v2412, %v2413
      %v2415 = vrot.slane %v2376, 1
      %v2416 = vrot.slane %v2377, 1
      %v2417 = vsel %vm308, %v2415, %v2416
      %v2418 = vrot.slane %v2378, 1
      %v2419 = vrot.slane %v2379, 1
      %v2420 = vsel %vm308, %v2418, %v2419
      %v2421 = vrot.slane %v2380, 1
      %v2422 = vrot.slane %v2381, 1
      %v2423 = vsel %vm308, %v2421, %v2422
      %v2424 = vrot.slane %v2382, 1
      %v2425 = vrot.slane %v2383, 1
      %v2426 = vsel %vm308, %v2424, %v2425
      %v2427 = vrot.slane %v2384, 1
      %v2428 = vrot.slane %v2385, 1
      %v2429 = vsel %vm308, %v2427, %v2428
      %v2438 = vrot.slane %v2370, 2
      %v2439 = vrot.slane %v2371, 2
      %v2440 = vsel %vm341, %v2438, %v2439
      %v2441 = vrot.slane %v2372, 2
      %v2442 = vrot.slane %v2373, 2
      %v2443 = vsel %vm341, %v2441, %v2442
      %v2444 = vrot.slane %v2374, 2
      %v2445 = vrot.slane %v2375, 2
      %v2446 = vsel %vm341, %v2444, %v2445
      %v2447 = vrot.slane %v2376, 2
      %v2448 = vrot.slane %v2377, 2
      %v2449 = vsel %vm341, %v2447, %v2448
      %v2450 = vrot.slane %v2378, 2
      %v2451 = vrot.slane %v2379, 2
      %v2452 = vsel %vm341, %v2450, %v2451
      %v2453 = vrot.slane %v2380, 2
      %v2454 = vrot.slane %v2381, 2
      %v2455 = vsel %vm341, %v2453, %v2454
      %v2456 = vrot.slane %v2382, 2
      %v2457 = vrot.slane %v2383, 2
      %v2458 = vsel %vm341, %v2456, %v2457
      %v2459 = vrot.slane %v2384, 2
      %v2460 = vrot.slane %v2385, 2
      %v2461 = vsel %vm341, %v2459, %v2460
      %v2472 = vrot.slane %v2386, 1
      %v2473 = vrot.slane %v2387, 1
      %v2474 = vsel %vm308, %v2472, %v2473
      %v2476 = vrot.slane %v2386, 2
      %v2477 = vrot.slane %v2387, 2
      %v2478 = vsel %vm341, %v2476, %v2477
      %v2482 = vrot.slane %v2388, 1
      %v2483 = vrot.slane %v2389, 1
      %v2484 = vsel %vm308, %v2482, %v2483
      %v2486 = vrot.slane %v2388, 2
      %v2487 = vrot.slane %v2389, 2
      %v2488 = vsel %vm341, %v2486, %v2487
      %v2490 = vpack.c.bf16 %v2372, %v2370
      %v2491 = vpack.c.bf16 %v2411, %v2408
      %v2492 = vpack.c.bf16 %v2443, %v2440
      %v2493 = vpack.c.bf16 %v2374, %v2372
      %v2494 = vpack.c.bf16 %v2414, %v2411
      %v2495 = vpack.c.bf16 %v2446, %v2443
      %v2496 = vpack.c.bf16 %v2376, %v2374
      %v2497 = vpack.c.bf16 %v2417, %v2414
      %v2498 = vpack.c.bf16 %v2449, %v2446
      %v2499 = vpack.c.bf16 %v2378, %v2376
      %v2500 = vpack.c.bf16 %v2420, %v2417
      %v2501 = vpack.c.bf16 %v2452, %v2449
      %v2502 = vpack.c.bf16 %v2380, %v2378
      %v2503 = vpack.c.bf16 %v2423, %v2420
      %v2504 = vpack.c.bf16 %v2455, %v2452
      %v2505 = vpack.c.bf16 %v2382, %v2380
      %v2506 = vpack.c.bf16 %v2426, %v2423
      %v2507 = vpack.c.bf16 %v2458, %v2455
      %v2508 = vpack.c.bf16 %v2384, %v2382
      %v2509 = vpack.c.bf16 %v2429, %v2426
      %v2510 = vpack.c.bf16 %v2461, %v2458
      %v2511 = vpack.c.bf16 %v2386, %v2384
      %v2512 = vpack.c.bf16 %v2474, %v2429
      %v2513 = vpack.c.bf16 %v2478, %v2461
      %v2514 = vpack.c.bf16 %v2388, %v2386
      %v2515 = vpack.c.bf16 %v2484, %v2474
      %v2516 = vpack.c.bf16 %v2488, %v2478
      %s2517 = scalar_lea.vmem %s3, 576
      %v2518 = vld [vmem:[%s2517] sm:$0xf]
      %v2519 = vld [vmem:[%s2517 + $0x4] sm:$0xf]
      %v2520 = vld [vmem:[%s2517 + $0x8] sm:$0xf]
      %v2521 = vld [vmem:[%s2517 + $0xc] sm:$0xf]
      %v2522 = vld [vmem:[%s2517 + $0x10] sm:$0xf]
      %v2523 = vld [vmem:[%s2517 + $0x14] sm:$0xf]
      %v2524 = vld [vmem:[%s2517 + $0x18] sm:$0xf]
      %v2525 = vld [vmem:[%s2517 + $0x1c] sm:$0xf]
      %v2526 = vld [vmem:[%s2517 + $0x20] sm:$0xf]
      %v2527 = vld [vmem:[%s2517 + $0x24] sm:$0xf]
      %v2528 = vld [vmem:[%s2517 + $0x28] sm:$0xf]
      %v2529 = vld [vmem:[%s2517 + $0x2c] sm:$0xf]
      %v2530 = vld [vmem:[%s2517 + $0x30] sm:$0xf]
      %v2531 = vld [vmem:[%s2517 + $0x34] sm:$0xf]
      %v2532 = vld [vmem:[%s2517 + $0x38] sm:$0xf]
      %v2533 = vld [vmem:[%s2517 + $0x3c] sm:$0xf]
      %v2534 = vld [vmem:[%s2517 + $0x40] sm:$0xf]
      %v2535 = vld [vmem:[%s2517 + $0x44] sm:$0xf]
      %v2536 = vld [vmem:[%s2517 + $0x48] sm:$0xf]
      %v2537 = vld [vmem:[%s2517 + $0x4c] sm:$0xf]
      %v2538 = vld [vmem:[%s2517 + $0x50] sm:$0xf]
      %v2539 = vld [vmem:[%s2517 + $0x54] sm:$0xf]
      %v2540 = vld [vmem:[%s2517 + $0x58] sm:$0xf]
      %v2541 = vld [vmem:[%s2517 + $0x5c] sm:$0xf]
      %v2542 = vld [vmem:[%s2517 + $0x60] sm:$0xf]
      %v2543 = vld [vmem:[%s2517 + $0x64] sm:$0xf]
      %v2544 = vld [vmem:[%s2517 + $0x68] sm:$0xf]
      %v2545 = vld [vmem:[%s2517 + $0x6c] sm:$0xf]
      %v2546 = vld [vmem:[%s2517 + $0x70] sm:$0xf]
      %v2547 = vld [vmem:[%s2517 + $0x74] sm:$0xf]
      %v2548 = vld [vmem:[%s2517 + $0x78] sm:$0xf]
      %v2549 = vld [vmem:[%s2517 + $0x7c] sm:$0xf]
      %v2550 = vld [vmem:[%s2517 + $0x80] sm:$0xf]
      %v2551 = vld [vmem:[%s2517 + $0x84] sm:$0xf]
      %v2552 = vld [vmem:[%s2517 + $0x88] sm:$0xf]
      %v2553 = vld [vmem:[%s2517 + $0x8c] sm:$0xf]
      %v2554 = vld [vmem:[%s2517 + $0x90] sm:$0xf]
      %v2555 = vld [vmem:[%s2517 + $0x94] sm:$0xf]
      %v2556 = vld [vmem:[%s2517 + $0x98] sm:$0xf]
      %v2557 = vld [vmem:[%s2517 + $0x9c] sm:$0xf]
      %v2558 = vld [vmem:[%s2517 + $0xa0] sm:$0xf]
      %v2559 = vld [vmem:[%s2517 + $0xa4] sm:$0xf]
      %v2560 = vld [vmem:[%s2517 + $0xa8] sm:$0xf]
      %v2561 = vld [vmem:[%s2517 + $0xac] sm:$0xf]
      %v2562 = vld [vmem:[%s2517 + $0xb0] sm:$0xf]
      %v2563 = vld [vmem:[%s2517 + $0xb4] sm:$0xf]
      %v2564 = vld [vmem:[%s2517 + $0xb8] sm:$0xf]
      %v2565 = vld [vmem:[%s2517 + $0xbc] sm:$0xf]
      %v2566 = vld [vmem:[%s2517 + $0xc0] sm:$0xf]
      %v2567 = vld [vmem:[%s2517 + $0xc4] sm:$0xf]
      %v2568 = vld [vmem:[%s2517 + $0xc8] sm:$0xf]
      %v2569 = vld [vmem:[%s2517 + $0xcc] sm:$0xf]
      %v2570 = vld [vmem:[%s2517 + $0xd0] sm:$0xf]
      %v2571 = vld [vmem:[%s2517 + $0xd4] sm:$0xf]
      %v2572 = vld [vmem:[%s2517 + $0xd8] sm:$0xf]
      %v2573 = vld [vmem:[%s2517 + $0xdc] sm:$0xf]
      %v2574 = vld [vmem:[%s2517 + $0xe0] sm:$0xf]
      %v2575 = vld [vmem:[%s2517 + $0xe4] sm:$0xf]
      %v2576 = vld [vmem:[%s2517 + $0xe8] sm:$0xf]
      %v2577 = vld [vmem:[%s2517 + $0xec] sm:$0xf]
      %v2578 = vld [vmem:[%s2517 + $0xf0] sm:$0xf]
      %v2579 = vld [vmem:[%s2517 + $0xf4] sm:$0xf]
      %v2580 = vld [vmem:[%s2517 + $0xf8] sm:$0xf]
      %v2581 = vld [vmem:[%s2517 + $0xfc] sm:$0xf]
      %v2582 = vld [vmem:[%s2517 + $0x100] sm:$0xf]
      %v2583 = vld [vmem:[%s2517 + $0x104] sm:$0xf]
      %v2584 = vld [vmem:[%s2517 + $0x108] sm:$0xf]
      %v2585 = vld [vmem:[%s2517 + $0x10c] sm:$0xf]
      %v2586 = vld [vmem:[%s2517 + $0x110] sm:$0xf]
      %v2587 = vld [vmem:[%s2517 + $0x114] sm:$0xf]
      %v2588 = vld [vmem:[%s2517 + $0x118] sm:$0xf]
      %v2589 = vld [vmem:[%s2517 + $0x11c] sm:$0xf]
      %v2590 = vld [vmem:[%s2517 + $0x120] sm:$0xf]
      %v2591 = vld [vmem:[%s2517 + $0x124] sm:$0xf]
      %v2592 = vld [vmem:[%s2517 + $0x128] sm:$0xf]
      %v2593 = vld [vmem:[%s2517 + $0x12c] sm:$0xf]
      %v2594 = vld [vmem:[%s2517 + $0x130] sm:$0xf]
      %v2595 = vld [vmem:[%s2517 + $0x134] sm:$0xf]
      %v2596 = vld [vmem:[%s2517 + $0x138] sm:$0xf]
      %v2597 = vld [vmem:[%s2517 + $0x13c] sm:$0xf]
      %v2598 = vld [vmem:[%s2517 + $0x140] sm:$0xf]
      %v2599 = vld [vmem:[%s2517 + $0x144] sm:$0xf]
      %v2600 = vld [vmem:[%s2517 + $0x148] sm:$0xf]
      %v2601 = vld [vmem:[%s2517 + $0x14c] sm:$0xf]
      %v2602 = vld [vmem:[%s2517 + $0x150] sm:$0xf]
      %v2603 = vld [vmem:[%s2517 + $0x154] sm:$0xf]
      %v2604 = vld [vmem:[%s2517 + $0x158] sm:$0xf]
      %v2605 = vld [vmem:[%s2517 + $0x15c] sm:$0xf]
      %v2606 = vld [vmem:[%s2517 + $0x160] sm:$0xf]
      %v2607 = vld [vmem:[%s2517 + $0x164] sm:$0xf]
      %v2608 = vld [vmem:[%s2517 + $0x168] sm:$0xf]
      %v2609 = vld [vmem:[%s2517 + $0x16c] sm:$0xf]
      %v2610 = vld [vmem:[%s2517 + $0x170] sm:$0xf]
      %v2611 = vld [vmem:[%s2517 + $0x174] sm:$0xf]
      %v2612 = vld [vmem:[%s2517 + $0x178] sm:$0xf]
      %v2613 = vld [vmem:[%s2517 + $0x17c] sm:$0xf]
      %v2614 = vld [vmem:[%s2517 + $0x180] sm:$0xf]
      %v2615 = vld [vmem:[%s2517 + $0x184] sm:$0xf]
      %v2616 = vld [vmem:[%s2517 + $0x188] sm:$0xf]
      %v2617 = vld [vmem:[%s2517 + $0x18c] sm:$0xf]
      %v2618 = vld [vmem:[%s2517 + $0x190] sm:$0xf]
      %v2619 = vld [vmem:[%s2517 + $0x194] sm:$0xf]
      %v2620 = vld [vmem:[%s2517 + $0x198] sm:$0xf]
      %v2621 = vld [vmem:[%s2517 + $0x19c] sm:$0xf]
      %v2622 = vld [vmem:[%s2517 + $0x1a0] sm:$0xf]
      %v2623 = vld [vmem:[%s2517 + $0x1a4] sm:$0xf]
      %v2624 = vld [vmem:[%s2517 + $0x1a8] sm:$0xf]
      %v2625 = vld [vmem:[%s2517 + $0x1ac] sm:$0xf]
      %v2626 = vld [vmem:[%s2517 + $0x1b0] sm:$0xf]
      %v2627 = vld [vmem:[%s2517 + $0x1b4] sm:$0xf]
      %v2628 = vld [vmem:[%s2517 + $0x1b8] sm:$0xf]
      %v2629 = vld [vmem:[%s2517 + $0x1bc] sm:$0xf]
      %v2630 = vld [vmem:[%s2517 + $0x1c0] sm:$0xf]
      %v2631 = vld [vmem:[%s2517 + $0x1c4] sm:$0xf]
      %v2632 = vld [vmem:[%s2517 + $0x1c8] sm:$0xf]
      %v2633 = vld [vmem:[%s2517 + $0x1cc] sm:$0xf]
      %v2634 = vld [vmem:[%s2517 + $0x1d0] sm:$0xf]
      %v2635 = vld [vmem:[%s2517 + $0x1d4] sm:$0xf]
      %v2636 = vld [vmem:[%s2517 + $0x1d8] sm:$0xf]
      %v2637 = vld [vmem:[%s2517 + $0x1dc] sm:$0xf]
      %v2638 = vld [vmem:[%s2517 + $0x1e0] sm:$0xf]
      %v2639 = vld [vmem:[%s2517 + $0x1e4] sm:$0xf]
      %v2640 = vld [vmem:[%s2517 + $0x1e8] sm:$0xf]
      %v2641 = vld [vmem:[%s2517 + $0x1ec] sm:$0xf]
      %v2642 = vld [vmem:[%s2517 + $0x1f0] sm:$0xf]
      %v2643 = vld [vmem:[%s2517 + $0x1f4] sm:$0xf]
      %v2644 = vld [vmem:[%s2517 + $0x1f8] sm:$0xf]
      %v2645 = vld [vmem:[%s2517 + $0x1fc] sm:$0xf]
      %v2646 = vld [vmem:[%s2517 + $0x200] sm:$0xf]
      %v2647 = vld [vmem:[%s2517 + $0x204] sm:$0xf]
      %v2648 = vld [vmem:[%s2517 + $0x208] sm:$0xf]
      %v2649 = vld [vmem:[%s2517 + $0x20c] sm:$0xf]
      %v2650 = vld [vmem:[%s2517 + $0x210] sm:$0xf]
      %v2651 = vld [vmem:[%s2517 + $0x214] sm:$0xf]
      %v2652 = vld [vmem:[%s2517 + $0x218] sm:$0xf]
      %v2653 = vld [vmem:[%s2517 + $0x21c] sm:$0xf]
      %v2654 = vld [vmem:[%s2517 + $0x220] sm:$0xf]
      %v2655 = vld [vmem:[%s2517 + $0x224] sm:$0xf]
      %v2656 = vld [vmem:[%s2517 + $0x228] sm:$0xf]
      %v2657 = vld [vmem:[%s2517 + $0x22c] sm:$0xf]
      %v2658 = vld [vmem:[%s2517 + $0x230] sm:$0xf]
      %v2659 = vld [vmem:[%s2517 + $0x234] sm:$0xf]
      %v2660 = vld [vmem:[%s2517 + $0x238] sm:$0xf]
      %v2661 = vld [vmem:[%s2517 + $0x23c] sm:$0xf]
      %v2806 = vunpack.c.l.b16 %v2518
      %v2807 = vunpack.c.l.b16 %v2519
      %v2808 = vunpack.c.l.b16 %v2520
      %v2809 = vunpack.c.l.b16 %v2521
      %v2810 = vunpack.c.l.b16 %v2522
      %v2811 = vunpack.c.l.b16 %v2523
      %v2812 = vunpack.c.l.b16 %v2524
      %v2813 = vunpack.c.l.b16 %v2525
      %v2814 = vunpack.c.l.b16 %v2526
      %v2815 = vunpack.c.l.b16 %v2527
      %v2816 = vunpack.c.l.b16 %v2528
      %v2817 = vunpack.c.l.b16 %v2529
      %v2818 = vunpack.c.l.b16 %v2530
      %v2819 = vunpack.c.l.b16 %v2531
      %v2820 = vunpack.c.l.b16 %v2532
      %v2821 = vunpack.c.l.b16 %v2533
      %v2822 = vunpack.c.l.b16 %v2534
      %v2823 = vunpack.c.l.b16 %v2535
      %v2824 = vunpack.c.l.b16 %v2536
      %v2825 = vunpack.c.l.b16 %v2537
      %v2826 = vunpack.c.l.b16 %v2538
      %v2827 = vunpack.c.l.b16 %v2539
      %v2828 = vunpack.c.l.b16 %v2540
      %v2829 = vunpack.c.l.b16 %v2541
      %v2830 = vunpack.c.l.b16 %v2542
      %v2831 = vunpack.c.l.b16 %v2543
      %v2832 = vunpack.c.l.b16 %v2544
      %v2833 = vunpack.c.l.b16 %v2545
      %v2834 = vunpack.c.l.b16 %v2546
      %v2835 = vunpack.c.l.b16 %v2547
      %v2836 = vunpack.c.l.b16 %v2548
      %v2837 = vunpack.c.l.b16 %v2549
      %v2838 = vunpack.c.l.b16 %v2550
      %v2839 = vunpack.c.l.b16 %v2551
      %v2840 = vunpack.c.l.b16 %v2552
      %v2841 = vunpack.c.l.b16 %v2553
      %v2842 = vunpack.c.l.b16 %v2554
      %v2843 = vunpack.c.l.b16 %v2555
      %v2844 = vunpack.c.l.b16 %v2556
      %v2845 = vunpack.c.l.b16 %v2557
      %v2846 = vunpack.c.l.b16 %v2558
      %v2847 = vunpack.c.l.b16 %v2559
      %v2848 = vunpack.c.l.b16 %v2560
      %v2849 = vunpack.c.l.b16 %v2561
      %v2850 = vunpack.c.l.b16 %v2562
      %v2851 = vunpack.c.l.b16 %v2563
      %v2852 = vunpack.c.l.b16 %v2564
      %v2853 = vunpack.c.l.b16 %v2565
      %v2854 = vunpack.c.l.b16 %v2566
      %v2855 = vunpack.c.l.b16 %v2567
      %v2856 = vunpack.c.l.b16 %v2568
      %v2857 = vunpack.c.l.b16 %v2569
      %v2858 = vunpack.c.l.b16 %v2570
      %v2859 = vunpack.c.l.b16 %v2571
      %v2860 = vunpack.c.l.b16 %v2572
      %v2861 = vunpack.c.l.b16 %v2573
      %v2862 = vunpack.c.l.b16 %v2574
      %v2863 = vunpack.c.l.b16 %v2575
      %v2864 = vunpack.c.l.b16 %v2576
      %v2865 = vunpack.c.l.b16 %v2577
      %v2866 = vunpack.c.l.b16 %v2578
      %v2867 = vunpack.c.l.b16 %v2579
      %v2868 = vunpack.c.l.b16 %v2580
      %v2869 = vunpack.c.l.b16 %v2581
      %v2870 = vunpack.c.l.b16 %v2582
      %v2871 = vunpack.c.l.b16 %v2583
      %v2872 = vunpack.c.l.b16 %v2584
      %v2873 = vunpack.c.l.b16 %v2585
      %v2874 = vunpack.c.l.b16 %v2586
      %v2875 = vunpack.c.l.b16 %v2587
      %v2876 = vunpack.c.l.b16 %v2588
      %v2877 = vunpack.c.l.b16 %v2589
      %v2878 = vunpack.c.l.b16 %v2590
      %v2879 = vunpack.c.l.b16 %v2591
      %v2880 = vunpack.c.l.b16 %v2592
      %v2881 = vunpack.c.l.b16 %v2593
      %v2882 = vunpack.c.l.b16 %v2594
      %v2883 = vunpack.c.l.b16 %v2595
      %v2884 = vunpack.c.l.b16 %v2596
      %v2885 = vunpack.c.l.b16 %v2597
      %v2886 = vunpack.c.l.b16 %v2598
      %v2887 = vunpack.c.l.b16 %v2599
      %v2888 = vunpack.c.l.b16 %v2600
      %v2889 = vunpack.c.l.b16 %v2601
      %v2890 = vunpack.c.l.b16 %v2602
      %v2891 = vunpack.c.l.b16 %v2603
      %v2892 = vunpack.c.l.b16 %v2604
      %v2893 = vunpack.c.l.b16 %v2605
      %v2894 = vunpack.c.l.b16 %v2606
      %v2895 = vunpack.c.l.b16 %v2607
      %v2896 = vunpack.c.l.b16 %v2608
      %v2897 = vunpack.c.l.b16 %v2609
      %v2898 = vunpack.c.l.b16 %v2610
      %v2899 = vunpack.c.l.b16 %v2611
      %v2900 = vunpack.c.l.b16 %v2612
      %v2901 = vunpack.c.l.b16 %v2613
      %v2902 = vunpack.c.l.b16 %v2614
      %v2903 = vunpack.c.l.b16 %v2615
      %v2904 = vunpack.c.l.b16 %v2616
      %v2905 = vunpack.c.l.b16 %v2617
      %v2906 = vunpack.c.l.b16 %v2618
      %v2907 = vunpack.c.l.b16 %v2619
      %v2908 = vunpack.c.l.b16 %v2620
      %v2909 = vunpack.c.l.b16 %v2621
      %v2910 = vunpack.c.l.b16 %v2622
      %v2911 = vunpack.c.l.b16 %v2623
      %v2912 = vunpack.c.l.b16 %v2624
      %v2913 = vunpack.c.l.b16 %v2625
      %v2914 = vunpack.c.l.b16 %v2626
      %v2915 = vunpack.c.l.b16 %v2627
      %v2916 = vunpack.c.l.b16 %v2628
      %v2917 = vunpack.c.l.b16 %v2629
      %v2918 = vunpack.c.l.b16 %v2630
      %v2919 = vunpack.c.l.b16 %v2631
      %v2920 = vunpack.c.l.b16 %v2632
      %v2921 = vunpack.c.l.b16 %v2633
      %v2922 = vunpack.c.l.b16 %v2634
      %v2923 = vunpack.c.l.b16 %v2635
      %v2924 = vunpack.c.l.b16 %v2636
      %v2925 = vunpack.c.l.b16 %v2637
      %v2926 = vunpack.c.l.b16 %v2638
      %v2927 = vunpack.c.l.b16 %v2639
      %v2928 = vunpack.c.l.b16 %v2640
      %v2929 = vunpack.c.l.b16 %v2641
      %v2930 = vunpack.c.l.b16 %v2642
      %v2931 = vunpack.c.l.b16 %v2643
      %v2932 = vunpack.c.l.b16 %v2644
      %v2933 = vunpack.c.l.b16 %v2645
      %v2934 = vunpack.c.l.b16 %v2646
      %v2935 = vunpack.c.l.b16 %v2647
      %v2936 = vunpack.c.l.b16 %v2648
      %v2937 = vunpack.c.l.b16 %v2649
      %v2938 = vunpack.c.l.b16 %v2650
      %v2939 = vunpack.c.l.b16 %v2651
      %v2940 = vunpack.c.l.b16 %v2652
      %v2941 = vunpack.c.l.b16 %v2653
      %v2942 = vunpack.c.l.b16 %v2654
      %v2943 = vunpack.c.l.b16 %v2655
      %v2944 = vunpack.c.l.b16 %v2656
      %v2945 = vunpack.c.l.b16 %v2657
      %v2946 = vunpack.c.l.b16 %v2658
      %v2947 = vunpack.c.l.b16 %v2659
      %v2948 = vunpack.c.l.b16 %v2660
      %v2949 = vunpack.c.l.b16 %v2661
      %v2950 = vpack.c.b16 %v2807, %v2806
      %v2951 = vpack.c.b16 %v2809, %v2808
      %v2952 = vpack.c.b16 %v2811, %v2810
      %v2953 = vpack.c.b16 %v2813, %v2812
      %v2954 = vpack.c.b16 %v2815, %v2814
      %v2955 = vpack.c.b16 %v2817, %v2816
      %v2956 = vpack.c.b16 %v2819, %v2818
      %v2957 = vpack.c.b16 %v2821, %v2820
      %v2958 = vpack.c.b16 %v2823, %v2822
      %v2959 = vpack.c.b16 %v2825, %v2824
      %v2960 = vpack.c.b16 %v2827, %v2826
      %v2961 = vpack.c.b16 %v2829, %v2828
      %v2962 = vpack.c.b16 %v2831, %v2830
      %v2963 = vpack.c.b16 %v2833, %v2832
      %v2964 = vpack.c.b16 %v2835, %v2834
      %v2965 = vpack.c.b16 %v2837, %v2836
      %v2966 = vpack.c.b16 %v2839, %v2838
      %v2967 = vpack.c.b16 %v2841, %v2840
      %v2968 = vpack.c.b16 %v2843, %v2842
      %v2969 = vpack.c.b16 %v2845, %v2844
      %v2970 = vpack.c.b16 %v2847, %v2846
      %v2971 = vpack.c.b16 %v2849, %v2848
      %v2972 = vpack.c.b16 %v2851, %v2850
      %v2973 = vpack.c.b16 %v2853, %v2852
      %v2974 = vpack.c.b16 %v2855, %v2854
      %v2975 = vpack.c.b16 %v2857, %v2856
      %v2976 = vpack.c.b16 %v2859, %v2858
      %v2977 = vpack.c.b16 %v2861, %v2860
      %v2978 = vpack.c.b16 %v2863, %v2862
      %v2979 = vpack.c.b16 %v2865, %v2864
      %v2980 = vpack.c.b16 %v2867, %v2866
      %v2981 = vpack.c.b16 %v2869, %v2868
      %v2982 = vpack.c.b16 %v2871, %v2870
      %v2983 = vpack.c.b16 %v2873, %v2872
      %v2984 = vpack.c.b16 %v2875, %v2874
      %v2985 = vpack.c.b16 %v2877, %v2876
      %v2986 = vpack.c.b16 %v2879, %v2878
      %v2987 = vpack.c.b16 %v2881, %v2880
      %v2988 = vpack.c.b16 %v2883, %v2882
      %v2989 = vpack.c.b16 %v2885, %v2884
      %v2990 = vpack.c.b16 %v2887, %v2886
      %v2991 = vpack.c.b16 %v2889, %v2888
      %v2992 = vpack.c.b16 %v2891, %v2890
      %v2993 = vpack.c.b16 %v2893, %v2892
      %v2994 = vpack.c.b16 %v2895, %v2894
      %v2995 = vpack.c.b16 %v2897, %v2896
      %v2996 = vpack.c.b16 %v2899, %v2898
      %v2997 = vpack.c.b16 %v2901, %v2900
      %v2998 = vpack.c.b16 %v2903, %v2902
      %v2999 = vpack.c.b16 %v2905, %v2904
      %v3000 = vpack.c.b16 %v2907, %v2906
      %v3001 = vpack.c.b16 %v2909, %v2908
      %v3002 = vpack.c.b16 %v2911, %v2910
      %v3003 = vpack.c.b16 %v2913, %v2912
      %v3004 = vpack.c.b16 %v2915, %v2914
      %v3005 = vpack.c.b16 %v2917, %v2916
      %v3006 = vpack.c.b16 %v2919, %v2918
      %v3007 = vpack.c.b16 %v2921, %v2920
      %v3008 = vpack.c.b16 %v2923, %v2922
      %v3009 = vpack.c.b16 %v2925, %v2924
      %v3010 = vpack.c.b16 %v2927, %v2926
      %v3011 = vpack.c.b16 %v2929, %v2928
      %v3012 = vpack.c.b16 %v2931, %v2930
      %v3013 = vpack.c.b16 %v2933, %v2932
      %v3014 = vpack.c.b16 %v2935, %v2934
      %v3015 = vpack.c.b16 %v2937, %v2936
      %v3016 = vpack.c.b16 %v2939, %v2938
      %v3017 = vpack.c.b16 %v2941, %v2940
      %v3018 = vpack.c.b16 %v2943, %v2942
      %v3019 = vpack.c.b16 %v2945, %v2944
      %v3020 = vpack.c.b16 %v2947, %v2946
      %v3021 = vpack.c.b16 %v2949, %v2948
      %3094 = vmatpush.bf16.msra.mxu0 %v2957
      %3095 = vmatpush.bf16.msra.mxu0 %v2956
      %3096 = vmatpush.bf16.msra.mxu0 %v2955
      %3097 = vmatpush.bf16.msra.mxu0 %v2954
      %3098 = vmatpush.bf16.msra.mxu0 %v2953
      %3099 = vmatpush.bf16.msra.mxu0 %v2952
      %3100 = vmatpush.bf16.msra.mxu0 %v2951
      %3101 = vmatpush.bf16.msra.mxu0 %v2950
      %3102 = vmatmul.bf16.gmra.mxu0 %v2490
      %v3103 = vpop.f32.mrf.mxu0
      %v3104 = vadd.f32 0.0, %v3103
      %v3105 = vpop.f32.mrf.mxu0
      %v3106 = vadd.f32 0.0, %v3105
      %3107 = vmatmul.bf16.gmra.mxu0 %v2496
      %v3108 = vpop.f32.mrf.mxu0
      %v3109 = vadd.f32 0.0, %v3108
      %v3110 = vpop.f32.mrf.mxu0
      %v3111 = vadd.f32 0.0, %v3110
      %3112 = vmatmul.bf16.gmra.mxu0 %v2502
      %v3113 = vpop.f32.mrf.mxu0
      %v3114 = vadd.f32 0.0, %v3113
      %v3115 = vpop.f32.mrf.mxu0
      %v3116 = vadd.f32 0.0, %v3115
      %3117 = vmatmul.bf16.gmra.mxu0 %v2508
      %v3118 = vpop.f32.mrf.mxu0
      %v3119 = vadd.f32 0.0, %v3118
      %v3120 = vpop.f32.mrf.mxu0
      %v3121 = vadd.f32 0.0, %v3120
      %3122 = vdwg.mxu0
      %3123 = vmatpush.bf16.msra.mxu0 %v2965
      %3124 = vmatpush.bf16.msra.mxu0 %v2964
      %3125 = vmatpush.bf16.msra.mxu0 %v2963
      %3126 = vmatpush.bf16.msra.mxu0 %v2962
      %3127 = vmatpush.bf16.msra.mxu0 %v2961
      %3128 = vmatpush.bf16.msra.mxu0 %v2960
      %3129 = vmatpush.bf16.msra.mxu0 %v2959
      %3130 = vmatpush.bf16.msra.mxu0 %v2958
      %3131 = vmatmul.bf16.gmra.mxu0 %v2491
      %v3132 = vpop.f32.mrf.mxu0
      %v3133 = vadd.f32 %v3104, %v3132
      %v3134 = vpop.f32.mrf.mxu0
      %v3135 = vadd.f32 %v3106, %v3134
      %3136 = vmatmul.bf16.gmra.mxu0 %v2497
      %v3137 = vpop.f32.mrf.mxu0
      %v3138 = vadd.f32 %v3109, %v3137
      %v3139 = vpop.f32.mrf.mxu0
      %v3140 = vadd.f32 %v3111, %v3139
      %3141 = vmatmul.bf16.gmra.mxu0 %v2503
      %v3142 = vpop.f32.mrf.mxu0
      %v3143 = vadd.f32 %v3114, %v3142
      %v3144 = vpop.f32.mrf.mxu0
      %v3145 = vadd.f32 %v3116, %v3144
      %3146 = vmatmul.bf16.gmra.mxu0 %v2509
      %v3147 = vpop.f32.mrf.mxu0
      %v3148 = vadd.f32 %v3119, %v3147
      %v3149 = vpop.f32.mrf.mxu0
      %v3150 = vadd.f32 %v3121, %v3149
      %3151 = vdwg.mxu0
      %3152 = vmatpush.bf16.msra.mxu0 %v2973
      %3153 = vmatpush.bf16.msra.mxu0 %v2972
      %3154 = vmatpush.bf16.msra.mxu0 %v2971
      %3155 = vmatpush.bf16.msra.mxu0 %v2970
      %3156 = vmatpush.bf16.msra.mxu0 %v2969
      %3157 = vmatpush.bf16.msra.mxu0 %v2968
      %3158 = vmatpush.bf16.msra.mxu0 %v2967
      %3159 = vmatpush.bf16.msra.mxu0 %v2966
      %3160 = vmatmul.bf16.gmra.mxu0 %v2492
      %v3161 = vpop.f32.mrf.mxu0
      %v3162 = vadd.f32 %v3133, %v3161
      %v3163 = vpop.f32.mrf.mxu0
      %v3164 = vadd.f32 %v3135, %v3163
      %3165 = vmatmul.bf16.gmra.mxu0 %v2498
      %v3166 = vpop.f32.mrf.mxu0
      %v3167 = vadd.f32 %v3138, %v3166
      %v3168 = vpop.f32.mrf.mxu0
      %v3169 = vadd.f32 %v3140, %v3168
      %3170 = vmatmul.bf16.gmra.mxu0 %v2504
      %v3171 = vpop.f32.mrf.mxu0
      %v3172 = vadd.f32 %v3143, %v3171
      %v3173 = vpop.f32.mrf.mxu0
      %v3174 = vadd.f32 %v3145, %v3173
      %3175 = vmatmul.bf16.gmra.mxu0 %v2510
      %v3176 = vpop.f32.mrf.mxu0
      %v3177 = vadd.f32 %v3148, %v3176
      %v3178 = vpop.f32.mrf.mxu0
      %v3179 = vadd.f32 %v3150, %v3178
      %3180 = vdwg.mxu0
      %3181 = vmatpush.bf16.msra.mxu0 %v2981
      %3182 = vmatpush.bf16.msra.mxu0 %v2980
      %3183 = vmatpush.bf16.msra.mxu0 %v2979
      %3184 = vmatpush.bf16.msra.mxu0 %v2978
      %3185 = vmatpush.bf16.msra.mxu0 %v2977
      %3186 = vmatpush.bf16.msra.mxu0 %v2976
      %3187 = vmatpush.bf16.msra.mxu0 %v2975
      %3188 = vmatpush.bf16.msra.mxu0 %v2974
      %3189 = vmatmul.bf16.gmra.mxu0 %v2493
      %v3190 = vpop.f32.mrf.mxu0
      %v3191 = vadd.f32 %v3162, %v3190
      %v3192 = vpop.f32.mrf.mxu0
      %v3193 = vadd.f32 %v3164, %v3192
      %3194 = vmatmul.bf16.gmra.mxu0 %v2499
      %v3195 = vpop.f32.mrf.mxu0
      %v3196 = vadd.f32 %v3167, %v3195
      %v3197 = vpop.f32.mrf.mxu0
      %v3198 = vadd.f32 %v3169, %v3197
      %3199 = vmatmul.bf16.gmra.mxu0 %v2505
      %v3200 = vpop.f32.mrf.mxu0
      %v3201 = vadd.f32 %v3172, %v3200
      %v3202 = vpop.f32.mrf.mxu0
      %v3203 = vadd.f32 %v3174, %v3202
      %3204 = vmatmul.bf16.gmra.mxu0 %v2511
      %v3205 = vpop.f32.mrf.mxu0
      %v3206 = vadd.f32 %v3177, %v3205
      %v3207 = vpop.f32.mrf.mxu0
      %v3208 = vadd.f32 %v3179, %v3207
      %3209 = vdwg.mxu0
      %3210 = vmatpush.bf16.msra.mxu0 %v2989
      %3211 = vmatpush.bf16.msra.mxu0 %v2988
      %3212 = vmatpush.bf16.msra.mxu0 %v2987
      %3213 = vmatpush.bf16.msra.mxu0 %v2986
      %3214 = vmatpush.bf16.msra.mxu0 %v2985
      %3215 = vmatpush.bf16.msra.mxu0 %v2984
      %3216 = vmatpush.bf16.msra.mxu0 %v2983
      %3217 = vmatpush.bf16.msra.mxu0 %v2982
      %3218 = vmatmul.bf16.gmra.mxu0 %v2494
      %v3219 = vpop.f32.mrf.mxu0
      %v3220 = vadd.f32 %v3191, %v3219
      %v3221 = vpop.f32.mrf.mxu0
      %v3222 = vadd.f32 %v3193, %v3221
      %3223 = vmatmul.bf16.gmra.mxu0 %v2500
      %v3224 = vpop.f32.mrf.mxu0
      %v3225 = vadd.f32 %v3196, %v3224
      %v3226 = vpop.f32.mrf.mxu0
      %v3227 = vadd.f32 %v3198, %v3226
      %3228 = vmatmul.bf16.gmra.mxu0 %v2506
      %v3229 = vpop.f32.mrf.mxu0
      %v3230 = vadd.f32 %v3201, %v3229
      %v3231 = vpop.f32.mrf.mxu0
      %v3232 = vadd.f32 %v3203, %v3231
      %3233 = vmatmul.bf16.gmra.mxu0 %v2512
      %v3234 = vpop.f32.mrf.mxu0
      %v3235 = vadd.f32 %v3206, %v3234
      %v3236 = vpop.f32.mrf.mxu0
      %v3237 = vadd.f32 %v3208, %v3236
      %3238 = vdwg.mxu0
      %3239 = vmatpush.bf16.msra.mxu0 %v2997
      %3240 = vmatpush.bf16.msra.mxu0 %v2996
      %3241 = vmatpush.bf16.msra.mxu0 %v2995
      %3242 = vmatpush.bf16.msra.mxu0 %v2994
      %3243 = vmatpush.bf16.msra.mxu0 %v2993
      %3244 = vmatpush.bf16.msra.mxu0 %v2992
      %3245 = vmatpush.bf16.msra.mxu0 %v2991
      %3246 = vmatpush.bf16.msra.mxu0 %v2990
      %3247 = vmatmul.bf16.gmra.mxu0 %v2495
      %v3248 = vpop.f32.mrf.mxu0
      %v3249 = vadd.f32 %v3220, %v3248
      %v3250 = vpop.f32.mrf.mxu0
      %v3251 = vadd.f32 %v3222, %v3250
      %3252 = vmatmul.bf16.gmra.mxu0 %v2501
      %v3253 = vpop.f32.mrf.mxu0
      %v3254 = vadd.f32 %v3225, %v3253
      %v3255 = vpop.f32.mrf.mxu0
      %v3256 = vadd.f32 %v3227, %v3255
      %3257 = vmatmul.bf16.gmra.mxu0 %v2507
      %v3258 = vpop.f32.mrf.mxu0
      %v3259 = vadd.f32 %v3230, %v3258
      %v3260 = vpop.f32.mrf.mxu0
      %v3261 = vadd.f32 %v3232, %v3260
      %3262 = vmatmul.bf16.gmra.mxu0 %v2513
      %v3263 = vpop.f32.mrf.mxu0
      %v3264 = vadd.f32 %v3235, %v3263
      %v3265 = vpop.f32.mrf.mxu0
      %v3266 = vadd.f32 %v3237, %v3265
      %3267 = vdwg.mxu0
      %3268 = vmatpush.bf16.msra.mxu0 %v3005
      %3269 = vmatpush.bf16.msra.mxu0 %v3004
      %3270 = vmatpush.bf16.msra.mxu0 %v3003
      %3271 = vmatpush.bf16.msra.mxu0 %v3002
      %3272 = vmatpush.bf16.msra.mxu0 %v3001
      %3273 = vmatpush.bf16.msra.mxu0 %v3000
      %3274 = vmatpush.bf16.msra.mxu0 %v2999
      %3275 = vmatpush.bf16.msra.mxu0 %v2998
      %3276 = vmatmul.bf16.gmra.mxu0 %v2496
      %v3277 = vpop.f32.mrf.mxu0
      %v3278 = vadd.f32 %v3249, %v3277
      %v3279 = vpop.f32.mrf.mxu0
      %v3280 = vadd.f32 %v3251, %v3279
      %3281 = vmatmul.bf16.gmra.mxu0 %v2502
      %v3282 = vpop.f32.mrf.mxu0
      %v3283 = vadd.f32 %v3254, %v3282
      %v3284 = vpop.f32.mrf.mxu0
      %v3285 = vadd.f32 %v3256, %v3284
      %3286 = vmatmul.bf16.gmra.mxu0 %v2508
      %v3287 = vpop.f32.mrf.mxu0
      %v3288 = vadd.f32 %v3259, %v3287
      %v3289 = vpop.f32.mrf.mxu0
      %v3290 = vadd.f32 %v3261, %v3289
      %3291 = vmatmul.bf16.gmra.mxu0 %v2514
      %v3292 = vpop.f32.mrf.mxu0
      %v3293 = vadd.f32 %v3264, %v3292
      %v3294 = vpop.f32.mrf.mxu0
      %v3295 = vadd.f32 %v3266, %v3294
      %3296 = vdwg.mxu0
      %3297 = vmatpush.bf16.msra.mxu0 %v3013
      %3298 = vmatpush.bf16.msra.mxu0 %v3012
      %3299 = vmatpush.bf16.msra.mxu0 %v3011
      %3300 = vmatpush.bf16.msra.mxu0 %v3010
      %3301 = vmatpush.bf16.msra.mxu0 %v3009
      %3302 = vmatpush.bf16.msra.mxu0 %v3008
      %3303 = vmatpush.bf16.msra.mxu0 %v3007
      %3304 = vmatpush.bf16.msra.mxu0 %v3006
      %3305 = vmatmul.bf16.gmra.mxu0 %v2497
      %v3306 = vpop.f32.mrf.mxu0
      %v3307 = vadd.f32 %v3278, %v3306
      %v3308 = vpop.f32.mrf.mxu0
      %v3309 = vadd.f32 %v3280, %v3308
      %3310 = vmatmul.bf16.gmra.mxu0 %v2503
      %v3311 = vpop.f32.mrf.mxu0
      %v3312 = vadd.f32 %v3283, %v3311
      %v3313 = vpop.f32.mrf.mxu0
      %v3314 = vadd.f32 %v3285, %v3313
      %3315 = vmatmul.bf16.gmra.mxu0 %v2509
      %v3316 = vpop.f32.mrf.mxu0
      %v3317 = vadd.f32 %v3288, %v3316
      %v3318 = vpop.f32.mrf.mxu0
      %v3319 = vadd.f32 %v3290, %v3318
      %3320 = vmatmul.bf16.gmra.mxu0 %v2515
      %v3321 = vpop.f32.mrf.mxu0
      %v3322 = vadd.f32 %v3293, %v3321
      %v3323 = vpop.f32.mrf.mxu0
      %v3324 = vadd.f32 %v3295, %v3323
      %3325 = vdwg.mxu0
      %3326 = vmatpush.bf16.msra.mxu0 %v3021
      %3327 = vmatpush.bf16.msra.mxu0 %v3020
      %3328 = vmatpush.bf16.msra.mxu0 %v3019
      %3329 = vmatpush.bf16.msra.mxu0 %v3018
      %3330 = vmatpush.bf16.msra.mxu0 %v3017
      %3331 = vmatpush.bf16.msra.mxu0 %v3016
      %3332 = vmatpush.bf16.msra.mxu0 %v3015
      %3333 = vmatpush.bf16.msra.mxu0 %v3014
      %3334 = vmatmul.bf16.gmra.mxu0 %v2498
      %v3335 = vpop.f32.mrf.mxu0
      %v3336 = vadd.f32 %v3307, %v3335
      %v3337 = vpop.f32.mrf.mxu0
      %v3338 = vadd.f32 %v3309, %v3337
      %3339 = vmatmul.bf16.gmra.mxu0 %v2504
      %v3340 = vpop.f32.mrf.mxu0
      %v3341 = vadd.f32 %v3312, %v3340
      %v3342 = vpop.f32.mrf.mxu0
      %v3343 = vadd.f32 %v3314, %v3342
      %3344 = vmatmul.bf16.gmra.mxu0 %v2510
      %v3345 = vpop.f32.mrf.mxu0
      %v3346 = vadd.f32 %v3317, %v3345
      %v3347 = vpop.f32.mrf.mxu0
      %v3348 = vadd.f32 %v3319, %v3347
      %3349 = vmatmul.bf16.gmra.mxu0 %v2516
      %v3350 = vpop.f32.mrf.mxu0
      %v3351 = vadd.f32 %v3322, %v3350
      %v3352 = vpop.f32.mrf.mxu0
      %v3353 = vadd.f32 %v3324, %v3352
      %3354 = vdwg.mxu0
      %v3355 = vmax.f32 %v3336, 0.0
      %v3356 = vmax.f32 %v3338, 0.0
      %v3357 = vmax.f32 %v3341, 0.0
      %v3358 = vmax.f32 %v3343, 0.0
      %v3359 = vmax.f32 %v3346, 0.0
      %v3360 = vmax.f32 %v3348, 0.0
      %v3361 = vmax.f32 %v3351, 0.0
      %v3362 = vmax.f32 %v3353, 0.0
      %v3363 = vpack.c.bf16 %v3356, %v3355
      %v3364 = vpack.c.bf16 %v3358, %v3357
      %v3365 = vpack.c.bf16 %v3360, %v3359
      %v3366 = vpack.c.bf16 %v3362, %v3361
      %s3367 = scalar_lea.vmem %s4, 8
      %v3368 = vld [vmem:[%s3367] sm:$0xf]
      %v3369 = vld [vmem:[%s3367 + $0x4] sm:$0xf]
      %v3372 = vunpack.c.l.b16 %v3368
      %v3373 = vunpack.c.l.b16 %v3369
      %v3374 = vpack.c.b16 %v3373, %v3372
      %v3377 = vsel %vm2304, %v3363, 0
      %v3380 = vsel %vm2304, %v3364, 0
      %v3383 = vsel %vm2304, %v3365, 0
      %v3386 = vsel %vm2304, %v3366, 0
      %3388 = vmatpush.bf16.msra.mxu0 0
      %3389 = vmatpush.bf16.msra.mxu0 0
      %3390 = vmatpush.bf16.msra.mxu0 0
      %3391 = vmatpush.bf16.msra.mxu0 0
      %3392 = vmatpush.bf16.msra.mxu0 0
      %3393 = vmatpush.bf16.msra.mxu0 0
      %3394 = vmatpush.bf16.msra.mxu0 0
      %3395 = vmatpush.bf16.msra.mxu0 %v3374
      %3396 = vmatmul.bf16.gmra.mxu0 %v3377
      %v3397 = vpop.f32.mrf.mxu0
      %v3398 = vadd.f32 0.0, %v3397
      %v3399 = vpop.f32.mrf.mxu0
      %v3400 = vadd.f32 0.0, %v3399
      %3401 = vmatmul.bf16.gmra.mxu0 %v3380
      %v3402 = vpop.f32.mrf.mxu0
      %v3403 = vadd.f32 0.0, %v3402
      %v3404 = vpop.f32.mrf.mxu0
      %v3405 = vadd.f32 0.0, %v3404
      %3406 = vmatmul.bf16.gmra.mxu0 %v3383
      %v3407 = vpop.f32.mrf.mxu0
      %v3408 = vadd.f32 0.0, %v3407
      %v3409 = vpop.f32.mrf.mxu0
      %v3410 = vadd.f32 0.0, %v3409
      %3411 = vmatmul.bf16.gmra.mxu0 %v3386
      %v3412 = vpop.f32.mrf.mxu0
      %v3413 = vadd.f32 0.0, %v3412
      %v3414 = vpop.f32.mrf.mxu0
      %v3415 = vadd.f32 0.0, %v3414
      %3416 = vdwg.mxu0
      %v3417 = vadd.f32 %v2346, %v3398
      %v3418 = vadd.f32 %v2347, %v3400
      %v3419 = vadd.f32 %v2348, %v3403
      %v3420 = vadd.f32 %v2349, %v3405
      %v3421 = vadd.f32 %v2350, %v3408
      %v3422 = vadd.f32 %v2351, %v3410
      %v3423 = vadd.f32 %v2352, %v3413
      %v3424 = vadd.f32 %v2353, %v3415
      %v3425 = vmax.f32 %v3417, 0.0
      %v3426 = vmax.f32 %v3418, 0.0
      %v3427 = vmax.f32 %v3419, 0.0
      %v3428 = vmax.f32 %v3420, 0.0
      %v3429 = vmax.f32 %v3421, 0.0
      %v3430 = vmax.f32 %v3422, 0.0
      %v3431 = vmax.f32 %v3423, 0.0
      %v3432 = vmax.f32 %v3424, 0.0
      %v3433 = vpack.c.bf16 %v3425, %v3425
      %v3434 = vpack.c.bf16 %v3426, %v3426
      %v3435 = vpack.c.bf16 %v3427, %v3427
      %v3436 = vpack.c.bf16 %v3428, %v3428
      %v3437 = vpack.c.bf16 %v3429, %v3429
      %v3438 = vpack.c.bf16 %v3430, %v3430
      %v3439 = vpack.c.bf16 %v3431, %v3431
      %v3440 = vpack.c.bf16 %v3432, %v3432
      %vm3441 = vcmask 257024
      %3442 = vst.msk [vmem:[%s224] sm:$0xf] %vm3441, %v3433
      %3443 = vst.msk [vmem:[%s224 + $0x4] sm:$0xf] %vm3441, %v3434
      %3444 = vst.msk [vmem:[%s224 + $0x8] sm:$0xf] %vm3441, %v3435
      %3445 = vst.msk [vmem:[%s224 + $0xc] sm:$0xf] %vm3441, %v3436
      %3446 = vst.msk [vmem:[%s224 + $0x10] sm:$0xf] %vm3441, %v3437
      %3447 = vst.msk [vmem:[%s224 + $0x14] sm:$0xf] %vm3441, %v3438
      %3448 = vst.msk [vmem:[%s224 + $0x18] sm:$0xf] %vm3441, %v3439
      %3449 = vst.msk [vmem:[%s224 + $0x1c] sm:$0xf] %vm3441, %v3440
      %p3450 = scmp.lt.s32.totalorder %s16, 1
      %s3451 = scalar_select %p3450, %s16, 1
      %s3452 = smul.addr %s3451, 8
      %s3453 = smul.addr %s3452, 4
      %s3454 = scalar_lea.vmem %s5, %s3453
      // Predicated region
      $region41: #{_lambda_.3} parent=39 // pred_check
        %p3455 = pneg %p144
      $region42: #{_lambda_.3} parent=39 // pred_check_branch
        %3457 = sbr.rel (%p3455) target = $region44
      $region43: #{_lambda_.3} parent=39 // pred_region
        _
      $region44: #{_lambda_.3} parent=39 // pred_fallthru
        _
    $region40: #{_lambda_.3} parent=5 // pred_fallthru
      _
    %p3458 = scmp.le.s32.totalorder 2, %s11
    // Predicated region
    $region45: #{_lambda_.3} parent=5 // pred_check
      %p3459 = pneg %p3458
    $region46: #{_lambda_.3} parent=5 // pred_check_branch
      %3461 = sbr.rel (%p3459) target = $region48
    $region47: #{_lambda_.3} parent=5 // pred_region
      %s3462 = ssub.s32 %s11, 2
      // Predicated region
      $region49: #{_lambda_.3} parent=47 // pred_check
        %p3463 = pneg %p150
      $region50: #{_lambda_.3} parent=47 // pred_check_branch
        %3465 = sbr.rel (%p3463) target = $region52
      $region51: #{_lambda_.3} parent=47 // pred_region
        %p3466 = scmp.lt.s32.totalorder %s17, 1
        %s3467 = scalar_select %p3466, %s17, 1
        %s3468 = smul.addr %s3467, 8
        %s3469 = smul.addr %s3468, 4
        %s3470 = scalar_lea.vmem %s5, %s3469
      $region52: #{_lambda_.3} parent=47 // pred_fallthru
        _
    $region48: #{_lambda_.3} parent=5 // pred_fallthru
      _
  $region6: #{_lambda_.3} parent=0 // loop_footer
    %s15 = sadd.s32 1, %s11
  $region7: #{_lambda_.3} parent=0 // loop_footer_branch
    %10 = sbr.rel target = $region3
  $region8: #{_lambda_.3} parent=0 // loop_exit
    _

// kernel: _lambda_.5
$region0: #{_lambda_.5}
  #allocation0 [shape = 'u32[]', space=smem, size = 0x4, offset = 0x4, fixed_abs, tag = 'smem constant byte address 0x4 - core index']
  #allocation1 [shape = 'u32[72,128]{1,0:T(1,128)}', space=vmem, size = 0x9000, scoped, tag = 'internal scratch']
  #allocation2 [shape = 'f32[1,18,18,128]{3,2,1,0:T(8,128)}', space=vmem, size = 0x36000, scoped, tag = 'scratch operand']
  %s0 = inlined_call_operand.vmem [shape: bf16[2,16,16,16], index: 0, kind: input, shape index: {}]
  %s1 = inlined_call_operand.vmem [shape: bf16[1152,32], index: 1, kind: input, shape index: {}]
  %s2 = inlined_call_operand.vmem [shape: f32[1,32], index: 2, kind: input, shape index: {}]
  %s3 = inlined_call_operand.vmem [shape: f32[2,16,2,16,16], index: 3, kind: output, shape index: {}]
  %s4 = sld [smem:[#allocation0]]
  $region45: #{_lambda_.5} parent=0
    _
  %s6 = ssub.s32 1, %s4
  %s7 = scalar_select 0, %s6, %s4
  loop: start=0, step=1, limit=4
  $region2: #{_lambda_.5} parent=0 // loop_pre_header
    _
  $region3: #{_lambda_.5} parent=0 // loop_header
    %s9 = sphi 0, %s13
    %p10 = scmp.ge.s32.totalorder %s9, 4
    %s19 = sphi 0, %s21
    %s22 = sphi 0, %s19
    %s23 = sphi 0, %s22
    %s39 = sphi 0, %s23
    %s43 = sphi 0, %s43
    %s45 = sphi 0, %s43
    %s46 = sphi 0, %s45
    %s60 = sphi 0, %s46
    %s64 = sphi 0, %s64
    %s66 = sphi 0, %s64
    %s67 = sphi 0, %s66
    %s81 = sphi 0, %s67
    %s87 = sphi 0, %s89
    %s90 = sphi 0, %s87
    %s91 = sphi 0, %s90
    %s107 = sphi 0, %s91
  $region4: #{_lambda_.5} parent=0 // loop_header_branch
    %12 = sbr.rel (%p10) target = $region8
  $region5: #{_lambda_.5} parent=0 // loop_body
    %s14 = ssub.s32 %s9, 1
    %s15 = ssub.s32 %s9, 2
    %s16 = sadd.s32 %s9, 1
    %s17 = ssub.s32 %s9, %s16
    %p18 = scmp.eq.s32.totalorder %s17, 0
    %s20 = sadd.s32 %s19, 1
    %s21 = scalar_select %p18, %s19, %s20
    %p24 = pneg %p18
    %p25 = scmp.eq.s32.totalorder %s9, 1
    %p26 = por %p24, %p25
    %p27 = scmp.ne.s32.totalorder %s19, %s22
    %p28 = scmp.eq.s32.totalorder %s9, 0
    %p29 = por %p27, %p28
    %p30 = scmp.ne.s32.totalorder %s19, %s22
    %p31 = scmp.eq.s32.totalorder %s14, 1
    %p32 = por %p30, %p31
    %p33 = scmp.ne.s32.totalorder %s22, %s23
    %p34 = scmp.eq.s32.totalorder %s14, 0
    %p35 = por %p33, %p34
    %p36 = scmp.ne.s32.totalorder %s22, %s23
    %p37 = scmp.eq.s32.totalorder %s15, 1
    %p38 = por %p36, %p37
    %p40 = scmp.ne.s32.totalorder %s23, %s39
    %p41 = scmp.eq.s32.totalorder %s15, 0
    %p42 = por %p40, %p41
    %s44 = sadd.s32 %s43, 1
    %p47 = scmp.eq.s32.totalorder %s9, 1
    %p48 = scmp.ne.s32.totalorder %s43, %s45
    %p49 = scmp.eq.s32.totalorder %s9, 0
    %p50 = por %p48, %p49
    %p51 = scmp.ne.s32.totalorder %s43, %s45
    %p52 = scmp.eq.s32.totalorder %s14, 1
    %p53 = por %p51, %p52
    %p54 = scmp.ne.s32.totalorder %s45, %s46
    %p55 = scmp.eq.s32.totalorder %s14, 0
    %p56 = por %p54, %p55
    %p57 = scmp.ne.s32.totalorder %s45, %s46
    %p58 = scmp.eq.s32.totalorder %s15, 1
    %p59 = por %p57, %p58
    %p61 = scmp.ne.s32.totalorder %s46, %s60
    %p62 = scmp.eq.s32.totalorder %s15, 0
    %p63 = por %p61, %p62
    %s65 = sadd.s32 %s64, 1
    %p68 = scmp.eq.s32.totalorder %s9, 1
    %p69 = scmp.ne.s32.totalorder %s64, %s66
    %p70 = scmp.eq.s32.totalorder %s9, 0
    %p71 = por %p69, %p70
    %p72 = scmp.ne.s32.totalorder %s64, %s66
    %p73 = scmp.eq.s32.totalorder %s14, 1
    %p74 = por %p72, %p73
    %p75 = scmp.ne.s32.totalorder %s66, %s67
    %p76 = scmp.eq.s32.totalorder %s14, 0
    %p77 = por %p75, %p76
    %p78 = scmp.ne.s32.totalorder %s66, %s67
    %p79 = scmp.eq.s32.totalorder %s15, 1
    %p80 = por %p78, %p79
    %p82 = scmp.ne.s32.totalorder %s67, %s81
    %p83 = scmp.eq.s32.totalorder %s15, 0
    %p84 = por %p82, %p83
    %s85 = ssub.s32 %s9, %s16
    %p86 = scmp.eq.s32.totalorder %s85, 0
    %s88 = sadd.s32 %s87, 1
    %s89 = scalar_select %p86, %s87, %s88
    %p92 = pneg %p86
    %p93 = scmp.eq.s32.totalorder %s9, 1
    %p94 = por %p92, %p93
    %p95 = scmp.ne.s32.totalorder %s87, %s90
    %p96 = scmp.eq.s32.totalorder %s9, 0
    %p97 = por %p95, %p96
    %p98 = scmp.ne.s32.totalorder %s87, %s90
    %p99 = scmp.eq.s32.totalorder %s14, 1
    %p100 = por %p98, %p99
    %p101 = scmp.ne.s32.totalorder %s90, %s91
    %p102 = scmp.eq.s32.totalorder %s14, 0
    %p103 = por %p101, %p102
    %p104 = scmp.ne.s32.totalorder %s90, %s91
    %p105 = scmp.eq.s32.totalorder %s15, 1
    %p106 = por %p104, %p105
    %p108 = scmp.ne.s32.totalorder %s91, %s107
    %p109 = scmp.eq.s32.totalorder %s15, 0
    %p110 = por %p108, %p109
    %p111 = scmp.le.s32.totalorder 1, %s9
    %p112 = scmp.lt.s32.totalorder %s9, 3
    %p113 = pnand %p111, %p112
    %p114 = pneg %p113
    // Predicated region
    $region9: #{_lambda_.5} parent=5 // pred_check
      _
    $region10: #{_lambda_.5} parent=5 // pred_check_branch
      %116 = sbr.rel (%p113) target = $region12
    $region11: #{_lambda_.5} parent=5 // pred_region
      %s117 = ssub.s32 %s9, 1
      // Predicated region
      $region13: #{_lambda_.5} parent=11 // pred_check
        %p118 = pneg %p56
      $region14: #{_lambda_.5} parent=11 // pred_check_branch
        %120 = sbr.rel (%p118) target = $region16
      $region15: #{_lambda_.5} parent=11 // pred_region
        _
      $region16: #{_lambda_.5} parent=11 // pred_fallthru
        _
      // Predicated region
      $region17: #{_lambda_.5} parent=11 // pred_check
        %p121 = pneg %p77
      $region18: #{_lambda_.5} parent=11 // pred_check_branch
        %123 = sbr.rel (%p121) target = $region20
      $region19: #{_lambda_.5} parent=11 // pred_region
        _
      $region20: #{_lambda_.5} parent=11 // pred_fallthru
        _
    $region12: #{_lambda_.5} parent=5 // pred_fallthru
      _
    %p124 = scmp.lt.s32.totalorder %s9, 2
    // Predicated region
    $region21: #{_lambda_.5} parent=5 // pred_check
      %p125 = pneg %p124
    $region22: #{_lambda_.5} parent=5 // pred_check_branch
      %127 = sbr.rel (%p125) target = $region24
    $region23: #{_lambda_.5} parent=5 // pred_region
      // Predicated region
      $region25: #{_lambda_.5} parent=23 // pred_check
        %p128 = pneg %p29
      $region26: #{_lambda_.5} parent=23 // pred_check_branch
        %130 = sbr.rel (%p128) target = $region28
      $region27: #{_lambda_.5} parent=23 // pred_region
        %p131 = scmp.lt.s32.totalorder %s9, 1
        %s132 = scalar_select %p131, %s9, 1
        %s133 = smul.addr %s132, 32
        %s134 = smul.addr %s133, 4
        %s135 = scalar_lea.vmem %s0, %s134
      $region28: #{_lambda_.5} parent=23 // pred_fallthru
        _
    $region24: #{_lambda_.5} parent=5 // pred_fallthru
      _
    %p136 = scmp.le.s32.totalorder 1, %s9
    %p137 = scmp.lt.s32.totalorder %s9, 3
    %p138 = pnand %p136, %p137
    %p139 = pneg %p138
    // Predicated region
    $region29: #{_lambda_.5} parent=5 // pred_check
      _
    $region30: #{_lambda_.5} parent=5 // pred_check_branch
      %141 = sbr.rel (%p138) target = $region32
    $region31: #{_lambda_.5} parent=5 // pred_region
      %s142 = ssub.s32 %s9, 1
      %p143 = scmp.lt.s32.totalorder %s14, 1
      %s144 = scalar_select %p143, %s14, 1
      %s145 = smul.addr %s144, 32
      %s146 = smul.addr %s145, 4
      %s147 = scalar_lea.vmem %s0, %s146
      %p148 = pneg %p35
      %p149 = pneg %p32
      %p150 = pneg %p56
      %p151 = pneg %p53
      %p152 = pneg %p77
      %p153 = pneg %p74
      %p154 = pneg %p103
      %p155 = pneg %p100
      %p156 = scmp.lt.s32.totalorder %s14, 1
      %s157 = scalar_select %p156, %s14, 1
      %s158 = smul.addr %s157, 64
      %s159 = smul.addr %s158, 8
      %s160 = scalar_lea.vmem %s3, %s159
      %p161 = scmp.lt.s32.totalorder %s14, 1
      %s162 = scalar_select %p161, %s14, 1
      %s163 = smul.addr %s162, 32
      %s164 = smul.addr %s163, 4
      %s165 = scalar_lea.vmem %s0, %s164
      %p166 = scmp.lt.s32.totalorder %s14, 1
      %s167 = scalar_select %p166, %s14, 1
      %s168 = smul.addr %s167, 64
      %s169 = smul.addr %s168, 8
      %s170 = scalar_lea.vmem %s3, %s169
      %171 = vst [vmem:[#allocation2] sm:$0xff] 0.0
      %172 = vst [vmem:[#allocation2 + $0x8] sm:$0xff] 0.0
      %173 = vst [vmem:[#allocation2 + $0x10] sm:$0x3] 0.0
      %174 = vst [vmem:[#allocation2 + $0x18] sm:$0xff] 0.0
      %175 = vst [vmem:[#allocation2 + $0x20] sm:$0xff] 0.0
      %176 = vst [vmem:[#allocation2 + $0x28] sm:$0x3] 0.0
      %177 = vst [vmem:[#allocation2 + $0x30] sm:$0xff] 0.0
      %178 = vst [vmem:[#allocation2 + $0x38] sm:$0xff] 0.0
      %179 = vst [vmem:[#allocation2 + $0x40] sm:$0x3] 0.0
      %180 = vst [vmem:[#allocation2 + $0x48] sm:$0xff] 0.0
      %181 = vst [vmem:[#allocation2 + $0x50] sm:$0xff] 0.0
      %182 = vst [vmem:[#allocation2 + $0x58] sm:$0x3] 0.0
      %183 = vst [vmem:[#allocation2 + $0x60] sm:$0xff] 0.0
      %184 = vst [vmem:[#allocation2 + $0x68] sm:$0xff] 0.0
      %185 = vst [vmem:[#allocation2 + $0x70] sm:$0x3] 0.0
      %186 = vst [vmem:[#allocation2 + $0x78] sm:$0xff] 0.0
      %187 = vst [vmem:[#allocation2 + $0x80] sm:$0xff] 0.0
      %188 = vst [vmem:[#allocation2 + $0x88] sm:$0x3] 0.0
      %189 = vst [vmem:[#allocation2 + $0x90] sm:$0xff] 0.0
      %190 = vst [vmem:[#allocation2 + $0x98] sm:$0xff] 0.0
      %191 = vst [vmem:[#allocation2 + $0xa0] sm:$0x3] 0.0
      %192 = vst [vmem:[#allocation2 + $0xa8] sm:$0xff] 0.0
      %193 = vst [vmem:[#allocation2 + $0xb0] sm:$0xff] 0.0
      %194 = vst [vmem:[#allocation2 + $0xb8] sm:$0x3] 0.0
      %195 = vst [vmem:[#allocation2 + $0xc0] sm:$0xff] 0.0
      %196 = vst [vmem:[#allocation2 + $0xc8] sm:$0xff] 0.0
      %197 = vst [vmem:[#allocation2 + $0xd0] sm:$0x3] 0.0
      %198 = vst [vmem:[#allocation2 + $0xd8] sm:$0xff] 0.0
      %199 = vst [vmem:[#allocation2 + $0xe0] sm:$0xff] 0.0
      %200 = vst [vmem:[#allocation2 + $0xe8] sm:$0x3] 0.0
      %201 = vst [vmem:[#allocation2 + $0xf0] sm:$0xff] 0.0
      %202 = vst [vmem:[#allocation2 + $0xf8] sm:$0xff] 0.0
      %203 = vst [vmem:[#allocation2 + $0x100] sm:$0x3] 0.0
      %204 = vst [vmem:[#allocation2 + $0x108] sm:$0xff] 0.0
      %205 = vst [vmem:[#allocation2 + $0x110] sm:$0xff] 0.0
      %206 = vst [vmem:[#allocation2 + $0x118] sm:$0x3] 0.0
      %207 = vst [vmem:[#allocation2 + $0x120] sm:$0xff] 0.0
      %208 = vst [vmem:[#allocation2 + $0x128] sm:$0xff] 0.0
      %209 = vst [vmem:[#allocation2 + $0x130] sm:$0x3] 0.0
      %210 = vst [vmem:[#allocation2 + $0x138] sm:$0xff] 0.0
      %211 = vst [vmem:[#allocation2 + $0x140] sm:$0xff] 0.0
      %212 = vst [vmem:[#allocation2 + $0x148] sm:$0x3] 0.0
      %213 = vst [vmem:[#allocation2 + $0x150] sm:$0xff] 0.0
      %214 = vst [vmem:[#allocation2 + $0x158] sm:$0xff] 0.0
      %215 = vst [vmem:[#allocation2 + $0x160] sm:$0x3] 0.0
      %216 = vst [vmem:[#allocation2 + $0x168] sm:$0xff] 0.0
      %217 = vst [vmem:[#allocation2 + $0x170] sm:$0xff] 0.0
      %218 = vst [vmem:[#allocation2 + $0x178] sm:$0x3] 0.0
      %219 = vst [vmem:[#allocation2 + $0x180] sm:$0xff] 0.0
      %220 = vst [vmem:[#allocation2 + $0x188] sm:$0xff] 0.0
      %221 = vst [vmem:[#allocation2 + $0x190] sm:$0x3] 0.0
      %222 = vst [vmem:[#allocation2 + $0x198] sm:$0xff] 0.0
      %223 = vst [vmem:[#allocation2 + $0x1a0] sm:$0xff] 0.0
      %224 = vst [vmem:[#allocation2 + $0x1a8] sm:$0x3] 0.0
      %v225 = vld [vmem:[%s165] sm:$0xf]
      %v226 = vld [vmem:[%s165 + $0x4] sm:$0xf]
      %v227 = vld [vmem:[%s165 + $0x8] sm:$0xf]
      %v228 = vld [vmem:[%s165 + $0xc] sm:$0xf]
      %v229 = vld [vmem:[%s165 + $0x10] sm:$0xf]
      %v230 = vld [vmem:[%s165 + $0x14] sm:$0xf]
      %v231 = vld [vmem:[%s165 + $0x18] sm:$0xf]
      %v232 = vld [vmem:[%s165 + $0x1c] sm:$0xf]
      %v233 = vld [vmem:[%s165 + $0x20] sm:$0xf]
      %v234 = vld [vmem:[%s165 + $0x24] sm:$0xf]
      %v235 = vld [vmem:[%s165 + $0x28] sm:$0xf]
      %v236 = vld [vmem:[%s165 + $0x2c] sm:$0xf]
      %v237 = vld [vmem:[%s165 + $0x30] sm:$0xf]
      %v238 = vld [vmem:[%s165 + $0x34] sm:$0xf]
      %v239 = vld [vmem:[%s165 + $0x38] sm:$0xf]
      %v240 = vld [vmem:[%s165 + $0x3c] sm:$0xf]
      %v241 = vld [vmem:[%s165 + $0x40] sm:$0xf]
      %v242 = vld [vmem:[%s165 + $0x44] sm:$0xf]
      %v243 = vld [vmem:[%s165 + $0x48] sm:$0xf]
      %v244 = vld [vmem:[%s165 + $0x4c] sm:$0xf]
      %v245 = vld [vmem:[%s165 + $0x50] sm:$0xf]
      %v246 = vld [vmem:[%s165 + $0x54] sm:$0xf]
      %v247 = vld [vmem:[%s165 + $0x58] sm:$0xf]
      %v248 = vld [vmem:[%s165 + $0x5c] sm:$0xf]
      %v249 = vld [vmem:[%s165 + $0x60] sm:$0xf]
      %v250 = vld [vmem:[%s165 + $0x64] sm:$0xf]
      %v251 = vld [vmem:[%s165 + $0x68] sm:$0xf]
      %v252 = vld [vmem:[%s165 + $0x6c] sm:$0xf]
      %v253 = vld [vmem:[%s165 + $0x70] sm:$0xf]
      %v254 = vld [vmem:[%s165 + $0x74] sm:$0xf]
      %v255 = vld [vmem:[%s165 + $0x78] sm:$0xf]
      %v256 = vld [vmem:[%s165 + $0x7c] sm:$0xf]
      %v257 = vunpack.c.l.bf16 %v225
      %v258 = vunpack.c.l.bf16 %v226
      %v259 = vunpack.c.l.bf16 %v227
      %v260 = vunpack.c.l.bf16 %v228
      %v261 = vunpack.c.l.bf16 %v229
      %v262 = vunpack.c.l.bf16 %v230
      %v263 = vunpack.c.l.bf16 %v231
      %v264 = vunpack.c.l.bf16 %v232
      %v265 = vunpack.c.l.bf16 %v233
      %v266 = vunpack.c.l.bf16 %v234
      %v267 = vunpack.c.l.bf16 %v235
      %v268 = vunpack.c.l.bf16 %v236
      %v269 = vunpack.c.l.bf16 %v237
      %v270 = vunpack.c.l.bf16 %v238
      %v271 = vunpack.c.l.bf16 %v239
      %v272 = vunpack.c.l.bf16 %v240
      %v273 = vunpack.c.l.bf16 %v241
      %v274 = vunpack.c.l.bf16 %v242
      %v275 = vunpack.c.l.bf16 %v243
      %v276 = vunpack.c.l.bf16 %v244
      %v277 = vunpack.c.l.bf16 %v245
      %v278 = vunpack.c.l.bf16 %v246
      %v279 = vunpack.c.l.bf16 %v247
      %v280 = vunpack.c.l.bf16 %v248
      %v281 = vunpack.c.l.bf16 %v249
      %v282 = vunpack.c.l.bf16 %v250
      %v283 = vunpack.c.l.bf16 %v251
      %v284 = vunpack.c.l.bf16 %v252
      %v285 = vunpack.c.l.bf16 %v253
      %v286 = vunpack.c.l.bf16 %v254
      %v287 = vunpack.c.l.bf16 %v255
      %v288 = vunpack.c.l.bf16 %v256
      %s289 = scalar_lea.vmem [#allocation2], 24
      %vm290 = vcmask 130048
      %291 = vst.msk [vmem:[%s289 + $0x1] sm:$0xff] %vm290, %v257
      %292 = vst.msk [vmem:[%s289 + $0x9] sm:$0xff] %vm290, %v258
      %293 = vst.msk [vmem:[%s289 + $0x19] sm:$0xff] %vm290, %v259
      %294 = vst.msk [vmem:[%s289 + $0x21] sm:$0xff] %vm290, %v260
      %295 = vst.msk [vmem:[%s289 + $0x31] sm:$0xff] %vm290, %v261
      %296 = vst.msk [vmem:[%s289 + $0x39] sm:$0xff] %vm290, %v262
      %297 = vst.msk [vmem:[%s289 + $0x49] sm:$0xff] %vm290, %v263
      %298 = vst.msk [vmem:[%s289 + $0x51] sm:$0xff] %vm290, %v264
      %299 = vst.msk [vmem:[%s289 + $0x61] sm:$0xff] %vm290, %v265
      %300 = vst.msk [vmem:[%s289 + $0x69] sm:$0xff] %vm290, %v266
      %301 = vst.msk [vmem:[%s289 + $0x79] sm:$0xff] %vm290, %v267
      %302 = vst.msk [vmem:[%s289 + $0x81] sm:$0xff] %vm290, %v268
      %303 = vst.msk [vmem:[%s289 + $0x91] sm:$0xff] %vm290, %v269
      %304 = vst.msk [vmem:[%s289 + $0x99] sm:$0xff] %vm290, %v270
      %305 = vst.msk [vmem:[%s289 + $0xa9] sm:$0xff] %vm290, %v271
      %306 = vst.msk [vmem:[%s289 + $0xb1] sm:$0xff] %vm290, %v272
      %307 = vst.msk [vmem:[%s289 + $0xc1] sm:$0xff] %vm290, %v273
      %308 = vst.msk [vmem:[%s289 + $0xc9] sm:$0xff] %vm290, %v274
      %309 = vst.msk [vmem:[%s289 + $0xd9] sm:$0xff] %vm290, %v275
      %310 = vst.msk [vmem:[%s289 + $0xe1] sm:$0xff] %vm290, %v276
      %311 = vst.msk [vmem:[%s289 + $0xf1] sm:$0xff] %vm290, %v277
      %312 = vst.msk [vmem:[%s289 + $0xf9] sm:$0xff] %vm290, %v278
      %313 = vst.msk [vmem:[%s289 + $0x109] sm:$0xff] %vm290, %v279
      %314 = vst.msk [vmem:[%s289 + $0x111] sm:$0xff] %vm290, %v280
      %315 = vst.msk [vmem:[%s289 + $0x121] sm:$0xff] %vm290, %v281
      %316 = vst.msk [vmem:[%s289 + $0x129] sm:$0xff] %vm290, %v282
      %317 = vst.msk [vmem:[%s289 + $0x139] sm:$0xff] %vm290, %v283
      %318 = vst.msk [vmem:[%s289 + $0x141] sm:$0xff] %vm290, %v284
      %319 = vst.msk [vmem:[%s289 + $0x151] sm:$0xff] %vm290, %v285
      %320 = vst.msk [vmem:[%s289 + $0x159] sm:$0xff] %vm290, %v286
      %321 = vst.msk [vmem:[%s289 + $0x169] sm:$0xff] %vm290, %v287
      %322 = vst.msk [vmem:[%s289 + $0x171] sm:$0xff] %vm290, %v288
      %v323 = vld [vmem:[#allocation2] sm:$0xff]
      %v324 = vld [vmem:[#allocation2 + $0x8] sm:$0xff]
      %v325 = vld [vmem:[#allocation2 + $0x10] sm:$0x3]
      %v326 = vld [vmem:[#allocation2 + $0x18] sm:$0xff]
      %v327 = vld [vmem:[#allocation2 + $0x20] sm:$0xff]
      %v328 = vld [vmem:[#allocation2 + $0x28] sm:$0x3]
      %v329 = vld [vmem:[#allocation2 + $0x30] sm:$0xff]
      %v330 = vld [vmem:[#allocation2 + $0x38] sm:$0xff]
      %v331 = vld [vmem:[#allocation2 + $0x40] sm:$0x3]
      %v332 = vld [vmem:[#allocation2 + $0x48] sm:$0xff]
      %v333 = vld [vmem:[#allocation2 + $0x50] sm:$0xff]
      %v334 = vld [vmem:[#allocation2 + $0x58] sm:$0x3]
      %v335 = vld [vmem:[#allocation2 + $0x60] sm:$0xff]
      %v336 = vld [vmem:[#allocation2 + $0x68] sm:$0xff]
      %v337 = vld [vmem:[#allocation2 + $0x70] sm:$0x3]
      %v338 = vld [vmem:[#allocation2 + $0x78] sm:$0xff]
      %v339 = vld [vmem:[#allocation2 + $0x80] sm:$0xff]
      %v340 = vld [vmem:[#allocation2 + $0x88] sm:$0x3]
      %v341 = vld [vmem:[#allocation2 + $0x90] sm:$0xff]
      %v342 = vld [vmem:[#allocation2 + $0x98] sm:$0xff]
      %v343 = vld [vmem:[#allocation2 + $0xa0] sm:$0x3]
      %v344 = vld [vmem:[#allocation2 + $0xa8] sm:$0xff]
      %v345 = vld [vmem:[#allocation2 + $0xb0] sm:$0xff]
      %v346 = vld [vmem:[#allocation2 + $0xb8] sm:$0x3]
      %v347 = vld [vmem:[#allocation2 + $0xc0] sm:$0xff]
      %v348 = vld [vmem:[#allocation2 + $0xc8] sm:$0xff]
      %v349 = vld [vmem:[#allocation2 + $0xd0] sm:$0x3]
      %v350 = vld [vmem:[#allocation2 + $0xd8] sm:$0xff]
      %v351 = vld [vmem:[#allocation2 + $0xe0] sm:$0xff]
      %v352 = vld [vmem:[#allocation2 + $0xe8] sm:$0x3]
      %v353 = vld [vmem:[#allocation2 + $0xf0] sm:$0xff]
      %v354 = vld [vmem:[#allocation2 + $0xf8] sm:$0xff]
      %v355 = vld [vmem:[#allocation2 + $0x100] sm:$0x3]
      %v356 = vld [vmem:[#allocation2 + $0x108] sm:$0xff]
      %v357 = vld [vmem:[#allocation2 + $0x110] sm:$0xff]
      %v358 = vld [vmem:[#allocation2 + $0x118] sm:$0x3]
      %v359 = vld [vmem:[#allocation2 + $0x120] sm:$0xff]
      %v360 = vld [vmem:[#allocation2 + $0x128] sm:$0xff]
      %v361 = vld [vmem:[#allocation2 + $0x130] sm:$0x3]
      %v362 = vld [vmem:[#allocation2 + $0x138] sm:$0xff]
      %v363 = vld [vmem:[#allocation2 + $0x140] sm:$0xff]
      %v364 = vld [vmem:[#allocation2 + $0x148] sm:$0x3]
      %v365 = vld [vmem:[#allocation2 + $0x150] sm:$0xff]
      %v366 = vld [vmem:[#allocation2 + $0x158] sm:$0xff]
      %v367 = vld [vmem:[#allocation2 + $0x160] sm:$0x3]
      %v368 = vld [vmem:[#allocation2 + $0x168] sm:$0xff]
      %v369 = vld [vmem:[#allocation2 + $0x170] sm:$0xff]
      %v370 = vld [vmem:[#allocation2 + $0x178] sm:$0x3]
      %v371 = vld [vmem:[#allocation2 + $0x180] sm:$0xff]
      %v372 = vld [vmem:[#allocation2 + $0x188] sm:$0xff]
      %v373 = vld [vmem:[#allocation2 + $0x190] sm:$0x3]
      %v374 = vld [vmem:[#allocation2 + $0x198] sm:$0xff]
      %v375 = vld [vmem:[#allocation2 + $0x1a0] sm:$0xff]
      %v376 = vld [vmem:[#allocation2 + $0x1a8] sm:$0x3]
      %vm425 = vcmask 1046528
      %v426 = vrot.slane %v323, 1
      %v427 = vrot.slane %v324, 1
      %v428 = vsel %vm425, %v426, %v427
      %v429 = vrot.slane %v325, 1
      %v430 = vsel %vm425, %v427, %v429
      %v431 = vrot.slane %v326, 1
      %v432 = vrot.slane %v327, 1
      %v433 = vsel %vm425, %v431, %v432
      %v434 = vrot.slane %v328, 1
      %v435 = vsel %vm425, %v432, %v434
      %v436 = vrot.slane %v329, 1
      %v437 = vrot.slane %v330, 1
      %v438 = vsel %vm425, %v436, %v437
      %v439 = vrot.slane %v331, 1
      %v440 = vsel %vm425, %v437, %v439
      %v441 = vrot.slane %v332, 1
      %v442 = vrot.slane %v333, 1
      %v443 = vsel %vm425, %v441, %v442
      %v444 = vrot.slane %v334, 1
      %v445 = vsel %vm425, %v442, %v444
      %v446 = vrot.slane %v335, 1
      %v447 = vrot.slane %v336, 1
      %v448 = vsel %vm425, %v446, %v447
      %v449 = vrot.slane %v337, 1
      %v450 = vsel %vm425, %v447, %v449
      %v451 = vrot.slane %v338, 1
      %v452 = vrot.slane %v339, 1
      %v453 = vsel %vm425, %v451, %v452
      %v454 = vrot.slane %v340, 1
      %v455 = vsel %vm425, %v452, %v454
      %v456 = vrot.slane %v341, 1
      %v457 = vrot.slane %v342, 1
      %v458 = vsel %vm425, %v456, %v457
      %v459 = vrot.slane %v343, 1
      %v460 = vsel %vm425, %v457, %v459
      %v461 = vrot.slane %v344, 1
      %v462 = vrot.slane %v345, 1
      %v463 = vsel %vm425, %v461, %v462
      %v464 = vrot.slane %v346, 1
      %v465 = vsel %vm425, %v462, %v464
      %v466 = vrot.slane %v347, 1
      %v467 = vrot.slane %v348, 1
      %v468 = vsel %vm425, %v466, %v467
      %v469 = vrot.slane %v349, 1
      %v470 = vsel %vm425, %v467, %v469
      %v471 = vrot.slane %v350, 1
      %v472 = vrot.slane %v351, 1
      %v473 = vsel %vm425, %v471, %v472
      %v474 = vrot.slane %v352, 1
      %v475 = vsel %vm425, %v472, %v474
      %v476 = vrot.slane %v353, 1
      %v477 = vrot.slane %v354, 1
      %v478 = vsel %vm425, %v476, %v477
      %v479 = vrot.slane %v355, 1
      %v480 = vsel %vm425, %v477, %v479
      %v481 = vrot.slane %v356, 1
      %v482 = vrot.slane %v357, 1
      %v483 = vsel %vm425, %v481, %v482
      %v484 = vrot.slane %v358, 1
      %v485 = vsel %vm425, %v482, %v484
      %v486 = vrot.slane %v359, 1
      %v487 = vrot.slane %v360, 1
      %v488 = vsel %vm425, %v486, %v487
      %v489 = vrot.slane %v361, 1
      %v490 = vsel %vm425, %v487, %v489
      %v491 = vrot.slane %v362, 1
      %v492 = vrot.slane %v363, 1
      %v493 = vsel %vm425, %v491, %v492
      %v494 = vrot.slane %v364, 1
      %v495 = vsel %vm425, %v492, %v494
      %v496 = vrot.slane %v365, 1
      %v497 = vrot.slane %v366, 1
      %v498 = vsel %vm425, %v496, %v497
      %v499 = vrot.slane %v367, 1
      %v500 = vsel %vm425, %v497, %v499
      %v501 = vrot.slane %v368, 1
      %v502 = vrot.slane %v369, 1
      %v503 = vsel %vm425, %v501, %v502
      %v504 = vrot.slane %v370, 1
      %v505 = vsel %vm425, %v502, %v504
      %vm538 = vcmask 1045504
      %v539 = vrot.slane %v323, 2
      %v540 = vrot.slane %v324, 2
      %v541 = vsel %vm538, %v539, %v540
      %v542 = vrot.slane %v325, 2
      %v543 = vsel %vm538, %v540, %v542
      %v544 = vrot.slane %v326, 2
      %v545 = vrot.slane %v327, 2
      %v546 = vsel %vm538, %v544, %v545
      %v547 = vrot.slane %v328, 2
      %v548 = vsel %vm538, %v545, %v547
      %v549 = vrot.slane %v329, 2
      %v550 = vrot.slane %v330, 2
      %v551 = vsel %vm538, %v549, %v550
      %v552 = vrot.slane %v331, 2
      %v553 = vsel %vm538, %v550, %v552
      %v554 = vrot.slane %v332, 2
      %v555 = vrot.slane %v333, 2
      %v556 = vsel %vm538, %v554, %v555
      %v557 = vrot.slane %v334, 2
      %v558 = vsel %vm538, %v555, %v557
      %v559 = vrot.slane %v335, 2
      %v560 = vrot.slane %v336, 2
      %v561 = vsel %vm538, %v559, %v560
      %v562 = vrot.slane %v337, 2
      %v563 = vsel %vm538, %v560, %v562
      %v564 = vrot.slane %v338, 2
      %v565 = vrot.slane %v339, 2
      %v566 = vsel %vm538, %v564, %v565
      %v567 = vrot.slane %v340, 2
      %v568 = vsel %vm538, %v565, %v567
      %v569 = vrot.slane %v341, 2
      %v570 = vrot.slane %v342, 2
      %v571 = vsel %vm538, %v569, %v570
      %v572 = vrot.slane %v343, 2
      %v573 = vsel %vm538, %v570, %v572
      %v574 = vrot.slane %v344, 2
      %v575 = vrot.slane %v345, 2
      %v576 = vsel %vm538, %v574, %v575
      %v577 = vrot.slane %v346, 2
      %v578 = vsel %vm538, %v575, %v577
      %v579 = vrot.slane %v347, 2
      %v580 = vrot.slane %v348, 2
      %v581 = vsel %vm538, %v579, %v580
      %v582 = vrot.slane %v349, 2
      %v583 = vsel %vm538, %v580, %v582
      %v584 = vrot.slane %v350, 2
      %v585 = vrot.slane %v351, 2
      %v586 = vsel %vm538, %v584, %v585
      %v587 = vrot.slane %v352, 2
      %v588 = vsel %vm538, %v585, %v587
      %v589 = vrot.slane %v353, 2
      %v590 = vrot.slane %v354, 2
      %v591 = vsel %vm538, %v589, %v590
      %v592 = vrot.slane %v355, 2
      %v593 = vsel %vm538, %v590, %v592
      %v594 = vrot.slane %v356, 2
      %v595 = vrot.slane %v357, 2
      %v596 = vsel %vm538, %v594, %v595
      %v597 = vrot.slane %v358, 2
      %v598 = vsel %vm538, %v595, %v597
      %v599 = vrot.slane %v359, 2
      %v600 = vrot.slane %v360, 2
      %v601 = vsel %vm538, %v599, %v600
      %v602 = vrot.slane %v361, 2
      %v603 = vsel %vm538, %v600, %v602
      %v604 = vrot.slane %v362, 2
      %v605 = vrot.slane %v363, 2
      %v606 = vsel %vm538, %v604, %v605
      %v607 = vrot.slane %v364, 2
      %v608 = vsel %vm538, %v605, %v607
      %v609 = vrot.slane %v365, 2
      %v610 = vrot.slane %v366, 2
      %v611 = vsel %vm538, %v609, %v610
      %v612 = vrot.slane %v367, 2
      %v613 = vsel %vm538, %v610, %v612
      %v614 = vrot.slane %v368, 2
      %v615 = vrot.slane %v369, 2
      %v616 = vsel %vm538, %v614, %v615
      %v617 = vrot.slane %v370, 2
      %v618 = vsel %vm538, %v615, %v617
      %v654 = vrot.slane %v371, 1
      %v655 = vrot.slane %v372, 1
      %v656 = vsel %vm425, %v654, %v655
      %v657 = vrot.slane %v373, 1
      %v658 = vsel %vm425, %v655, %v657
      %v661 = vrot.slane %v371, 2
      %v662 = vrot.slane %v372, 2
      %v663 = vsel %vm538, %v661, %v662
      %v664 = vrot.slane %v373, 2
      %v665 = vsel %vm538, %v662, %v664
      %v671 = vrot.slane %v374, 1
      %v672 = vrot.slane %v375, 1
      %v673 = vsel %vm425, %v671, %v672
      %v674 = vrot.slane %v376, 1
      %v675 = vsel %vm425, %v672, %v674
      %v678 = vrot.slane %v374, 2
      %v679 = vrot.slane %v375, 2
      %v680 = vsel %vm538, %v678, %v679
      %v681 = vrot.slane %v376, 2
      %v682 = vsel %vm538, %v679, %v681
      %v685 = vpack.c.bf16 %v324, %v323
      %v686 = vpack.c.bf16 %v430, %v428
      %v687 = vpack.c.bf16 %v543, %v541
      %v688 = vpack.c.bf16 %v327, %v326
      %v689 = vpack.c.bf16 %v435, %v433
      %v690 = vpack.c.bf16 %v548, %v546
      %v691 = vpack.c.bf16 %v330, %v329
      %v692 = vpack.c.bf16 %v440, %v438
      %v693 = vpack.c.bf16 %v553, %v551
      %v694 = vpack.c.bf16 %v333, %v332
      %v695 = vpack.c.bf16 %v445, %v443
      %v696 = vpack.c.bf16 %v558, %v556
      %v697 = vpack.c.bf16 %v336, %v335
      %v698 = vpack.c.bf16 %v450, %v448
      %v699 = vpack.c.bf16 %v563, %v561
      %v700 = vpack.c.bf16 %v339, %v338
      %v701 = vpack.c.bf16 %v455, %v453
      %v702 = vpack.c.bf16 %v568, %v566
      %v703 = vpack.c.bf16 %v342, %v341
      %v704 = vpack.c.bf16 %v460, %v458
      %v705 = vpack.c.bf16 %v573, %v571
      %v706 = vpack.c.bf16 %v345, %v344
      %v707 = vpack.c.bf16 %v465, %v463
      %v708 = vpack.c.bf16 %v578, %v576
      %v709 = vpack.c.bf16 %v348, %v347
      %v710 = vpack.c.bf16 %v470, %v468
      %v711 = vpack.c.bf16 %v583, %v581
      %v712 = vpack.c.bf16 %v351, %v350
      %v713 = vpack.c.bf16 %v475, %v473
      %v714 = vpack.c.bf16 %v588, %v586
      %v715 = vpack.c.bf16 %v354, %v353
      %v716 = vpack.c.bf16 %v480, %v478
      %v717 = vpack.c.bf16 %v593, %v591
      %v718 = vpack.c.bf16 %v357, %v356
      %v719 = vpack.c.bf16 %v485, %v483
      %v720 = vpack.c.bf16 %v598, %v596
      %v721 = vpack.c.bf16 %v360, %v359
      %v722 = vpack.c.bf16 %v490, %v488
      %v723 = vpack.c.bf16 %v603, %v601
      %v724 = vpack.c.bf16 %v363, %v362
      %v725 = vpack.c.bf16 %v495, %v493
      %v726 = vpack.c.bf16 %v608, %v606
      %v727 = vpack.c.bf16 %v366, %v365
      %v728 = vpack.c.bf16 %v500, %v498
      %v729 = vpack.c.bf16 %v613, %v611
      %v730 = vpack.c.bf16 %v369, %v368
      %v731 = vpack.c.bf16 %v505, %v503
      %v732 = vpack.c.bf16 %v618, %v616
      %v733 = vpack.c.bf16 %v372, %v371
      %v734 = vpack.c.bf16 %v658, %v656
      %v735 = vpack.c.bf16 %v665, %v663
      %v736 = vpack.c.bf16 %v375, %v374
      %v737 = vpack.c.bf16 %v675, %v673
      %v738 = vpack.c.bf16 %v682, %v680
      %v739 = vld [vmem:[%s1] sm:$0xf]
      %v740 = vld [vmem:[%s1 + $0x4] sm:$0xf]
      %v741 = vld [vmem:[%s1 + $0x8] sm:$0xf]
      %v742 = vld [vmem:[%s1 + $0xc] sm:$0xf]
      %v743 = vld [vmem:[%s1 + $0x10] sm:$0xf]
      %v744 = vld [vmem:[%s1 + $0x14] sm:$0xf]
      %v745 = vld [vmem:[%s1 + $0x18] sm:$0xf]
      %v746 = vld [vmem:[%s1 + $0x1c] sm:$0xf]
      %v747 = vld [vmem:[%s1 + $0x20] sm:$0xf]
      %v748 = vld [vmem:[%s1 + $0x24] sm:$0xf]
      %v749 = vld [vmem:[%s1 + $0x28] sm:$0xf]
      %v750 = vld [vmem:[%s1 + $0x2c] sm:$0xf]
      %v751 = vld [vmem:[%s1 + $0x30] sm:$0xf]
      %v752 = vld [vmem:[%s1 + $0x34] sm:$0xf]
      %v753 = vld [vmem:[%s1 + $0x38] sm:$0xf]
      %v754 = vld [vmem:[%s1 + $0x3c] sm:$0xf]
      %v755 = vld [vmem:[%s1 + $0x40] sm:$0xf]
      %v756 = vld [vmem:[%s1 + $0x44] sm:$0xf]
      %v757 = vld [vmem:[%s1 + $0x48] sm:$0xf]
      %v758 = vld [vmem:[%s1 + $0x4c] sm:$0xf]
      %v759 = vld [vmem:[%s1 + $0x50] sm:$0xf]
      %v760 = vld [vmem:[%s1 + $0x54] sm:$0xf]
      %v761 = vld [vmem:[%s1 + $0x58] sm:$0xf]
      %v762 = vld [vmem:[%s1 + $0x5c] sm:$0xf]
      %v763 = vld [vmem:[%s1 + $0x60] sm:$0xf]
      %v764 = vld [vmem:[%s1 + $0x64] sm:$0xf]
      %v765 = vld [vmem:[%s1 + $0x68] sm:$0xf]
      %v766 = vld [vmem:[%s1 + $0x6c] sm:$0xf]
      %v767 = vld [vmem:[%s1 + $0x70] sm:$0xf]
      %v768 = vld [vmem:[%s1 + $0x74] sm:$0xf]
      %v769 = vld [vmem:[%s1 + $0x78] sm:$0xf]
      %v770 = vld [vmem:[%s1 + $0x7c] sm:$0xf]
      %v771 = vld [vmem:[%s1 + $0x80] sm:$0xf]
      %v772 = vld [vmem:[%s1 + $0x84] sm:$0xf]
      %v773 = vld [vmem:[%s1 + $0x88] sm:$0xf]
      %v774 = vld [vmem:[%s1 + $0x8c] sm:$0xf]
      %v775 = vld [vmem:[%s1 + $0x90] sm:$0xf]
      %v776 = vld [vmem:[%s1 + $0x94] sm:$0xf]
      %v777 = vld [vmem:[%s1 + $0x98] sm:$0xf]
      %v778 = vld [vmem:[%s1 + $0x9c] sm:$0xf]
      %v779 = vld [vmem:[%s1 + $0xa0] sm:$0xf]
      %v780 = vld [vmem:[%s1 + $0xa4] sm:$0xf]
      %v781 = vld [vmem:[%s1 + $0xa8] sm:$0xf]
      %v782 = vld [vmem:[%s1 + $0xac] sm:$0xf]
      %v783 = vld [vmem:[%s1 + $0xb0] sm:$0xf]
      %v784 = vld [vmem:[%s1 + $0xb4] sm:$0xf]
      %v785 = vld [vmem:[%s1 + $0xb8] sm:$0xf]
      %v786 = vld [vmem:[%s1 + $0xbc] sm:$0xf]
      %v787 = vld [vmem:[%s1 + $0xc0] sm:$0xf]
      %v788 = vld [vmem:[%s1 + $0xc4] sm:$0xf]
      %v789 = vld [vmem:[%s1 + $0xc8] sm:$0xf]
      %v790 = vld [vmem:[%s1 + $0xcc] sm:$0xf]
      %v791 = vld [vmem:[%s1 + $0xd0] sm:$0xf]
      %v792 = vld [vmem:[%s1 + $0xd4] sm:$0xf]
      %v793 = vld [vmem:[%s1 + $0xd8] sm:$0xf]
      %v794 = vld [vmem:[%s1 + $0xdc] sm:$0xf]
      %v795 = vld [vmem:[%s1 + $0xe0] sm:$0xf]
      %v796 = vld [vmem:[%s1 + $0xe4] sm:$0xf]
      %v797 = vld [vmem:[%s1 + $0xe8] sm:$0xf]
      %v798 = vld [vmem:[%s1 + $0xec] sm:$0xf]
      %v799 = vld [vmem:[%s1 + $0xf0] sm:$0xf]
      %v800 = vld [vmem:[%s1 + $0xf4] sm:$0xf]
      %v801 = vld [vmem:[%s1 + $0xf8] sm:$0xf]
      %v802 = vld [vmem:[%s1 + $0xfc] sm:$0xf]
      %v803 = vld [vmem:[%s1 + $0x100] sm:$0xf]
      %v804 = vld [vmem:[%s1 + $0x104] sm:$0xf]
      %v805 = vld [vmem:[%s1 + $0x108] sm:$0xf]
      %v806 = vld [vmem:[%s1 + $0x10c] sm:$0xf]
      %v807 = vld [vmem:[%s1 + $0x110] sm:$0xf]
      %v808 = vld [vmem:[%s1 + $0x114] sm:$0xf]
      %v809 = vld [vmem:[%s1 + $0x118] sm:$0xf]
      %v810 = vld [vmem:[%s1 + $0x11c] sm:$0xf]
      %v811 = vld [vmem:[%s1 + $0x120] sm:$0xf]
      %v812 = vld [vmem:[%s1 + $0x124] sm:$0xf]
      %v813 = vld [vmem:[%s1 + $0x128] sm:$0xf]
      %v814 = vld [vmem:[%s1 + $0x12c] sm:$0xf]
      %v815 = vld [vmem:[%s1 + $0x130] sm:$0xf]
      %v816 = vld [vmem:[%s1 + $0x134] sm:$0xf]
      %v817 = vld [vmem:[%s1 + $0x138] sm:$0xf]
      %v818 = vld [vmem:[%s1 + $0x13c] sm:$0xf]
      %v819 = vld [vmem:[%s1 + $0x140] sm:$0xf]
      %v820 = vld [vmem:[%s1 + $0x144] sm:$0xf]
      %v821 = vld [vmem:[%s1 + $0x148] sm:$0xf]
      %v822 = vld [vmem:[%s1 + $0x14c] sm:$0xf]
      %v823 = vld [vmem:[%s1 + $0x150] sm:$0xf]
      %v824 = vld [vmem:[%s1 + $0x154] sm:$0xf]
      %v825 = vld [vmem:[%s1 + $0x158] sm:$0xf]
      %v826 = vld [vmem:[%s1 + $0x15c] sm:$0xf]
      %v827 = vld [vmem:[%s1 + $0x160] sm:$0xf]
      %v828 = vld [vmem:[%s1 + $0x164] sm:$0xf]
      %v829 = vld [vmem:[%s1 + $0x168] sm:$0xf]
      %v830 = vld [vmem:[%s1 + $0x16c] sm:$0xf]
      %v831 = vld [vmem:[%s1 + $0x170] sm:$0xf]
      %v832 = vld [vmem:[%s1 + $0x174] sm:$0xf]
      %v833 = vld [vmem:[%s1 + $0x178] sm:$0xf]
      %v834 = vld [vmem:[%s1 + $0x17c] sm:$0xf]
      %v835 = vld [vmem:[%s1 + $0x180] sm:$0xf]
      %v836 = vld [vmem:[%s1 + $0x184] sm:$0xf]
      %v837 = vld [vmem:[%s1 + $0x188] sm:$0xf]
      %v838 = vld [vmem:[%s1 + $0x18c] sm:$0xf]
      %v839 = vld [vmem:[%s1 + $0x190] sm:$0xf]
      %v840 = vld [vmem:[%s1 + $0x194] sm:$0xf]
      %v841 = vld [vmem:[%s1 + $0x198] sm:$0xf]
      %v842 = vld [vmem:[%s1 + $0x19c] sm:$0xf]
      %v843 = vld [vmem:[%s1 + $0x1a0] sm:$0xf]
      %v844 = vld [vmem:[%s1 + $0x1a4] sm:$0xf]
      %v845 = vld [vmem:[%s1 + $0x1a8] sm:$0xf]
      %v846 = vld [vmem:[%s1 + $0x1ac] sm:$0xf]
      %v847 = vld [vmem:[%s1 + $0x1b0] sm:$0xf]
      %v848 = vld [vmem:[%s1 + $0x1b4] sm:$0xf]
      %v849 = vld [vmem:[%s1 + $0x1b8] sm:$0xf]
      %v850 = vld [vmem:[%s1 + $0x1bc] sm:$0xf]
      %v851 = vld [vmem:[%s1 + $0x1c0] sm:$0xf]
      %v852 = vld [vmem:[%s1 + $0x1c4] sm:$0xf]
      %v853 = vld [vmem:[%s1 + $0x1c8] sm:$0xf]
      %v854 = vld [vmem:[%s1 + $0x1cc] sm:$0xf]
      %v855 = vld [vmem:[%s1 + $0x1d0] sm:$0xf]
      %v856 = vld [vmem:[%s1 + $0x1d4] sm:$0xf]
      %v857 = vld [vmem:[%s1 + $0x1d8] sm:$0xf]
      %v858 = vld [vmem:[%s1 + $0x1dc] sm:$0xf]
      %v859 = vld [vmem:[%s1 + $0x1e0] sm:$0xf]
      %v860 = vld [vmem:[%s1 + $0x1e4] sm:$0xf]
      %v861 = vld [vmem:[%s1 + $0x1e8] sm:$0xf]
      %v862 = vld [vmem:[%s1 + $0x1ec] sm:$0xf]
      %v863 = vld [vmem:[%s1 + $0x1f0] sm:$0xf]
      %v864 = vld [vmem:[%s1 + $0x1f4] sm:$0xf]
      %v865 = vld [vmem:[%s1 + $0x1f8] sm:$0xf]
      %v866 = vld [vmem:[%s1 + $0x1fc] sm:$0xf]
      %v867 = vld [vmem:[%s1 + $0x200] sm:$0xf]
      %v868 = vld [vmem:[%s1 + $0x204] sm:$0xf]
      %v869 = vld [vmem:[%s1 + $0x208] sm:$0xf]
      %v870 = vld [vmem:[%s1 + $0x20c] sm:$0xf]
      %v871 = vld [vmem:[%s1 + $0x210] sm:$0xf]
      %v872 = vld [vmem:[%s1 + $0x214] sm:$0xf]
      %v873 = vld [vmem:[%s1 + $0x218] sm:$0xf]
      %v874 = vld [vmem:[%s1 + $0x21c] sm:$0xf]
      %v875 = vld [vmem:[%s1 + $0x220] sm:$0xf]
      %v876 = vld [vmem:[%s1 + $0x224] sm:$0xf]
      %v877 = vld [vmem:[%s1 + $0x228] sm:$0xf]
      %v878 = vld [vmem:[%s1 + $0x22c] sm:$0xf]
      %v879 = vld [vmem:[%s1 + $0x230] sm:$0xf]
      %v880 = vld [vmem:[%s1 + $0x234] sm:$0xf]
      %v881 = vld [vmem:[%s1 + $0x238] sm:$0xf]
      %v882 = vld [vmem:[%s1 + $0x23c] sm:$0xf]
      %v883 = vld [vmem:[%s2] sm:$0x1]
      %v885 = vperm.slane %v883, 0
      %v1031 = vunpack.c.l.b16 %v739
      %v1032 = vunpack.c.l.b16 %v740
      %v1033 = vunpack.c.l.b16 %v741
      %v1034 = vunpack.c.l.b16 %v742
      %v1035 = vunpack.c.l.b16 %v743
      %v1036 = vunpack.c.l.b16 %v744
      %v1037 = vunpack.c.l.b16 %v745
      %v1038 = vunpack.c.l.b16 %v746
      %v1039 = vunpack.c.l.b16 %v747
      %v1040 = vunpack.c.l.b16 %v748
      %v1041 = vunpack.c.l.b16 %v749
      %v1042 = vunpack.c.l.b16 %v750
      %v1043 = vunpack.c.l.b16 %v751
      %v1044 = vunpack.c.l.b16 %v752
      %v1045 = vunpack.c.l.b16 %v753
      %v1046 = vunpack.c.l.b16 %v754
      %v1047 = vunpack.c.l.b16 %v755
      %v1048 = vunpack.c.l.b16 %v756
      %v1049 = vunpack.c.l.b16 %v757
      %v1050 = vunpack.c.l.b16 %v758
      %v1051 = vunpack.c.l.b16 %v759
      %v1052 = vunpack.c.l.b16 %v760
      %v1053 = vunpack.c.l.b16 %v761
      %v1054 = vunpack.c.l.b16 %v762
      %v1055 = vunpack.c.l.b16 %v763
      %v1056 = vunpack.c.l.b16 %v764
      %v1057 = vunpack.c.l.b16 %v765
      %v1058 = vunpack.c.l.b16 %v766
      %v1059 = vunpack.c.l.b16 %v767
      %v1060 = vunpack.c.l.b16 %v768
      %v1061 = vunpack.c.l.b16 %v769
      %v1062 = vunpack.c.l.b16 %v770
      %v1063 = vunpack.c.l.b16 %v771
      %v1064 = vunpack.c.l.b16 %v772
      %v1065 = vunpack.c.l.b16 %v773
      %v1066 = vunpack.c.l.b16 %v774
      %v1067 = vunpack.c.l.b16 %v775
      %v1068 = vunpack.c.l.b16 %v776
      %v1069 = vunpack.c.l.b16 %v777
      %v1070 = vunpack.c.l.b16 %v778
      %v1071 = vunpack.c.l.b16 %v779
      %v1072 = vunpack.c.l.b16 %v780
      %v1073 = vunpack.c.l.b16 %v781
      %v1074 = vunpack.c.l.b16 %v782
      %v1075 = vunpack.c.l.b16 %v783
      %v1076 = vunpack.c.l.b16 %v784
      %v1077 = vunpack.c.l.b16 %v785
      %v1078 = vunpack.c.l.b16 %v786
      %v1079 = vunpack.c.l.b16 %v787
      %v1080 = vunpack.c.l.b16 %v788
      %v1081 = vunpack.c.l.b16 %v789
      %v1082 = vunpack.c.l.b16 %v790
      %v1083 = vunpack.c.l.b16 %v791
      %v1084 = vunpack.c.l.b16 %v792
      %v1085 = vunpack.c.l.b16 %v793
      %v1086 = vunpack.c.l.b16 %v794
      %v1087 = vunpack.c.l.b16 %v795
      %v1088 = vunpack.c.l.b16 %v796
      %v1089 = vunpack.c.l.b16 %v797
      %v1090 = vunpack.c.l.b16 %v798
      %v1091 = vunpack.c.l.b16 %v799
      %v1092 = vunpack.c.l.b16 %v800
      %v1093 = vunpack.c.l.b16 %v801
      %v1094 = vunpack.c.l.b16 %v802
      %v1095 = vunpack.c.l.b16 %v803
      %v1096 = vunpack.c.l.b16 %v804
      %v1097 = vunpack.c.l.b16 %v805
      %v1098 = vunpack.c.l.b16 %v806
      %v1099 = vunpack.c.l.b16 %v807
      %v1100 = vunpack.c.l.b16 %v808
      %v1101 = vunpack.c.l.b16 %v809
      %v1102 = vunpack.c.l.b16 %v810
      %v1103 = vunpack.c.l.b16 %v811
      %v1104 = vunpack.c.l.b16 %v812
      %v1105 = vunpack.c.l.b16 %v813
      %v1106 = vunpack.c.l.b16 %v814
      %v1107 = vunpack.c.l.b16 %v815
      %v1108 = vunpack.c.l.b16 %v816
      %v1109 = vunpack.c.l.b16 %v817
      %v1110 = vunpack.c.l.b16 %v818
      %v1111 = vunpack.c.l.b16 %v819
      %v1112 = vunpack.c.l.b16 %v820
      %v1113 = vunpack.c.l.b16 %v821
      %v1114 = vunpack.c.l.b16 %v822
      %v1115 = vunpack.c.l.b16 %v823
      %v1116 = vunpack.c.l.b16 %v824
      %v1117 = vunpack.c.l.b16 %v825
      %v1118 = vunpack.c.l.b16 %v826
      %v1119 = vunpack.c.l.b16 %v827
      %v1120 = vunpack.c.l.b16 %v828
      %v1121 = vunpack.c.l.b16 %v829
      %v1122 = vunpack.c.l.b16 %v830
      %v1123 = vunpack.c.l.b16 %v831
      %v1124 = vunpack.c.l.b16 %v832
      %v1125 = vunpack.c.l.b16 %v833
      %v1126 = vunpack.c.l.b16 %v834
      %v1127 = vunpack.c.l.b16 %v835
      %v1128 = vunpack.c.l.b16 %v836
      %v1129 = vunpack.c.l.b16 %v837
      %v1130 = vunpack.c.l.b16 %v838
      %v1131 = vunpack.c.l.b16 %v839
      %v1132 = vunpack.c.l.b16 %v840
      %v1133 = vunpack.c.l.b16 %v841
      %v1134 = vunpack.c.l.b16 %v842
      %v1135 = vunpack.c.l.b16 %v843
      %v1136 = vunpack.c.l.b16 %v844
      %v1137 = vunpack.c.l.b16 %v845
      %v1138 = vunpack.c.l.b16 %v846
      %v1139 = vunpack.c.l.b16 %v847
      %v1140 = vunpack.c.l.b16 %v848
      %v1141 = vunpack.c.l.b16 %v849
      %v1142 = vunpack.c.l.b16 %v850
      %v1143 = vunpack.c.l.b16 %v851
      %v1144 = vunpack.c.l.b16 %v852
      %v1145 = vunpack.c.l.b16 %v853
      %v1146 = vunpack.c.l.b16 %v854
      %v1147 = vunpack.c.l.b16 %v855
      %v1148 = vunpack.c.l.b16 %v856
      %v1149 = vunpack.c.l.b16 %v857
      %v1150 = vunpack.c.l.b16 %v858
      %v1151 = vunpack.c.l.b16 %v859
      %v1152 = vunpack.c.l.b16 %v860
      %v1153 = vunpack.c.l.b16 %v861
      %v1154 = vunpack.c.l.b16 %v862
      %v1155 = vunpack.c.l.b16 %v863
      %v1156 = vunpack.c.l.b16 %v864
      %v1157 = vunpack.c.l.b16 %v865
      %v1158 = vunpack.c.l.b16 %v866
      %v1159 = vunpack.c.l.b16 %v867
      %v1160 = vunpack.c.l.b16 %v868
      %v1161 = vunpack.c.l.b16 %v869
      %v1162 = vunpack.c.l.b16 %v870
      %v1163 = vunpack.c.l.b16 %v871
      %v1164 = vunpack.c.l.b16 %v872
      %v1165 = vunpack.c.l.b16 %v873
      %v1166 = vunpack.c.l.b16 %v874
      %v1167 = vunpack.c.l.b16 %v875
      %v1168 = vunpack.c.l.b16 %v876
      %v1169 = vunpack.c.l.b16 %v877
      %v1170 = vunpack.c.l.b16 %v878
      %v1171 = vunpack.c.l.b16 %v879
      %v1172 = vunpack.c.l.b16 %v880
      %v1173 = vunpack.c.l.b16 %v881
      %v1174 = vunpack.c.l.b16 %v882
      %v1175 = vpack.c.b16 %v1032, %v1031
      %v1176 = vpack.c.b16 %v1034, %v1033
      %v1177 = vpack.c.b16 %v1036, %v1035
      %v1178 = vpack.c.b16 %v1038, %v1037
      %v1179 = vpack.c.b16 %v1040, %v1039
      %v1180 = vpack.c.b16 %v1042, %v1041
      %v1181 = vpack.c.b16 %v1044, %v1043
      %v1182 = vpack.c.b16 %v1046, %v1045
      %v1183 = vpack.c.b16 %v1048, %v1047
      %v1184 = vpack.c.b16 %v1050, %v1049
      %v1185 = vpack.c.b16 %v1052, %v1051
      %v1186 = vpack.c.b16 %v1054, %v1053
      %v1187 = vpack.c.b16 %v1056, %v1055
      %v1188 = vpack.c.b16 %v1058, %v1057
      %v1189 = vpack.c.b16 %v1060, %v1059
      %v1190 = vpack.c.b16 %v1062, %v1061
      %v1191 = vpack.c.b16 %v1064, %v1063
      %v1192 = vpack.c.b16 %v1066, %v1065
      %v1193 = vpack.c.b16 %v1068, %v1067
      %v1194 = vpack.c.b16 %v1070, %v1069
      %v1195 = vpack.c.b16 %v1072, %v1071
      %v1196 = vpack.c.b16 %v1074, %v1073
      %v1197 = vpack.c.b16 %v1076, %v1075
      %v1198 = vpack.c.b16 %v1078, %v1077
      %v1199 = vpack.c.b16 %v1080, %v1079
      %v1200 = vpack.c.b16 %v1082, %v1081
      %v1201 = vpack.c.b16 %v1084, %v1083
      %v1202 = vpack.c.b16 %v1086, %v1085
      %v1203 = vpack.c.b16 %v1088, %v1087
      %v1204 = vpack.c.b16 %v1090, %v1089
      %v1205 = vpack.c.b16 %v1092, %v1091
      %v1206 = vpack.c.b16 %v1094, %v1093
      %v1207 = vpack.c.b16 %v1096, %v1095
      %v1208 = vpack.c.b16 %v1098, %v1097
      %v1209 = vpack.c.b16 %v1100, %v1099
      %v1210 = vpack.c.b16 %v1102, %v1101
      %v1211 = vpack.c.b16 %v1104, %v1103
      %v1212 = vpack.c.b16 %v1106, %v1105
      %v1213 = vpack.c.b16 %v1108, %v1107
      %v1214 = vpack.c.b16 %v1110, %v1109
      %v1215 = vpack.c.b16 %v1112, %v1111
      %v1216 = vpack.c.b16 %v1114, %v1113
      %v1217 = vpack.c.b16 %v1116, %v1115
      %v1218 = vpack.c.b16 %v1118, %v1117
      %v1219 = vpack.c.b16 %v1120, %v1119
      %v1220 = vpack.c.b16 %v1122, %v1121
      %v1221 = vpack.c.b16 %v1124, %v1123
      %v1222 = vpack.c.b16 %v1126, %v1125
      %v1223 = vpack.c.b16 %v1128, %v1127
      %v1224 = vpack.c.b16 %v1130, %v1129
      %v1225 = vpack.c.b16 %v1132, %v1131
      %v1226 = vpack.c.b16 %v1134, %v1133
      %v1227 = vpack.c.b16 %v1136, %v1135
      %v1228 = vpack.c.b16 %v1138, %v1137
      %v1229 = vpack.c.b16 %v1140, %v1139
      %v1230 = vpack.c.b16 %v1142, %v1141
      %v1231 = vpack.c.b16 %v1144, %v1143
      %v1232 = vpack.c.b16 %v1146, %v1145
      %v1233 = vpack.c.b16 %v1148, %v1147
      %v1234 = vpack.c.b16 %v1150, %v1149
      %v1235 = vpack.c.b16 %v1152, %v1151
      %v1236 = vpack.c.b16 %v1154, %v1153
      %v1237 = vpack.c.b16 %v1156, %v1155
      %v1238 = vpack.c.b16 %v1158, %v1157
      %v1239 = vpack.c.b16 %v1160, %v1159
      %v1240 = vpack.c.b16 %v1162, %v1161
      %v1241 = vpack.c.b16 %v1164, %v1163
      %v1242 = vpack.c.b16 %v1166, %v1165
      %v1243 = vpack.c.b16 %v1168, %v1167
      %v1244 = vpack.c.b16 %v1170, %v1169
      %v1245 = vpack.c.b16 %v1172, %v1171
      %v1246 = vpack.c.b16 %v1174, %v1173
      %1319 = vmatpush.bf16.msra.mxu0 %v1182
      %1320 = vmatpush.bf16.msra.mxu0 %v1181
      %1321 = vmatpush.bf16.msra.mxu0 %v1180
      %1322 = vmatpush.bf16.msra.mxu0 %v1179
      %1323 = vmatpush.bf16.msra.mxu0 %v1178
      %1324 = vmatpush.bf16.msra.mxu0 %v1177
      %1325 = vmatpush.bf16.msra.mxu0 %v1176
      %1326 = vmatpush.bf16.msra.mxu0 %v1175
      %1327 = vmatmul.bf16.gmra.mxu0 %v685
      %v1328 = vpop.f32.mrf.mxu0
      %v1329 = vadd.f32 %v885, %v1328
      %v1330 = vpop.f32.mrf.mxu0
      %v1331 = vadd.f32 %v885, %v1330
      %1332 = vmatmul.bf16.gmra.mxu0 %v688
      %v1333 = vpop.f32.mrf.mxu0
      %v1334 = vadd.f32 %v885, %v1333
      %v1335 = vpop.f32.mrf.mxu0
      %v1336 = vadd.f32 %v885, %v1335
      %1337 = vmatmul.bf16.gmra.mxu0 %v691
      %v1338 = vpop.f32.mrf.mxu0
      %v1339 = vadd.f32 %v885, %v1338
      %v1340 = vpop.f32.mrf.mxu0
      %v1341 = vadd.f32 %v885, %v1340
      %1342 = vmatmul.bf16.gmra.mxu0 %v694
      %v1343 = vpop.f32.mrf.mxu0
      %v1344 = vadd.f32 %v885, %v1343
      %v1345 = vpop.f32.mrf.mxu0
      %v1346 = vadd.f32 %v885, %v1345
      %1347 = vmatmul.bf16.gmra.mxu0 %v697
      %v1348 = vpop.f32.mrf.mxu0
      %v1349 = vadd.f32 %v885, %v1348
      %v1350 = vpop.f32.mrf.mxu0
      %v1351 = vadd.f32 %v885, %v1350
      %1352 = vmatmul.bf16.gmra.mxu0 %v700
      %v1353 = vpop.f32.mrf.mxu0
      %v1354 = vadd.f32 %v885, %v1353
      %v1355 = vpop.f32.mrf.mxu0
      %v1356 = vadd.f32 %v885, %v1355
      %1357 = vmatmul.bf16.gmra.mxu0 %v703
      %v1358 = vpop.f32.mrf.mxu0
      %v1359 = vadd.f32 %v885, %v1358
      %v1360 = vpop.f32.mrf.mxu0
      %v1361 = vadd.f32 %v885, %v1360
      %1362 = vmatmul.bf16.gmra.mxu0 %v706
      %v1363 = vpop.f32.mrf.mxu0
      %v1364 = vadd.f32 %v885, %v1363
      %v1365 = vpop.f32.mrf.mxu0
      %v1366 = vadd.f32 %v885, %v1365
      %1367 = vmatmul.bf16.gmra.mxu0 %v709
      %v1368 = vpop.f32.mrf.mxu0
      %v1369 = vadd.f32 %v885, %v1368
      %v1370 = vpop.f32.mrf.mxu0
      %v1371 = vadd.f32 %v885, %v1370
      %1372 = vmatmul.bf16.gmra.mxu0 %v712
      %v1373 = vpop.f32.mrf.mxu0
      %v1374 = vadd.f32 %v885, %v1373
      %v1375 = vpop.f32.mrf.mxu0
      %v1376 = vadd.f32 %v885, %v1375
      %1377 = vmatmul.bf16.gmra.mxu0 %v715
      %v1378 = vpop.f32.mrf.mxu0
      %v1379 = vadd.f32 %v885, %v1378
      %v1380 = vpop.f32.mrf.mxu0
      %v1381 = vadd.f32 %v885, %v1380
      %1382 = vmatmul.bf16.gmra.mxu0 %v718
      %v1383 = vpop.f32.mrf.mxu0
      %v1384 = vadd.f32 %v885, %v1383
      %v1385 = vpop.f32.mrf.mxu0
      %v1386 = vadd.f32 %v885, %v1385
      %1387 = vmatmul.bf16.gmra.mxu0 %v721
      %v1388 = vpop.f32.mrf.mxu0
      %v1389 = vadd.f32 %v885, %v1388
      %v1390 = vpop.f32.mrf.mxu0
      %v1391 = vadd.f32 %v885, %v1390
      %1392 = vmatmul.bf16.gmra.mxu0 %v724
      %v1393 = vpop.f32.mrf.mxu0
      %v1394 = vadd.f32 %v885, %v1393
      %v1395 = vpop.f32.mrf.mxu0
      %v1396 = vadd.f32 %v885, %v1395
      %1397 = vmatmul.bf16.gmra.mxu0 %v727
      %v1398 = vpop.f32.mrf.mxu0
      %v1399 = vadd.f32 %v885, %v1398
      %v1400 = vpop.f32.mrf.mxu0
      %v1401 = vadd.f32 %v885, %v1400
      %1402 = vmatmul.bf16.gmra.mxu0 %v730
      %v1403 = vpop.f32.mrf.mxu0
      %v1404 = vadd.f32 %v885, %v1403
      %v1405 = vpop.f32.mrf.mxu0
      %v1406 = vadd.f32 %v885, %v1405
      %1407 = vdwg.mxu0
      %1408 = vmatpush.bf16.msra.mxu0 %v1190
      %1409 = vmatpush.bf16.msra.mxu0 %v1189
      %1410 = vmatpush.bf16.msra.mxu0 %v1188
      %1411 = vmatpush.bf16.msra.mxu0 %v1187
      %1412 = vmatpush.bf16.msra.mxu0 %v1186
      %1413 = vmatpush.bf16.msra.mxu0 %v1185
      %1414 = vmatpush.bf16.msra.mxu0 %v1184
      %1415 = vmatpush.bf16.msra.mxu0 %v1183
      %1416 = vmatmul.bf16.gmra.mxu0 %v686
      %v1417 = vpop.f32.mrf.mxu0
      %v1418 = vadd.f32 %v1329, %v1417
      %v1419 = vpop.f32.mrf.mxu0
      %v1420 = vadd.f32 %v1331, %v1419
      %1421 = vmatmul.bf16.gmra.mxu0 %v689
      %v1422 = vpop.f32.mrf.mxu0
      %v1423 = vadd.f32 %v1334, %v1422
      %v1424 = vpop.f32.mrf.mxu0
      %v1425 = vadd.f32 %v1336, %v1424
      %1426 = vmatmul.bf16.gmra.mxu0 %v692
      %v1427 = vpop.f32.mrf.mxu0
      %v1428 = vadd.f32 %v1339, %v1427
      %v1429 = vpop.f32.mrf.mxu0
      %v1430 = vadd.f32 %v1341, %v1429
      %1431 = vmatmul.bf16.gmra.mxu0 %v695
      %v1432 = vpop.f32.mrf.mxu0
      %v1433 = vadd.f32 %v1344, %v1432
      %v1434 = vpop.f32.mrf.mxu0
      %v1435 = vadd.f32 %v1346, %v1434
      %1436 = vmatmul.bf16.gmra.mxu0 %v698
      %v1437 = vpop.f32.mrf.mxu0
      %v1438 = vadd.f32 %v1349, %v1437
      %v1439 = vpop.f32.mrf.mxu0
      %v1440 = vadd.f32 %v1351, %v1439
      %1441 = vmatmul.bf16.gmra.mxu0 %v701
      %v1442 = vpop.f32.mrf.mxu0
      %v1443 = vadd.f32 %v1354, %v1442
      %v1444 = vpop.f32.mrf.mxu0
      %v1445 = vadd.f32 %v1356, %v1444
      %1446 = vmatmul.bf16.gmra.mxu0 %v704
      %v1447 = vpop.f32.mrf.mxu0
      %v1448 = vadd.f32 %v1359, %v1447
      %v1449 = vpop.f32.mrf.mxu0
      %v1450 = vadd.f32 %v1361, %v1449
      %1451 = vmatmul.bf16.gmra.mxu0 %v707
      %v1452 = vpop.f32.mrf.mxu0
      %v1453 = vadd.f32 %v1364, %v1452
      %v1454 = vpop.f32.mrf.mxu0
      %v1455 = vadd.f32 %v1366, %v1454
      %1456 = vmatmul.bf16.gmra.mxu0 %v710
      %v1457 = vpop.f32.mrf.mxu0
      %v1458 = vadd.f32 %v1369, %v1457
      %v1459 = vpop.f32.mrf.mxu0
      %v1460 = vadd.f32 %v1371, %v1459
      %1461 = vmatmul.bf16.gmra.mxu0 %v713
      %v1462 = vpop.f32.mrf.mxu0
      %v1463 = vadd.f32 %v1374, %v1462
      %v1464 = vpop.f32.mrf.mxu0
      %v1465 = vadd.f32 %v1376, %v1464
      %1466 = vmatmul.bf16.gmra.mxu0 %v716
      %v1467 = vpop.f32.mrf.mxu0
      %v1468 = vadd.f32 %v1379, %v1467
      %v1469 = vpop.f32.mrf.mxu0
      %v1470 = vadd.f32 %v1381, %v1469
      %1471 = vmatmul.bf16.gmra.mxu0 %v719
      %v1472 = vpop.f32.mrf.mxu0
      %v1473 = vadd.f32 %v1384, %v1472
      %v1474 = vpop.f32.mrf.mxu0
      %v1475 = vadd.f32 %v1386, %v1474
      %1476 = vmatmul.bf16.gmra.mxu0 %v722
      %v1477 = vpop.f32.mrf.mxu0
      %v1478 = vadd.f32 %v1389, %v1477
      %v1479 = vpop.f32.mrf.mxu0
      %v1480 = vadd.f32 %v1391, %v1479
      %1481 = vmatmul.bf16.gmra.mxu0 %v725
      %v1482 = vpop.f32.mrf.mxu0
      %v1483 = vadd.f32 %v1394, %v1482
      %v1484 = vpop.f32.mrf.mxu0
      %v1485 = vadd.f32 %v1396, %v1484
      %1486 = vmatmul.bf16.gmra.mxu0 %v728
      %v1487 = vpop.f32.mrf.mxu0
      %v1488 = vadd.f32 %v1399, %v1487
      %v1489 = vpop.f32.mrf.mxu0
      %v1490 = vadd.f32 %v1401, %v1489
      %1491 = vmatmul.bf16.gmra.mxu0 %v731
      %v1492 = vpop.f32.mrf.mxu0
      %v1493 = vadd.f32 %v1404, %v1492
      %v1494 = vpop.f32.mrf.mxu0
      %v1495 = vadd.f32 %v1406, %v1494
      %1496 = vdwg.mxu0
      %1497 = vmatpush.bf16.msra.mxu0 %v1198
      %1498 = vmatpush.bf16.msra.mxu0 %v1197
      %1499 = vmatpush.bf16.msra.mxu0 %v1196
      %1500 = vmatpush.bf16.msra.mxu0 %v1195
      %1501 = vmatpush.bf16.msra.mxu0 %v1194
      %1502 = vmatpush.bf16.msra.mxu0 %v1193
      %1503 = vmatpush.bf16.msra.mxu0 %v1192
      %1504 = vmatpush.bf16.msra.mxu0 %v1191
      %1505 = vmatmul.bf16.gmra.mxu0 %v687
      %v1506 = vpop.f32.mrf.mxu0
      %v1507 = vadd.f32 %v1418, %v1506
      %v1508 = vpop.f32.mrf.mxu0
      %v1509 = vadd.f32 %v1420, %v1508
      %1510 = vmatmul.bf16.gmra.mxu0 %v690
      %v1511 = vpop.f32.mrf.mxu0
      %v1512 = vadd.f32 %v1423, %v1511
      %v1513 = vpop.f32.mrf.mxu0
      %v1514 = vadd.f32 %v1425, %v1513
      %1515 = vmatmul.bf16.gmra.mxu0 %v693
      %v1516 = vpop.f32.mrf.mxu0
      %v1517 = vadd.f32 %v1428, %v1516
      %v1518 = vpop.f32.mrf.mxu0
      %v1519 = vadd.f32 %v1430, %v1518
      %1520 = vmatmul.bf16.gmra.mxu0 %v696
      %v1521 = vpop.f32.mrf.mxu0
      %v1522 = vadd.f32 %v1433, %v1521
      %v1523 = vpop.f32.mrf.mxu0
      %v1524 = vadd.f32 %v1435, %v1523
      %1525 = vmatmul.bf16.gmra.mxu0 %v699
      %v1526 = vpop.f32.mrf.mxu0
      %v1527 = vadd.f32 %v1438, %v1526
      %v1528 = vpop.f32.mrf.mxu0
      %v1529 = vadd.f32 %v1440, %v1528
      %1530 = vmatmul.bf16.gmra.mxu0 %v702
      %v1531 = vpop.f32.mrf.mxu0
      %v1532 = vadd.f32 %v1443, %v1531
      %v1533 = vpop.f32.mrf.mxu0
      %v1534 = vadd.f32 %v1445, %v1533
      %1535 = vmatmul.bf16.gmra.mxu0 %v705
      %v1536 = vpop.f32.mrf.mxu0
      %v1537 = vadd.f32 %v1448, %v1536
      %v1538 = vpop.f32.mrf.mxu0
      %v1539 = vadd.f32 %v1450, %v1538
      %1540 = vmatmul.bf16.gmra.mxu0 %v708
      %v1541 = vpop.f32.mrf.mxu0
      %v1542 = vadd.f32 %v1453, %v1541
      %v1543 = vpop.f32.mrf.mxu0
      %v1544 = vadd.f32 %v1455, %v1543
      %1545 = vmatmul.bf16.gmra.mxu0 %v711
      %v1546 = vpop.f32.mrf.mxu0
      %v1547 = vadd.f32 %v1458, %v1546
      %v1548 = vpop.f32.mrf.mxu0
      %v1549 = vadd.f32 %v1460, %v1548
      %1550 = vmatmul.bf16.gmra.mxu0 %v714
      %v1551 = vpop.f32.mrf.mxu0
      %v1552 = vadd.f32 %v1463, %v1551
      %v1553 = vpop.f32.mrf.mxu0
      %v1554 = vadd.f32 %v1465, %v1553
      %1555 = vmatmul.bf16.gmra.mxu0 %v717
      %v1556 = vpop.f32.mrf.mxu0
      %v1557 = vadd.f32 %v1468, %v1556
      %v1558 = vpop.f32.mrf.mxu0
      %v1559 = vadd.f32 %v1470, %v1558
      %1560 = vmatmul.bf16.gmra.mxu0 %v720
      %v1561 = vpop.f32.mrf.mxu0
      %v1562 = vadd.f32 %v1473, %v1561
      %v1563 = vpop.f32.mrf.mxu0
      %v1564 = vadd.f32 %v1475, %v1563
      %1565 = vmatmul.bf16.gmra.mxu0 %v723
      %v1566 = vpop.f32.mrf.mxu0
      %v1567 = vadd.f32 %v1478, %v1566
      %v1568 = vpop.f32.mrf.mxu0
      %v1569 = vadd.f32 %v1480, %v1568
      %1570 = vmatmul.bf16.gmra.mxu0 %v726
      %v1571 = vpop.f32.mrf.mxu0
      %v1572 = vadd.f32 %v1483, %v1571
      %v1573 = vpop.f32.mrf.mxu0
      %v1574 = vadd.f32 %v1485, %v1573
      %1575 = vmatmul.bf16.gmra.mxu0 %v729
      %v1576 = vpop.f32.mrf.mxu0
      %v1577 = vadd.f32 %v1488, %v1576
      %v1578 = vpop.f32.mrf.mxu0
      %v1579 = vadd.f32 %v1490, %v1578
      %1580 = vmatmul.bf16.gmra.mxu0 %v732
      %v1581 = vpop.f32.mrf.mxu0
      %v1582 = vadd.f32 %v1493, %v1581
      %v1583 = vpop.f32.mrf.mxu0
      %v1584 = vadd.f32 %v1495, %v1583
      %1585 = vdwg.mxu0
      %1586 = vmatpush.bf16.msra.mxu0 %v1206
      %1587 = vmatpush.bf16.msra.mxu0 %v1205
      %1588 = vmatpush.bf16.msra.mxu0 %v1204
      %1589 = vmatpush.bf16.msra.mxu0 %v1203
      %1590 = vmatpush.bf16.msra.mxu0 %v1202
      %1591 = vmatpush.bf16.msra.mxu0 %v1201
      %1592 = vmatpush.bf16.msra.mxu0 %v1200
      %1593 = vmatpush.bf16.msra.mxu0 %v1199
      %1594 = vmatmul.bf16.gmra.mxu0 %v688
      %v1595 = vpop.f32.mrf.mxu0
      %v1596 = vadd.f32 %v1507, %v1595
      %v1597 = vpop.f32.mrf.mxu0
      %v1598 = vadd.f32 %v1509, %v1597
      %1599 = vmatmul.bf16.gmra.mxu0 %v691
      %v1600 = vpop.f32.mrf.mxu0
      %v1601 = vadd.f32 %v1512, %v1600
      %v1602 = vpop.f32.mrf.mxu0
      %v1603 = vadd.f32 %v1514, %v1602
      %1604 = vmatmul.bf16.gmra.mxu0 %v694
      %v1605 = vpop.f32.mrf.mxu0
      %v1606 = vadd.f32 %v1517, %v1605
      %v1607 = vpop.f32.mrf.mxu0
      %v1608 = vadd.f32 %v1519, %v1607
      %1609 = vmatmul.bf16.gmra.mxu0 %v697
      %v1610 = vpop.f32.mrf.mxu0
      %v1611 = vadd.f32 %v1522, %v1610
      %v1612 = vpop.f32.mrf.mxu0
      %v1613 = vadd.f32 %v1524, %v1612
      %1614 = vmatmul.bf16.gmra.mxu0 %v700
      %v1615 = vpop.f32.mrf.mxu0
      %v1616 = vadd.f32 %v1527, %v1615
      %v1617 = vpop.f32.mrf.mxu0
      %v1618 = vadd.f32 %v1529, %v1617
      %1619 = vmatmul.bf16.gmra.mxu0 %v703
      %v1620 = vpop.f32.mrf.mxu0
      %v1621 = vadd.f32 %v1532, %v1620
      %v1622 = vpop.f32.mrf.mxu0
      %v1623 = vadd.f32 %v1534, %v1622
      %1624 = vmatmul.bf16.gmra.mxu0 %v706
      %v1625 = vpop.f32.mrf.mxu0
      %v1626 = vadd.f32 %v1537, %v1625
      %v1627 = vpop.f32.mrf.mxu0
      %v1628 = vadd.f32 %v1539, %v1627
      %1629 = vmatmul.bf16.gmra.mxu0 %v709
      %v1630 = vpop.f32.mrf.mxu0
      %v1631 = vadd.f32 %v1542, %v1630
      %v1632 = vpop.f32.mrf.mxu0
      %v1633 = vadd.f32 %v1544, %v1632
      %1634 = vmatmul.bf16.gmra.mxu0 %v712
      %v1635 = vpop.f32.mrf.mxu0
      %v1636 = vadd.f32 %v1547, %v1635
      %v1637 = vpop.f32.mrf.mxu0
      %v1638 = vadd.f32 %v1549, %v1637
      %1639 = vmatmul.bf16.gmra.mxu0 %v715
      %v1640 = vpop.f32.mrf.mxu0
      %v1641 = vadd.f32 %v1552, %v1640
      %v1642 = vpop.f32.mrf.mxu0
      %v1643 = vadd.f32 %v1554, %v1642
      %1644 = vmatmul.bf16.gmra.mxu0 %v718
      %v1645 = vpop.f32.mrf.mxu0
      %v1646 = vadd.f32 %v1557, %v1645
      %v1647 = vpop.f32.mrf.mxu0
      %v1648 = vadd.f32 %v1559, %v1647
      %1649 = vmatmul.bf16.gmra.mxu0 %v721
      %v1650 = vpop.f32.mrf.mxu0
      %v1651 = vadd.f32 %v1562, %v1650
      %v1652 = vpop.f32.mrf.mxu0
      %v1653 = vadd.f32 %v1564, %v1652
      %1654 = vmatmul.bf16.gmra.mxu0 %v724
      %v1655 = vpop.f32.mrf.mxu0
      %v1656 = vadd.f32 %v1567, %v1655
      %v1657 = vpop.f32.mrf.mxu0
      %v1658 = vadd.f32 %v1569, %v1657
      %1659 = vmatmul.bf16.gmra.mxu0 %v727
      %v1660 = vpop.f32.mrf.mxu0
      %v1661 = vadd.f32 %v1572, %v1660
      %v1662 = vpop.f32.mrf.mxu0
      %v1663 = vadd.f32 %v1574, %v1662
      %1664 = vmatmul.bf16.gmra.mxu0 %v730
      %v1665 = vpop.f32.mrf.mxu0
      %v1666 = vadd.f32 %v1577, %v1665
      %v1667 = vpop.f32.mrf.mxu0
      %v1668 = vadd.f32 %v1579, %v1667
      %1669 = vmatmul.bf16.gmra.mxu0 %v733
      %v1670 = vpop.f32.mrf.mxu0
      %v1671 = vadd.f32 %v1582, %v1670
      %v1672 = vpop.f32.mrf.mxu0
      %v1673 = vadd.f32 %v1584, %v1672
      %1674 = vdwg.mxu0
      %1675 = vmatpush.bf16.msra.mxu0 %v1214
      %1676 = vmatpush.bf16.msra.mxu0 %v1213
      %1677 = vmatpush.bf16.msra.mxu0 %v1212
      %1678 = vmatpush.bf16.msra.mxu0 %v1211
      %1679 = vmatpush.bf16.msra.mxu0 %v1210
      %1680 = vmatpush.bf16.msra.mxu0 %v1209
      %1681 = vmatpush.bf16.msra.mxu0 %v1208
      %1682 = vmatpush.bf16.msra.mxu0 %v1207
      %1683 = vmatmul.bf16.gmra.mxu0 %v689
      %v1684 = vpop.f32.mrf.mxu0
      %v1685 = vadd.f32 %v1596, %v1684
      %v1686 = vpop.f32.mrf.mxu0
      %v1687 = vadd.f32 %v1598, %v1686
      %1688 = vmatmul.bf16.gmra.mxu0 %v692
      %v1689 = vpop.f32.mrf.mxu0
      %v1690 = vadd.f32 %v1601, %v1689
      %v1691 = vpop.f32.mrf.mxu0
      %v1692 = vadd.f32 %v1603, %v1691
      %1693 = vmatmul.bf16.gmra.mxu0 %v695
      %v1694 = vpop.f32.mrf.mxu0
      %v1695 = vadd.f32 %v1606, %v1694
      %v1696 = vpop.f32.mrf.mxu0
      %v1697 = vadd.f32 %v1608, %v1696
      %1698 = vmatmul.bf16.gmra.mxu0 %v698
      %v1699 = vpop.f32.mrf.mxu0
      %v1700 = vadd.f32 %v1611, %v1699
      %v1701 = vpop.f32.mrf.mxu0
      %v1702 = vadd.f32 %v1613, %v1701
      %1703 = vmatmul.bf16.gmra.mxu0 %v701
      %v1704 = vpop.f32.mrf.mxu0
      %v1705 = vadd.f32 %v1616, %v1704
      %v1706 = vpop.f32.mrf.mxu0
      %v1707 = vadd.f32 %v1618, %v1706
      %1708 = vmatmul.bf16.gmra.mxu0 %v704
      %v1709 = vpop.f32.mrf.mxu0
      %v1710 = vadd.f32 %v1621, %v1709
      %v1711 = vpop.f32.mrf.mxu0
      %v1712 = vadd.f32 %v1623, %v1711
      %1713 = vmatmul.bf16.gmra.mxu0 %v707
      %v1714 = vpop.f32.mrf.mxu0
      %v1715 = vadd.f32 %v1626, %v1714
      %v1716 = vpop.f32.mrf.mxu0
      %v1717 = vadd.f32 %v1628, %v1716
      %1718 = vmatmul.bf16.gmra.mxu0 %v710
      %v1719 = vpop.f32.mrf.mxu0
      %v1720 = vadd.f32 %v1631, %v1719
      %v1721 = vpop.f32.mrf.mxu0
      %v1722 = vadd.f32 %v1633, %v1721
      %1723 = vmatmul.bf16.gmra.mxu0 %v713
      %v1724 = vpop.f32.mrf.mxu0
      %v1725 = vadd.f32 %v1636, %v1724
      %v1726 = vpop.f32.mrf.mxu0
      %v1727 = vadd.f32 %v1638, %v1726
      %1728 = vmatmul.bf16.gmra.mxu0 %v716
      %v1729 = vpop.f32.mrf.mxu0
      %v1730 = vadd.f32 %v1641, %v1729
      %v1731 = vpop.f32.mrf.mxu0
      %v1732 = vadd.f32 %v1643, %v1731
      %1733 = vmatmul.bf16.gmra.mxu0 %v719
      %v1734 = vpop.f32.mrf.mxu0
      %v1735 = vadd.f32 %v1646, %v1734
      %v1736 = vpop.f32.mrf.mxu0
      %v1737 = vadd.f32 %v1648, %v1736
      %1738 = vmatmul.bf16.gmra.mxu0 %v722
      %v1739 = vpop.f32.mrf.mxu0
      %v1740 = vadd.f32 %v1651, %v1739
      %v1741 = vpop.f32.mrf.mxu0
      %v1742 = vadd.f32 %v1653, %v1741
      %1743 = vmatmul.bf16.gmra.mxu0 %v725
      %v1744 = vpop.f32.mrf.mxu0
      %v1745 = vadd.f32 %v1656, %v1744
      %v1746 = vpop.f32.mrf.mxu0
      %v1747 = vadd.f32 %v1658, %v1746
      %1748 = vmatmul.bf16.gmra.mxu0 %v728
      %v1749 = vpop.f32.mrf.mxu0
      %v1750 = vadd.f32 %v1661, %v1749
      %v1751 = vpop.f32.mrf.mxu0
      %v1752 = vadd.f32 %v1663, %v1751
      %1753 = vmatmul.bf16.gmra.mxu0 %v731
      %v1754 = vpop.f32.mrf.mxu0
      %v1755 = vadd.f32 %v1666, %v1754
      %v1756 = vpop.f32.mrf.mxu0
      %v1757 = vadd.f32 %v1668, %v1756
      %1758 = vmatmul.bf16.gmra.mxu0 %v734
      %v1759 = vpop.f32.mrf.mxu0
      %v1760 = vadd.f32 %v1671, %v1759
      %v1761 = vpop.f32.mrf.mxu0
      %v1762 = vadd.f32 %v1673, %v1761
      %1763 = vdwg.mxu0
      %1764 = vmatpush.bf16.msra.mxu0 %v1222
      %1765 = vmatpush.bf16.msra.mxu0 %v1221
      %1766 = vmatpush.bf16.msra.mxu0 %v1220
      %1767 = vmatpush.bf16.msra.mxu0 %v1219
      %1768 = vmatpush.bf16.msra.mxu0 %v1218
      %1769 = vmatpush.bf16.msra.mxu0 %v1217
      %1770 = vmatpush.bf16.msra.mxu0 %v1216
      %1771 = vmatpush.bf16.msra.mxu0 %v1215
      %1772 = vmatmul.bf16.gmra.mxu0 %v690
      %v1773 = vpop.f32.mrf.mxu0
      %v1774 = vadd.f32 %v1685, %v1773
      %v1775 = vpop.f32.mrf.mxu0
      %v1776 = vadd.f32 %v1687, %v1775
      %1777 = vmatmul.bf16.gmra.mxu0 %v693
      %v1778 = vpop.f32.mrf.mxu0
      %v1779 = vadd.f32 %v1690, %v1778
      %v1780 = vpop.f32.mrf.mxu0
      %v1781 = vadd.f32 %v1692, %v1780
      %1782 = vmatmul.bf16.gmra.mxu0 %v696
      %v1783 = vpop.f32.mrf.mxu0
      %v1784 = vadd.f32 %v1695, %v1783
      %v1785 = vpop.f32.mrf.mxu0
      %v1786 = vadd.f32 %v1697, %v1785
      %1787 = vmatmul.bf16.gmra.mxu0 %v699
      %v1788 = vpop.f32.mrf.mxu0
      %v1789 = vadd.f32 %v1700, %v1788
      %v1790 = vpop.f32.mrf.mxu0
      %v1791 = vadd.f32 %v1702, %v1790
      %1792 = vmatmul.bf16.gmra.mxu0 %v702
      %v1793 = vpop.f32.mrf.mxu0
      %v1794 = vadd.f32 %v1705, %v1793
      %v1795 = vpop.f32.mrf.mxu0
      %v1796 = vadd.f32 %v1707, %v1795
      %1797 = vmatmul.bf16.gmra.mxu0 %v705
      %v1798 = vpop.f32.mrf.mxu0
      %v1799 = vadd.f32 %v1710, %v1798
      %v1800 = vpop.f32.mrf.mxu0
      %v1801 = vadd.f32 %v1712, %v1800
      %1802 = vmatmul.bf16.gmra.mxu0 %v708
      %v1803 = vpop.f32.mrf.mxu0
      %v1804 = vadd.f32 %v1715, %v1803
      %v1805 = vpop.f32.mrf.mxu0
      %v1806 = vadd.f32 %v1717, %v1805
      %1807 = vmatmul.bf16.gmra.mxu0 %v711
      %v1808 = vpop.f32.mrf.mxu0
      %v1809 = vadd.f32 %v1720, %v1808
      %v1810 = vpop.f32.mrf.mxu0
      %v1811 = vadd.f32 %v1722, %v1810
      %1812 = vmatmul.bf16.gmra.mxu0 %v714
      %v1813 = vpop.f32.mrf.mxu0
      %v1814 = vadd.f32 %v1725, %v1813
      %v1815 = vpop.f32.mrf.mxu0
      %v1816 = vadd.f32 %v1727, %v1815
      %1817 = vmatmul.bf16.gmra.mxu0 %v717
      %v1818 = vpop.f32.mrf.mxu0
      %v1819 = vadd.f32 %v1730, %v1818
      %v1820 = vpop.f32.mrf.mxu0
      %v1821 = vadd.f32 %v1732, %v1820
      %1822 = vmatmul.bf16.gmra.mxu0 %v720
      %v1823 = vpop.f32.mrf.mxu0
      %v1824 = vadd.f32 %v1735, %v1823
      %v1825 = vpop.f32.mrf.mxu0
      %v1826 = vadd.f32 %v1737, %v1825
      %1827 = vmatmul.bf16.gmra.mxu0 %v723
      %v1828 = vpop.f32.mrf.mxu0
      %v1829 = vadd.f32 %v1740, %v1828
      %v1830 = vpop.f32.mrf.mxu0
      %v1831 = vadd.f32 %v1742, %v1830
      %1832 = vmatmul.bf16.gmra.mxu0 %v726
      %v1833 = vpop.f32.mrf.mxu0
      %v1834 = vadd.f32 %v1745, %v1833
      %v1835 = vpop.f32.mrf.mxu0
      %v1836 = vadd.f32 %v1747, %v1835
      %1837 = vmatmul.bf16.gmra.mxu0 %v729
      %v1838 = vpop.f32.mrf.mxu0
      %v1839 = vadd.f32 %v1750, %v1838
      %v1840 = vpop.f32.mrf.mxu0
      %v1841 = vadd.f32 %v1752, %v1840
      %1842 = vmatmul.bf16.gmra.mxu0 %v732
      %v1843 = vpop.f32.mrf.mxu0
      %v1844 = vadd.f32 %v1755, %v1843
      %v1845 = vpop.f32.mrf.mxu0
      %v1846 = vadd.f32 %v1757, %v1845
      %1847 = vmatmul.bf16.gmra.mxu0 %v735
      %v1848 = vpop.f32.mrf.mxu0
      %v1849 = vadd.f32 %v1760, %v1848
      %v1850 = vpop.f32.mrf.mxu0
      %v1851 = vadd.f32 %v1762, %v1850
      %1852 = vdwg.mxu0
      %1853 = vmatpush.bf16.msra.mxu0 %v1230
      %1854 = vmatpush.bf16.msra.mxu0 %v1229
      %1855 = vmatpush.bf16.msra.mxu0 %v1228
      %1856 = vmatpush.bf16.msra.mxu0 %v1227
      %1857 = vmatpush.bf16.msra.mxu0 %v1226
      %1858 = vmatpush.bf16.msra.mxu0 %v1225
      %1859 = vmatpush.bf16.msra.mxu0 %v1224
      %1860 = vmatpush.bf16.msra.mxu0 %v1223
      %1861 = vmatmul.bf16.gmra.mxu0 %v691
      %v1862 = vpop.f32.mrf.mxu0
      %v1863 = vadd.f32 %v1774, %v1862
      %v1864 = vpop.f32.mrf.mxu0
      %v1865 = vadd.f32 %v1776, %v1864
      %1866 = vmatmul.bf16.gmra.mxu0 %v694
      %v1867 = vpop.f32.mrf.mxu0
      %v1868 = vadd.f32 %v1779, %v1867
      %v1869 = vpop.f32.mrf.mxu0
      %v1870 = vadd.f32 %v1781, %v1869
      %1871 = vmatmul.bf16.gmra.mxu0 %v697
      %v1872 = vpop.f32.mrf.mxu0
      %v1873 = vadd.f32 %v1784, %v1872
      %v1874 = vpop.f32.mrf.mxu0
      %v1875 = vadd.f32 %v1786, %v1874
      %1876 = vmatmul.bf16.gmra.mxu0 %v700
      %v1877 = vpop.f32.mrf.mxu0
      %v1878 = vadd.f32 %v1789, %v1877
      %v1879 = vpop.f32.mrf.mxu0
      %v1880 = vadd.f32 %v1791, %v1879
      %1881 = vmatmul.bf16.gmra.mxu0 %v703
      %v1882 = vpop.f32.mrf.mxu0
      %v1883 = vadd.f32 %v1794, %v1882
      %v1884 = vpop.f32.mrf.mxu0
      %v1885 = vadd.f32 %v1796, %v1884
      %1886 = vmatmul.bf16.gmra.mxu0 %v706
      %v1887 = vpop.f32.mrf.mxu0
      %v1888 = vadd.f32 %v1799, %v1887
      %v1889 = vpop.f32.mrf.mxu0
      %v1890 = vadd.f32 %v1801, %v1889
      %1891 = vmatmul.bf16.gmra.mxu0 %v709
      %v1892 = vpop.f32.mrf.mxu0
      %v1893 = vadd.f32 %v1804, %v1892
      %v1894 = vpop.f32.mrf.mxu0
      %v1895 = vadd.f32 %v1806, %v1894
      %1896 = vmatmul.bf16.gmra.mxu0 %v712
      %v1897 = vpop.f32.mrf.mxu0
      %v1898 = vadd.f32 %v1809, %v1897
      %v1899 = vpop.f32.mrf.mxu0
      %v1900 = vadd.f32 %v1811, %v1899
      %1901 = vmatmul.bf16.gmra.mxu0 %v715
      %v1902 = vpop.f32.mrf.mxu0
      %v1903 = vadd.f32 %v1814, %v1902
      %v1904 = vpop.f32.mrf.mxu0
      %v1905 = vadd.f32 %v1816, %v1904
      %1906 = vmatmul.bf16.gmra.mxu0 %v718
      %v1907 = vpop.f32.mrf.mxu0
      %v1908 = vadd.f32 %v1819, %v1907
      %v1909 = vpop.f32.mrf.mxu0
      %v1910 = vadd.f32 %v1821, %v1909
      %1911 = vmatmul.bf16.gmra.mxu0 %v721
      %v1912 = vpop.f32.mrf.mxu0
      %v1913 = vadd.f32 %v1824, %v1912
      %v1914 = vpop.f32.mrf.mxu0
      %v1915 = vadd.f32 %v1826, %v1914
      %1916 = vmatmul.bf16.gmra.mxu0 %v724
      %v1917 = vpop.f32.mrf.mxu0
      %v1918 = vadd.f32 %v1829, %v1917
      %v1919 = vpop.f32.mrf.mxu0
      %v1920 = vadd.f32 %v1831, %v1919
      %1921 = vmatmul.bf16.gmra.mxu0 %v727
      %v1922 = vpop.f32.mrf.mxu0
      %v1923 = vadd.f32 %v1834, %v1922
      %v1924 = vpop.f32.mrf.mxu0
      %v1925 = vadd.f32 %v1836, %v1924
      %1926 = vmatmul.bf16.gmra.mxu0 %v730
      %v1927 = vpop.f32.mrf.mxu0
      %v1928 = vadd.f32 %v1839, %v1927
      %v1929 = vpop.f32.mrf.mxu0
      %v1930 = vadd.f32 %v1841, %v1929
      %1931 = vmatmul.bf16.gmra.mxu0 %v733
      %v1932 = vpop.f32.mrf.mxu0
      %v1933 = vadd.f32 %v1844, %v1932
      %v1934 = vpop.f32.mrf.mxu0
      %v1935 = vadd.f32 %v1846, %v1934
      %1936 = vmatmul.bf16.gmra.mxu0 %v736
      %v1937 = vpop.f32.mrf.mxu0
      %v1938 = vadd.f32 %v1849, %v1937
      %v1939 = vpop.f32.mrf.mxu0
      %v1940 = vadd.f32 %v1851, %v1939
      %1941 = vdwg.mxu0
      %1942 = vmatpush.bf16.msra.mxu0 %v1238
      %1943 = vmatpush.bf16.msra.mxu0 %v1237
      %1944 = vmatpush.bf16.msra.mxu0 %v1236
      %1945 = vmatpush.bf16.msra.mxu0 %v1235
      %1946 = vmatpush.bf16.msra.mxu0 %v1234
      %1947 = vmatpush.bf16.msra.mxu0 %v1233
      %1948 = vmatpush.bf16.msra.mxu0 %v1232
      %1949 = vmatpush.bf16.msra.mxu0 %v1231
      %1950 = vmatmul.bf16.gmra.mxu0 %v692
      %v1951 = vpop.f32.mrf.mxu0
      %v1952 = vadd.f32 %v1863, %v1951
      %v1953 = vpop.f32.mrf.mxu0
      %v1954 = vadd.f32 %v1865, %v1953
      %1955 = vmatmul.bf16.gmra.mxu0 %v695
      %v1956 = vpop.f32.mrf.mxu0
      %v1957 = vadd.f32 %v1868, %v1956
      %v1958 = vpop.f32.mrf.mxu0
      %v1959 = vadd.f32 %v1870, %v1958
      %1960 = vmatmul.bf16.gmra.mxu0 %v698
      %v1961 = vpop.f32.mrf.mxu0
      %v1962 = vadd.f32 %v1873, %v1961
      %v1963 = vpop.f32.mrf.mxu0
      %v1964 = vadd.f32 %v1875, %v1963
      %1965 = vmatmul.bf16.gmra.mxu0 %v701
      %v1966 = vpop.f32.mrf.mxu0
      %v1967 = vadd.f32 %v1878, %v1966
      %v1968 = vpop.f32.mrf.mxu0
      %v1969 = vadd.f32 %v1880, %v1968
      %1970 = vmatmul.bf16.gmra.mxu0 %v704
      %v1971 = vpop.f32.mrf.mxu0
      %v1972 = vadd.f32 %v1883, %v1971
      %v1973 = vpop.f32.mrf.mxu0
      %v1974 = vadd.f32 %v1885, %v1973
      %1975 = vmatmul.bf16.gmra.mxu0 %v707
      %v1976 = vpop.f32.mrf.mxu0
      %v1977 = vadd.f32 %v1888, %v1976
      %v1978 = vpop.f32.mrf.mxu0
      %v1979 = vadd.f32 %v1890, %v1978
      %1980 = vmatmul.bf16.gmra.mxu0 %v710
      %v1981 = vpop.f32.mrf.mxu0
      %v1982 = vadd.f32 %v1893, %v1981
      %v1983 = vpop.f32.mrf.mxu0
      %v1984 = vadd.f32 %v1895, %v1983
      %1985 = vmatmul.bf16.gmra.mxu0 %v713
      %v1986 = vpop.f32.mrf.mxu0
      %v1987 = vadd.f32 %v1898, %v1986
      %v1988 = vpop.f32.mrf.mxu0
      %v1989 = vadd.f32 %v1900, %v1988
      %1990 = vmatmul.bf16.gmra.mxu0 %v716
      %v1991 = vpop.f32.mrf.mxu0
      %v1992 = vadd.f32 %v1903, %v1991
      %v1993 = vpop.f32.mrf.mxu0
      %v1994 = vadd.f32 %v1905, %v1993
      %1995 = vmatmul.bf16.gmra.mxu0 %v719
      %v1996 = vpop.f32.mrf.mxu0
      %v1997 = vadd.f32 %v1908, %v1996
      %v1998 = vpop.f32.mrf.mxu0
      %v1999 = vadd.f32 %v1910, %v1998
      %2000 = vmatmul.bf16.gmra.mxu0 %v722
      %v2001 = vpop.f32.mrf.mxu0
      %v2002 = vadd.f32 %v1913, %v2001
      %v2003 = vpop.f32.mrf.mxu0
      %v2004 = vadd.f32 %v1915, %v2003
      %2005 = vmatmul.bf16.gmra.mxu0 %v725
      %v2006 = vpop.f32.mrf.mxu0
      %v2007 = vadd.f32 %v1918, %v2006
      %v2008 = vpop.f32.mrf.mxu0
      %v2009 = vadd.f32 %v1920, %v2008
      %2010 = vmatmul.bf16.gmra.mxu0 %v728
      %v2011 = vpop.f32.mrf.mxu0
      %v2012 = vadd.f32 %v1923, %v2011
      %v2013 = vpop.f32.mrf.mxu0
      %v2014 = vadd.f32 %v1925, %v2013
      %2015 = vmatmul.bf16.gmra.mxu0 %v731
      %v2016 = vpop.f32.mrf.mxu0
      %v2017 = vadd.f32 %v1928, %v2016
      %v2018 = vpop.f32.mrf.mxu0
      %v2019 = vadd.f32 %v1930, %v2018
      %2020 = vmatmul.bf16.gmra.mxu0 %v734
      %v2021 = vpop.f32.mrf.mxu0
      %v2022 = vadd.f32 %v1933, %v2021
      %v2023 = vpop.f32.mrf.mxu0
      %v2024 = vadd.f32 %v1935, %v2023
      %2025 = vmatmul.bf16.gmra.mxu0 %v737
      %v2026 = vpop.f32.mrf.mxu0
      %v2027 = vadd.f32 %v1938, %v2026
      %v2028 = vpop.f32.mrf.mxu0
      %v2029 = vadd.f32 %v1940, %v2028
      %2030 = vdwg.mxu0
      %2031 = vmatpush.bf16.msra.mxu0 %v1246
      %2032 = vmatpush.bf16.msra.mxu0 %v1245
      %2033 = vmatpush.bf16.msra.mxu0 %v1244
      %2034 = vmatpush.bf16.msra.mxu0 %v1243
      %2035 = vmatpush.bf16.msra.mxu0 %v1242
      %2036 = vmatpush.bf16.msra.mxu0 %v1241
      %2037 = vmatpush.bf16.msra.mxu0 %v1240
      %2038 = vmatpush.bf16.msra.mxu0 %v1239
      %2039 = vmatmul.bf16.gmra.mxu0 %v693
      %v2040 = vpop.f32.mrf.mxu0
      %v2041 = vadd.f32 %v1952, %v2040
      %v2042 = vpop.f32.mrf.mxu0
      %v2043 = vadd.f32 %v1954, %v2042
      %2044 = vmatmul.bf16.gmra.mxu0 %v696
      %v2045 = vpop.f32.mrf.mxu0
      %v2046 = vadd.f32 %v1957, %v2045
      %v2047 = vpop.f32.mrf.mxu0
      %v2048 = vadd.f32 %v1959, %v2047
      %2049 = vmatmul.bf16.gmra.mxu0 %v699
      %v2050 = vpop.f32.mrf.mxu0
      %v2051 = vadd.f32 %v1962, %v2050
      %v2052 = vpop.f32.mrf.mxu0
      %v2053 = vadd.f32 %v1964, %v2052
      %2054 = vmatmul.bf16.gmra.mxu0 %v702
      %v2055 = vpop.f32.mrf.mxu0
      %v2056 = vadd.f32 %v1967, %v2055
      %v2057 = vpop.f32.mrf.mxu0
      %v2058 = vadd.f32 %v1969, %v2057
      %2059 = vmatmul.bf16.gmra.mxu0 %v705
      %v2060 = vpop.f32.mrf.mxu0
      %v2061 = vadd.f32 %v1972, %v2060
      %v2062 = vpop.f32.mrf.mxu0
      %v2063 = vadd.f32 %v1974, %v2062
      %2064 = vmatmul.bf16.gmra.mxu0 %v708
      %v2065 = vpop.f32.mrf.mxu0
      %v2066 = vadd.f32 %v1977, %v2065
      %v2067 = vpop.f32.mrf.mxu0
      %v2068 = vadd.f32 %v1979, %v2067
      %2069 = vmatmul.bf16.gmra.mxu0 %v711
      %v2070 = vpop.f32.mrf.mxu0
      %v2071 = vadd.f32 %v1982, %v2070
      %v2072 = vpop.f32.mrf.mxu0
      %v2073 = vadd.f32 %v1984, %v2072
      %2074 = vmatmul.bf16.gmra.mxu0 %v714
      %v2075 = vpop.f32.mrf.mxu0
      %v2076 = vadd.f32 %v1987, %v2075
      %v2077 = vpop.f32.mrf.mxu0
      %v2078 = vadd.f32 %v1989, %v2077
      %2079 = vmatmul.bf16.gmra.mxu0 %v717
      %v2080 = vpop.f32.mrf.mxu0
      %v2081 = vadd.f32 %v1992, %v2080
      %v2082 = vpop.f32.mrf.mxu0
      %v2083 = vadd.f32 %v1994, %v2082
      %2084 = vmatmul.bf16.gmra.mxu0 %v720
      %v2085 = vpop.f32.mrf.mxu0
      %v2086 = vadd.f32 %v1997, %v2085
      %v2087 = vpop.f32.mrf.mxu0
      %v2088 = vadd.f32 %v1999, %v2087
      %2089 = vmatmul.bf16.gmra.mxu0 %v723
      %v2090 = vpop.f32.mrf.mxu0
      %v2091 = vadd.f32 %v2002, %v2090
      %v2092 = vpop.f32.mrf.mxu0
      %v2093 = vadd.f32 %v2004, %v2092
      %2094 = vmatmul.bf16.gmra.mxu0 %v726
      %v2095 = vpop.f32.mrf.mxu0
      %v2096 = vadd.f32 %v2007, %v2095
      %v2097 = vpop.f32.mrf.mxu0
      %v2098 = vadd.f32 %v2009, %v2097
      %2099 = vmatmul.bf16.gmra.mxu0 %v729
      %v2100 = vpop.f32.mrf.mxu0
      %v2101 = vadd.f32 %v2012, %v2100
      %v2102 = vpop.f32.mrf.mxu0
      %v2103 = vadd.f32 %v2014, %v2102
      %2104 = vmatmul.bf16.gmra.mxu0 %v732
      %v2105 = vpop.f32.mrf.mxu0
      %v2106 = vadd.f32 %v2017, %v2105
      %v2107 = vpop.f32.mrf.mxu0
      %v2108 = vadd.f32 %v2019, %v2107
      %2109 = vmatmul.bf16.gmra.mxu0 %v735
      %v2110 = vpop.f32.mrf.mxu0
      %v2111 = vadd.f32 %v2022, %v2110
      %v2112 = vpop.f32.mrf.mxu0
      %v2113 = vadd.f32 %v2024, %v2112
      %2114 = vmatmul.bf16.gmra.mxu0 %v738
      %v2115 = vpop.f32.mrf.mxu0
      %v2116 = vadd.f32 %v2027, %v2115
      %v2117 = vpop.f32.mrf.mxu0
      %v2118 = vadd.f32 %v2029, %v2117
      %2119 = vdwg.mxu0
      %2120 = vst.msk [vmem:[%s170] sm:$0xff] %vm290, %v2041
      %2121 = vst.msk [vmem:[%s170 + $0x8] sm:$0xff] %vm290, %v2043
      %2122 = vst.msk [vmem:[%s170 + $0x20] sm:$0xff] %vm290, %v2046
      %2123 = vst.msk [vmem:[%s170 + $0x28] sm:$0xff] %vm290, %v2048
      %2124 = vst.msk [vmem:[%s170 + $0x40] sm:$0xff] %vm290, %v2051
      %2125 = vst.msk [vmem:[%s170 + $0x48] sm:$0xff] %vm290, %v2053
      %2126 = vst.msk [vmem:[%s170 + $0x60] sm:$0xff] %vm290, %v2056
      %2127 = vst.msk [vmem:[%s170 + $0x68] sm:$0xff] %vm290, %v2058
      %2128 = vst.msk [vmem:[%s170 + $0x80] sm:$0xff] %vm290, %v2061
      %2129 = vst.msk [vmem:[%s170 + $0x88] sm:$0xff] %vm290, %v2063
      %2130 = vst.msk [vmem:[%s170 + $0xa0] sm:$0xff] %vm290, %v2066
      %2131 = vst.msk [vmem:[%s170 + $0xa8] sm:$0xff] %vm290, %v2068
      %2132 = vst.msk [vmem:[%s170 + $0xc0] sm:$0xff] %vm290, %v2071
      %2133 = vst.msk [vmem:[%s170 + $0xc8] sm:$0xff] %vm290, %v2073
      %2134 = vst.msk [vmem:[%s170 + $0xe0] sm:$0xff] %vm290, %v2076
      %2135 = vst.msk [vmem:[%s170 + $0xe8] sm:$0xff] %vm290, %v2078
      %2136 = vst.msk [vmem:[%s170 + $0x100] sm:$0xff] %vm290, %v2081
      %2137 = vst.msk [vmem:[%s170 + $0x108] sm:$0xff] %vm290, %v2083
      %2138 = vst.msk [vmem:[%s170 + $0x120] sm:$0xff] %vm290, %v2086
      %2139 = vst.msk [vmem:[%s170 + $0x128] sm:$0xff] %vm290, %v2088
      %2140 = vst.msk [vmem:[%s170 + $0x140] sm:$0xff] %vm290, %v2091
      %2141 = vst.msk [vmem:[%s170 + $0x148] sm:$0xff] %vm290, %v2093
      %2142 = vst.msk [vmem:[%s170 + $0x160] sm:$0xff] %vm290, %v2096
      %2143 = vst.msk [vmem:[%s170 + $0x168] sm:$0xff] %vm290, %v2098
      %2144 = vst.msk [vmem:[%s170 + $0x180] sm:$0xff] %vm290, %v2101
      %2145 = vst.msk [vmem:[%s170 + $0x188] sm:$0xff] %vm290, %v2103
      %2146 = vst.msk [vmem:[%s170 + $0x1a0] sm:$0xff] %vm290, %v2106
      %2147 = vst.msk [vmem:[%s170 + $0x1a8] sm:$0xff] %vm290, %v2108
      %2148 = vst.msk [vmem:[%s170 + $0x1c0] sm:$0xff] %vm290, %v2111
      %2149 = vst.msk [vmem:[%s170 + $0x1c8] sm:$0xff] %vm290, %v2113
      %2150 = vst.msk [vmem:[%s170 + $0x1e0] sm:$0xff] %vm290, %v2116
      %2151 = vst.msk [vmem:[%s170 + $0x1e8] sm:$0xff] %vm290, %v2118
      %2184 = vrot.lane.b32.xlu0 %v2041, 112
      %v2185 = vpop.permute.xlu0 %2184
      %2186 = vrot.lane.b32.xlu0 %v2043, 112
      %v2187 = vpop.permute.xlu0 %2186
      %2188 = vrot.lane.b32.xlu0 %v2046, 112
      %v2189 = vpop.permute.xlu0 %2188
      %2190 = vrot.lane.b32.xlu0 %v2048, 112
      %v2191 = vpop.permute.xlu0 %2190
      %2192 = vrot.lane.b32.xlu0 %v2051, 112
      %v2193 = vpop.permute.xlu0 %2192
      %2194 = vrot.lane.b32.xlu0 %v2053, 112
      %v2195 = vpop.permute.xlu0 %2194
      %2196 = vrot.lane.b32.xlu0 %v2056, 112
      %v2197 = vpop.permute.xlu0 %2196
      %2198 = vrot.lane.b32.xlu0 %v2058, 112
      %v2199 = vpop.permute.xlu0 %2198
      %2200 = vrot.lane.b32.xlu0 %v2061, 112
      %v2201 = vpop.permute.xlu0 %2200
      %2202 = vrot.lane.b32.xlu0 %v2063, 112
      %v2203 = vpop.permute.xlu0 %2202
      %2204 = vrot.lane.b32.xlu0 %v2066, 112
      %v2205 = vpop.permute.xlu0 %2204
      %2206 = vrot.lane.b32.xlu0 %v2068, 112
      %v2207 = vpop.permute.xlu0 %2206
      %2208 = vrot.lane.b32.xlu0 %v2071, 112
      %v2209 = vpop.permute.xlu0 %2208
      %2210 = vrot.lane.b32.xlu0 %v2073, 112
      %v2211 = vpop.permute.xlu0 %2210
      %2212 = vrot.lane.b32.xlu0 %v2076, 112
      %v2213 = vpop.permute.xlu0 %2212
      %2214 = vrot.lane.b32.xlu0 %v2078, 112
      %v2215 = vpop.permute.xlu0 %2214
      %2216 = vrot.lane.b32.xlu0 %v2081, 112
      %v2217 = vpop.permute.xlu0 %2216
      %2218 = vrot.lane.b32.xlu0 %v2083, 112
      %v2219 = vpop.permute.xlu0 %2218
      %2220 = vrot.lane.b32.xlu0 %v2086, 112
      %v2221 = vpop.permute.xlu0 %2220
      %2222 = vrot.lane.b32.xlu0 %v2088, 112
      %v2223 = vpop.permute.xlu0 %2222
      %2224 = vrot.lane.b32.xlu0 %v2091, 112
      %v2225 = vpop.permute.xlu0 %2224
      %2226 = vrot.lane.b32.xlu0 %v2093, 112
      %v2227 = vpop.permute.xlu0 %2226
      %2228 = vrot.lane.b32.xlu0 %v2096, 112
      %v2229 = vpop.permute.xlu0 %2228
      %2230 = vrot.lane.b32.xlu0 %v2098, 112
      %v2231 = vpop.permute.xlu0 %2230
      %2232 = vrot.lane.b32.xlu0 %v2101, 112
      %v2233 = vpop.permute.xlu0 %2232
      %2234 = vrot.lane.b32.xlu0 %v2103, 112
      %v2235 = vpop.permute.xlu0 %2234
      %2236 = vrot.lane.b32.xlu0 %v2106, 112
      %v2237 = vpop.permute.xlu0 %2236
      %2238 = vrot.lane.b32.xlu0 %v2108, 112
      %v2239 = vpop.permute.xlu0 %2238
      %2240 = vrot.lane.b32.xlu0 %v2111, 112
      %v2241 = vpop.permute.xlu0 %2240
      %2242 = vrot.lane.b32.xlu0 %v2113, 112
      %v2243 = vpop.permute.xlu0 %2242
      %2244 = vrot.lane.b32.xlu0 %v2116, 112
      %v2245 = vpop.permute.xlu0 %2244
      %2246 = vrot.lane.b32.xlu0 %v2118, 112
      %v2247 = vpop.permute.xlu0 %2246
      %s2280 = scalar_lea.vmem %s170, 16
      %2281 = vst.msk [vmem:[%s2280] sm:$0xff] %vm290, %v2185
      %2282 = vst.msk [vmem:[%s2280 + $0x8] sm:$0xff] %vm290, %v2187
      %2283 = vst.msk [vmem:[%s2280 + $0x20] sm:$0xff] %vm290, %v2189
      %2284 = vst.msk [vmem:[%s2280 + $0x28] sm:$0xff] %vm290, %v2191
      %2285 = vst.msk [vmem:[%s2280 + $0x40] sm:$0xff] %vm290, %v2193
      %2286 = vst.msk [vmem:[%s2280 + $0x48] sm:$0xff] %vm290, %v2195
      %2287 = vst.msk [vmem:[%s2280 + $0x60] sm:$0xff] %vm290, %v2197
      %2288 = vst.msk [vmem:[%s2280 + $0x68] sm:$0xff] %vm290, %v2199
      %2289 = vst.msk [vmem:[%s2280 + $0x80] sm:$0xff] %vm290, %v2201
      %2290 = vst.msk [vmem:[%s2280 + $0x88] sm:$0xff] %vm290, %v2203
      %2291 = vst.msk [vmem:[%s2280 + $0xa0] sm:$0xff] %vm290, %v2205
      %2292 = vst.msk [vmem:[%s2280 + $0xa8] sm:$0xff] %vm290, %v2207
      %2293 = vst.msk [vmem:[%s2280 + $0xc0] sm:$0xff] %vm290, %v2209
      %2294 = vst.msk [vmem:[%s2280 + $0xc8] sm:$0xff] %vm290, %v2211
      %2295 = vst.msk [vmem:[%s2280 + $0xe0] sm:$0xff] %vm290, %v2213
      %2296 = vst.msk [vmem:[%s2280 + $0xe8] sm:$0xff] %vm290, %v2215
      %2297 = vst.msk [vmem:[%s2280 + $0x100] sm:$0xff] %vm290, %v2217
      %2298 = vst.msk [vmem:[%s2280 + $0x108] sm:$0xff] %vm290, %v2219
      %2299 = vst.msk [vmem:[%s2280 + $0x120] sm:$0xff] %vm290, %v2221
      %2300 = vst.msk [vmem:[%s2280 + $0x128] sm:$0xff] %vm290, %v2223
      %2301 = vst.msk [vmem:[%s2280 + $0x140] sm:$0xff] %vm290, %v2225
      %2302 = vst.msk [vmem:[%s2280 + $0x148] sm:$0xff] %vm290, %v2227
      %2303 = vst.msk [vmem:[%s2280 + $0x160] sm:$0xff] %vm290, %v2229
      %2304 = vst.msk [vmem:[%s2280 + $0x168] sm:$0xff] %vm290, %v2231
      %2305 = vst.msk [vmem:[%s2280 + $0x180] sm:$0xff] %vm290, %v2233
      %2306 = vst.msk [vmem:[%s2280 + $0x188] sm:$0xff] %vm290, %v2235
      %2307 = vst.msk [vmem:[%s2280 + $0x1a0] sm:$0xff] %vm290, %v2237
      %2308 = vst.msk [vmem:[%s2280 + $0x1a8] sm:$0xff] %vm290, %v2239
      %2309 = vst.msk [vmem:[%s2280 + $0x1c0] sm:$0xff] %vm290, %v2241
      %2310 = vst.msk [vmem:[%s2280 + $0x1c8] sm:$0xff] %vm290, %v2243
      %2311 = vst.msk [vmem:[%s2280 + $0x1e0] sm:$0xff] %vm290, %v2245
      %2312 = vst.msk [vmem:[%s2280 + $0x1e8] sm:$0xff] %vm290, %v2247
      %p2313 = scmp.lt.s32.totalorder %s14, 1
      %s2314 = scalar_select %p2313, %s14, 1
      %s2315 = smul.addr %s2314, 64
      %s2316 = smul.addr %s2315, 8
      %s2317 = scalar_lea.vmem %s3, %s2316
      // Predicated region
      $region33: #{_lambda_.5} parent=31 // pred_check
        %p2318 = pneg %p100
      $region34: #{_lambda_.5} parent=31 // pred_check_branch
        %2320 = sbr.rel (%p2318) target = $region36
      $region35: #{_lambda_.5} parent=31 // pred_region
        _
      $region36: #{_lambda_.5} parent=31 // pred_fallthru
        _
    $region32: #{_lambda_.5} parent=5 // pred_fallthru
      _
    %p2321 = scmp.le.s32.totalorder 2, %s9
    // Predicated region
    $region37: #{_lambda_.5} parent=5 // pred_check
      %p2322 = pneg %p2321
    $region38: #{_lambda_.5} parent=5 // pred_check_branch
      %2324 = sbr.rel (%p2322) target = $region40
    $region39: #{_lambda_.5} parent=5 // pred_region
      %s2325 = ssub.s32 %s9, 2
      // Predicated region
      $region41: #{_lambda_.5} parent=39 // pred_check
        %p2326 = pneg %p106
      $region42: #{_lambda_.5} parent=39 // pred_check_branch
        %2328 = sbr.rel (%p2326) target = $region44
      $region43: #{_lambda_.5} parent=39 // pred_region
        %p2329 = scmp.lt.s32.totalorder %s15, 1
        %s2330 = scalar_select %p2329, %s15, 1
        %s2331 = smul.addr %s2330, 64
        %s2332 = smul.addr %s2331, 8
        %s2333 = scalar_lea.vmem %s3, %s2332
      $region44: #{_lambda_.5} parent=39 // pred_fallthru
        _
    $region40: #{_lambda_.5} parent=5 // pred_fallthru
      _
  $region6: #{_lambda_.5} parent=0 // loop_footer
    %s13 = sadd.s32 1, %s9
  $region7: #{_lambda_.5} parent=0 // loop_footer_branch
    %8 = sbr.rel target = $region3
  $region8: #{_lambda_.5} parent=0 // loop_exit
    _

</llo_original>
